<compile_context>
chip_gen: v5e
topology: v5e:2x2
jax: 0.10.0
libtpu: 0.0.40
codegen_flags: <defaults>
</compile_context>

<pallas_src>
import functools

import jax
import jax.numpy as jnp
from jax.experimental import pallas as pl
from jax.experimental.pallas import tpu as pltpu

LEAKY_SLOPE = 0.01          # nn.LeakyReLU() default
BN_EPS = 1e-5               # nn.BatchNorm1d default
LANE = 128                  # TPU lane width (channel padding target)
_VMEM_LIMIT = 48 * 1024 * 1024


def _round_up(n, m):
    return (n + m - 1) // m * m


def _pad_channels(x, cp):
    c = x.shape[-1]
    if c == cp:
        return x
    return jnp.pad(x, [(0, 0)] * (x.ndim - 1) + [(0, cp - c)])


# ---------------------------------------------------------------------------
# Kernel 1: plane-tiled SubMConv3d (+ LeakyReLU + BN partial statistics)
#
# The padded plane is presented flattened to [Hp*Wp (+2), C] rows so that each
# (dy, dx) tap is a contiguous row-slice at offset dy*Wp + dx; kd in-D taps are
# provided as kd shifted views of the same padded volume (block index z+dz).
# ---------------------------------------------------------------------------
def _make_conv_plane_kernel(kd, wp, w_valid, hwp):
    def kernel(*refs):
        plane_refs = refs[:kd]
        w_ref = refs[kd]
        y_ref = refs[kd + 1]
        stats_ref = refs[kd + 2]
        cp = y_ref.shape[-1]

        acc = jnp.zeros((hwp, cp), jnp.float32)
        t = 0
        for dz in range(kd):
            for dy in range(3):
                for dx in range(3):
                    off = dy * wp + dx
                    patch = plane_refs[dz][0, 0, off:off + hwp, :]   # bf16
                    acc = acc + jnp.dot(patch, w_ref[t],
                                        preferred_element_type=jnp.float32)
                    t += 1

        # LeakyReLU
        y = jnp.where(acc >= 0.0, acc, LEAKY_SLOPE * acc)
        # zero out the padded-width "garbage" columns (x >= W within each row)
        col = jax.lax.broadcasted_iota(jnp.int32, (hwp, 1), 0) % wp
        y = jnp.where(col < w_valid, y, 0.0)

        y_ref[0, 0] = y.astype(y_ref.dtype)

        # per-plane partial BatchNorm statistics (sum, sum of squares)
        ps = jnp.sum(y, axis=0, keepdims=True)
        pss = jnp.sum(y * y, axis=0, keepdims=True)
        stats_ref[0, 0] = jnp.concatenate([ps, pss], axis=0)

    return kernel


def conv_plane_act(x, w, kd):
    """SubMConv3d (kd x 3 x 3, SAME) + LeakyReLU + BN partial stats.

    x: [B, D, H, W, CI] bf16;  w: [kd*9, CI, CP] bf16.
    Returns (y [B, D, H, W, CP] f32, stats [B, D, 2, CP] f32).
    """
    b, d, h, w_sp, ci = x.shape
    t_taps, _, cp = w.shape

    pd = 1 if kd == 3 else 0
    xp = jnp.pad(x, ((0, 0), (pd, pd), (1, 1), (1, 1), (0, 0)))
    dp, hp, wp = d + 2 * pd, h + 2, w_sp + 2
    hwp = h * wp
    r = hp * wp
    r_pad = _round_up(r + 2, 8)           # slack rows so every tap slice fits
    flat = xp.reshape(b, dp, r, ci)
    flat = jnp.pad(flat, ((0, 0), (0, 0), (0, r_pad - r), (0, 0)))

    in_specs = [
        pl.BlockSpec((1, 1, r_pad, ci),
                     (lambda bi, zi, dz=dz: (bi, zi + dz, 0, 0)))
        for dz in range(kd)
    ]
    in_specs.append(pl.BlockSpec((t_taps, ci, cp), lambda bi, zi: (0, 0, 0)))

    y, stats = pl.pallas_call(
        _make_conv_plane_kernel(kd, wp, w_sp, hwp),
        out_shape=(jax.ShapeDtypeStruct((b, d, hwp, cp), jnp.float32),
                   jax.ShapeDtypeStruct((b, d, 2, cp), jnp.float32)),
        grid=(b, d),
        in_specs=in_specs,
        out_specs=(pl.BlockSpec((1, 1, hwp, cp), lambda bi, zi: (bi, zi, 0, 0)),
                   pl.BlockSpec((1, 1, 2, cp), lambda bi, zi: (bi, zi, 0, 0))),
        compiler_params=pltpu.CompilerParams(
            dimension_semantics=("parallel", "parallel"),
            vmem_limit_bytes=_VMEM_LIMIT),
    )(*([flat] * kd), w)

    y = y.reshape(b, d, h, wp, cp)[:, :, :, :w_sp, :]
    return y, stats


# ---------------------------------------------------------------------------
# Kernel 2: tiled lane-dense matmul (all 27 taps of the inverse conv at once)
# ---------------------------------------------------------------------------
def _matmul_kernel(x_ref, w_ref, o_ref):
    o_ref[...] = jnp.dot(x_ref[...], w_ref[...],
                         preferred_element_type=jnp.float32).astype(o_ref.dtype)


def matmul_tiled(x2d, w, *, max_tile=256):
    n, k = x2d.shape
    _, m = w.shape
    t = min(max_tile, _round_up(n, 8))
    n_pad = _round_up(n, t)
    if n_pad != n:
        x2d = jnp.pad(x2d, ((0, n_pad - n), (0, 0)))
    out = pl.pallas_call(
        _matmul_kernel,
        out_shape=jax.ShapeDtypeStruct((n_pad, m), jnp.float32),
        grid=(n_pad // t,),
        in_specs=[pl.BlockSpec((t, k), lambda i: (i, 0)),
                  pl.BlockSpec((k, m), lambda i: (0, 0))],
        out_specs=pl.BlockSpec((t, m), lambda i: (i, 0)),
        compiler_params=pltpu.CompilerParams(
            dimension_semantics=("parallel",),
            vmem_limit_bytes=_VMEM_LIMIT),
    )(x2d, w)
    return out[:n] if n_pad != n else out


# ---------------------------------------------------------------------------
# Kernel 3: BatchNorm application (tiled, lane-dense elementwise)
# ---------------------------------------------------------------------------
def _bn_apply_kernel(y_ref, scale_ref, shift_ref, o_ref):
    o_ref[...] = (y_ref[...] * scale_ref[...] + shift_ref[...]).astype(o_ref.dtype)


def bn_apply(y2d, scale, shift, out_dtype, *, max_tile=1024):
    n, cp = y2d.shape
    t = min(max_tile, _round_up(n, 8))
    n_pad = _round_up(n, t)
    if n_pad != n:
        y2d = jnp.pad(y2d, ((0, n_pad - n), (0, 0)))
    out = pl.pallas_call(
        _bn_apply_kernel,
        out_shape=jax.ShapeDtypeStruct((n_pad, cp), out_dtype),
        grid=(n_pad // t,),
        in_specs=[pl.BlockSpec((t, cp), lambda i: (i, 0)),
                  pl.BlockSpec((1, cp), lambda i: (0, 0)),
                  pl.BlockSpec((1, cp), lambda i: (0, 0))],
        out_specs=pl.BlockSpec((t, cp), lambda i: (i, 0)),
        compiler_params=pltpu.CompilerParams(
            dimension_semantics=("parallel",),
            vmem_limit_bytes=_VMEM_LIMIT),
    )(y2d, scale, shift)
    return out[:n] if n_pad != n else out


def bn_scale_shift(stats, n_vox):
    """Reduce per-plane partial stats to per-channel (scale, shift)."""
    s = jnp.sum(stats[:, :, 0, :], axis=(0, 1))
    ss = jnp.sum(stats[:, :, 1, :], axis=(0, 1))
    mean = s / n_vox
    var = jnp.maximum(ss / n_vox - mean * mean, 0.0)   # biased batch variance
    inv = jax.lax.rsqrt(var + BN_EPS)
    return inv.reshape(1, -1), (-mean * inv).reshape(1, -1)


# ---------------------------------------------------------------------------
# SparseInverseConv3d (stride-2 transposed conv, k=3) + skip add
# ---------------------------------------------------------------------------
def _phase_slices(s, d):
    # output index o = 2*i + s - 1, clipped to [0, 2d)
    if s == 0:
        return slice(1, 2 * d - 2, 2), slice(1, d)
    if s == 1:
        return slice(0, 2 * d, 2), slice(0, d)
    return slice(1, 2 * d, 2), slice(0, d)


def inverse_conv_add_skip(up_feats, w_up_all, skip_grid):
    """up_feats: [B, Dl, Hl, Wl, CP] bf16; w_up_all: [CP, 27*CP] bf16;
    skip_grid: [B, 2Dl, 2Hl, 2Wl, CP] f32. Returns f32 high-res grid."""
    b, dl, hl, wl, cp = up_feats.shape
    y_all = matmul_tiled(up_feats.reshape(-1, cp), w_up_all)     # [N_low, 27*CP]
    y_all = y_all.reshape(b, dl, hl, wl, 27, cp)

    out = skip_grid
    for sz in range(3):
        oz, iz = _phase_slices(sz, dl)
        for sy in range(3):
            oy, iy = _phase_slices(sy, hl)
            for sx in range(3):
                ox, ix = _phase_slices(sx, wl)
                t = (sz * 3 + sy) * 3 + sx
                out = out.at[:, oz, oy, ox, :].add(y_all[:, iz, iy, ix, t, :])
    return out


# ---------------------------------------------------------------------------
# Parameter preprocessing (hoisted: pad channels, reshape taps, cast bf16)
# ---------------------------------------------------------------------------
def prepare_params(raw, in_filters, out_filters):
    cpi = _round_up(in_filters, LANE)
    cp = _round_up(out_filters, LANE)

    def pad_taps(w, ci, ci_pad):
        kd, kh, kw = w.shape[:3]
        t = kd * kh * kw
        wp = jnp.zeros((t, ci_pad, cp), jnp.float32)
        wp = wp.at[:, :ci, :out_filters].set(w.reshape(t, ci, out_filters))
        return wp.astype(jnp.bfloat16)

    w_up = pad_taps(raw["w_up"], out_filters, cp)                 # (27, CP, CP)
    w_up_all = w_up.transpose(1, 0, 2).reshape(cp, 27 * cp)       # (CP, 27*CP)

    return {
        "w_trans": pad_taps(raw["w_trans"], in_filters, cpi),     # (27, CPI, CP)
        "w_up_all": w_up_all,
        "w_c1": pad_taps(raw["w_c1"], out_filters, cp),           # (9, CP, CP)
        "w_c2": pad_taps(raw["w_c2"], out_filters, cp),
        "w_c3": pad_taps(raw["w_c3"], out_filters, cp),
    }


# ---------------------------------------------------------------------------
# UpBlock forward
# ---------------------------------------------------------------------------
def up_block_forward(x, skip, params, *, out_filters):
    b, dl, hl, wl, _ = x.shape
    cp = params["w_c1"].shape[-1]
    cpi = params["w_trans"].shape[1]

    # trans_dilao: 3x3x3 subm conv -> LeakyReLU -> BatchNorm1d (two-pass BN)
    xb = _pad_channels(x, cpi).astype(jnp.bfloat16)
    y, stats = conv_plane_act(xb, params["w_trans"], kd=3)
    scale, shift = bn_scale_shift(stats, b * dl * hl * wl)
    up_a = bn_apply(y.reshape(-1, cp), scale, shift, jnp.bfloat16)
    up_a = up_a.reshape(b, dl, hl, wl, cp)

    # up_subm: SparseInverseConv3d (stride-2 transposed conv, k=3) + skip add
    skip_grid = _pad_channels(skip, cp).astype(jnp.float32)
    up_e = inverse_conv_add_skip(up_a, params["w_up_all"], skip_grid)

    # conv1/2/3: (1,3,3) subm conv -> LeakyReLU -> BatchNorm1d
    dh, hh, wh = 2 * dl, 2 * hl, 2 * wl
    n_hi = b * dh * hh * wh
    feats = up_e
    for i, name in enumerate(("w_c1", "w_c2", "w_c3")):
        xb = feats.astype(jnp.bfloat16)
        y, stats = conv_plane_act(xb, params[name], kd=1)
        scale, shift = bn_scale_shift(stats, n_hi)
        out_dtype = jnp.float32 if i == 2 else jnp.bfloat16
        feats = bn_apply(y.reshape(-1, cp), scale, shift, out_dtype)
        feats = feats.reshape(b, dh, hh, wh, cp)

    return feats[..., :out_filters]


def init_params(key, in_filters, out_filters):
    k0, k1, k2, k3, k4 = jax.random.split(key, 5)

    def w(k, shape):
        fan_in = shape[0] * shape[1] * shape[2] * shape[3]
        return jax.random.normal(k, shape, jnp.float32) * (1.0 / jnp.sqrt(fan_in))

    return {
        "w_trans": w(k0, (3, 3, 3, in_filters, out_filters)),
        "w_up":    w(k1, (3, 3, 3, out_filters, out_filters)),
        "w_c1":    w(k2, (1, 3, 3, out_filters, out_filters)),
        "w_c2":    w(k3, (1, 3, 3, out_filters, out_filters)),
        "w_c3":    w(k4, (1, 3, 3, out_filters, out_filters)),
        # BatchNorm weight=1 / bias=0 (per weight_initialization) are folded
        # into the (y - mean) * rsqrt(var + eps) normalisation.
    }


if __name__ == "__main__":
    in_filters, out_filters = 16, 16
    B, D, H, W = 2, 2, 4, 4                     # low-res input grid
    Ds, Hs, Ws = 2 * D, 2 * H, 2 * W            # skip grid (2x upsampled)

    key = jax.random.PRNGKey(0)
    kx, ks, kp = jax.random.split(key, 3)
    x = jax.random.normal(kx, (B, D, H, W, in_filters), jnp.float32)
    skip = jax.random.normal(ks, (B, Ds, Hs, Ws, out_filters), jnp.float32)

    raw = init_params(kp, in_filters, out_filters)
    params = prepare_params(raw, in_filters, out_filters)   # hoisted weight prep

    fwd = jax.jit(functools.partial(up_block_forward, out_filters=out_filters))
    out = fwd(x, skip, params)
    jax.block_until_ready(out)

    assert out.shape == (B, Ds, Hs, Ws, out_filters)
    assert bool(jnp.isfinite(out).all())
    print("KERNEL_OK")
</pallas_src>

<mosaic_0001>
module attributes {stable_mosaic.version = 11 : i64} {
  func.func @kernel(%arg0: i32, %arg1: i32, %arg2: memref<1x1x40x128xbf16, #tpu.memory_space<vmem>>, %arg3: memref<1x1x40x128xbf16, #tpu.memory_space<vmem>>, %arg4: memref<1x1x40x128xbf16, #tpu.memory_space<vmem>>, %arg5: memref<27x128x128xbf16, #tpu.memory_space<vmem>>, %arg6: memref<1x1x24x128xf32, #tpu.memory_space<vmem>>, %arg7: memref<1x1x2x128xf32, #tpu.memory_space<vmem>>) attributes {dimension_semantics = [#tpu.dimension_semantics<parallel>, #tpu.dimension_semantics<parallel>], iteration_bounds = array<i64: 2, 2>, scalar_prefetch = 0 : i64, scratch_operands = 0 : i64, tpu.core_type = #tpu.core_type<tc>, window_params = [{transform_indices = @transform_0, window_bounds = array<i64: 1, 1, 40, 128>}, {transform_indices = @transform_1, window_bounds = array<i64: 1, 1, 40, 128>}, {transform_indices = @transform_2, window_bounds = array<i64: 1, 1, 40, 128>}, {pipeline_mode = #tpu.pipeline_mode<synchronous>, transform_indices = @transform_3, window_bounds = array<i64: 27, 128, 128>}, {transform_indices = @transform_4, window_bounds = array<i64: 1, 1, 24, 128>}, {transform_indices = @transform_5, window_bounds = array<i64: 1, 1, 2, 128>}]} {
    %cst = arith.constant 0.000000e+00 : f32
    %0 = vector.broadcast %cst : f32 to vector<24x128xf32>
    %c0 = arith.constant 0 : index
    %c0_0 = arith.constant 0 : index
    %c0_1 = arith.constant 0 : index
    %c0_2 = arith.constant 0 : index
    %1 = vector.load %arg2[%c0, %c0_0, %c0_1, %c0_2] : memref<1x1x40x128xbf16, #tpu.memory_space<vmem>>, vector<1x1x24x128xbf16>
    %2 = vector.shape_cast %1 : vector<1x1x24x128xbf16> to vector<24x128xbf16>
    %c0_3 = arith.constant 0 : index
    %c0_4 = arith.constant 0 : index
    %c0_5 = arith.constant 0 : index
    %3 = vector.load %arg5[%c0_3, %c0_4, %c0_5] : memref<27x128x128xbf16, #tpu.memory_space<vmem>>, vector<1x128x128xbf16>
    %4 = vector.shape_cast %3 : vector<1x128x128xbf16> to vector<128x128xbf16>
    %cst_6 = arith.constant dense<0.000000e+00> : vector<24x128xf32>
    %5 = tpu.matmul %2, %4, %cst_6 {dimension_numbers = #tpu.dot_dimension_numbers<[1], [0], [0], [1], [0, 0, 1, 1], [], []>} : vector<24x128xbf16>, vector<128x128xbf16>, vector<24x128xf32> -> vector<24x128xf32>
    %6 = arith.addf %0, %5 : vector<24x128xf32>
    %c0_7 = arith.constant 0 : index
    %c0_8 = arith.constant 0 : index
    %c1 = arith.constant 1 : index
    %c0_9 = arith.constant 0 : index
    %7 = vector.load %arg2[%c0_7, %c0_8, %c1, %c0_9] : memref<1x1x40x128xbf16, #tpu.memory_space<vmem>>, vector<1x1x24x128xbf16>
    %8 = vector.shape_cast %7 : vector<1x1x24x128xbf16> to vector<24x128xbf16>
    %c1_10 = arith.constant 1 : index
    %c0_11 = arith.constant 0 : index
    %c0_12 = arith.constant 0 : index
    %9 = vector.load %arg5[%c1_10, %c0_11, %c0_12] : memref<27x128x128xbf16, #tpu.memory_space<vmem>>, vector<1x128x128xbf16>
    %10 = vector.shape_cast %9 : vector<1x128x128xbf16> to vector<128x128xbf16>
    %cst_13 = arith.constant dense<0.000000e+00> : vector<24x128xf32>
    %11 = tpu.matmul %8, %10, %cst_13 {dimension_numbers = #tpu.dot_dimension_numbers<[1], [0], [0], [1], [0, 0, 1, 1], [], []>} : vector<24x128xbf16>, vector<128x128xbf16>, vector<24x128xf32> -> vector<24x128xf32>
    %12 = arith.addf %6, %11 : vector<24x128xf32>
    %c0_14 = arith.constant 0 : index
    %c0_15 = arith.constant 0 : index
    %c2 = arith.constant 2 : index
    %c0_16 = arith.constant 0 : index
    %13 = vector.load %arg2[%c0_14, %c0_15, %c2, %c0_16] : memref<1x1x40x128xbf16, #tpu.memory_space<vmem>>, vector<1x1x24x128xbf16>
    %14 = vector.shape_cast %13 : vector<1x1x24x128xbf16> to vector<24x128xbf16>
    %c2_17 = arith.constant 2 : index
    %c0_18 = arith.constant 0 : index
    %c0_19 = arith.constant 0 : index
    %15 = vector.load %arg5[%c2_17, %c0_18, %c0_19] : memref<27x128x128xbf16, #tpu.memory_space<vmem>>, vector<1x128x128xbf16>
    %16 = vector.shape_cast %15 : vector<1x128x128xbf16> to vector<128x128xbf16>
    %cst_20 = arith.constant dense<0.000000e+00> : vector<24x128xf32>
    %17 = tpu.matmul %14, %16, %cst_20 {dimension_numbers = #tpu.dot_dimension_numbers<[1], [0], [0], [1], [0, 0, 1, 1], [], []>} : vector<24x128xbf16>, vector<128x128xbf16>, vector<24x128xf32> -> vector<24x128xf32>
    %18 = arith.addf %12, %17 : vector<24x128xf32>
    %c0_21 = arith.constant 0 : index
    %c0_22 = arith.constant 0 : index
    %c6 = arith.constant 6 : index
    %c0_23 = arith.constant 0 : index
    %19 = vector.load %arg2[%c0_21, %c0_22, %c6, %c0_23] : memref<1x1x40x128xbf16, #tpu.memory_space<vmem>>, vector<1x1x24x128xbf16>
    %20 = vector.shape_cast %19 : vector<1x1x24x128xbf16> to vector<24x128xbf16>
    %c3 = arith.constant 3 : index
    %c0_24 = arith.constant 0 : index
    %c0_25 = arith.constant 0 : index
    %21 = vector.load %arg5[%c3, %c0_24, %c0_25] : memref<27x128x128xbf16, #tpu.memory_space<vmem>>, vector<1x128x128xbf16>
    %22 = vector.shape_cast %21 : vector<1x128x128xbf16> to vector<128x128xbf16>
    %cst_26 = arith.constant dense<0.000000e+00> : vector<24x128xf32>
    %23 = tpu.matmul %20, %22, %cst_26 {dimension_numbers = #tpu.dot_dimension_numbers<[1], [0], [0], [1], [0, 0, 1, 1], [], []>} : vector<24x128xbf16>, vector<128x128xbf16>, vector<24x128xf32> -> vector<24x128xf32>
    %24 = arith.addf %18, %23 : vector<24x128xf32>
    %c0_27 = arith.constant 0 : index
    %c0_28 = arith.constant 0 : index
    %c7 = arith.constant 7 : index
    %c0_29 = arith.constant 0 : index
    %25 = vector.load %arg2[%c0_27, %c0_28, %c7, %c0_29] : memref<1x1x40x128xbf16, #tpu.memory_space<vmem>>, vector<1x1x24x128xbf16>
    %26 = vector.shape_cast %25 : vector<1x1x24x128xbf16> to vector<24x128xbf16>
    %c4 = arith.constant 4 : index
    %c0_30 = arith.constant 0 : index
    %c0_31 = arith.constant 0 : index
    %27 = vector.load %arg5[%c4, %c0_30, %c0_31] : memref<27x128x128xbf16, #tpu.memory_space<vmem>>, vector<1x128x128xbf16>
    %28 = vector.shape_cast %27 : vector<1x128x128xbf16> to vector<128x128xbf16>
    %cst_32 = arith.constant dense<0.000000e+00> : vector<24x128xf32>
    %29 = tpu.matmul %26, %28, %cst_32 {dimension_numbers = #tpu.dot_dimension_numbers<[1], [0], [0], [1], [0, 0, 1, 1], [], []>} : vector<24x128xbf16>, vector<128x128xbf16>, vector<24x128xf32> -> vector<24x128xf32>
    %30 = arith.addf %24, %29 : vector<24x128xf32>
    %c0_33 = arith.constant 0 : index
    %c0_34 = arith.constant 0 : index
    %c8 = arith.constant 8 : index
    %c0_35 = arith.constant 0 : index
    %31 = vector.load %arg2[%c0_33, %c0_34, %c8, %c0_35] : memref<1x1x40x128xbf16, #tpu.memory_space<vmem>>, vector<1x1x24x128xbf16>
    %32 = vector.shape_cast %31 : vector<1x1x24x128xbf16> to vector<24x128xbf16>
    %c5 = arith.constant 5 : index
    %c0_36 = arith.constant 0 : index
    %c0_37 = arith.constant 0 : index
    %33 = vector.load %arg5[%c5, %c0_36, %c0_37] : memref<27x128x128xbf16, #tpu.memory_space<vmem>>, vector<1x128x128xbf16>
    %34 = vector.shape_cast %33 : vector<1x128x128xbf16> to vector<128x128xbf16>
    %cst_38 = arith.constant dense<0.000000e+00> : vector<24x128xf32>
    %35 = tpu.matmul %32, %34, %cst_38 {dimension_numbers = #tpu.dot_dimension_numbers<[1], [0], [0], [1], [0, 0, 1, 1], [], []>} : vector<24x128xbf16>, vector<128x128xbf16>, vector<24x128xf32> -> vector<24x128xf32>
    %36 = arith.addf %30, %35 : vector<24x128xf32>
    %c0_39 = arith.constant 0 : index
    %c0_40 = arith.constant 0 : index
    %c12 = arith.constant 12 : index
    %c0_41 = arith.constant 0 : index
    %37 = vector.load %arg2[%c0_39, %c0_40, %c12, %c0_41] : memref<1x1x40x128xbf16, #tpu.memory_space<vmem>>, vector<1x1x24x128xbf16>
    %38 = vector.shape_cast %37 : vector<1x1x24x128xbf16> to vector<24x128xbf16>
    %c6_42 = arith.constant 6 : index
    %c0_43 = arith.constant 0 : index
    %c0_44 = arith.constant 0 : index
    %39 = vector.load %arg5[%c6_42, %c0_43, %c0_44] : memref<27x128x128xbf16, #tpu.memory_space<vmem>>, vector<1x128x128xbf16>
    %40 = vector.shape_cast %39 : vector<1x128x128xbf16> to vector<128x128xbf16>
    %cst_45 = arith.constant dense<0.000000e+00> : vector<24x128xf32>
    %41 = tpu.matmul %38, %40, %cst_45 {dimension_numbers = #tpu.dot_dimension_numbers<[1], [0], [0], [1], [0, 0, 1, 1], [], []>} : vector<24x128xbf16>, vector<128x128xbf16>, vector<24x128xf32> -> vector<24x128xf32>
    %42 = arith.addf %36, %41 : vector<24x128xf32>
    %c0_46 = arith.constant 0 : index
    %c0_47 = arith.constant 0 : index
    %c13 = arith.constant 13 : index
    %c0_48 = arith.constant 0 : index
    %43 = vector.load %arg2[%c0_46, %c0_47, %c13, %c0_48] : memref<1x1x40x128xbf16, #tpu.memory_space<vmem>>, vector<1x1x24x128xbf16>
    %44 = vector.shape_cast %43 : vector<1x1x24x128xbf16> to vector<24x128xbf16>
    %c7_49 = arith.constant 7 : index
    %c0_50 = arith.constant 0 : index
    %c0_51 = arith.constant 0 : index
    %45 = vector.load %arg5[%c7_49, %c0_50, %c0_51] : memref<27x128x128xbf16, #tpu.memory_space<vmem>>, vector<1x128x128xbf16>
    %46 = vector.shape_cast %45 : vector<1x128x128xbf16> to vector<128x128xbf16>
    %cst_52 = arith.constant dense<0.000000e+00> : vector<24x128xf32>
    %47 = tpu.matmul %44, %46, %cst_52 {dimension_numbers = #tpu.dot_dimension_numbers<[1], [0], [0], [1], [0, 0, 1, 1], [], []>} : vector<24x128xbf16>, vector<128x128xbf16>, vector<24x128xf32> -> vector<24x128xf32>
    %48 = arith.addf %42, %47 : vector<24x128xf32>
    %c0_53 = arith.constant 0 : index
    %c0_54 = arith.constant 0 : index
    %c14 = arith.constant 14 : index
    %c0_55 = arith.constant 0 : index
    %49 = vector.load %arg2[%c0_53, %c0_54, %c14, %c0_55] : memref<1x1x40x128xbf16, #tpu.memory_space<vmem>>, vector<1x1x24x128xbf16>
    %50 = vector.shape_cast %49 : vector<1x1x24x128xbf16> to vector<24x128xbf16>
    %c8_56 = arith.constant 8 : index
    %c0_57 = arith.constant 0 : index
    %c0_58 = arith.constant 0 : index
    %51 = vector.load %arg5[%c8_56, %c0_57, %c0_58] : memref<27x128x128xbf16, #tpu.memory_space<vmem>>, vector<1x128x128xbf16>
    %52 = vector.shape_cast %51 : vector<1x128x128xbf16> to vector<128x128xbf16>
    %cst_59 = arith.constant dense<0.000000e+00> : vector<24x128xf32>
    %53 = tpu.matmul %50, %52, %cst_59 {dimension_numbers = #tpu.dot_dimension_numbers<[1], [0], [0], [1], [0, 0, 1, 1], [], []>} : vector<24x128xbf16>, vector<128x128xbf16>, vector<24x128xf32> -> vector<24x128xf32>
    %54 = arith.addf %48, %53 : vector<24x128xf32>
    %c0_60 = arith.constant 0 : index
    %c0_61 = arith.constant 0 : index
    %c0_62 = arith.constant 0 : index
    %c0_63 = arith.constant 0 : index
    %55 = vector.load %arg3[%c0_60, %c0_61, %c0_62, %c0_63] : memref<1x1x40x128xbf16, #tpu.memory_space<vmem>>, vector<1x1x24x128xbf16>
    %56 = vector.shape_cast %55 : vector<1x1x24x128xbf16> to vector<24x128xbf16>
    %c9 = arith.constant 9 : index
    %c0_64 = arith.constant 0 : index
    %c0_65 = arith.constant 0 : index
    %57 = vector.load %arg5[%c9, %c0_64, %c0_65] : memref<27x128x128xbf16, #tpu.memory_space<vmem>>, vector<1x128x128xbf16>
    %58 = vector.shape_cast %57 : vector<1x128x128xbf16> to vector<128x128xbf16>
    %cst_66 = arith.constant dense<0.000000e+00> : vector<24x128xf32>
    %59 = tpu.matmul %56, %58, %cst_66 {dimension_numbers = #tpu.dot_dimension_numbers<[1], [0], [0], [1], [0, 0, 1, 1], [], []>} : vector<24x128xbf16>, vector<128x128xbf16>, vector<24x128xf32> -> vector<24x128xf32>
    %60 = arith.addf %54, %59 : vector<24x128xf32>
    %c0_67 = arith.constant 0 : index
    %c0_68 = arith.constant 0 : index
    %c1_69 = arith.constant 1 : index
    %c0_70 = arith.constant 0 : index
    %61 = vector.load %arg3[%c0_67, %c0_68, %c1_69, %c0_70] : memref<1x1x40x128xbf16, #tpu.memory_space<vmem>>, vector<1x1x24x128xbf16>
    %62 = vector.shape_cast %61 : vector<1x1x24x128xbf16> to vector<24x128xbf16>
    %c10 = arith.constant 10 : index
    %c0_71 = arith.constant 0 : index
    %c0_72 = arith.constant 0 : index
    %63 = vector.load %arg5[%c10, %c0_71, %c0_72] : memref<27x128x128xbf16, #tpu.memory_space<vmem>>, vector<1x128x128xbf16>
    %64 = vector.shape_cast %63 : vector<1x128x128xbf16> to vector<128x128xbf16>
    %cst_73 = arith.constant dense<0.000000e+00> : vector<24x128xf32>
    %65 = tpu.matmul %62, %64, %cst_73 {dimension_numbers = #tpu.dot_dimension_numbers<[1], [0], [0], [1], [0, 0, 1, 1], [], []>} : vector<24x128xbf16>, vector<128x128xbf16>, vector<24x128xf32> -> vector<24x128xf32>
    %66 = arith.addf %60, %65 : vector<24x128xf32>
    %c0_74 = arith.constant 0 : index
    %c0_75 = arith.constant 0 : index
    %c2_76 = arith.constant 2 : index
    %c0_77 = arith.constant 0 : index
    %67 = vector.load %arg3[%c0_74, %c0_75, %c2_76, %c0_77] : memref<1x1x40x128xbf16, #tpu.memory_space<vmem>>, vector<1x1x24x128xbf16>
    %68 = vector.shape_cast %67 : vector<1x1x24x128xbf16> to vector<24x128xbf16>
    %c11 = arith.constant 11 : index
    %c0_78 = arith.constant 0 : index
    %c0_79 = arith.constant 0 : index
    %69 = vector.load %arg5[%c11, %c0_78, %c0_79] : memref<27x128x128xbf16, #tpu.memory_space<vmem>>, vector<1x128x128xbf16>
    %70 = vector.shape_cast %69 : vector<1x128x128xbf16> to vector<128x128xbf16>
    %cst_80 = arith.constant dense<0.000000e+00> : vector<24x128xf32>
    %71 = tpu.matmul %68, %70, %cst_80 {dimension_numbers = #tpu.dot_dimension_numbers<[1], [0], [0], [1], [0, 0, 1, 1], [], []>} : vector<24x128xbf16>, vector<128x128xbf16>, vector<24x128xf32> -> vector<24x128xf32>
    %72 = arith.addf %66, %71 : vector<24x128xf32>
    %c0_81 = arith.constant 0 : index
    %c0_82 = arith.constant 0 : index
    %c6_83 = arith.constant 6 : index
    %c0_84 = arith.constant 0 : index
    %73 = vector.load %arg3[%c0_81, %c0_82, %c6_83, %c0_84] : memref<1x1x40x128xbf16, #tpu.memory_space<vmem>>, vector<1x1x24x128xbf16>
    %74 = vector.shape_cast %73 : vector<1x1x24x128xbf16> to vector<24x128xbf16>
    %c12_85 = arith.constant 12 : index
    %c0_86 = arith.constant 0 : index
    %c0_87 = arith.constant 0 : index
    %75 = vector.load %arg5[%c12_85, %c0_86, %c0_87] : memref<27x128x128xbf16, #tpu.memory_space<vmem>>, vector<1x128x128xbf16>
    %76 = vector.shape_cast %75 : vector<1x128x128xbf16> to vector<128x128xbf16>
    %cst_88 = arith.constant dense<0.000000e+00> : vector<24x128xf32>
    %77 = tpu.matmul %74, %76, %cst_88 {dimension_numbers = #tpu.dot_dimension_numbers<[1], [0], [0], [1], [0, 0, 1, 1], [], []>} : vector<24x128xbf16>, vector<128x128xbf16>, vector<24x128xf32> -> vector<24x128xf32>
    %78 = arith.addf %72, %77 : vector<24x128xf32>
    %c0_89 = arith.constant 0 : index
    %c0_90 = arith.constant 0 : index
    %c7_91 = arith.constant 7 : index
    %c0_92 = arith.constant 0 : index
    %79 = vector.load %arg3[%c0_89, %c0_90, %c7_91, %c0_92] : memref<1x1x40x128xbf16, #tpu.memory_space<vmem>>, vector<1x1x24x128xbf16>
    %80 = vector.shape_cast %79 : vector<1x1x24x128xbf16> to vector<24x128xbf16>
    %c13_93 = arith.constant 13 : index
    %c0_94 = arith.constant 0 : index
    %c0_95 = arith.constant 0 : index
    %81 = vector.load %arg5[%c13_93, %c0_94, %c0_95] : memref<27x128x128xbf16, #tpu.memory_space<vmem>>, vector<1x128x128xbf16>
    %82 = vector.shape_cast %81 : vector<1x128x128xbf16> to vector<128x128xbf16>
    %cst_96 = arith.constant dense<0.000000e+00> : vector<24x128xf32>
    %83 = tpu.matmul %80, %82, %cst_96 {dimension_numbers = #tpu.dot_dimension_numbers<[1], [0], [0], [1], [0, 0, 1, 1], [], []>} : vector<24x128xbf16>, vector<128x128xbf16>, vector<24x128xf32> -> vector<24x128xf32>
    %84 = arith.addf %78, %83 : vector<24x128xf32>
    %c0_97 = arith.constant 0 : index
    %c0_98 = arith.constant 0 : index
    %c8_99 = arith.constant 8 : index
    %c0_100 = arith.constant 0 : index
    %85 = vector.load %arg3[%c0_97, %c0_98, %c8_99, %c0_100] : memref<1x1x40x128xbf16, #tpu.memory_space<vmem>>, vector<1x1x24x128xbf16>
    %86 = vector.shape_cast %85 : vector<1x1x24x128xbf16> to vector<24x128xbf16>
    %c14_101 = arith.constant 14 : index
    %c0_102 = arith.constant 0 : index
    %c0_103 = arith.constant 0 : index
    %87 = vector.load %arg5[%c14_101, %c0_102, %c0_103] : memref<27x128x128xbf16, #tpu.memory_space<vmem>>, vector<1x128x128xbf16>
    %88 = vector.shape_cast %87 : vector<1x128x128xbf16> to vector<128x128xbf16>
    %cst_104 = arith.constant dense<0.000000e+00> : vector<24x128xf32>
    %89 = tpu.matmul %86, %88, %cst_104 {dimension_numbers = #tpu.dot_dimension_numbers<[1], [0], [0], [1], [0, 0, 1, 1], [], []>} : vector<24x128xbf16>, vector<128x128xbf16>, vector<24x128xf32> -> vector<24x128xf32>
    %90 = arith.addf %84, %89 : vector<24x128xf32>
    %c0_105 = arith.constant 0 : index
    %c0_106 = arith.constant 0 : index
    %c12_107 = arith.constant 12 : index
    %c0_108 = arith.constant 0 : index
    %91 = vector.load %arg3[%c0_105, %c0_106, %c12_107, %c0_108] : memref<1x1x40x128xbf16, #tpu.memory_space<vmem>>, vector<1x1x24x128xbf16>
    %92 = vector.shape_cast %91 : vector<1x1x24x128xbf16> to vector<24x128xbf16>
    %c15 = arith.constant 15 : index
    %c0_109 = arith.constant 0 : index
    %c0_110 = arith.constant 0 : index
    %93 = vector.load %arg5[%c15, %c0_109, %c0_110] : memref<27x128x128xbf16, #tpu.memory_space<vmem>>, vector<1x128x128xbf16>
    %94 = vector.shape_cast %93 : vector<1x128x128xbf16> to vector<128x128xbf16>
    %cst_111 = arith.constant dense<0.000000e+00> : vector<24x128xf32>
    %95 = tpu.matmul %92, %94, %cst_111 {dimension_numbers = #tpu.dot_dimension_numbers<[1], [0], [0], [1], [0, 0, 1, 1], [], []>} : vector<24x128xbf16>, vector<128x128xbf16>, vector<24x128xf32> -> vector<24x128xf32>
    %96 = arith.addf %90, %95 : vector<24x128xf32>
    %c0_112 = arith.constant 0 : index
    %c0_113 = arith.constant 0 : index
    %c13_114 = arith.constant 13 : index
    %c0_115 = arith.constant 0 : index
    %97 = vector.load %arg3[%c0_112, %c0_113, %c13_114, %c0_115] : memref<1x1x40x128xbf16, #tpu.memory_space<vmem>>, vector<1x1x24x128xbf16>
    %98 = vector.shape_cast %97 : vector<1x1x24x128xbf16> to vector<24x128xbf16>
    %c16 = arith.constant 16 : index
    %c0_116 = arith.constant 0 : index
    %c0_117 = arith.constant 0 : index
    %99 = vector.load %arg5[%c16, %c0_116, %c0_117] : memref<27x128x128xbf16, #tpu.memory_space<vmem>>, vector<1x128x128xbf16>
    %100 = vector.shape_cast %99 : vector<1x128x128xbf16> to vector<128x128xbf16>
    %cst_118 = arith.constant dense<0.000000e+00> : vector<24x128xf32>
    %101 = tpu.matmul %98, %100, %cst_118 {dimension_numbers = #tpu.dot_dimension_numbers<[1], [0], [0], [1], [0, 0, 1, 1], [], []>} : vector<24x128xbf16>, vector<128x128xbf16>, vector<24x128xf32> -> vector<24x128xf32>
    %102 = arith.addf %96, %101 : vector<24x128xf32>
    %c0_119 = arith.constant 0 : index
    %c0_120 = arith.constant 0 : index
    %c14_121 = arith.constant 14 : index
    %c0_122 = arith.constant 0 : index
    %103 = vector.load %arg3[%c0_119, %c0_120, %c14_121, %c0_122] : memref<1x1x40x128xbf16, #tpu.memory_space<vmem>>, vector<1x1x24x128xbf16>
    %104 = vector.shape_cast %103 : vector<1x1x24x128xbf16> to vector<24x128xbf16>
    %c17 = arith.constant 17 : index
    %c0_123 = arith.constant 0 : index
    %c0_124 = arith.constant 0 : index
    %105 = vector.load %arg5[%c17, %c0_123, %c0_124] : memref<27x128x128xbf16, #tpu.memory_space<vmem>>, vector<1x128x128xbf16>
    %106 = vector.shape_cast %105 : vector<1x128x128xbf16> to vector<128x128xbf16>
    %cst_125 = arith.constant dense<0.000000e+00> : vector<24x128xf32>
    %107 = tpu.matmul %104, %106, %cst_125 {dimension_numbers = #tpu.dot_dimension_numbers<[1], [0], [0], [1], [0, 0, 1, 1], [], []>} : vector<24x128xbf16>, vector<128x128xbf16>, vector<24x128xf32> -> vector<24x128xf32>
    %108 = arith.addf %102, %107 : vector<24x128xf32>
    %c0_126 = arith.constant 0 : index
    %c0_127 = arith.constant 0 : index
    %c0_128 = arith.constant 0 : index
    %c0_129 = arith.constant 0 : index
    %109 = vector.load %arg4[%c0_126, %c0_127, %c0_128, %c0_129] : memref<1x1x40x128xbf16, #tpu.memory_space<vmem>>, vector<1x1x24x128xbf16>
    %110 = vector.shape_cast %109 : vector<1x1x24x128xbf16> to vector<24x128xbf16>
    %c18 = arith.constant 18 : index
    %c0_130 = arith.constant 0 : index
    %c0_131 = arith.constant 0 : index
    %111 = vector.load %arg5[%c18, %c0_130, %c0_131] : memref<27x128x128xbf16, #tpu.memory_space<vmem>>, vector<1x128x128xbf16>
    %112 = vector.shape_cast %111 : vector<1x128x128xbf16> to vector<128x128xbf16>
    %cst_132 = arith.constant dense<0.000000e+00> : vector<24x128xf32>
    %113 = tpu.matmul %110, %112, %cst_132 {dimension_numbers = #tpu.dot_dimension_numbers<[1], [0], [0], [1], [0, 0, 1, 1], [], []>} : vector<24x128xbf16>, vector<128x128xbf16>, vector<24x128xf32> -> vector<24x128xf32>
    %114 = arith.addf %108, %113 : vector<24x128xf32>
    %c0_133 = arith.constant 0 : index
    %c0_134 = arith.constant 0 : index
    %c1_135 = arith.constant 1 : index
    %c0_136 = arith.constant 0 : index
    %115 = vector.load %arg4[%c0_133, %c0_134, %c1_135, %c0_136] : memref<1x1x40x128xbf16, #tpu.memory_space<vmem>>, vector<1x1x24x128xbf16>
    %116 = vector.shape_cast %115 : vector<1x1x24x128xbf16> to vector<24x128xbf16>
    %c19 = arith.constant 19 : index
    %c0_137 = arith.constant 0 : index
    %c0_138 = arith.constant 0 : index
    %117 = vector.load %arg5[%c19, %c0_137, %c0_138] : memref<27x128x128xbf16, #tpu.memory_space<vmem>>, vector<1x128x128xbf16>
    %118 = vector.shape_cast %117 : vector<1x128x128xbf16> to vector<128x128xbf16>
    %cst_139 = arith.constant dense<0.000000e+00> : vector<24x128xf32>
    %119 = tpu.matmul %116, %118, %cst_139 {dimension_numbers = #tpu.dot_dimension_numbers<[1], [0], [0], [1], [0, 0, 1, 1], [], []>} : vector<24x128xbf16>, vector<128x128xbf16>, vector<24x128xf32> -> vector<24x128xf32>
    %120 = arith.addf %114, %119 : vector<24x128xf32>
    %c0_140 = arith.constant 0 : index
    %c0_141 = arith.constant 0 : index
    %c2_142 = arith.constant 2 : index
    %c0_143 = arith.constant 0 : index
    %121 = vector.load %arg4[%c0_140, %c0_141, %c2_142, %c0_143] : memref<1x1x40x128xbf16, #tpu.memory_space<vmem>>, vector<1x1x24x128xbf16>
    %122 = vector.shape_cast %121 : vector<1x1x24x128xbf16> to vector<24x128xbf16>
    %c20 = arith.constant 20 : index
    %c0_144 = arith.constant 0 : index
    %c0_145 = arith.constant 0 : index
    %123 = vector.load %arg5[%c20, %c0_144, %c0_145] : memref<27x128x128xbf16, #tpu.memory_space<vmem>>, vector<1x128x128xbf16>
    %124 = vector.shape_cast %123 : vector<1x128x128xbf16> to vector<128x128xbf16>
    %cst_146 = arith.constant dense<0.000000e+00> : vector<24x128xf32>
    %125 = tpu.matmul %122, %124, %cst_146 {dimension_numbers = #tpu.dot_dimension_numbers<[1], [0], [0], [1], [0, 0, 1, 1], [], []>} : vector<24x128xbf16>, vector<128x128xbf16>, vector<24x128xf32> -> vector<24x128xf32>
    %126 = arith.addf %120, %125 : vector<24x128xf32>
    %c0_147 = arith.constant 0 : index
    %c0_148 = arith.constant 0 : index
    %c6_149 = arith.constant 6 : index
    %c0_150 = arith.constant 0 : index
    %127 = vector.load %arg4[%c0_147, %c0_148, %c6_149, %c0_150] : memref<1x1x40x128xbf16, #tpu.memory_space<vmem>>, vector<1x1x24x128xbf16>
    %128 = vector.shape_cast %127 : vector<1x1x24x128xbf16> to vector<24x128xbf16>
    %c21 = arith.constant 21 : index
    %c0_151 = arith.constant 0 : index
    %c0_152 = arith.constant 0 : index
    %129 = vector.load %arg5[%c21, %c0_151, %c0_152] : memref<27x128x128xbf16, #tpu.memory_space<vmem>>, vector<1x128x128xbf16>
    %130 = vector.shape_cast %129 : vector<1x128x128xbf16> to vector<128x128xbf16>
    %cst_153 = arith.constant dense<0.000000e+00> : vector<24x128xf32>
    %131 = tpu.matmul %128, %130, %cst_153 {dimension_numbers = #tpu.dot_dimension_numbers<[1], [0], [0], [1], [0, 0, 1, 1], [], []>} : vector<24x128xbf16>, vector<128x128xbf16>, vector<24x128xf32> -> vector<24x128xf32>
    %132 = arith.addf %126, %131 : vector<24x128xf32>
    %c0_154 = arith.constant 0 : index
    %c0_155 = arith.constant 0 : index
    %c7_156 = arith.constant 7 : index
    %c0_157 = arith.constant 0 : index
    %133 = vector.load %arg4[%c0_154, %c0_155, %c7_156, %c0_157] : memref<1x1x40x128xbf16, #tpu.memory_space<vmem>>, vector<1x1x24x128xbf16>
    %134 = vector.shape_cast %133 : vector<1x1x24x128xbf16> to vector<24x128xbf16>
    %c22 = arith.constant 22 : index
    %c0_158 = arith.constant 0 : index
    %c0_159 = arith.constant 0 : index
    %135 = vector.load %arg5[%c22, %c0_158, %c0_159] : memref<27x128x128xbf16, #tpu.memory_space<vmem>>, vector<1x128x128xbf16>
    %136 = vector.shape_cast %135 : vector<1x128x128xbf16> to vector<128x128xbf16>
    %cst_160 = arith.constant dense<0.000000e+00> : vector<24x128xf32>
    %137 = tpu.matmul %134, %136, %cst_160 {dimension_numbers = #tpu.dot_dimension_numbers<[1], [0], [0], [1], [0, 0, 1, 1], [], []>} : vector<24x128xbf16>, vector<128x128xbf16>, vector<24x128xf32> -> vector<24x128xf32>
    %138 = arith.addf %132, %137 : vector<24x128xf32>
    %c0_161 = arith.constant 0 : index
    %c0_162 = arith.constant 0 : index
    %c8_163 = arith.constant 8 : index
    %c0_164 = arith.constant 0 : index
    %139 = vector.load %arg4[%c0_161, %c0_162, %c8_163, %c0_164] : memref<1x1x40x128xbf16, #tpu.memory_space<vmem>>, vector<1x1x24x128xbf16>
    %140 = vector.shape_cast %139 : vector<1x1x24x128xbf16> to vector<24x128xbf16>
    %c23 = arith.constant 23 : index
    %c0_165 = arith.constant 0 : index
    %c0_166 = arith.constant 0 : index
    %141 = vector.load %arg5[%c23, %c0_165, %c0_166] : memref<27x128x128xbf16, #tpu.memory_space<vmem>>, vector<1x128x128xbf16>
    %142 = vector.shape_cast %141 : vector<1x128x128xbf16> to vector<128x128xbf16>
    %cst_167 = arith.constant dense<0.000000e+00> : vector<24x128xf32>
    %143 = tpu.matmul %140, %142, %cst_167 {dimension_numbers = #tpu.dot_dimension_numbers<[1], [0], [0], [1], [0, 0, 1, 1], [], []>} : vector<24x128xbf16>, vector<128x128xbf16>, vector<24x128xf32> -> vector<24x128xf32>
    %144 = arith.addf %138, %143 : vector<24x128xf32>
    %c0_168 = arith.constant 0 : index
    %c0_169 = arith.constant 0 : index
    %c12_170 = arith.constant 12 : index
    %c0_171 = arith.constant 0 : index
    %145 = vector.load %arg4[%c0_168, %c0_169, %c12_170, %c0_171] : memref<1x1x40x128xbf16, #tpu.memory_space<vmem>>, vector<1x1x24x128xbf16>
    %146 = vector.shape_cast %145 : vector<1x1x24x128xbf16> to vector<24x128xbf16>
    %c24 = arith.constant 24 : index
    %c0_172 = arith.constant 0 : index
    %c0_173 = arith.constant 0 : index
    %147 = vector.load %arg5[%c24, %c0_172, %c0_173] : memref<27x128x128xbf16, #tpu.memory_space<vmem>>, vector<1x128x128xbf16>
    %148 = vector.shape_cast %147 : vector<1x128x128xbf16> to vector<128x128xbf16>
    %cst_174 = arith.constant dense<0.000000e+00> : vector<24x128xf32>
    %149 = tpu.matmul %146, %148, %cst_174 {dimension_numbers = #tpu.dot_dimension_numbers<[1], [0], [0], [1], [0, 0, 1, 1], [], []>} : vector<24x128xbf16>, vector<128x128xbf16>, vector<24x128xf32> -> vector<24x128xf32>
    %150 = arith.addf %144, %149 : vector<24x128xf32>
    %c0_175 = arith.constant 0 : index
    %c0_176 = arith.constant 0 : index
    %c13_177 = arith.constant 13 : index
    %c0_178 = arith.constant 0 : index
    %151 = vector.load %arg4[%c0_175, %c0_176, %c13_177, %c0_178] : memref<1x1x40x128xbf16, #tpu.memory_space<vmem>>, vector<1x1x24x128xbf16>
    %152 = vector.shape_cast %151 : vector<1x1x24x128xbf16> to vector<24x128xbf16>
    %c25 = arith.constant 25 : index
    %c0_179 = arith.constant 0 : index
    %c0_180 = arith.constant 0 : index
    %153 = vector.load %arg5[%c25, %c0_179, %c0_180] : memref<27x128x128xbf16, #tpu.memory_space<vmem>>, vector<1x128x128xbf16>
    %154 = vector.shape_cast %153 : vector<1x128x128xbf16> to vector<128x128xbf16>
    %cst_181 = arith.constant dense<0.000000e+00> : vector<24x128xf32>
    %155 = tpu.matmul %152, %154, %cst_181 {dimension_numbers = #tpu.dot_dimension_numbers<[1], [0], [0], [1], [0, 0, 1, 1], [], []>} : vector<24x128xbf16>, vector<128x128xbf16>, vector<24x128xf32> -> vector<24x128xf32>
    %156 = arith.addf %150, %155 : vector<24x128xf32>
    %c0_182 = arith.constant 0 : index
    %c0_183 = arith.constant 0 : index
    %c14_184 = arith.constant 14 : index
    %c0_185 = arith.constant 0 : index
    %157 = vector.load %arg4[%c0_182, %c0_183, %c14_184, %c0_185] : memref<1x1x40x128xbf16, #tpu.memory_space<vmem>>, vector<1x1x24x128xbf16>
    %158 = vector.shape_cast %157 : vector<1x1x24x128xbf16> to vector<24x128xbf16>
    %c26 = arith.constant 26 : index
    %c0_186 = arith.constant 0 : index
    %c0_187 = arith.constant 0 : index
    %159 = vector.load %arg5[%c26, %c0_186, %c0_187] : memref<27x128x128xbf16, #tpu.memory_space<vmem>>, vector<1x128x128xbf16>
    %160 = vector.shape_cast %159 : vector<1x128x128xbf16> to vector<128x128xbf16>
    %cst_188 = arith.constant dense<0.000000e+00> : vector<24x128xf32>
    %161 = tpu.matmul %158, %160, %cst_188 {dimension_numbers = #tpu.dot_dimension_numbers<[1], [0], [0], [1], [0, 0, 1, 1], [], []>} : vector<24x128xbf16>, vector<128x128xbf16>, vector<24x128xf32> -> vector<24x128xf32>
    %162 = arith.addf %156, %161 : vector<24x128xf32>
    %cst_189 = arith.constant 0.000000e+00 : f32
    %163 = vector.broadcast %cst_189 : f32 to vector<24x128xf32>
    %164 = arith.cmpf oge, %162, %163 : vector<24x128xf32>
    %cst_190 = arith.constant 0.00999999977 : f32
    %165 = vector.broadcast %cst_190 : f32 to vector<24x128xf32>
    %166 = arith.mulf %165, %162 : vector<24x128xf32>
    %167 = arith.select %164, %162, %166 : vector<24x128xi1>, vector<24x128xf32>
    %168 = tpu.iota {dimensions = array<i32: 0>} : vector<24x1xi32>
    %c6_i32 = arith.constant 6 : i32
    %c0_i32 = arith.constant 0 : i32
    %169 = arith.cmpi eq, %c6_i32, %c0_i32 : i32
    %c1_i32 = arith.constant 1 : i32
    %170 = arith.select %169, %c1_i32, %c6_i32 : i32
    %171 = vector.broadcast %170 : i32 to vector<24x1xi32>
    %172 = arith.remsi %168, %171 : vector<24x1xi32>
    %c0_i32_191 = arith.constant 0 : i32
    %173 = vector.broadcast %c0_i32_191 : i32 to vector<24x1xi32>
    %174 = arith.cmpi ne, %172, %173 : vector<24x1xi32>
    %c0_i32_192 = arith.constant 0 : i32
    %175 = vector.broadcast %c0_i32_192 : i32 to vector<24x1xi32>
    %176 = arith.cmpi slt, %172, %175 : vector<24x1xi32>
    %c0_i32_193 = arith.constant 0 : i32
    %177 = arith.cmpi slt, %170, %c0_i32_193 : i32
    %178 = vector.broadcast %177 : i1 to vector<24x1xi1>
    %179 = vector.broadcast %178 : vector<24x1xi1> to vector<24x1xi1>
    %180 = arith.xori %176, %179 : vector<24x1xi1>
    %181 = arith.andi %180, %174 : vector<24x1xi1>
    %182 = vector.broadcast %170 : i32 to vector<24x1xi32>
    %183 = arith.addi %172, %182 : vector<24x1xi32>
    %184 = arith.select %181, %183, %172 : vector<24x1xi1>, vector<24x1xi32>
    %c4_i32 = arith.constant 4 : i32
    %185 = vector.broadcast %c4_i32 : i32 to vector<24x1xi32>
    %186 = arith.cmpi slt, %184, %185 : vector<24x1xi32>
    %cst_194 = arith.constant 0.000000e+00 : f32
    %187 = vector.shape_cast %186 : vector<24x1xi1> to vector<24x1xi1>
    %188 = vector.broadcast %187 : vector<24x1xi1> to vector<24x128xi1>
    %189 = vector.broadcast %cst_194 : f32 to vector<24x128xf32>
    %190 = arith.select %188, %167, %189 : vector<24x128xi1>, vector<24x128xf32>
    %c0_195 = arith.constant 0 : index
    %c0_196 = arith.constant 0 : index
    %c0_197 = arith.constant 0 : index
    %c0_198 = arith.constant 0 : index
    %191 = vector.load %arg6[%c0_195, %c0_196, %c0_197, %c0_198] : memref<1x1x24x128xf32, #tpu.memory_space<vmem>>, vector<1x1x24x128xf32>
    %192 = vector.shape_cast %191 : vector<1x1x24x128xf32> to vector<24x128xf32>
    %193 = vector.shape_cast %190 : vector<24x128xf32> to vector<1x1x24x128xf32>
    tpu.vector_store %arg6[%c0_195, %c0_196, %c0_197, %c0_198], %193 {strides = array<i32>} : memref<1x1x24x128xf32, #tpu.memory_space<vmem>>, vector<1x1x24x128xf32>,
    %cst_199 = arith.constant dense<0.000000e+00> : vector<128xf32>
    %194 = vector.multi_reduction <add>, %190, %cst_199 [0] : vector<24x128xf32> to vector<128xf32>
    %195 = vector.shape_cast %194 : vector<128xf32> to vector<1x128xf32>
    %196 = arith.mulf %190, %190 : vector<24x128xf32>
    %cst_200 = arith.constant dense<0.000000e+00> : vector<128xf32>
    %197 = vector.multi_reduction <add>, %196, %cst_200 [0] : vector<24x128xf32> to vector<128xf32>
    %198 = vector.shape_cast %197 : vector<128xf32> to vector<1x128xf32>
    %199 = tpu.concatenate %195, %198 in 0 : vector<1x128xf32>, vector<1x128xf32> -> vector<2x128xf32>
    %c0_201 = arith.constant 0 : index
    %c0_202 = arith.constant 0 : index
    %c0_203 = arith.constant 0 : index
    %c0_204 = arith.constant 0 : index
    %200 = vector.load %arg7[%c0_201, %c0_202, %c0_203, %c0_204] : memref<1x1x2x128xf32, #tpu.memory_space<vmem>>, vector<1x1x2x128xf32>
    %201 = vector.shape_cast %200 : vector<1x1x2x128xf32> to vector<2x128xf32>
    %202 = vector.shape_cast %199 : vector<2x128xf32> to vector<1x1x2x128xf32>
    tpu.vector_store %arg7[%c0_201, %c0_202, %c0_203, %c0_204], %202 {strides = array<i32>} : memref<1x1x2x128xf32, #tpu.memory_space<vmem>>, vector<1x1x2x128xf32>,
    return
  }
  func.func @transform_0(%arg0: i32, %arg1: i32) -> (i32, i32, i32, i32) {
    %c0_i32 = arith.constant 0 : i32
    %0 = arith.addi %arg1, %c0_i32 : i32
    %c0_i32_0 = arith.constant 0 : i32
    %c0_i32_1 = arith.constant 0 : i32
    %c0_i32_2 = arith.constant 0 : i32
    return %arg0, %0, %c0_i32_0, %c0_i32_1 : i32, i32, i32, i32
  }
  func.func @transform_1(%arg0: i32, %arg1: i32) -> (i32, i32, i32, i32) {
    %c1_i32 = arith.constant 1 : i32
    %0 = arith.addi %arg1, %c1_i32 : i32
    %c0_i32 = arith.constant 0 : i32
    %c0_i32_0 = arith.constant 0 : i32
    %c0_i32_1 = arith.constant 0 : i32
    return %arg0, %0, %c0_i32, %c0_i32_0 : i32, i32, i32, i32
  }
  func.func @transform_2(%arg0: i32, %arg1: i32) -> (i32, i32, i32, i32) {
    %c2_i32 = arith.constant 2 : i32
    %0 = arith.addi %arg1, %c2_i32 : i32
    %c0_i32 = arith.constant 0 : i32
    %c0_i32_0 = arith.constant 0 : i32
    %c0_i32_1 = arith.constant 0 : i32
    return %arg0, %0, %c0_i32, %c0_i32_0 : i32, i32, i32, i32
  }
  func.func @transform_3(%arg0: i32, %arg1: i32) -> (i32, i32, i32) {
    %c0_i32 = arith.constant 0 : i32
    %c0_i32_0 = arith.constant 0 : i32
    %c0_i32_1 = arith.constant 0 : i32
    %c0_i32_2 = arith.constant 0 : i32
    return %c0_i32, %c0_i32_0, %c0_i32_1 : i32, i32, i32
  }
  func.func @transform_4(%arg0: i32, %arg1: i32) -> (i32, i32, i32, i32) {
    %c0_i32 = arith.constant 0 : i32
    %c0_i32_0 = arith.constant 0 : i32
    %c0_i32_1 = arith.constant 0 : i32
    return %arg0, %arg1, %c0_i32, %c0_i32_0 : i32, i32, i32, i32
  }
  func.func @transform_5(%arg0: i32, %arg1: i32) -> (i32, i32, i32, i32) {
    %c0_i32 = arith.constant 0 : i32
    %c0_i32_0 = arith.constant 0 : i32
    %c0_i32_1 = arith.constant 0 : i32
    return %arg0, %arg1, %c0_i32, %c0_i32_0 : i32, i32, i32, i32
  }
}

module attributes {stable_mosaic.version = 11 : i64} {
  func.func @_bn_apply_kernel(%arg0: i32, %arg1: memref<64x128xf32, #tpu.memory_space<vmem>>, %arg2: memref<1x128xf32, #tpu.memory_space<vmem>>, %arg3: memref<1x128xf32, #tpu.memory_space<vmem>>, %arg4: memref<64x128xbf16, #tpu.memory_space<vmem>>) attributes {dimension_semantics = [#tpu.dimension_semantics<parallel>], iteration_bounds = array<i64: 1>, scalar_prefetch = 0 : i64, scratch_operands = 0 : i64, tpu.core_type = #tpu.core_type<tc>, window_params = [{transform_indices = @transform_0, window_bounds = array<i64: 64, 128>}, {pipeline_mode = #tpu.pipeline_mode<synchronous>, transform_indices = @transform_1, window_bounds = array<i64: 1, 128>}, {pipeline_mode = #tpu.pipeline_mode<synchronous>, transform_indices = @transform_2, window_bounds = array<i64: 1, 128>}, {transform_indices = @transform_3, window_bounds = array<i64: 64, 128>}]} {
    %c0 = arith.constant 0 : index
    %c0_0 = arith.constant 0 : index
    %0 = vector.load %arg1[%c0, %c0_0] : memref<64x128xf32, #tpu.memory_space<vmem>>, vector<64x128xf32>
    %c0_1 = arith.constant 0 : index
    %c0_2 = arith.constant 0 : index
    %1 = vector.load %arg2[%c0_1, %c0_2] : memref<1x128xf32, #tpu.memory_space<vmem>>, vector<1x128xf32>
    %2 = vector.broadcast %1 : vector<1x128xf32> to vector<64x128xf32>
    %3 = arith.mulf %0, %2 : vector<64x128xf32>
    %c0_3 = arith.constant 0 : index
    %c0_4 = arith.constant 0 : index
    %4 = vector.load %arg3[%c0_3, %c0_4] : memref<1x128xf32, #tpu.memory_space<vmem>>, vector<1x128xf32>
    %5 = vector.broadcast %4 : vector<1x128xf32> to vector<64x128xf32>
    %6 = arith.addf %3, %5 : vector<64x128xf32>
    %7 = arith.truncf %6 : vector<64x128xf32> to vector<64x128xbf16>
    %c0_5 = arith.constant 0 : index
    %c0_6 = arith.constant 0 : index
    %8 = vector.load %arg4[%c0_5, %c0_6] : memref<64x128xbf16, #tpu.memory_space<vmem>>, vector<64x128xbf16>
    tpu.vector_store %arg4[%c0_5, %c0_6], %7 {strides = array<i32>} : memref<64x128xbf16, #tpu.memory_space<vmem>>, vector<64x128xbf16>,
    return
  }
  func.func @transform_0(%arg0: i32) -> (i32, i32) {
    %c0_i32 = arith.constant 0 : i32
    %c0_i32_0 = arith.constant 0 : i32
    return %arg0, %c0_i32 : i32, i32
  }
  func.func @transform_1(%arg0: i32) -> (i32, i32) {
    %c0_i32 = arith.constant 0 : i32
    %c0_i32_0 = arith.constant 0 : i32
    %c0_i32_1 = arith.constant 0 : i32
    return %c0_i32, %c0_i32_0 : i32, i32
  }
  func.func @transform_2(%arg0: i32) -> (i32, i32) {
    %c0_i32 = arith.constant 0 : i32
    %c0_i32_0 = arith.constant 0 : i32
    %c0_i32_1 = arith.constant 0 : i32
    return %c0_i32, %c0_i32_0 : i32, i32
  }
  func.func @transform_3(%arg0: i32) -> (i32, i32) {
    %c0_i32 = arith.constant 0 : i32
    %c0_i32_0 = arith.constant 0 : i32
    return %arg0, %c0_i32 : i32, i32
  }
}

module attributes {stable_mosaic.version = 11 : i64} {
  func.func @_matmul_kernel(%arg0: i32, %arg1: memref<64x128xbf16, #tpu.memory_space<vmem>>, %arg2: memref<128x3456xbf16, #tpu.memory_space<vmem>>, %arg3: memref<64x3456xf32, #tpu.memory_space<vmem>>) attributes {dimension_semantics = [#tpu.dimension_semantics<parallel>], iteration_bounds = array<i64: 1>, scalar_prefetch = 0 : i64, scratch_operands = 0 : i64, tpu.core_type = #tpu.core_type<tc>, window_params = [{transform_indices = @transform_0, window_bounds = array<i64: 64, 128>}, {pipeline_mode = #tpu.pipeline_mode<synchronous>, transform_indices = @transform_1, window_bounds = array<i64: 128, 3456>}, {transform_indices = @transform_2, window_bounds = array<i64: 64, 3456>}]} {
    %c0 = arith.constant 0 : index
    %c0_0 = arith.constant 0 : index
    %0 = vector.load %arg1[%c0, %c0_0] : memref<64x128xbf16, #tpu.memory_space<vmem>>, vector<64x128xbf16>
    %c0_1 = arith.constant 0 : index
    %c0_2 = arith.constant 0 : index
    %1 = vector.load %arg2[%c0_1, %c0_2] : memref<128x3456xbf16, #tpu.memory_space<vmem>>, vector<128x3456xbf16>
    %cst = arith.constant dense<0.000000e+00> : vector<64x3456xf32>
    %2 = tpu.matmul %0, %1, %cst {dimension_numbers = #tpu.dot_dimension_numbers<[1], [0], [0], [1], [0, 0, 1, 1], [], []>} : vector<64x128xbf16>, vector<128x3456xbf16>, vector<64x3456xf32> -> vector<64x3456xf32>
    %c0_3 = arith.constant 0 : index
    %c0_4 = arith.constant 0 : index
    %3 = vector.load %arg3[%c0_3, %c0_4] : memref<64x3456xf32, #tpu.memory_space<vmem>>, vector<64x3456xf32>
    tpu.vector_store %arg3[%c0_3, %c0_4], %2 {strides = array<i32>} : memref<64x3456xf32, #tpu.memory_space<vmem>>, vector<64x3456xf32>,
    return
  }
  func.func @transform_0(%arg0: i32) -> (i32, i32) {
    %c0_i32 = arith.constant 0 : i32
    %c0_i32_0 = arith.constant 0 : i32
    return %arg0, %c0_i32 : i32, i32
  }
  func.func @transform_1(%arg0: i32) -> (i32, i32) {
    %c0_i32 = arith.constant 0 : i32
    %c0_i32_0 = arith.constant 0 : i32
    %c0_i32_1 = arith.constant 0 : i32
    return %c0_i32, %c0_i32_0 : i32, i32
  }
  func.func @transform_2(%arg0: i32) -> (i32, i32) {
    %c0_i32 = arith.constant 0 : i32
    %c0_i32_0 = arith.constant 0 : i32
    return %arg0, %c0_i32 : i32, i32
  }
}

module attributes {stable_mosaic.version = 11 : i64} {
  func.func @kernel(%arg0: i32, %arg1: i32, %arg2: memref<1x1x104x128xbf16, #tpu.memory_space<vmem>>, %arg3: memref<9x128x128xbf16, #tpu.memory_space<vmem>>, %arg4: memref<1x1x80x128xf32, #tpu.memory_space<vmem>>, %arg5: memref<1x1x2x128xf32, #tpu.memory_space<vmem>>) attributes {dimension_semantics = [#tpu.dimension_semantics<parallel>, #tpu.dimension_semantics<parallel>], iteration_bounds = array<i64: 2, 4>, scalar_prefetch = 0 : i64, scratch_operands = 0 : i64, tpu.core_type = #tpu.core_type<tc>, window_params = [{transform_indices = @transform_0, window_bounds = array<i64: 1, 1, 104, 128>}, {pipeline_mode = #tpu.pipeline_mode<synchronous>, transform_indices = @transform_1, window_bounds = array<i64: 9, 128, 128>}, {transform_indices = @transform_2, window_bounds = array<i64: 1, 1, 80, 128>}, {transform_indices = @transform_3, window_bounds = array<i64: 1, 1, 2, 128>}]} {
    %cst = arith.constant 0.000000e+00 : f32
    %0 = vector.broadcast %cst : f32 to vector<80x128xf32>
    %c0 = arith.constant 0 : index
    %c0_0 = arith.constant 0 : index
    %c0_1 = arith.constant 0 : index
    %c0_2 = arith.constant 0 : index
    %1 = vector.load %arg2[%c0, %c0_0, %c0_1, %c0_2] : memref<1x1x104x128xbf16, #tpu.memory_space<vmem>>, vector<1x1x80x128xbf16>
    %2 = vector.shape_cast %1 : vector<1x1x80x128xbf16> to vector<80x128xbf16>
    %c0_3 = arith.constant 0 : index
    %c0_4 = arith.constant 0 : index
    %c0_5 = arith.constant 0 : index
    %3 = vector.load %arg3[%c0_3, %c0_4, %c0_5] : memref<9x128x128xbf16, #tpu.memory_space<vmem>>, vector<1x128x128xbf16>
    %4 = vector.shape_cast %3 : vector<1x128x128xbf16> to vector<128x128xbf16>
    %cst_6 = arith.constant dense<0.000000e+00> : vector<80x128xf32>
    %5 = tpu.matmul %2, %4, %cst_6 {dimension_numbers = #tpu.dot_dimension_numbers<[1], [0], [0], [1], [0, 0, 1, 1], [], []>} : vector<80x128xbf16>, vector<128x128xbf16>, vector<80x128xf32> -> vector<80x128xf32>
    %6 = arith.addf %0, %5 : vector<80x128xf32>
    %c0_7 = arith.constant 0 : index
    %c0_8 = arith.constant 0 : index
    %c1 = arith.constant 1 : index
    %c0_9 = arith.constant 0 : index
    %7 = vector.load %arg2[%c0_7, %c0_8, %c1, %c0_9] : memref<1x1x104x128xbf16, #tpu.memory_space<vmem>>, vector<1x1x80x128xbf16>
    %8 = vector.shape_cast %7 : vector<1x1x80x128xbf16> to vector<80x128xbf16>
    %c1_10 = arith.constant 1 : index
    %c0_11 = arith.constant 0 : index
    %c0_12 = arith.constant 0 : index
    %9 = vector.load %arg3[%c1_10, %c0_11, %c0_12] : memref<9x128x128xbf16, #tpu.memory_space<vmem>>, vector<1x128x128xbf16>
    %10 = vector.shape_cast %9 : vector<1x128x128xbf16> to vector<128x128xbf16>
    %cst_13 = arith.constant dense<0.000000e+00> : vector<80x128xf32>
    %11 = tpu.matmul %8, %10, %cst_13 {dimension_numbers = #tpu.dot_dimension_numbers<[1], [0], [0], [1], [0, 0, 1, 1], [], []>} : vector<80x128xbf16>, vector<128x128xbf16>, vector<80x128xf32> -> vector<80x128xf32>
    %12 = arith.addf %6, %11 : vector<80x128xf32>
    %c0_14 = arith.constant 0 : index
    %c0_15 = arith.constant 0 : index
    %c2 = arith.constant 2 : index
    %c0_16 = arith.constant 0 : index
    %13 = vector.load %arg2[%c0_14, %c0_15, %c2, %c0_16] : memref<1x1x104x128xbf16, #tpu.memory_space<vmem>>, vector<1x1x80x128xbf16>
    %14 = vector.shape_cast %13 : vector<1x1x80x128xbf16> to vector<80x128xbf16>
    %c2_17 = arith.constant 2 : index
    %c0_18 = arith.constant 0 : index
    %c0_19 = arith.constant 0 : index
    %15 = vector.load %arg3[%c2_17, %c0_18, %c0_19] : memref<9x128x128xbf16, #tpu.memory_space<vmem>>, vector<1x128x128xbf16>
    %16 = vector.shape_cast %15 : vector<1x128x128xbf16> to vector<128x128xbf16>
    %cst_20 = arith.constant dense<0.000000e+00> : vector<80x128xf32>
    %17 = tpu.matmul %14, %16, %cst_20 {dimension_numbers = #tpu.dot_dimension_numbers<[1], [0], [0], [1], [0, 0, 1, 1], [], []>} : vector<80x128xbf16>, vector<128x128xbf16>, vector<80x128xf32> -> vector<80x128xf32>
    %18 = arith.addf %12, %17 : vector<80x128xf32>
    %c0_21 = arith.constant 0 : index
    %c0_22 = arith.constant 0 : index
    %c10 = arith.constant 10 : index
    %c0_23 = arith.constant 0 : index
    %19 = vector.load %arg2[%c0_21, %c0_22, %c10, %c0_23] : memref<1x1x104x128xbf16, #tpu.memory_space<vmem>>, vector<1x1x80x128xbf16>
    %20 = vector.shape_cast %19 : vector<1x1x80x128xbf16> to vector<80x128xbf16>
    %c3 = arith.constant 3 : index
    %c0_24 = arith.constant 0 : index
    %c0_25 = arith.constant 0 : index
    %21 = vector.load %arg3[%c3, %c0_24, %c0_25] : memref<9x128x128xbf16, #tpu.memory_space<vmem>>, vector<1x128x128xbf16>
    %22 = vector.shape_cast %21 : vector<1x128x128xbf16> to vector<128x128xbf16>
    %cst_26 = arith.constant dense<0.000000e+00> : vector<80x128xf32>
    %23 = tpu.matmul %20, %22, %cst_26 {dimension_numbers = #tpu.dot_dimension_numbers<[1], [0], [0], [1], [0, 0, 1, 1], [], []>} : vector<80x128xbf16>, vector<128x128xbf16>, vector<80x128xf32> -> vector<80x128xf32>
    %24 = arith.addf %18, %23 : vector<80x128xf32>
    %c0_27 = arith.constant 0 : index
    %c0_28 = arith.constant 0 : index
    %c11 = arith.constant 11 : index
    %c0_29 = arith.constant 0 : index
    %25 = vector.load %arg2[%c0_27, %c0_28, %c11, %c0_29] : memref<1x1x104x128xbf16, #tpu.memory_space<vmem>>, vector<1x1x80x128xbf16>
    %26 = vector.shape_cast %25 : vector<1x1x80x128xbf16> to vector<80x128xbf16>
    %c4 = arith.constant 4 : index
    %c0_30 = arith.constant 0 : index
    %c0_31 = arith.constant 0 : index
    %27 = vector.load %arg3[%c4, %c0_30, %c0_31] : memref<9x128x128xbf16, #tpu.memory_space<vmem>>, vector<1x128x128xbf16>
    %28 = vector.shape_cast %27 : vector<1x128x128xbf16> to vector<128x128xbf16>
    %cst_32 = arith.constant dense<0.000000e+00> : vector<80x128xf32>
    %29 = tpu.matmul %26, %28, %cst_32 {dimension_numbers = #tpu.dot_dimension_numbers<[1], [0], [0], [1], [0, 0, 1, 1], [], []>} : vector<80x128xbf16>, vector<128x128xbf16>, vector<80x128xf32> -> vector<80x128xf32>
    %30 = arith.addf %24, %29 : vector<80x128xf32>
    %c0_33 = arith.constant 0 : index
    %c0_34 = arith.constant 0 : index
    %c12 = arith.constant 12 : index
    %c0_35 = arith.constant 0 : index
    %31 = vector.load %arg2[%c0_33, %c0_34, %c12, %c0_35] : memref<1x1x104x128xbf16, #tpu.memory_space<vmem>>, vector<1x1x80x128xbf16>
    %32 = vector.shape_cast %31 : vector<1x1x80x128xbf16> to vector<80x128xbf16>
    %c5 = arith.constant 5 : index
    %c0_36 = arith.constant 0 : index
    %c0_37 = arith.constant 0 : index
    %33 = vector.load %arg3[%c5, %c0_36, %c0_37] : memref<9x128x128xbf16, #tpu.memory_space<vmem>>, vector<1x128x128xbf16>
    %34 = vector.shape_cast %33 : vector<1x128x128xbf16> to vector<128x128xbf16>
    %cst_38 = arith.constant dense<0.000000e+00> : vector<80x128xf32>
    %35 = tpu.matmul %32, %34, %cst_38 {dimension_numbers = #tpu.dot_dimension_numbers<[1], [0], [0], [1], [0, 0, 1, 1], [], []>} : vector<80x128xbf16>, vector<128x128xbf16>, vector<80x128xf32> -> vector<80x128xf32>
    %36 = arith.addf %30, %35 : vector<80x128xf32>
    %c0_39 = arith.constant 0 : index
    %c0_40 = arith.constant 0 : index
    %c20 = arith.constant 20 : index
    %c0_41 = arith.constant 0 : index
    %37 = vector.load %arg2[%c0_39, %c0_40, %c20, %c0_41] : memref<1x1x104x128xbf16, #tpu.memory_space<vmem>>, vector<1x1x80x128xbf16>
    %38 = vector.shape_cast %37 : vector<1x1x80x128xbf16> to vector<80x128xbf16>
    %c6 = arith.constant 6 : index
    %c0_42 = arith.constant 0 : index
    %c0_43 = arith.constant 0 : index
    %39 = vector.load %arg3[%c6, %c0_42, %c0_43] : memref<9x128x128xbf16, #tpu.memory_space<vmem>>, vector<1x128x128xbf16>
    %40 = vector.shape_cast %39 : vector<1x128x128xbf16> to vector<128x128xbf16>
    %cst_44 = arith.constant dense<0.000000e+00> : vector<80x128xf32>
    %41 = tpu.matmul %38, %40, %cst_44 {dimension_numbers = #tpu.dot_dimension_numbers<[1], [0], [0], [1], [0, 0, 1, 1], [], []>} : vector<80x128xbf16>, vector<128x128xbf16>, vector<80x128xf32> -> vector<80x128xf32>
    %42 = arith.addf %36, %41 : vector<80x128xf32>
    %c0_45 = arith.constant 0 : index
    %c0_46 = arith.constant 0 : index
    %c21 = arith.constant 21 : index
    %c0_47 = arith.constant 0 : index
    %43 = vector.load %arg2[%c0_45, %c0_46, %c21, %c0_47] : memref<1x1x104x128xbf16, #tpu.memory_space<vmem>>, vector<1x1x80x128xbf16>
    %44 = vector.shape_cast %43 : vector<1x1x80x128xbf16> to vector<80x128xbf16>
    %c7 = arith.constant 7 : index
    %c0_48 = arith.constant 0 : index
    %c0_49 = arith.constant 0 : index
    %45 = vector.load %arg3[%c7, %c0_48, %c0_49] : memref<9x128x128xbf16, #tpu.memory_space<vmem>>, vector<1x128x128xbf16>
    %46 = vector.shape_cast %45 : vector<1x128x128xbf16> to vector<128x128xbf16>
    %cst_50 = arith.constant dense<0.000000e+00> : vector<80x128xf32>
    %47 = tpu.matmul %44, %46, %cst_50 {dimension_numbers = #tpu.dot_dimension_numbers<[1], [0], [0], [1], [0, 0, 1, 1], [], []>} : vector<80x128xbf16>, vector<128x128xbf16>, vector<80x128xf32> -> vector<80x128xf32>
    %48 = arith.addf %42, %47 : vector<80x128xf32>
    %c0_51 = arith.constant 0 : index
    %c0_52 = arith.constant 0 : index
    %c22 = arith.constant 22 : index
    %c0_53 = arith.constant 0 : index
    %49 = vector.load %arg2[%c0_51, %c0_52, %c22, %c0_53] : memref<1x1x104x128xbf16, #tpu.memory_space<vmem>>, vector<1x1x80x128xbf16>
    %50 = vector.shape_cast %49 : vector<1x1x80x128xbf16> to vector<80x128xbf16>
    %c8 = arith.constant 8 : index
    %c0_54 = arith.constant 0 : index
    %c0_55 = arith.constant 0 : index
    %51 = vector.load %arg3[%c8, %c0_54, %c0_55] : memref<9x128x128xbf16, #tpu.memory_space<vmem>>, vector<1x128x128xbf16>
    %52 = vector.shape_cast %51 : vector<1x128x128xbf16> to vector<128x128xbf16>
    %cst_56 = arith.constant dense<0.000000e+00> : vector<80x128xf32>
    %53 = tpu.matmul %50, %52, %cst_56 {dimension_numbers = #tpu.dot_dimension_numbers<[1], [0], [0], [1], [0, 0, 1, 1], [], []>} : vector<80x128xbf16>, vector<128x128xbf16>, vector<80x128xf32> -> vector<80x128xf32>
    %54 = arith.addf %48, %53 : vector<80x128xf32>
    %cst_57 = arith.constant 0.000000e+00 : f32
    %55 = vector.broadcast %cst_57 : f32 to vector<80x128xf32>
    %56 = arith.cmpf oge, %54, %55 : vector<80x128xf32>
    %cst_58 = arith.constant 0.00999999977 : f32
    %57 = vector.broadcast %cst_58 : f32 to vector<80x128xf32>
    %58 = arith.mulf %57, %54 : vector<80x128xf32>
    %59 = arith.select %56, %54, %58 : vector<80x128xi1>, vector<80x128xf32>
    %60 = tpu.iota {dimensions = array<i32: 0>} : vector<80x1xi32>
    %c10_i32 = arith.constant 10 : i32
    %c0_i32 = arith.constant 0 : i32
    %61 = arith.cmpi eq, %c10_i32, %c0_i32 : i32
    %c1_i32 = arith.constant 1 : i32
    %62 = arith.select %61, %c1_i32, %c10_i32 : i32
    %63 = vector.broadcast %62 : i32 to vector<80x1xi32>
    %64 = arith.remsi %60, %63 : vector<80x1xi32>
    %c0_i32_59 = arith.constant 0 : i32
    %65 = vector.broadcast %c0_i32_59 : i32 to vector<80x1xi32>
    %66 = arith.cmpi ne, %64, %65 : vector<80x1xi32>
    %c0_i32_60 = arith.constant 0 : i32
    %67 = vector.broadcast %c0_i32_60 : i32 to vector<80x1xi32>
    %68 = arith.cmpi slt, %64, %67 : vector<80x1xi32>
    %c0_i32_61 = arith.constant 0 : i32
    %69 = arith.cmpi slt, %62, %c0_i32_61 : i32
    %70 = vector.broadcast %69 : i1 to vector<80x1xi1>
    %71 = vector.broadcast %70 : vector<80x1xi1> to vector<80x1xi1>
    %72 = arith.xori %68, %71 : vector<80x1xi1>
    %73 = arith.andi %72, %66 : vector<80x1xi1>
    %74 = vector.broadcast %62 : i32 to vector<80x1xi32>
    %75 = arith.addi %64, %74 : vector<80x1xi32>
    %76 = arith.select %73, %75, %64 : vector<80x1xi1>, vector<80x1xi32>
    %c8_i32 = arith.constant 8 : i32
    %77 = vector.broadcast %c8_i32 : i32 to vector<80x1xi32>
    %78 = arith.cmpi slt, %76, %77 : vector<80x1xi32>
    %cst_62 = arith.constant 0.000000e+00 : f32
    %79 = vector.shape_cast %78 : vector<80x1xi1> to vector<80x1xi1>
    %80 = vector.broadcast %79 : vector<80x1xi1> to vector<80x128xi1>
    %81 = vector.broadcast %cst_62 : f32 to vector<80x128xf32>
    %82 = arith.select %80, %59, %81 : vector<80x128xi1>, vector<80x128xf32>
    %c0_63 = arith.constant 0 : index
    %c0_64 = arith.constant 0 : index
    %c0_65 = arith.constant 0 : index
    %c0_66 = arith.constant 0 : index
    %83 = vector.load %arg4[%c0_63, %c0_64, %c0_65, %c0_66] : memref<1x1x80x128xf32, #tpu.memory_space<vmem>>, vector<1x1x80x128xf32>
    %84 = vector.shape_cast %83 : vector<1x1x80x128xf32> to vector<80x128xf32>
    %85 = vector.shape_cast %82 : vector<80x128xf32> to vector<1x1x80x128xf32>
    tpu.vector_store %arg4[%c0_63, %c0_64, %c0_65, %c0_66], %85 {strides = array<i32>} : memref<1x1x80x128xf32, #tpu.memory_space<vmem>>, vector<1x1x80x128xf32>,
    %cst_67 = arith.constant dense<0.000000e+00> : vector<128xf32>
    %86 = vector.multi_reduction <add>, %82, %cst_67 [0] : vector<80x128xf32> to vector<128xf32>
    %87 = vector.shape_cast %86 : vector<128xf32> to vector<1x128xf32>
    %88 = arith.mulf %82, %82 : vector<80x128xf32>
    %cst_68 = arith.constant dense<0.000000e+00> : vector<128xf32>
    %89 = vector.multi_reduction <add>, %88, %cst_68 [0] : vector<80x128xf32> to vector<128xf32>
    %90 = vector.shape_cast %89 : vector<128xf32> to vector<1x128xf32>
    %91 = tpu.concatenate %87, %90 in 0 : vector<1x128xf32>, vector<1x128xf32> -> vector<2x128xf32>
    %c0_69 = arith.constant 0 : index
    %c0_70 = arith.constant 0 : index
    %c0_71 = arith.constant 0 : index
    %c0_72 = arith.constant 0 : index
    %92 = vector.load %arg5[%c0_69, %c0_70, %c0_71, %c0_72] : memref<1x1x2x128xf32, #tpu.memory_space<vmem>>, vector<1x1x2x128xf32>
    %93 = vector.shape_cast %92 : vector<1x1x2x128xf32> to vector<2x128xf32>
    %94 = vector.shape_cast %91 : vector<2x128xf32> to vector<1x1x2x128xf32>
    tpu.vector_store %arg5[%c0_69, %c0_70, %c0_71, %c0_72], %94 {strides = array<i32>} : memref<1x1x2x128xf32, #tpu.memory_space<vmem>>, vector<1x1x2x128xf32>,
    return
  }
  func.func @transform_0(%arg0: i32, %arg1: i32) -> (i32, i32, i32, i32) {
    %c0_i32 = arith.constant 0 : i32
    %0 = arith.addi %arg1, %c0_i32 : i32
    %c0_i32_0 = arith.constant 0 : i32
    %c0_i32_1 = arith.constant 0 : i32
    %c0_i32_2 = arith.constant 0 : i32
    return %arg0, %0, %c0_i32_0, %c0_i32_1 : i32, i32, i32, i32
  }
  func.func @transform_1(%arg0: i32, %arg1: i32) -> (i32, i32, i32) {
    %c0_i32 = arith.constant 0 : i32
    %c0_i32_0 = arith.constant 0 : i32
    %c0_i32_1 = arith.constant 0 : i32
    %c0_i32_2 = arith.constant 0 : i32
    return %c0_i32, %c0_i32_0, %c0_i32_1 : i32, i32, i32
  }
  func.func @transform_2(%arg0: i32, %arg1: i32) -> (i32, i32, i32, i32) {
    %c0_i32 = arith.constant 0 : i32
    %c0_i32_0 = arith.constant 0 : i32
    %c0_i32_1 = arith.constant 0 : i32
    return %arg0, %arg1, %c0_i32, %c0_i32_0 : i32, i32, i32, i32
  }
  func.func @transform_3(%arg0: i32, %arg1: i32) -> (i32, i32, i32, i32) {
    %c0_i32 = arith.constant 0 : i32
    %c0_i32_0 = arith.constant 0 : i32
    %c0_i32_1 = arith.constant 0 : i32
    return %arg0, %arg1, %c0_i32, %c0_i32_0 : i32, i32, i32, i32
  }
}

module attributes {stable_mosaic.version = 11 : i64} {
  func.func @_bn_apply_kernel(%arg0: i32, %arg1: memref<512x128xf32, #tpu.memory_space<vmem>>, %arg2: memref<1x128xf32, #tpu.memory_space<vmem>>, %arg3: memref<1x128xf32, #tpu.memory_space<vmem>>, %arg4: memref<512x128xbf16, #tpu.memory_space<vmem>>) attributes {dimension_semantics = [#tpu.dimension_semantics<parallel>], iteration_bounds = array<i64: 1>, scalar_prefetch = 0 : i64, scratch_operands = 0 : i64, tpu.core_type = #tpu.core_type<tc>, window_params = [{transform_indices = @transform_0, window_bounds = array<i64: 512, 128>}, {pipeline_mode = #tpu.pipeline_mode<synchronous>, transform_indices = @transform_1, window_bounds = array<i64: 1, 128>}, {pipeline_mode = #tpu.pipeline_mode<synchronous>, transform_indices = @transform_2, window_bounds = array<i64: 1, 128>}, {transform_indices = @transform_3, window_bounds = array<i64: 512, 128>}]} {
    %c0 = arith.constant 0 : index
    %c0_0 = arith.constant 0 : index
    %0 = vector.load %arg1[%c0, %c0_0] : memref<512x128xf32, #tpu.memory_space<vmem>>, vector<512x128xf32>
    %c0_1 = arith.constant 0 : index
    %c0_2 = arith.constant 0 : index
    %1 = vector.load %arg2[%c0_1, %c0_2] : memref<1x128xf32, #tpu.memory_space<vmem>>, vector<1x128xf32>
    %2 = vector.broadcast %1 : vector<1x128xf32> to vector<512x128xf32>
    %3 = arith.mulf %0, %2 : vector<512x128xf32>
    %c0_3 = arith.constant 0 : index
    %c0_4 = arith.constant 0 : index
    %4 = vector.load %arg3[%c0_3, %c0_4] : memref<1x128xf32, #tpu.memory_space<vmem>>, vector<1x128xf32>
    %5 = vector.broadcast %4 : vector<1x128xf32> to vector<512x128xf32>
    %6 = arith.addf %3, %5 : vector<512x128xf32>
    %7 = arith.truncf %6 : vector<512x128xf32> to vector<512x128xbf16>
    %c0_5 = arith.constant 0 : index
    %c0_6 = arith.constant 0 : index
    %8 = vector.load %arg4[%c0_5, %c0_6] : memref<512x128xbf16, #tpu.memory_space<vmem>>, vector<512x128xbf16>
    tpu.vector_store %arg4[%c0_5, %c0_6], %7 {strides = array<i32>} : memref<512x128xbf16, #tpu.memory_space<vmem>>, vector<512x128xbf16>,
    return
  }
  func.func @transform_0(%arg0: i32) -> (i32, i32) {
    %c0_i32 = arith.constant 0 : i32
    %c0_i32_0 = arith.constant 0 : i32
    return %arg0, %c0_i32 : i32, i32
  }
  func.func @transform_1(%arg0: i32) -> (i32, i32) {
    %c0_i32 = arith.constant 0 : i32
    %c0_i32_0 = arith.constant 0 : i32
    %c0_i32_1 = arith.constant 0 : i32
    return %c0_i32, %c0_i32_0 : i32, i32
  }
  func.func @transform_2(%arg0: i32) -> (i32, i32) {
    %c0_i32 = arith.constant 0 : i32
    %c0_i32_0 = arith.constant 0 : i32
    %c0_i32_1 = arith.constant 0 : i32
    return %c0_i32, %c0_i32_0 : i32, i32
  }
  func.func @transform_3(%arg0: i32) -> (i32, i32) {
    %c0_i32 = arith.constant 0 : i32
    %c0_i32_0 = arith.constant 0 : i32
    return %arg0, %c0_i32 : i32, i32
  }
}

module attributes {stable_mosaic.version = 11 : i64} {
  func.func @_bn_apply_kernel(%arg0: i32, %arg1: memref<512x128xf32, #tpu.memory_space<vmem>>, %arg2: memref<1x128xf32, #tpu.memory_space<vmem>>, %arg3: memref<1x128xf32, #tpu.memory_space<vmem>>, %arg4: memref<512x128xf32, #tpu.memory_space<vmem>>) attributes {dimension_semantics = [#tpu.dimension_semantics<parallel>], iteration_bounds = array<i64: 1>, scalar_prefetch = 0 : i64, scratch_operands = 0 : i64, tpu.core_type = #tpu.core_type<tc>, window_params = [{transform_indices = @transform_0, window_bounds = array<i64: 512, 128>}, {pipeline_mode = #tpu.pipeline_mode<synchronous>, transform_indices = @transform_1, window_bounds = array<i64: 1, 128>}, {pipeline_mode = #tpu.pipeline_mode<synchronous>, transform_indices = @transform_2, window_bounds = array<i64: 1, 128>}, {transform_indices = @transform_3, window_bounds = array<i64: 512, 128>}]} {
    %c0 = arith.constant 0 : index
    %c0_0 = arith.constant 0 : index
    %0 = vector.load %arg1[%c0, %c0_0] : memref<512x128xf32, #tpu.memory_space<vmem>>, vector<512x128xf32>
    %c0_1 = arith.constant 0 : index
    %c0_2 = arith.constant 0 : index
    %1 = vector.load %arg2[%c0_1, %c0_2] : memref<1x128xf32, #tpu.memory_space<vmem>>, vector<1x128xf32>
    %2 = vector.broadcast %1 : vector<1x128xf32> to vector<512x128xf32>
    %3 = arith.mulf %0, %2 : vector<512x128xf32>
    %c0_3 = arith.constant 0 : index
    %c0_4 = arith.constant 0 : index
    %4 = vector.load %arg3[%c0_3, %c0_4] : memref<1x128xf32, #tpu.memory_space<vmem>>, vector<1x128xf32>
    %5 = vector.broadcast %4 : vector<1x128xf32> to vector<512x128xf32>
    %6 = arith.addf %3, %5 : vector<512x128xf32>
    %c0_5 = arith.constant 0 : index
    %c0_6 = arith.constant 0 : index
    %7 = vector.load %arg4[%c0_5, %c0_6] : memref<512x128xf32, #tpu.memory_space<vmem>>, vector<512x128xf32>
    tpu.vector_store %arg4[%c0_5, %c0_6], %6 {strides = array<i32>} : memref<512x128xf32, #tpu.memory_space<vmem>>, vector<512x128xf32>,
    return
  }
  func.func @transform_0(%arg0: i32) -> (i32, i32) {
    %c0_i32 = arith.constant 0 : i32
    %c0_i32_0 = arith.constant 0 : i32
    return %arg0, %c0_i32 : i32, i32
  }
  func.func @transform_1(%arg0: i32) -> (i32, i32) {
    %c0_i32 = arith.constant 0 : i32
    %c0_i32_0 = arith.constant 0 : i32
    %c0_i32_1 = arith.constant 0 : i32
    return %c0_i32, %c0_i32_0 : i32, i32
  }
  func.func @transform_2(%arg0: i32) -> (i32, i32) {
    %c0_i32 = arith.constant 0 : i32
    %c0_i32_0 = arith.constant 0 : i32
    %c0_i32_1 = arith.constant 0 : i32
    return %c0_i32, %c0_i32_0 : i32, i32
  }
  func.func @transform_3(%arg0: i32) -> (i32, i32) {
    %c0_i32 = arith.constant 0 : i32
    %c0_i32_0 = arith.constant 0 : i32
    return %arg0, %c0_i32 : i32, i32
  }
}

</mosaic_0001>

<llo_original>
// kernel: up_block_forward.10
$region0: #{up_block_forward.10}
  #allocation0 [shape = 'u32[]', space=smem, size = 0x4, offset = 0x4, fixed_abs, tag = 'smem constant byte address 0x4 - core index']
  #allocation1 [shape = 'u32[72,128]{1,0:T(1,128)}', space=vmem, size = 0x9000, scoped, tag = 'internal scratch']
  %s0 = inlined_call_operand.vmem [shape: f32[64,128], index: 0, kind: input, shape index: {}]
  %s1 = inlined_call_operand.vmem [shape: f32[1,128], index: 1, kind: input, shape index: {}]
  %s2 = inlined_call_operand.vmem [shape: f32[1,128], index: 2, kind: input, shape index: {}]
  %s3 = inlined_call_operand.vmem [shape: bf16[64,128], index: 3, kind: output, shape index: {}]
  %s4 = sld [smem:[#allocation0]]
  $region22: #{up_block_forward.10} parent=0
    _
  %s6 = ssub.s32 1, %s4
  %s7 = scalar_select 0, %s6, %s4
  // Predicated region
  $region2: #{up_block_forward.10} parent=0 // pred_check
    _
  $region3: #{up_block_forward.10} parent=0 // pred_check_branch
    %9 = sbr.rel (0) target = $region5
  $region4: #{up_block_forward.10} parent=0 // pred_region
    _
  $region5: #{up_block_forward.10} parent=0 // pred_fallthru
    _
  // Predicated region
  $region6: #{up_block_forward.10} parent=0 // pred_check
    _
  $region7: #{up_block_forward.10} parent=0 // pred_check_branch
    %11 = sbr.rel (0) target = $region9
  $region8: #{up_block_forward.10} parent=0 // pred_region
    _
  $region9: #{up_block_forward.10} parent=0 // pred_fallthru
    _
  // Predicated region
  $region10: #{up_block_forward.10} parent=0 // pred_check
    _
  $region11: #{up_block_forward.10} parent=0 // pred_check_branch
    %13 = sbr.rel (0) target = $region13
  $region12: #{up_block_forward.10} parent=0 // pred_region
    _
  $region13: #{up_block_forward.10} parent=0 // pred_fallthru
    _
  %v14 = vld [vmem:[%s0] sm:$0xff]
  %v15 = vld [vmem:[%s0 + $0x8] sm:$0xff]
  %v16 = vld [vmem:[%s0 + $0x10] sm:$0xff]
  %v17 = vld [vmem:[%s0 + $0x18] sm:$0xff]
  %v18 = vld [vmem:[%s0 + $0x20] sm:$0xff]
  %v19 = vld [vmem:[%s0 + $0x28] sm:$0xff]
  %v20 = vld [vmem:[%s0 + $0x30] sm:$0xff]
  %v21 = vld [vmem:[%s0 + $0x38] sm:$0xff]
  %v22 = vld [vmem:[%s1] sm:$0x1]
  %v24 = vperm.slane %v22, 0
  %v26 = vmul.f32 %v14, %v24
  %v27 = vmul.f32 %v15, %v24
  %v28 = vmul.f32 %v16, %v24
  %v29 = vmul.f32 %v17, %v24
  %v30 = vmul.f32 %v18, %v24
  %v31 = vmul.f32 %v19, %v24
  %v32 = vmul.f32 %v20, %v24
  %v33 = vmul.f32 %v21, %v24
  %v34 = vld [vmem:[%s2] sm:$0x1]
  %v36 = vperm.slane %v34, 0
  %v38 = vadd.f32 %v26, %v36
  %v39 = vadd.f32 %v27, %v36
  %v40 = vadd.f32 %v28, %v36
  %v41 = vadd.f32 %v29, %v36
  %v42 = vadd.f32 %v30, %v36
  %v43 = vadd.f32 %v31, %v36
  %v44 = vadd.f32 %v32, %v36
  %v45 = vadd.f32 %v33, %v36
  %v46 = vpack.c.bf16 %v38, %v38
  %v47 = vpack.c.bf16 %v39, %v39
  %v48 = vpack.c.bf16 %v40, %v40
  %v49 = vpack.c.bf16 %v41, %v41
  %v50 = vpack.c.bf16 %v42, %v42
  %v51 = vpack.c.bf16 %v43, %v43
  %v52 = vpack.c.bf16 %v44, %v44
  %v53 = vpack.c.bf16 %v45, %v45
  %54 = vst [vmem:[%s3] sm:$0xf] %v46
  %55 = vst [vmem:[%s3 + $0x4] sm:$0xf] %v47
  %56 = vst [vmem:[%s3 + $0x8] sm:$0xf] %v48
  %57 = vst [vmem:[%s3 + $0xc] sm:$0xf] %v49
  %58 = vst [vmem:[%s3 + $0x10] sm:$0xf] %v50
  %59 = vst [vmem:[%s3 + $0x14] sm:$0xf] %v51
  %60 = vst [vmem:[%s3 + $0x18] sm:$0xf] %v52
  %61 = vst [vmem:[%s3 + $0x1c] sm:$0xf] %v53
  // Predicated region
  $region14: #{up_block_forward.10} parent=0 // pred_check
    _
  $region15: #{up_block_forward.10} parent=0 // pred_check_branch
    %63 = sbr.rel (0) target = $region17
  $region16: #{up_block_forward.10} parent=0 // pred_region
    _
  $region17: #{up_block_forward.10} parent=0 // pred_fallthru
    _
  // Predicated region
  $region18: #{up_block_forward.10} parent=0 // pred_check
    _
  $region19: #{up_block_forward.10} parent=0 // pred_check_branch
    %65 = sbr.rel (0) target = $region21
  $region20: #{up_block_forward.10} parent=0 // pred_region
    _
  $region21: #{up_block_forward.10} parent=0 // pred_fallthru
    _

// kernel: up_block_forward.11
$region0: #{up_block_forward.11}
  #allocation0 [shape = 'u32[]', space=smem, size = 0x4, offset = 0x4, fixed_abs, tag = 'smem constant byte address 0x4 - core index']
  #allocation1 [shape = 'u32[72,128]{1,0:T(1,128)}', space=vmem, size = 0x9000, scoped, tag = 'internal scratch']
  %s0 = inlined_call_operand.vmem [shape: bf16[64,128], index: 0, kind: input, shape index: {}]
  %s1 = inlined_call_operand.hbm [shape: bf16[128,3456], index: 1, kind: input, shape index: {}]
  %s2 = inlined_call_operand.vmem [shape: f32[64,3456], index: 2, kind: output, shape index: {}]
  %s3 = sld [smem:[#allocation0]]
  $region22: #{up_block_forward.11} parent=0
    _
  %s5 = ssub.s32 1, %s3
  %s6 = scalar_select 0, %s5, %s3
  $region1: #{up_block_forward.11} parent=0
    #allocation2 [shape = 'u8[884736]{0}', space=vmem, size = 0xd8000, scoped, tag = 'input window, operand 1, single buffered']
    #allocation3 [shape = 's32[1]{0}', space=sflag, size = 0x4, scoped, tag = 'scoped memory for up_block_forward.11']
    %7 = vsyncpa [#allocation3], 0
    // Predicated region
    $region2: #{up_block_forward.11} parent=1 // pred_check
      _
    $region3: #{up_block_forward.11} parent=1 // pred_check_branch
      %9 = sbr.rel (0) target = $region5
    $region4: #{up_block_forward.11} parent=1 // pred_region
      _
    $region5: #{up_block_forward.11} parent=1 // pred_fallthru
      _
    // Predicated region
    $region6: #{up_block_forward.11} parent=1 // pred_check
      _
    $region7: #{up_block_forward.11} parent=1 // pred_check_branch
      %11 = sbr.rel (0) target = $region9
    $region8: #{up_block_forward.11} parent=1 // pred_region
      %13 = vsyncadd [#allocation3], 0
      %s14 = sshll.u32 %s1, 4
      %s15 = int_to_ptr.hbm [resolvable:$true] %s14
      %s16 = sshll.u32 [#allocation2], 4
      %s17 = int_to_ptr.vmem [resolvable:$true] %s16
      %22 = dma.hbm_to_vmem [thread:$0]  %s15, 27648, %s17, [#allocation3], 1728, 1728, 108
    $region9: #{up_block_forward.11} parent=1 // pred_fallthru
      _
    // Predicated region
    $region10: #{up_block_forward.11} parent=1 // pred_check
      _
    $region11: #{up_block_forward.11} parent=1 // pred_check_branch
      %24 = sbr.rel (0) target = $region13
    $region12: #{up_block_forward.11} parent=1 // pred_region
      %26 = dma.done [#allocation3], 27648
    $region13: #{up_block_forward.11} parent=1 // pred_fallthru
      _
    %v27 = vld [vmem:[%s0] sm:$0xf]
    %v28 = vld [vmem:[%s0 + $0x4] sm:$0xf]
    %v29 = vld [vmem:[%s0 + $0x8] sm:$0xf]
    %v30 = vld [vmem:[%s0 + $0xc] sm:$0xf]
    %v31 = vld [vmem:[%s0 + $0x10] sm:$0xf]
    %v32 = vld [vmem:[%s0 + $0x14] sm:$0xf]
    %v33 = vld [vmem:[%s0 + $0x18] sm:$0xf]
    %v34 = vld [vmem:[%s0 + $0x1c] sm:$0xf]
    %v35 = vld [vmem:[#allocation2] sm:$0xff]
    %v36 = vld [vmem:[#allocation2 + $0x8] sm:$0xff]
    %v37 = vld [vmem:[#allocation2 + $0x10] sm:$0xff]
    %v38 = vld [vmem:[#allocation2 + $0x18] sm:$0xff]
    %v39 = vld [vmem:[#allocation2 + $0x20] sm:$0xff]
    %v40 = vld [vmem:[#allocation2 + $0x28] sm:$0xff]
    %v41 = vld [vmem:[#allocation2 + $0x30] sm:$0xff]
    %v42 = vld [vmem:[#allocation2 + $0x38] sm:$0xff]
    %v43 = vld [vmem:[#allocation2 + $0x40] sm:$0xff]
    %v44 = vld [vmem:[#allocation2 + $0x48] sm:$0xff]
    %v45 = vld [vmem:[#allocation2 + $0x50] sm:$0xff]
    %v46 = vld [vmem:[#allocation2 + $0x58] sm:$0xff]
    %v47 = vld [vmem:[#allocation2 + $0x60] sm:$0xff]
    %v48 = vld [vmem:[#allocation2 + $0x68] sm:$0xf]
    %v49 = vld [vmem:[#allocation2 + $0x6c] sm:$0xff]
    %v50 = vld [vmem:[#allocation2 + $0x74] sm:$0xff]
    %v51 = vld [vmem:[#allocation2 + $0x7c] sm:$0xff]
    %v52 = vld [vmem:[#allocation2 + $0x84] sm:$0xff]
    %v53 = vld [vmem:[#allocation2 + $0x8c] sm:$0xff]
    %v54 = vld [vmem:[#allocation2 + $0x94] sm:$0xff]
    %v55 = vld [vmem:[#allocation2 + $0x9c] sm:$0xff]
    %v56 = vld [vmem:[#allocation2 + $0xa4] sm:$0xff]
    %v57 = vld [vmem:[#allocation2 + $0xac] sm:$0xff]
    %v58 = vld [vmem:[#allocation2 + $0xb4] sm:$0xff]
    %v59 = vld [vmem:[#allocation2 + $0xbc] sm:$0xff]
    %v60 = vld [vmem:[#allocation2 + $0xc4] sm:$0xff]
    %v61 = vld [vmem:[#allocation2 + $0xcc] sm:$0xff]
    %v62 = vld [vmem:[#allocation2 + $0xd4] sm:$0xf]
    %v63 = vld [vmem:[#allocation2 + $0xd8] sm:$0xff]
    %v64 = vld [vmem:[#allocation2 + $0xe0] sm:$0xff]
    %v65 = vld [vmem:[#allocation2 + $0xe8] sm:$0xff]
    %v66 = vld [vmem:[#allocation2 + $0xf0] sm:$0xff]
    %v67 = vld [vmem:[#allocation2 + $0xf8] sm:$0xff]
    %v68 = vld [vmem:[#allocation2 + $0x100] sm:$0xff]
    %v69 = vld [vmem:[#allocation2 + $0x108] sm:$0xff]
    %v70 = vld [vmem:[#allocation2 + $0x110] sm:$0xff]
    %v71 = vld [vmem:[#allocation2 + $0x118] sm:$0xff]
    %v72 = vld [vmem:[#allocation2 + $0x120] sm:$0xff]
    %v73 = vld [vmem:[#allocation2 + $0x128] sm:$0xff]
    %v74 = vld [vmem:[#allocation2 + $0x130] sm:$0xff]
    %v75 = vld [vmem:[#allocation2 + $0x138] sm:$0xff]
    %v76 = vld [vmem:[#allocation2 + $0x140] sm:$0xf]
    %v77 = vld [vmem:[#allocation2 + $0x144] sm:$0xff]
    %v78 = vld [vmem:[#allocation2 + $0x14c] sm:$0xff]
    %v79 = vld [vmem:[#allocation2 + $0x154] sm:$0xff]
    %v80 = vld [vmem:[#allocation2 + $0x15c] sm:$0xff]
    %v81 = vld [vmem:[#allocation2 + $0x164] sm:$0xff]
    %v82 = vld [vmem:[#allocation2 + $0x16c] sm:$0xff]
    %v83 = vld [vmem:[#allocation2 + $0x174] sm:$0xff]
    %v84 = vld [vmem:[#allocation2 + $0x17c] sm:$0xff]
    %v85 = vld [vmem:[#allocation2 + $0x184] sm:$0xff]
    %v86 = vld [vmem:[#allocation2 + $0x18c] sm:$0xff]
    %v87 = vld [vmem:[#allocation2 + $0x194] sm:$0xff]
    %v88 = vld [vmem:[#allocation2 + $0x19c] sm:$0xff]
    %v89 = vld [vmem:[#allocation2 + $0x1a4] sm:$0xff]
    %v90 = vld [vmem:[#allocation2 + $0x1ac] sm:$0xf]
    %v91 = vld [vmem:[#allocation2 + $0x1b0] sm:$0xff]
    %v92 = vld [vmem:[#allocation2 + $0x1b8] sm:$0xff]
    %v93 = vld [vmem:[#allocation2 + $0x1c0] sm:$0xff]
    %v94 = vld [vmem:[#allocation2 + $0x1c8] sm:$0xff]
    %v95 = vld [vmem:[#allocation2 + $0x1d0] sm:$0xff]
    %v96 = vld [vmem:[#allocation2 + $0x1d8] sm:$0xff]
    %v97 = vld [vmem:[#allocation2 + $0x1e0] sm:$0xff]
    %v98 = vld [vmem:[#allocation2 + $0x1e8] sm:$0xff]
    %v99 = vld [vmem:[#allocation2 + $0x1f0] sm:$0xff]
    %v100 = vld [vmem:[#allocation2 + $0x1f8] sm:$0xff]
    %v101 = vld [vmem:[#allocation2 + $0x200] sm:$0xff]
    %v102 = vld [vmem:[#allocation2 + $0x208] sm:$0xff]
    %v103 = vld [vmem:[#allocation2 + $0x210] sm:$0xff]
    %v104 = vld [vmem:[#allocation2 + $0x218] sm:$0xf]
    %v105 = vld [vmem:[#allocation2 + $0x21c] sm:$0xff]
    %v106 = vld [vmem:[#allocation2 + $0x224] sm:$0xff]
    %v107 = vld [vmem:[#allocation2 + $0x22c] sm:$0xff]
    %v108 = vld [vmem:[#allocation2 + $0x234] sm:$0xff]
    %v109 = vld [vmem:[#allocation2 + $0x23c] sm:$0xff]
    %v110 = vld [vmem:[#allocation2 + $0x244] sm:$0xff]
    %v111 = vld [vmem:[#allocation2 + $0x24c] sm:$0xff]
    %v112 = vld [vmem:[#allocation2 + $0x254] sm:$0xff]
    %v113 = vld [vmem:[#allocation2 + $0x25c] sm:$0xff]
    %v114 = vld [vmem:[#allocation2 + $0x264] sm:$0xff]
    %v115 = vld [vmem:[#allocation2 + $0x26c] sm:$0xff]
    %v116 = vld [vmem:[#allocation2 + $0x274] sm:$0xff]
    %v117 = vld [vmem:[#allocation2 + $0x27c] sm:$0xff]
    %v118 = vld [vmem:[#allocation2 + $0x284] sm:$0xf]
    %v119 = vld [vmem:[#allocation2 + $0x288] sm:$0xff]
    %v120 = vld [vmem:[#allocation2 + $0x290] sm:$0xff]
    %v121 = vld [vmem:[#allocation2 + $0x298] sm:$0xff]
    %v122 = vld [vmem:[#allocation2 + $0x2a0] sm:$0xff]
    %v123 = vld [vmem:[#allocation2 + $0x2a8] sm:$0xff]
    %v124 = vld [vmem:[#allocation2 + $0x2b0] sm:$0xff]
    %v125 = vld [vmem:[#allocation2 + $0x2b8] sm:$0xff]
    %v126 = vld [vmem:[#allocation2 + $0x2c0] sm:$0xff]
    %v127 = vld [vmem:[#allocation2 + $0x2c8] sm:$0xff]
    %v128 = vld [vmem:[#allocation2 + $0x2d0] sm:$0xff]
    %v129 = vld [vmem:[#allocation2 + $0x2d8] sm:$0xff]
    %v130 = vld [vmem:[#allocation2 + $0x2e0] sm:$0xff]
    %v131 = vld [vmem:[#allocation2 + $0x2e8] sm:$0xff]
    %v132 = vld [vmem:[#allocation2 + $0x2f0] sm:$0xf]
    %v133 = vld [vmem:[#allocation2 + $0x2f4] sm:$0xff]
    %v134 = vld [vmem:[#allocation2 + $0x2fc] sm:$0xff]
    %v135 = vld [vmem:[#allocation2 + $0x304] sm:$0xff]
    %v136 = vld [vmem:[#allocation2 + $0x30c] sm:$0xff]
    %v137 = vld [vmem:[#allocation2 + $0x314] sm:$0xff]
    %v138 = vld [vmem:[#allocation2 + $0x31c] sm:$0xff]
    %v139 = vld [vmem:[#allocation2 + $0x324] sm:$0xff]
    %v140 = vld [vmem:[#allocation2 + $0x32c] sm:$0xff]
    %v141 = vld [vmem:[#allocation2 + $0x334] sm:$0xff]
    %v142 = vld [vmem:[#allocation2 + $0x33c] sm:$0xff]
    %v143 = vld [vmem:[#allocation2 + $0x344] sm:$0xff]
    %v144 = vld [vmem:[#allocation2 + $0x34c] sm:$0xff]
    %v145 = vld [vmem:[#allocation2 + $0x354] sm:$0xff]
    %v146 = vld [vmem:[#allocation2 + $0x35c] sm:$0xf]
    %v147 = vld [vmem:[#allocation2 + $0x360] sm:$0xff]
    %v148 = vld [vmem:[#allocation2 + $0x368] sm:$0xff]
    %v149 = vld [vmem:[#allocation2 + $0x370] sm:$0xff]
    %v150 = vld [vmem:[#allocation2 + $0x378] sm:$0xff]
    %v151 = vld [vmem:[#allocation2 + $0x380] sm:$0xff]
    %v152 = vld [vmem:[#allocation2 + $0x388] sm:$0xff]
    %v153 = vld [vmem:[#allocation2 + $0x390] sm:$0xff]
    %v154 = vld [vmem:[#allocation2 + $0x398] sm:$0xff]
    %v155 = vld [vmem:[#allocation2 + $0x3a0] sm:$0xff]
    %v156 = vld [vmem:[#allocation2 + $0x3a8] sm:$0xff]
    %v157 = vld [vmem:[#allocation2 + $0x3b0] sm:$0xff]
    %v158 = vld [vmem:[#allocation2 + $0x3b8] sm:$0xff]
    %v159 = vld [vmem:[#allocation2 + $0x3c0] sm:$0xff]
    %v160 = vld [vmem:[#allocation2 + $0x3c8] sm:$0xf]
    %v161 = vld [vmem:[#allocation2 + $0x3cc] sm:$0xff]
    %v162 = vld [vmem:[#allocation2 + $0x3d4] sm:$0xff]
    %v163 = vld [vmem:[#allocation2 + $0x3dc] sm:$0xff]
    %v164 = vld [vmem:[#allocation2 + $0x3e4] sm:$0xff]
    %v165 = vld [vmem:[#allocation2 + $0x3ec] sm:$0xff]
    %v166 = vld [vmem:[#allocation2 + $0x3f4] sm:$0xff]
    %v167 = vld [vmem:[#allocation2 + $0x3fc] sm:$0xff]
    %v168 = vld [vmem:[#allocation2 + $0x404] sm:$0xff]
    %v169 = vld [vmem:[#allocation2 + $0x40c] sm:$0xff]
    %v170 = vld [vmem:[#allocation2 + $0x414] sm:$0xff]
    %v171 = vld [vmem:[#allocation2 + $0x41c] sm:$0xff]
    %v172 = vld [vmem:[#allocation2 + $0x424] sm:$0xff]
    %v173 = vld [vmem:[#allocation2 + $0x42c] sm:$0xff]
    %v174 = vld [vmem:[#allocation2 + $0x434] sm:$0xf]
    %v175 = vld [vmem:[#allocation2 + $0x438] sm:$0xff]
    %v176 = vld [vmem:[#allocation2 + $0x440] sm:$0xff]
    %v177 = vld [vmem:[#allocation2 + $0x448] sm:$0xff]
    %v178 = vld [vmem:[#allocation2 + $0x450] sm:$0xff]
    %v179 = vld [vmem:[#allocation2 + $0x458] sm:$0xff]
    %v180 = vld [vmem:[#allocation2 + $0x460] sm:$0xff]
    %v181 = vld [vmem:[#allocation2 + $0x468] sm:$0xff]
    %v182 = vld [vmem:[#allocation2 + $0x470] sm:$0xff]
    %v183 = vld [vmem:[#allocation2 + $0x478] sm:$0xff]
    %v184 = vld [vmem:[#allocation2 + $0x480] sm:$0xff]
    %v185 = vld [vmem:[#allocation2 + $0x488] sm:$0xff]
    %v186 = vld [vmem:[#allocation2 + $0x490] sm:$0xff]
    %v187 = vld [vmem:[#allocation2 + $0x498] sm:$0xff]
    %v188 = vld [vmem:[#allocation2 + $0x4a0] sm:$0xf]
    %v189 = vld [vmem:[#allocation2 + $0x4a4] sm:$0xff]
    %v190 = vld [vmem:[#allocation2 + $0x4ac] sm:$0xff]
    %v191 = vld [vmem:[#allocation2 + $0x4b4] sm:$0xff]
    %v192 = vld [vmem:[#allocation2 + $0x4bc] sm:$0xff]
    %v193 = vld [vmem:[#allocation2 + $0x4c4] sm:$0xff]
    %v194 = vld [vmem:[#allocation2 + $0x4cc] sm:$0xff]
    %v195 = vld [vmem:[#allocation2 + $0x4d4] sm:$0xff]
    %v196 = vld [vmem:[#allocation2 + $0x4dc] sm:$0xff]
    %v197 = vld [vmem:[#allocation2 + $0x4e4] sm:$0xff]
    %v198 = vld [vmem:[#allocation2 + $0x4ec] sm:$0xff]
    %v199 = vld [vmem:[#allocation2 + $0x4f4] sm:$0xff]
    %v200 = vld [vmem:[#allocation2 + $0x4fc] sm:$0xff]
    %v201 = vld [vmem:[#allocation2 + $0x504] sm:$0xff]
    %v202 = vld [vmem:[#allocation2 + $0x50c] sm:$0xf]
    %v203 = vld [vmem:[#allocation2 + $0x510] sm:$0xff]
    %v204 = vld [vmem:[#allocation2 + $0x518] sm:$0xff]
    %v205 = vld [vmem:[#allocation2 + $0x520] sm:$0xff]
    %v206 = vld [vmem:[#allocation2 + $0x528] sm:$0xff]
    %v207 = vld [vmem:[#allocation2 + $0x530] sm:$0xff]
    %v208 = vld [vmem:[#allocation2 + $0x538] sm:$0xff]
    %v209 = vld [vmem:[#allocation2 + $0x540] sm:$0xff]
    %v210 = vld [vmem:[#allocation2 + $0x548] sm:$0xff]
    %v211 = vld [vmem:[#allocation2 + $0x550] sm:$0xff]
    %v212 = vld [vmem:[#allocation2 + $0x558] sm:$0xff]
    %v213 = vld [vmem:[#allocation2 + $0x560] sm:$0xff]
    %v214 = vld [vmem:[#allocation2 + $0x568] sm:$0xff]
    %v215 = vld [vmem:[#allocation2 + $0x570] sm:$0xff]
    %v216 = vld [vmem:[#allocation2 + $0x578] sm:$0xf]
    %v217 = vld [vmem:[#allocation2 + $0x57c] sm:$0xff]
    %v218 = vld [vmem:[#allocation2 + $0x584] sm:$0xff]
    %v219 = vld [vmem:[#allocation2 + $0x58c] sm:$0xff]
    %v220 = vld [vmem:[#allocation2 + $0x594] sm:$0xff]
    %v221 = vld [vmem:[#allocation2 + $0x59c] sm:$0xff]
    %v222 = vld [vmem:[#allocation2 + $0x5a4] sm:$0xff]
    %v223 = vld [vmem:[#allocation2 + $0x5ac] sm:$0xff]
    %v224 = vld [vmem:[#allocation2 + $0x5b4] sm:$0xff]
    %v225 = vld [vmem:[#allocation2 + $0x5bc] sm:$0xff]
    %v226 = vld [vmem:[#allocation2 + $0x5c4] sm:$0xff]
    %v227 = vld [vmem:[#allocation2 + $0x5cc] sm:$0xff]
    %v228 = vld [vmem:[#allocation2 + $0x5d4] sm:$0xff]
    %v229 = vld [vmem:[#allocation2 + $0x5dc] sm:$0xff]
    %v230 = vld [vmem:[#allocation2 + $0x5e4] sm:$0xf]
    %v231 = vld [vmem:[#allocation2 + $0x5e8] sm:$0xff]
    %v232 = vld [vmem:[#allocation2 + $0x5f0] sm:$0xff]
    %v233 = vld [vmem:[#allocation2 + $0x5f8] sm:$0xff]
    %v234 = vld [vmem:[#allocation2 + $0x600] sm:$0xff]
    %v235 = vld [vmem:[#allocation2 + $0x608] sm:$0xff]
    %v236 = vld [vmem:[#allocation2 + $0x610] sm:$0xff]
    %v237 = vld [vmem:[#allocation2 + $0x618] sm:$0xff]
    %v238 = vld [vmem:[#allocation2 + $0x620] sm:$0xff]
    %v239 = vld [vmem:[#allocation2 + $0x628] sm:$0xff]
    %v240 = vld [vmem:[#allocation2 + $0x630] sm:$0xff]
    %v241 = vld [vmem:[#allocation2 + $0x638] sm:$0xff]
    %v242 = vld [vmem:[#allocation2 + $0x640] sm:$0xff]
    %v243 = vld [vmem:[#allocation2 + $0x648] sm:$0xff]
    %v244 = vld [vmem:[#allocation2 + $0x650] sm:$0xf]
    %v245 = vld [vmem:[#allocation2 + $0x654] sm:$0xff]
    %v246 = vld [vmem:[#allocation2 + $0x65c] sm:$0xff]
    %v247 = vld [vmem:[#allocation2 + $0x664] sm:$0xff]
    %v248 = vld [vmem:[#allocation2 + $0x66c] sm:$0xff]
    %v249 = vld [vmem:[#allocation2 + $0x674] sm:$0xff]
    %v250 = vld [vmem:[#allocation2 + $0x67c] sm:$0xff]
    %v251 = vld [vmem:[#allocation2 + $0x684] sm:$0xff]
    %v252 = vld [vmem:[#allocation2 + $0x68c] sm:$0xff]
    %v253 = vld [vmem:[#allocation2 + $0x694] sm:$0xff]
    %v254 = vld [vmem:[#allocation2 + $0x69c] sm:$0xff]
    %v255 = vld [vmem:[#allocation2 + $0x6a4] sm:$0xff]
    %v256 = vld [vmem:[#allocation2 + $0x6ac] sm:$0xff]
    %v257 = vld [vmem:[#allocation2 + $0x6b4] sm:$0xff]
    %v258 = vld [vmem:[#allocation2 + $0x6bc] sm:$0xf]
    %v267 = vunpack.c.l.b16 %v27
    %v268 = vunpack.c.l.b16 %v28
    %v269 = vunpack.c.l.b16 %v29
    %v270 = vunpack.c.l.b16 %v30
    %v271 = vunpack.c.l.b16 %v31
    %v272 = vunpack.c.l.b16 %v32
    %v273 = vunpack.c.l.b16 %v33
    %v274 = vunpack.c.l.b16 %v34
    %v275 = vpack.c.b16 %v268, %v267
    %v276 = vpack.c.b16 %v270, %v269
    %v277 = vpack.c.b16 %v272, %v271
    %v278 = vpack.c.b16 %v274, %v273
    %v507 = vunpack.c.l.b16 %v35
    %v508 = vunpack.c.h.b16 %v35
    %v509 = vunpack.c.l.b16 %v36
    %v510 = vunpack.c.h.b16 %v36
    %v511 = vunpack.c.l.b16 %v37
    %v512 = vunpack.c.h.b16 %v37
    %v513 = vunpack.c.l.b16 %v38
    %v514 = vunpack.c.h.b16 %v38
    %v515 = vunpack.c.l.b16 %v39
    %v516 = vunpack.c.h.b16 %v39
    %v517 = vunpack.c.l.b16 %v40
    %v518 = vunpack.c.h.b16 %v40
    %v519 = vunpack.c.l.b16 %v41
    %v520 = vunpack.c.h.b16 %v41
    %v521 = vunpack.c.l.b16 %v42
    %v522 = vunpack.c.h.b16 %v42
    %v523 = vunpack.c.l.b16 %v43
    %v524 = vunpack.c.h.b16 %v43
    %v525 = vunpack.c.l.b16 %v44
    %v526 = vunpack.c.h.b16 %v44
    %v527 = vunpack.c.l.b16 %v45
    %v528 = vunpack.c.h.b16 %v45
    %v529 = vunpack.c.l.b16 %v46
    %v530 = vunpack.c.h.b16 %v46
    %v531 = vunpack.c.l.b16 %v47
    %v532 = vunpack.c.h.b16 %v47
    %v533 = vunpack.c.l.b16 %v48
    %v534 = vunpack.c.l.b16 %v49
    %v535 = vunpack.c.h.b16 %v49
    %v536 = vunpack.c.l.b16 %v50
    %v537 = vunpack.c.h.b16 %v50
    %v538 = vunpack.c.l.b16 %v51
    %v539 = vunpack.c.h.b16 %v51
    %v540 = vunpack.c.l.b16 %v52
    %v541 = vunpack.c.h.b16 %v52
    %v542 = vunpack.c.l.b16 %v53
    %v543 = vunpack.c.h.b16 %v53
    %v544 = vunpack.c.l.b16 %v54
    %v545 = vunpack.c.h.b16 %v54
    %v546 = vunpack.c.l.b16 %v55
    %v547 = vunpack.c.h.b16 %v55
    %v548 = vunpack.c.l.b16 %v56
    %v549 = vunpack.c.h.b16 %v56
    %v550 = vunpack.c.l.b16 %v57
    %v551 = vunpack.c.h.b16 %v57
    %v552 = vunpack.c.l.b16 %v58
    %v553 = vunpack.c.h.b16 %v58
    %v554 = vunpack.c.l.b16 %v59
    %v555 = vunpack.c.h.b16 %v59
    %v556 = vunpack.c.l.b16 %v60
    %v557 = vunpack.c.h.b16 %v60
    %v558 = vunpack.c.l.b16 %v61
    %v559 = vunpack.c.h.b16 %v61
    %v560 = vunpack.c.l.b16 %v62
    %v561 = vunpack.c.l.b16 %v63
    %v562 = vunpack.c.h.b16 %v63
    %v563 = vunpack.c.l.b16 %v64
    %v564 = vunpack.c.h.b16 %v64
    %v565 = vunpack.c.l.b16 %v65
    %v566 = vunpack.c.h.b16 %v65
    %v567 = vunpack.c.l.b16 %v66
    %v568 = vunpack.c.h.b16 %v66
    %v569 = vunpack.c.l.b16 %v67
    %v570 = vunpack.c.h.b16 %v67
    %v571 = vunpack.c.l.b16 %v68
    %v572 = vunpack.c.h.b16 %v68
    %v573 = vunpack.c.l.b16 %v69
    %v574 = vunpack.c.h.b16 %v69
    %v575 = vunpack.c.l.b16 %v70
    %v576 = vunpack.c.h.b16 %v70
    %v577 = vunpack.c.l.b16 %v71
    %v578 = vunpack.c.h.b16 %v71
    %v579 = vunpack.c.l.b16 %v72
    %v580 = vunpack.c.h.b16 %v72
    %v581 = vunpack.c.l.b16 %v73
    %v582 = vunpack.c.h.b16 %v73
    %v583 = vunpack.c.l.b16 %v74
    %v584 = vunpack.c.h.b16 %v74
    %v585 = vunpack.c.l.b16 %v75
    %v586 = vunpack.c.h.b16 %v75
    %v587 = vunpack.c.l.b16 %v76
    %v588 = vunpack.c.l.b16 %v77
    %v589 = vunpack.c.h.b16 %v77
    %v590 = vunpack.c.l.b16 %v78
    %v591 = vunpack.c.h.b16 %v78
    %v592 = vunpack.c.l.b16 %v79
    %v593 = vunpack.c.h.b16 %v79
    %v594 = vunpack.c.l.b16 %v80
    %v595 = vunpack.c.h.b16 %v80
    %v596 = vunpack.c.l.b16 %v81
    %v597 = vunpack.c.h.b16 %v81
    %v598 = vunpack.c.l.b16 %v82
    %v599 = vunpack.c.h.b16 %v82
    %v600 = vunpack.c.l.b16 %v83
    %v601 = vunpack.c.h.b16 %v83
    %v602 = vunpack.c.l.b16 %v84
    %v603 = vunpack.c.h.b16 %v84
    %v604 = vunpack.c.l.b16 %v85
    %v605 = vunpack.c.h.b16 %v85
    %v606 = vunpack.c.l.b16 %v86
    %v607 = vunpack.c.h.b16 %v86
    %v608 = vunpack.c.l.b16 %v87
    %v609 = vunpack.c.h.b16 %v87
    %v610 = vunpack.c.l.b16 %v88
    %v611 = vunpack.c.h.b16 %v88
    %v612 = vunpack.c.l.b16 %v89
    %v613 = vunpack.c.h.b16 %v89
    %v614 = vunpack.c.l.b16 %v90
    %v615 = vunpack.c.l.b16 %v91
    %v616 = vunpack.c.h.b16 %v91
    %v617 = vunpack.c.l.b16 %v92
    %v618 = vunpack.c.h.b16 %v92
    %v619 = vunpack.c.l.b16 %v93
    %v620 = vunpack.c.h.b16 %v93
    %v621 = vunpack.c.l.b16 %v94
    %v622 = vunpack.c.h.b16 %v94
    %v623 = vunpack.c.l.b16 %v95
    %v624 = vunpack.c.h.b16 %v95
    %v625 = vunpack.c.l.b16 %v96
    %v626 = vunpack.c.h.b16 %v96
    %v627 = vunpack.c.l.b16 %v97
    %v628 = vunpack.c.h.b16 %v97
    %v629 = vunpack.c.l.b16 %v98
    %v630 = vunpack.c.h.b16 %v98
    %v631 = vunpack.c.l.b16 %v99
    %v632 = vunpack.c.h.b16 %v99
    %v633 = vunpack.c.l.b16 %v100
    %v634 = vunpack.c.h.b16 %v100
    %v635 = vunpack.c.l.b16 %v101
    %v636 = vunpack.c.h.b16 %v101
    %v637 = vunpack.c.l.b16 %v102
    %v638 = vunpack.c.h.b16 %v102
    %v639 = vunpack.c.l.b16 %v103
    %v640 = vunpack.c.h.b16 %v103
    %v641 = vunpack.c.l.b16 %v104
    %v642 = vunpack.c.l.b16 %v105
    %v643 = vunpack.c.h.b16 %v105
    %v644 = vunpack.c.l.b16 %v106
    %v645 = vunpack.c.h.b16 %v106
    %v646 = vunpack.c.l.b16 %v107
    %v647 = vunpack.c.h.b16 %v107
    %v648 = vunpack.c.l.b16 %v108
    %v649 = vunpack.c.h.b16 %v108
    %v650 = vunpack.c.l.b16 %v109
    %v651 = vunpack.c.h.b16 %v109
    %v652 = vunpack.c.l.b16 %v110
    %v653 = vunpack.c.h.b16 %v110
    %v654 = vunpack.c.l.b16 %v111
    %v655 = vunpack.c.h.b16 %v111
    %v656 = vunpack.c.l.b16 %v112
    %v657 = vunpack.c.h.b16 %v112
    %v658 = vunpack.c.l.b16 %v113
    %v659 = vunpack.c.h.b16 %v113
    %v660 = vunpack.c.l.b16 %v114
    %v661 = vunpack.c.h.b16 %v114
    %v662 = vunpack.c.l.b16 %v115
    %v663 = vunpack.c.h.b16 %v115
    %v664 = vunpack.c.l.b16 %v116
    %v665 = vunpack.c.h.b16 %v116
    %v666 = vunpack.c.l.b16 %v117
    %v667 = vunpack.c.h.b16 %v117
    %v668 = vunpack.c.l.b16 %v118
    %v669 = vunpack.c.l.b16 %v119
    %v670 = vunpack.c.h.b16 %v119
    %v671 = vunpack.c.l.b16 %v120
    %v672 = vunpack.c.h.b16 %v120
    %v673 = vunpack.c.l.b16 %v121
    %v674 = vunpack.c.h.b16 %v121
    %v675 = vunpack.c.l.b16 %v122
    %v676 = vunpack.c.h.b16 %v122
    %v677 = vunpack.c.l.b16 %v123
    %v678 = vunpack.c.h.b16 %v123
    %v679 = vunpack.c.l.b16 %v124
    %v680 = vunpack.c.h.b16 %v124
    %v681 = vunpack.c.l.b16 %v125
    %v682 = vunpack.c.h.b16 %v125
    %v683 = vunpack.c.l.b16 %v126
    %v684 = vunpack.c.h.b16 %v126
    %v685 = vunpack.c.l.b16 %v127
    %v686 = vunpack.c.h.b16 %v127
    %v687 = vunpack.c.l.b16 %v128
    %v688 = vunpack.c.h.b16 %v128
    %v689 = vunpack.c.l.b16 %v129
    %v690 = vunpack.c.h.b16 %v129
    %v691 = vunpack.c.l.b16 %v130
    %v692 = vunpack.c.h.b16 %v130
    %v693 = vunpack.c.l.b16 %v131
    %v694 = vunpack.c.h.b16 %v131
    %v695 = vunpack.c.l.b16 %v132
    %v696 = vunpack.c.l.b16 %v133
    %v697 = vunpack.c.h.b16 %v133
    %v698 = vunpack.c.l.b16 %v134
    %v699 = vunpack.c.h.b16 %v134
    %v700 = vunpack.c.l.b16 %v135
    %v701 = vunpack.c.h.b16 %v135
    %v702 = vunpack.c.l.b16 %v136
    %v703 = vunpack.c.h.b16 %v136
    %v704 = vunpack.c.l.b16 %v137
    %v705 = vunpack.c.h.b16 %v137
    %v706 = vunpack.c.l.b16 %v138
    %v707 = vunpack.c.h.b16 %v138
    %v708 = vunpack.c.l.b16 %v139
    %v709 = vunpack.c.h.b16 %v139
    %v710 = vunpack.c.l.b16 %v140
    %v711 = vunpack.c.h.b16 %v140
    %v712 = vunpack.c.l.b16 %v141
    %v713 = vunpack.c.h.b16 %v141
    %v714 = vunpack.c.l.b16 %v142
    %v715 = vunpack.c.h.b16 %v142
    %v716 = vunpack.c.l.b16 %v143
    %v717 = vunpack.c.h.b16 %v143
    %v718 = vunpack.c.l.b16 %v144
    %v719 = vunpack.c.h.b16 %v144
    %v720 = vunpack.c.l.b16 %v145
    %v721 = vunpack.c.h.b16 %v145
    %v722 = vunpack.c.l.b16 %v146
    %v723 = vunpack.c.l.b16 %v147
    %v724 = vunpack.c.h.b16 %v147
    %v725 = vunpack.c.l.b16 %v148
    %v726 = vunpack.c.h.b16 %v148
    %v727 = vunpack.c.l.b16 %v149
    %v728 = vunpack.c.h.b16 %v149
    %v729 = vunpack.c.l.b16 %v150
    %v730 = vunpack.c.h.b16 %v150
    %v731 = vunpack.c.l.b16 %v151
    %v732 = vunpack.c.h.b16 %v151
    %v733 = vunpack.c.l.b16 %v152
    %v734 = vunpack.c.h.b16 %v152
    %v735 = vunpack.c.l.b16 %v153
    %v736 = vunpack.c.h.b16 %v153
    %v737 = vunpack.c.l.b16 %v154
    %v738 = vunpack.c.h.b16 %v154
    %v739 = vunpack.c.l.b16 %v155
    %v740 = vunpack.c.h.b16 %v155
    %v741 = vunpack.c.l.b16 %v156
    %v742 = vunpack.c.h.b16 %v156
    %v743 = vunpack.c.l.b16 %v157
    %v744 = vunpack.c.h.b16 %v157
    %v745 = vunpack.c.l.b16 %v158
    %v746 = vunpack.c.h.b16 %v158
    %v747 = vunpack.c.l.b16 %v159
    %v748 = vunpack.c.h.b16 %v159
    %v749 = vunpack.c.l.b16 %v160
    %v750 = vunpack.c.l.b16 %v161
    %v751 = vunpack.c.h.b16 %v161
    %v752 = vunpack.c.l.b16 %v162
    %v753 = vunpack.c.h.b16 %v162
    %v754 = vunpack.c.l.b16 %v163
    %v755 = vunpack.c.h.b16 %v163
    %v756 = vunpack.c.l.b16 %v164
    %v757 = vunpack.c.h.b16 %v164
    %v758 = vunpack.c.l.b16 %v165
    %v759 = vunpack.c.h.b16 %v165
    %v760 = vunpack.c.l.b16 %v166
    %v761 = vunpack.c.h.b16 %v166
    %v762 = vunpack.c.l.b16 %v167
    %v763 = vunpack.c.h.b16 %v167
    %v764 = vunpack.c.l.b16 %v168
    %v765 = vunpack.c.h.b16 %v168
    %v766 = vunpack.c.l.b16 %v169
    %v767 = vunpack.c.h.b16 %v169
    %v768 = vunpack.c.l.b16 %v170
    %v769 = vunpack.c.h.b16 %v170
    %v770 = vunpack.c.l.b16 %v171
    %v771 = vunpack.c.h.b16 %v171
    %v772 = vunpack.c.l.b16 %v172
    %v773 = vunpack.c.h.b16 %v172
    %v774 = vunpack.c.l.b16 %v173
    %v775 = vunpack.c.h.b16 %v173
    %v776 = vunpack.c.l.b16 %v174
    %v777 = vunpack.c.l.b16 %v175
    %v778 = vunpack.c.h.b16 %v175
    %v779 = vunpack.c.l.b16 %v176
    %v780 = vunpack.c.h.b16 %v176
    %v781 = vunpack.c.l.b16 %v177
    %v782 = vunpack.c.h.b16 %v177
    %v783 = vunpack.c.l.b16 %v178
    %v784 = vunpack.c.h.b16 %v178
    %v785 = vunpack.c.l.b16 %v179
    %v786 = vunpack.c.h.b16 %v179
    %v787 = vunpack.c.l.b16 %v180
    %v788 = vunpack.c.h.b16 %v180
    %v789 = vunpack.c.l.b16 %v181
    %v790 = vunpack.c.h.b16 %v181
    %v791 = vunpack.c.l.b16 %v182
    %v792 = vunpack.c.h.b16 %v182
    %v793 = vunpack.c.l.b16 %v183
    %v794 = vunpack.c.h.b16 %v183
    %v795 = vunpack.c.l.b16 %v184
    %v796 = vunpack.c.h.b16 %v184
    %v797 = vunpack.c.l.b16 %v185
    %v798 = vunpack.c.h.b16 %v185
    %v799 = vunpack.c.l.b16 %v186
    %v800 = vunpack.c.h.b16 %v186
    %v801 = vunpack.c.l.b16 %v187
    %v802 = vunpack.c.h.b16 %v187
    %v803 = vunpack.c.l.b16 %v188
    %v804 = vunpack.c.l.b16 %v189
    %v805 = vunpack.c.h.b16 %v189
    %v806 = vunpack.c.l.b16 %v190
    %v807 = vunpack.c.h.b16 %v190
    %v808 = vunpack.c.l.b16 %v191
    %v809 = vunpack.c.h.b16 %v191
    %v810 = vunpack.c.l.b16 %v192
    %v811 = vunpack.c.h.b16 %v192
    %v812 = vunpack.c.l.b16 %v193
    %v813 = vunpack.c.h.b16 %v193
    %v814 = vunpack.c.l.b16 %v194
    %v815 = vunpack.c.h.b16 %v194
    %v816 = vunpack.c.l.b16 %v195
    %v817 = vunpack.c.h.b16 %v195
    %v818 = vunpack.c.l.b16 %v196
    %v819 = vunpack.c.h.b16 %v196
    %v820 = vunpack.c.l.b16 %v197
    %v821 = vunpack.c.h.b16 %v197
    %v822 = vunpack.c.l.b16 %v198
    %v823 = vunpack.c.h.b16 %v198
    %v824 = vunpack.c.l.b16 %v199
    %v825 = vunpack.c.h.b16 %v199
    %v826 = vunpack.c.l.b16 %v200
    %v827 = vunpack.c.h.b16 %v200
    %v828 = vunpack.c.l.b16 %v201
    %v829 = vunpack.c.h.b16 %v201
    %v830 = vunpack.c.l.b16 %v202
    %v831 = vunpack.c.l.b16 %v203
    %v832 = vunpack.c.h.b16 %v203
    %v833 = vunpack.c.l.b16 %v204
    %v834 = vunpack.c.h.b16 %v204
    %v835 = vunpack.c.l.b16 %v205
    %v836 = vunpack.c.h.b16 %v205
    %v837 = vunpack.c.l.b16 %v206
    %v838 = vunpack.c.h.b16 %v206
    %v839 = vunpack.c.l.b16 %v207
    %v840 = vunpack.c.h.b16 %v207
    %v841 = vunpack.c.l.b16 %v208
    %v842 = vunpack.c.h.b16 %v208
    %v843 = vunpack.c.l.b16 %v209
    %v844 = vunpack.c.h.b16 %v209
    %v845 = vunpack.c.l.b16 %v210
    %v846 = vunpack.c.h.b16 %v210
    %v847 = vunpack.c.l.b16 %v211
    %v848 = vunpack.c.h.b16 %v211
    %v849 = vunpack.c.l.b16 %v212
    %v850 = vunpack.c.h.b16 %v212
    %v851 = vunpack.c.l.b16 %v213
    %v852 = vunpack.c.h.b16 %v213
    %v853 = vunpack.c.l.b16 %v214
    %v854 = vunpack.c.h.b16 %v214
    %v855 = vunpack.c.l.b16 %v215
    %v856 = vunpack.c.h.b16 %v215
    %v857 = vunpack.c.l.b16 %v216
    %v858 = vunpack.c.l.b16 %v217
    %v859 = vunpack.c.h.b16 %v217
    %v860 = vunpack.c.l.b16 %v218
    %v861 = vunpack.c.h.b16 %v218
    %v862 = vunpack.c.l.b16 %v219
    %v863 = vunpack.c.h.b16 %v219
    %v864 = vunpack.c.l.b16 %v220
    %v865 = vunpack.c.h.b16 %v220
    %v866 = vunpack.c.l.b16 %v221
    %v867 = vunpack.c.h.b16 %v221
    %v868 = vunpack.c.l.b16 %v222
    %v869 = vunpack.c.h.b16 %v222
    %v870 = vunpack.c.l.b16 %v223
    %v871 = vunpack.c.h.b16 %v223
    %v872 = vunpack.c.l.b16 %v224
    %v873 = vunpack.c.h.b16 %v224
    %v874 = vunpack.c.l.b16 %v225
    %v875 = vunpack.c.h.b16 %v225
    %v876 = vunpack.c.l.b16 %v226
    %v877 = vunpack.c.h.b16 %v226
    %v878 = vunpack.c.l.b16 %v227
    %v879 = vunpack.c.h.b16 %v227
    %v880 = vunpack.c.l.b16 %v228
    %v881 = vunpack.c.h.b16 %v228
    %v882 = vunpack.c.l.b16 %v229
    %v883 = vunpack.c.h.b16 %v229
    %v884 = vunpack.c.l.b16 %v230
    %v885 = vunpack.c.l.b16 %v231
    %v886 = vunpack.c.h.b16 %v231
    %v887 = vunpack.c.l.b16 %v232
    %v888 = vunpack.c.h.b16 %v232
    %v889 = vunpack.c.l.b16 %v233
    %v890 = vunpack.c.h.b16 %v233
    %v891 = vunpack.c.l.b16 %v234
    %v892 = vunpack.c.h.b16 %v234
    %v893 = vunpack.c.l.b16 %v235
    %v894 = vunpack.c.h.b16 %v235
    %v895 = vunpack.c.l.b16 %v236
    %v896 = vunpack.c.h.b16 %v236
    %v897 = vunpack.c.l.b16 %v237
    %v898 = vunpack.c.h.b16 %v237
    %v899 = vunpack.c.l.b16 %v238
    %v900 = vunpack.c.h.b16 %v238
    %v901 = vunpack.c.l.b16 %v239
    %v902 = vunpack.c.h.b16 %v239
    %v903 = vunpack.c.l.b16 %v240
    %v904 = vunpack.c.h.b16 %v240
    %v905 = vunpack.c.l.b16 %v241
    %v906 = vunpack.c.h.b16 %v241
    %v907 = vunpack.c.l.b16 %v242
    %v908 = vunpack.c.h.b16 %v242
    %v909 = vunpack.c.l.b16 %v243
    %v910 = vunpack.c.h.b16 %v243
    %v911 = vunpack.c.l.b16 %v244
    %v912 = vunpack.c.l.b16 %v245
    %v913 = vunpack.c.h.b16 %v245
    %v914 = vunpack.c.l.b16 %v246
    %v915 = vunpack.c.h.b16 %v246
    %v916 = vunpack.c.l.b16 %v247
    %v917 = vunpack.c.h.b16 %v247
    %v918 = vunpack.c.l.b16 %v248
    %v919 = vunpack.c.h.b16 %v248
    %v920 = vunpack.c.l.b16 %v249
    %v921 = vunpack.c.h.b16 %v249
    %v922 = vunpack.c.l.b16 %v250
    %v923 = vunpack.c.h.b16 %v250
    %v924 = vunpack.c.l.b16 %v251
    %v925 = vunpack.c.h.b16 %v251
    %v926 = vunpack.c.l.b16 %v252
    %v927 = vunpack.c.h.b16 %v252
    %v928 = vunpack.c.l.b16 %v253
    %v929 = vunpack.c.h.b16 %v253
    %v930 = vunpack.c.l.b16 %v254
    %v931 = vunpack.c.h.b16 %v254
    %v932 = vunpack.c.l.b16 %v255
    %v933 = vunpack.c.h.b16 %v255
    %v934 = vunpack.c.l.b16 %v256
    %v935 = vunpack.c.h.b16 %v256
    %v936 = vunpack.c.l.b16 %v257
    %v937 = vunpack.c.h.b16 %v257
    %v938 = vunpack.c.l.b16 %v258
    %v939 = vpack.c.b16 %v534, %v507
    %v940 = vpack.c.b16 %v535, %v508
    %v941 = vpack.c.b16 %v536, %v509
    %v942 = vpack.c.b16 %v537, %v510
    %v943 = vpack.c.b16 %v538, %v511
    %v944 = vpack.c.b16 %v539, %v512
    %v945 = vpack.c.b16 %v540, %v513
    %v946 = vpack.c.b16 %v541, %v514
    %v947 = vpack.c.b16 %v542, %v515
    %v948 = vpack.c.b16 %v543, %v516
    %v949 = vpack.c.b16 %v544, %v517
    %v950 = vpack.c.b16 %v545, %v518
    %v951 = vpack.c.b16 %v546, %v519
    %v952 = vpack.c.b16 %v547, %v520
    %v953 = vpack.c.b16 %v548, %v521
    %v954 = vpack.c.b16 %v549, %v522
    %v955 = vpack.c.b16 %v550, %v523
    %v956 = vpack.c.b16 %v551, %v524
    %v957 = vpack.c.b16 %v552, %v525
    %v958 = vpack.c.b16 %v553, %v526
    %v959 = vpack.c.b16 %v554, %v527
    %v960 = vpack.c.b16 %v555, %v528
    %v961 = vpack.c.b16 %v556, %v529
    %v962 = vpack.c.b16 %v557, %v530
    %v963 = vpack.c.b16 %v558, %v531
    %v964 = vpack.c.b16 %v559, %v532
    %v965 = vpack.c.b16 %v560, %v533
    %v966 = vpack.c.b16 %v588, %v561
    %v967 = vpack.c.b16 %v589, %v562
    %v968 = vpack.c.b16 %v590, %v563
    %v969 = vpack.c.b16 %v591, %v564
    %v970 = vpack.c.b16 %v592, %v565
    %v971 = vpack.c.b16 %v593, %v566
    %v972 = vpack.c.b16 %v594, %v567
    %v973 = vpack.c.b16 %v595, %v568
    %v974 = vpack.c.b16 %v596, %v569
    %v975 = vpack.c.b16 %v597, %v570
    %v976 = vpack.c.b16 %v598, %v571
    %v977 = vpack.c.b16 %v599, %v572
    %v978 = vpack.c.b16 %v600, %v573
    %v979 = vpack.c.b16 %v601, %v574
    %v980 = vpack.c.b16 %v602, %v575
    %v981 = vpack.c.b16 %v603, %v576
    %v982 = vpack.c.b16 %v604, %v577
    %v983 = vpack.c.b16 %v605, %v578
    %v984 = vpack.c.b16 %v606, %v579
    %v985 = vpack.c.b16 %v607, %v580
    %v986 = vpack.c.b16 %v608, %v581
    %v987 = vpack.c.b16 %v609, %v582
    %v988 = vpack.c.b16 %v610, %v583
    %v989 = vpack.c.b16 %v611, %v584
    %v990 = vpack.c.b16 %v612, %v585
    %v991 = vpack.c.b16 %v613, %v586
    %v992 = vpack.c.b16 %v614, %v587
    %v993 = vpack.c.b16 %v642, %v615
    %v994 = vpack.c.b16 %v643, %v616
    %v995 = vpack.c.b16 %v644, %v617
    %v996 = vpack.c.b16 %v645, %v618
    %v997 = vpack.c.b16 %v646, %v619
    %v998 = vpack.c.b16 %v647, %v620
    %v999 = vpack.c.b16 %v648, %v621
    %v1000 = vpack.c.b16 %v649, %v622
    %v1001 = vpack.c.b16 %v650, %v623
    %v1002 = vpack.c.b16 %v651, %v624
    %v1003 = vpack.c.b16 %v652, %v625
    %v1004 = vpack.c.b16 %v653, %v626
    %v1005 = vpack.c.b16 %v654, %v627
    %v1006 = vpack.c.b16 %v655, %v628
    %v1007 = vpack.c.b16 %v656, %v629
    %v1008 = vpack.c.b16 %v657, %v630
    %v1009 = vpack.c.b16 %v658, %v631
    %v1010 = vpack.c.b16 %v659, %v632
    %v1011 = vpack.c.b16 %v660, %v633
    %v1012 = vpack.c.b16 %v661, %v634
    %v1013 = vpack.c.b16 %v662, %v635
    %v1014 = vpack.c.b16 %v663, %v636
    %v1015 = vpack.c.b16 %v664, %v637
    %v1016 = vpack.c.b16 %v665, %v638
    %v1017 = vpack.c.b16 %v666, %v639
    %v1018 = vpack.c.b16 %v667, %v640
    %v1019 = vpack.c.b16 %v668, %v641
    %v1020 = vpack.c.b16 %v696, %v669
    %v1021 = vpack.c.b16 %v697, %v670
    %v1022 = vpack.c.b16 %v698, %v671
    %v1023 = vpack.c.b16 %v699, %v672
    %v1024 = vpack.c.b16 %v700, %v673
    %v1025 = vpack.c.b16 %v701, %v674
    %v1026 = vpack.c.b16 %v702, %v675
    %v1027 = vpack.c.b16 %v703, %v676
    %v1028 = vpack.c.b16 %v704, %v677
    %v1029 = vpack.c.b16 %v705, %v678
    %v1030 = vpack.c.b16 %v706, %v679
    %v1031 = vpack.c.b16 %v707, %v680
    %v1032 = vpack.c.b16 %v708, %v681
    %v1033 = vpack.c.b16 %v709, %v682
    %v1034 = vpack.c.b16 %v710, %v683
    %v1035 = vpack.c.b16 %v711, %v684
    %v1036 = vpack.c.b16 %v712, %v685
    %v1037 = vpack.c.b16 %v713, %v686
    %v1038 = vpack.c.b16 %v714, %v687
    %v1039 = vpack.c.b16 %v715, %v688
    %v1040 = vpack.c.b16 %v716, %v689
    %v1041 = vpack.c.b16 %v717, %v690
    %v1042 = vpack.c.b16 %v718, %v691
    %v1043 = vpack.c.b16 %v719, %v692
    %v1044 = vpack.c.b16 %v720, %v693
    %v1045 = vpack.c.b16 %v721, %v694
    %v1046 = vpack.c.b16 %v722, %v695
    %v1047 = vpack.c.b16 %v750, %v723
    %v1048 = vpack.c.b16 %v751, %v724
    %v1049 = vpack.c.b16 %v752, %v725
    %v1050 = vpack.c.b16 %v753, %v726
    %v1051 = vpack.c.b16 %v754, %v727
    %v1052 = vpack.c.b16 %v755, %v728
    %v1053 = vpack.c.b16 %v756, %v729
    %v1054 = vpack.c.b16 %v757, %v730
    %v1055 = vpack.c.b16 %v758, %v731
    %v1056 = vpack.c.b16 %v759, %v732
    %v1057 = vpack.c.b16 %v760, %v733
    %v1058 = vpack.c.b16 %v761, %v734
    %v1059 = vpack.c.b16 %v762, %v735
    %v1060 = vpack.c.b16 %v763, %v736
    %v1061 = vpack.c.b16 %v764, %v737
    %v1062 = vpack.c.b16 %v765, %v738
    %v1063 = vpack.c.b16 %v766, %v739
    %v1064 = vpack.c.b16 %v767, %v740
    %v1065 = vpack.c.b16 %v768, %v741
    %v1066 = vpack.c.b16 %v769, %v742
    %v1067 = vpack.c.b16 %v770, %v743
    %v1068 = vpack.c.b16 %v771, %v744
    %v1069 = vpack.c.b16 %v772, %v745
    %v1070 = vpack.c.b16 %v773, %v746
    %v1071 = vpack.c.b16 %v774, %v747
    %v1072 = vpack.c.b16 %v775, %v748
    %v1073 = vpack.c.b16 %v776, %v749
    %v1074 = vpack.c.b16 %v804, %v777
    %v1075 = vpack.c.b16 %v805, %v778
    %v1076 = vpack.c.b16 %v806, %v779
    %v1077 = vpack.c.b16 %v807, %v780
    %v1078 = vpack.c.b16 %v808, %v781
    %v1079 = vpack.c.b16 %v809, %v782
    %v1080 = vpack.c.b16 %v810, %v783
    %v1081 = vpack.c.b16 %v811, %v784
    %v1082 = vpack.c.b16 %v812, %v785
    %v1083 = vpack.c.b16 %v813, %v786
    %v1084 = vpack.c.b16 %v814, %v787
    %v1085 = vpack.c.b16 %v815, %v788
    %v1086 = vpack.c.b16 %v816, %v789
    %v1087 = vpack.c.b16 %v817, %v790
    %v1088 = vpack.c.b16 %v818, %v791
    %v1089 = vpack.c.b16 %v819, %v792
    %v1090 = vpack.c.b16 %v820, %v793
    %v1091 = vpack.c.b16 %v821, %v794
    %v1092 = vpack.c.b16 %v822, %v795
    %v1093 = vpack.c.b16 %v823, %v796
    %v1094 = vpack.c.b16 %v824, %v797
    %v1095 = vpack.c.b16 %v825, %v798
    %v1096 = vpack.c.b16 %v826, %v799
    %v1097 = vpack.c.b16 %v827, %v800
    %v1098 = vpack.c.b16 %v828, %v801
    %v1099 = vpack.c.b16 %v829, %v802
    %v1100 = vpack.c.b16 %v830, %v803
    %v1101 = vpack.c.b16 %v858, %v831
    %v1102 = vpack.c.b16 %v859, %v832
    %v1103 = vpack.c.b16 %v860, %v833
    %v1104 = vpack.c.b16 %v861, %v834
    %v1105 = vpack.c.b16 %v862, %v835
    %v1106 = vpack.c.b16 %v863, %v836
    %v1107 = vpack.c.b16 %v864, %v837
    %v1108 = vpack.c.b16 %v865, %v838
    %v1109 = vpack.c.b16 %v866, %v839
    %v1110 = vpack.c.b16 %v867, %v840
    %v1111 = vpack.c.b16 %v868, %v841
    %v1112 = vpack.c.b16 %v869, %v842
    %v1113 = vpack.c.b16 %v870, %v843
    %v1114 = vpack.c.b16 %v871, %v844
    %v1115 = vpack.c.b16 %v872, %v845
    %v1116 = vpack.c.b16 %v873, %v846
    %v1117 = vpack.c.b16 %v874, %v847
    %v1118 = vpack.c.b16 %v875, %v848
    %v1119 = vpack.c.b16 %v876, %v849
    %v1120 = vpack.c.b16 %v877, %v850
    %v1121 = vpack.c.b16 %v878, %v851
    %v1122 = vpack.c.b16 %v879, %v852
    %v1123 = vpack.c.b16 %v880, %v853
    %v1124 = vpack.c.b16 %v881, %v854
    %v1125 = vpack.c.b16 %v882, %v855
    %v1126 = vpack.c.b16 %v883, %v856
    %v1127 = vpack.c.b16 %v884, %v857
    %v1128 = vpack.c.b16 %v912, %v885
    %v1129 = vpack.c.b16 %v913, %v886
    %v1130 = vpack.c.b16 %v914, %v887
    %v1131 = vpack.c.b16 %v915, %v888
    %v1132 = vpack.c.b16 %v916, %v889
    %v1133 = vpack.c.b16 %v917, %v890
    %v1134 = vpack.c.b16 %v918, %v891
    %v1135 = vpack.c.b16 %v919, %v892
    %v1136 = vpack.c.b16 %v920, %v893
    %v1137 = vpack.c.b16 %v921, %v894
    %v1138 = vpack.c.b16 %v922, %v895
    %v1139 = vpack.c.b16 %v923, %v896
    %v1140 = vpack.c.b16 %v924, %v897
    %v1141 = vpack.c.b16 %v925, %v898
    %v1142 = vpack.c.b16 %v926, %v899
    %v1143 = vpack.c.b16 %v927, %v900
    %v1144 = vpack.c.b16 %v928, %v901
    %v1145 = vpack.c.b16 %v929, %v902
    %v1146 = vpack.c.b16 %v930, %v903
    %v1147 = vpack.c.b16 %v931, %v904
    %v1148 = vpack.c.b16 %v932, %v905
    %v1149 = vpack.c.b16 %v933, %v906
    %v1150 = vpack.c.b16 %v934, %v907
    %v1151 = vpack.c.b16 %v935, %v908
    %v1152 = vpack.c.b16 %v936, %v909
    %v1153 = vpack.c.b16 %v937, %v910
    %v1154 = vpack.c.b16 %v938, %v911
    %1371 = vmatpush.bf16.msra.mxu0 %v1128
    %1372 = vmatpush.bf16.msra.mxu0 %v1101
    %1373 = vmatpush.bf16.msra.mxu0 %v1074
    %1374 = vmatpush.bf16.msra.mxu0 %v1047
    %1375 = vmatpush.bf16.msra.mxu0 %v1020
    %1376 = vmatpush.bf16.msra.mxu0 %v993
    %1377 = vmatpush.bf16.msra.mxu0 %v966
    %1378 = vmatpush.bf16.msra.mxu0 %v939
    %1379 = vmatmul.bf16.gmra.mxu0 %v275
    %v1380 = vpop.f32.mrf.mxu0
    %v1381 = vadd.f32 0.0, %v1380
    %v1382 = vpop.f32.mrf.mxu0
    %v1383 = vadd.f32 0.0, %v1382
    %1384 = vmatmul.bf16.gmra.mxu0 %v276
    %v1385 = vpop.f32.mrf.mxu0
    %v1386 = vadd.f32 0.0, %v1385
    %v1387 = vpop.f32.mrf.mxu0
    %v1388 = vadd.f32 0.0, %v1387
    %1389 = vmatmul.bf16.gmra.mxu0 %v277
    %v1390 = vpop.f32.mrf.mxu0
    %v1391 = vadd.f32 0.0, %v1390
    %v1392 = vpop.f32.mrf.mxu0
    %v1393 = vadd.f32 0.0, %v1392
    %1394 = vmatmul.bf16.gmra.mxu0 %v278
    %v1395 = vpop.f32.mrf.mxu0
    %v1396 = vadd.f32 0.0, %v1395
    %v1397 = vpop.f32.mrf.mxu0
    %v1398 = vadd.f32 0.0, %v1397
    %1399 = vdwg.mxu0
    %1400 = vmatpush.bf16.msra.mxu0 %v1129
    %1401 = vmatpush.bf16.msra.mxu0 %v1102
    %1402 = vmatpush.bf16.msra.mxu0 %v1075
    %1403 = vmatpush.bf16.msra.mxu0 %v1048
    %1404 = vmatpush.bf16.msra.mxu0 %v1021
    %1405 = vmatpush.bf16.msra.mxu0 %v994
    %1406 = vmatpush.bf16.msra.mxu0 %v967
    %1407 = vmatpush.bf16.msra.mxu0 %v940
    %1408 = vmatmul.bf16.gmra.mxu0 %v275
    %v1409 = vpop.f32.mrf.mxu0
    %v1410 = vadd.f32 0.0, %v1409
    %v1411 = vpop.f32.mrf.mxu0
    %v1412 = vadd.f32 0.0, %v1411
    %1413 = vmatmul.bf16.gmra.mxu0 %v276
    %v1414 = vpop.f32.mrf.mxu0
    %v1415 = vadd.f32 0.0, %v1414
    %v1416 = vpop.f32.mrf.mxu0
    %v1417 = vadd.f32 0.0, %v1416
    %1418 = vmatmul.bf16.gmra.mxu0 %v277
    %v1419 = vpop.f32.mrf.mxu0
    %v1420 = vadd.f32 0.0, %v1419
    %v1421 = vpop.f32.mrf.mxu0
    %v1422 = vadd.f32 0.0, %v1421
    %1423 = vmatmul.bf16.gmra.mxu0 %v278
    %v1424 = vpop.f32.mrf.mxu0
    %v1425 = vadd.f32 0.0, %v1424
    %v1426 = vpop.f32.mrf.mxu0
    %v1427 = vadd.f32 0.0, %v1426
    %1428 = vdwg.mxu0
    %1429 = vmatpush.bf16.msra.mxu0 %v1130
    %1430 = vmatpush.bf16.msra.mxu0 %v1103
    %1431 = vmatpush.bf16.msra.mxu0 %v1076
    %1432 = vmatpush.bf16.msra.mxu0 %v1049
    %1433 = vmatpush.bf16.msra.mxu0 %v1022
    %1434 = vmatpush.bf16.msra.mxu0 %v995
    %1435 = vmatpush.bf16.msra.mxu0 %v968
    %1436 = vmatpush.bf16.msra.mxu0 %v941
    %1437 = vmatmul.bf16.gmra.mxu0 %v275
    %v1438 = vpop.f32.mrf.mxu0
    %v1439 = vadd.f32 0.0, %v1438
    %v1440 = vpop.f32.mrf.mxu0
    %v1441 = vadd.f32 0.0, %v1440
    %1442 = vmatmul.bf16.gmra.mxu0 %v276
    %v1443 = vpop.f32.mrf.mxu0
    %v1444 = vadd.f32 0.0, %v1443
    %v1445 = vpop.f32.mrf.mxu0
    %v1446 = vadd.f32 0.0, %v1445
    %1447 = vmatmul.bf16.gmra.mxu0 %v277
    %v1448 = vpop.f32.mrf.mxu0
    %v1449 = vadd.f32 0.0, %v1448
    %v1450 = vpop.f32.mrf.mxu0
    %v1451 = vadd.f32 0.0, %v1450
    %1452 = vmatmul.bf16.gmra.mxu0 %v278
    %v1453 = vpop.f32.mrf.mxu0
    %v1454 = vadd.f32 0.0, %v1453
    %v1455 = vpop.f32.mrf.mxu0
    %v1456 = vadd.f32 0.0, %v1455
    %1457 = vdwg.mxu0
    %1458 = vmatpush.bf16.msra.mxu0 %v1131
    %1459 = vmatpush.bf16.msra.mxu0 %v1104
    %1460 = vmatpush.bf16.msra.mxu0 %v1077
    %1461 = vmatpush.bf16.msra.mxu0 %v1050
    %1462 = vmatpush.bf16.msra.mxu0 %v1023
    %1463 = vmatpush.bf16.msra.mxu0 %v996
    %1464 = vmatpush.bf16.msra.mxu0 %v969
    %1465 = vmatpush.bf16.msra.mxu0 %v942
    %1466 = vmatmul.bf16.gmra.mxu0 %v275
    %v1467 = vpop.f32.mrf.mxu0
    %v1468 = vadd.f32 0.0, %v1467
    %v1469 = vpop.f32.mrf.mxu0
    %v1470 = vadd.f32 0.0, %v1469
    %1471 = vmatmul.bf16.gmra.mxu0 %v276
    %v1472 = vpop.f32.mrf.mxu0
    %v1473 = vadd.f32 0.0, %v1472
    %v1474 = vpop.f32.mrf.mxu0
    %v1475 = vadd.f32 0.0, %v1474
    %1476 = vmatmul.bf16.gmra.mxu0 %v277
    %v1477 = vpop.f32.mrf.mxu0
    %v1478 = vadd.f32 0.0, %v1477
    %v1479 = vpop.f32.mrf.mxu0
    %v1480 = vadd.f32 0.0, %v1479
    %1481 = vmatmul.bf16.gmra.mxu0 %v278
    %v1482 = vpop.f32.mrf.mxu0
    %v1483 = vadd.f32 0.0, %v1482
    %v1484 = vpop.f32.mrf.mxu0
    %v1485 = vadd.f32 0.0, %v1484
    %1486 = vdwg.mxu0
    %1487 = vmatpush.bf16.msra.mxu0 %v1132
    %1488 = vmatpush.bf16.msra.mxu0 %v1105
    %1489 = vmatpush.bf16.msra.mxu0 %v1078
    %1490 = vmatpush.bf16.msra.mxu0 %v1051
    %1491 = vmatpush.bf16.msra.mxu0 %v1024
    %1492 = vmatpush.bf16.msra.mxu0 %v997
    %1493 = vmatpush.bf16.msra.mxu0 %v970
    %1494 = vmatpush.bf16.msra.mxu0 %v943
    %1495 = vmatmul.bf16.gmra.mxu0 %v275
    %v1496 = vpop.f32.mrf.mxu0
    %v1497 = vadd.f32 0.0, %v1496
    %v1498 = vpop.f32.mrf.mxu0
    %v1499 = vadd.f32 0.0, %v1498
    %1500 = vmatmul.bf16.gmra.mxu0 %v276
    %v1501 = vpop.f32.mrf.mxu0
    %v1502 = vadd.f32 0.0, %v1501
    %v1503 = vpop.f32.mrf.mxu0
    %v1504 = vadd.f32 0.0, %v1503
    %1505 = vmatmul.bf16.gmra.mxu0 %v277
    %v1506 = vpop.f32.mrf.mxu0
    %v1507 = vadd.f32 0.0, %v1506
    %v1508 = vpop.f32.mrf.mxu0
    %v1509 = vadd.f32 0.0, %v1508
    %1510 = vmatmul.bf16.gmra.mxu0 %v278
    %v1511 = vpop.f32.mrf.mxu0
    %v1512 = vadd.f32 0.0, %v1511
    %v1513 = vpop.f32.mrf.mxu0
    %v1514 = vadd.f32 0.0, %v1513
    %1515 = vdwg.mxu0
    %1516 = vmatpush.bf16.msra.mxu0 %v1133
    %1517 = vmatpush.bf16.msra.mxu0 %v1106
    %1518 = vmatpush.bf16.msra.mxu0 %v1079
    %1519 = vmatpush.bf16.msra.mxu0 %v1052
    %1520 = vmatpush.bf16.msra.mxu0 %v1025
    %1521 = vmatpush.bf16.msra.mxu0 %v998
    %1522 = vmatpush.bf16.msra.mxu0 %v971
    %1523 = vmatpush.bf16.msra.mxu0 %v944
    %1524 = vmatmul.bf16.gmra.mxu0 %v275
    %v1525 = vpop.f32.mrf.mxu0
    %v1526 = vadd.f32 0.0, %v1525
    %v1527 = vpop.f32.mrf.mxu0
    %v1528 = vadd.f32 0.0, %v1527
    %1529 = vmatmul.bf16.gmra.mxu0 %v276
    %v1530 = vpop.f32.mrf.mxu0
    %v1531 = vadd.f32 0.0, %v1530
    %v1532 = vpop.f32.mrf.mxu0
    %v1533 = vadd.f32 0.0, %v1532
    %1534 = vmatmul.bf16.gmra.mxu0 %v277
    %v1535 = vpop.f32.mrf.mxu0
    %v1536 = vadd.f32 0.0, %v1535
    %v1537 = vpop.f32.mrf.mxu0
    %v1538 = vadd.f32 0.0, %v1537
    %1539 = vmatmul.bf16.gmra.mxu0 %v278
    %v1540 = vpop.f32.mrf.mxu0
    %v1541 = vadd.f32 0.0, %v1540
    %v1542 = vpop.f32.mrf.mxu0
    %v1543 = vadd.f32 0.0, %v1542
    %1544 = vdwg.mxu0
    %1545 = vmatpush.bf16.msra.mxu0 %v1134
    %1546 = vmatpush.bf16.msra.mxu0 %v1107
    %1547 = vmatpush.bf16.msra.mxu0 %v1080
    %1548 = vmatpush.bf16.msra.mxu0 %v1053
    %1549 = vmatpush.bf16.msra.mxu0 %v1026
    %1550 = vmatpush.bf16.msra.mxu0 %v999
    %1551 = vmatpush.bf16.msra.mxu0 %v972
    %1552 = vmatpush.bf16.msra.mxu0 %v945
    %1553 = vmatmul.bf16.gmra.mxu0 %v275
    %v1554 = vpop.f32.mrf.mxu0
    %v1555 = vadd.f32 0.0, %v1554
    %v1556 = vpop.f32.mrf.mxu0
    %v1557 = vadd.f32 0.0, %v1556
    %1558 = vmatmul.bf16.gmra.mxu0 %v276
    %v1559 = vpop.f32.mrf.mxu0
    %v1560 = vadd.f32 0.0, %v1559
    %v1561 = vpop.f32.mrf.mxu0
    %v1562 = vadd.f32 0.0, %v1561
    %1563 = vmatmul.bf16.gmra.mxu0 %v277
    %v1564 = vpop.f32.mrf.mxu0
    %v1565 = vadd.f32 0.0, %v1564
    %v1566 = vpop.f32.mrf.mxu0
    %v1567 = vadd.f32 0.0, %v1566
    %1568 = vmatmul.bf16.gmra.mxu0 %v278
    %v1569 = vpop.f32.mrf.mxu0
    %v1570 = vadd.f32 0.0, %v1569
    %v1571 = vpop.f32.mrf.mxu0
    %v1572 = vadd.f32 0.0, %v1571
    %1573 = vdwg.mxu0
    %1574 = vmatpush.bf16.msra.mxu0 %v1135
    %1575 = vmatpush.bf16.msra.mxu0 %v1108
    %1576 = vmatpush.bf16.msra.mxu0 %v1081
    %1577 = vmatpush.bf16.msra.mxu0 %v1054
    %1578 = vmatpush.bf16.msra.mxu0 %v1027
    %1579 = vmatpush.bf16.msra.mxu0 %v1000
    %1580 = vmatpush.bf16.msra.mxu0 %v973
    %1581 = vmatpush.bf16.msra.mxu0 %v946
    %1582 = vmatmul.bf16.gmra.mxu0 %v275
    %v1583 = vpop.f32.mrf.mxu0
    %v1584 = vadd.f32 0.0, %v1583
    %v1585 = vpop.f32.mrf.mxu0
    %v1586 = vadd.f32 0.0, %v1585
    %1587 = vmatmul.bf16.gmra.mxu0 %v276
    %v1588 = vpop.f32.mrf.mxu0
    %v1589 = vadd.f32 0.0, %v1588
    %v1590 = vpop.f32.mrf.mxu0
    %v1591 = vadd.f32 0.0, %v1590
    %1592 = vmatmul.bf16.gmra.mxu0 %v277
    %v1593 = vpop.f32.mrf.mxu0
    %v1594 = vadd.f32 0.0, %v1593
    %v1595 = vpop.f32.mrf.mxu0
    %v1596 = vadd.f32 0.0, %v1595
    %1597 = vmatmul.bf16.gmra.mxu0 %v278
    %v1598 = vpop.f32.mrf.mxu0
    %v1599 = vadd.f32 0.0, %v1598
    %v1600 = vpop.f32.mrf.mxu0
    %v1601 = vadd.f32 0.0, %v1600
    %1602 = vdwg.mxu0
    %1603 = vmatpush.bf16.msra.mxu0 %v1136
    %1604 = vmatpush.bf16.msra.mxu0 %v1109
    %1605 = vmatpush.bf16.msra.mxu0 %v1082
    %1606 = vmatpush.bf16.msra.mxu0 %v1055
    %1607 = vmatpush.bf16.msra.mxu0 %v1028
    %1608 = vmatpush.bf16.msra.mxu0 %v1001
    %1609 = vmatpush.bf16.msra.mxu0 %v974
    %1610 = vmatpush.bf16.msra.mxu0 %v947
    %1611 = vmatmul.bf16.gmra.mxu0 %v275
    %v1612 = vpop.f32.mrf.mxu0
    %v1613 = vadd.f32 0.0, %v1612
    %v1614 = vpop.f32.mrf.mxu0
    %v1615 = vadd.f32 0.0, %v1614
    %1616 = vmatmul.bf16.gmra.mxu0 %v276
    %v1617 = vpop.f32.mrf.mxu0
    %v1618 = vadd.f32 0.0, %v1617
    %v1619 = vpop.f32.mrf.mxu0
    %v1620 = vadd.f32 0.0, %v1619
    %1621 = vmatmul.bf16.gmra.mxu0 %v277
    %v1622 = vpop.f32.mrf.mxu0
    %v1623 = vadd.f32 0.0, %v1622
    %v1624 = vpop.f32.mrf.mxu0
    %v1625 = vadd.f32 0.0, %v1624
    %1626 = vmatmul.bf16.gmra.mxu0 %v278
    %v1627 = vpop.f32.mrf.mxu0
    %v1628 = vadd.f32 0.0, %v1627
    %v1629 = vpop.f32.mrf.mxu0
    %v1630 = vadd.f32 0.0, %v1629
    %1631 = vdwg.mxu0
    %1632 = vmatpush.bf16.msra.mxu0 %v1137
    %1633 = vmatpush.bf16.msra.mxu0 %v1110
    %1634 = vmatpush.bf16.msra.mxu0 %v1083
    %1635 = vmatpush.bf16.msra.mxu0 %v1056
    %1636 = vmatpush.bf16.msra.mxu0 %v1029
    %1637 = vmatpush.bf16.msra.mxu0 %v1002
    %1638 = vmatpush.bf16.msra.mxu0 %v975
    %1639 = vmatpush.bf16.msra.mxu0 %v948
    %1640 = vmatmul.bf16.gmra.mxu0 %v275
    %v1641 = vpop.f32.mrf.mxu0
    %v1642 = vadd.f32 0.0, %v1641
    %v1643 = vpop.f32.mrf.mxu0
    %v1644 = vadd.f32 0.0, %v1643
    %1645 = vmatmul.bf16.gmra.mxu0 %v276
    %v1646 = vpop.f32.mrf.mxu0
    %v1647 = vadd.f32 0.0, %v1646
    %v1648 = vpop.f32.mrf.mxu0
    %v1649 = vadd.f32 0.0, %v1648
    %1650 = vmatmul.bf16.gmra.mxu0 %v277
    %v1651 = vpop.f32.mrf.mxu0
    %v1652 = vadd.f32 0.0, %v1651
    %v1653 = vpop.f32.mrf.mxu0
    %v1654 = vadd.f32 0.0, %v1653
    %1655 = vmatmul.bf16.gmra.mxu0 %v278
    %v1656 = vpop.f32.mrf.mxu0
    %v1657 = vadd.f32 0.0, %v1656
    %v1658 = vpop.f32.mrf.mxu0
    %v1659 = vadd.f32 0.0, %v1658
    %1660 = vdwg.mxu0
    %1661 = vmatpush.bf16.msra.mxu0 %v1138
    %1662 = vmatpush.bf16.msra.mxu0 %v1111
    %1663 = vmatpush.bf16.msra.mxu0 %v1084
    %1664 = vmatpush.bf16.msra.mxu0 %v1057
    %1665 = vmatpush.bf16.msra.mxu0 %v1030
    %1666 = vmatpush.bf16.msra.mxu0 %v1003
    %1667 = vmatpush.bf16.msra.mxu0 %v976
    %1668 = vmatpush.bf16.msra.mxu0 %v949
    %1669 = vmatmul.bf16.gmra.mxu0 %v275
    %v1670 = vpop.f32.mrf.mxu0
    %v1671 = vadd.f32 0.0, %v1670
    %v1672 = vpop.f32.mrf.mxu0
    %v1673 = vadd.f32 0.0, %v1672
    %1674 = vmatmul.bf16.gmra.mxu0 %v276
    %v1675 = vpop.f32.mrf.mxu0
    %v1676 = vadd.f32 0.0, %v1675
    %v1677 = vpop.f32.mrf.mxu0
    %v1678 = vadd.f32 0.0, %v1677
    %1679 = vmatmul.bf16.gmra.mxu0 %v277
    %v1680 = vpop.f32.mrf.mxu0
    %v1681 = vadd.f32 0.0, %v1680
    %v1682 = vpop.f32.mrf.mxu0
    %v1683 = vadd.f32 0.0, %v1682
    %1684 = vmatmul.bf16.gmra.mxu0 %v278
    %v1685 = vpop.f32.mrf.mxu0
    %v1686 = vadd.f32 0.0, %v1685
    %v1687 = vpop.f32.mrf.mxu0
    %v1688 = vadd.f32 0.0, %v1687
    %1689 = vdwg.mxu0
    %1690 = vmatpush.bf16.msra.mxu0 %v1139
    %1691 = vmatpush.bf16.msra.mxu0 %v1112
    %1692 = vmatpush.bf16.msra.mxu0 %v1085
    %1693 = vmatpush.bf16.msra.mxu0 %v1058
    %1694 = vmatpush.bf16.msra.mxu0 %v1031
    %1695 = vmatpush.bf16.msra.mxu0 %v1004
    %1696 = vmatpush.bf16.msra.mxu0 %v977
    %1697 = vmatpush.bf16.msra.mxu0 %v950
    %1698 = vmatmul.bf16.gmra.mxu0 %v275
    %v1699 = vpop.f32.mrf.mxu0
    %v1700 = vadd.f32 0.0, %v1699
    %v1701 = vpop.f32.mrf.mxu0
    %v1702 = vadd.f32 0.0, %v1701
    %1703 = vmatmul.bf16.gmra.mxu0 %v276
    %v1704 = vpop.f32.mrf.mxu0
    %v1705 = vadd.f32 0.0, %v1704
    %v1706 = vpop.f32.mrf.mxu0
    %v1707 = vadd.f32 0.0, %v1706
    %1708 = vmatmul.bf16.gmra.mxu0 %v277
    %v1709 = vpop.f32.mrf.mxu0
    %v1710 = vadd.f32 0.0, %v1709
    %v1711 = vpop.f32.mrf.mxu0
    %v1712 = vadd.f32 0.0, %v1711
    %1713 = vmatmul.bf16.gmra.mxu0 %v278
    %v1714 = vpop.f32.mrf.mxu0
    %v1715 = vadd.f32 0.0, %v1714
    %v1716 = vpop.f32.mrf.mxu0
    %v1717 = vadd.f32 0.0, %v1716
    %1718 = vdwg.mxu0
    %1719 = vmatpush.bf16.msra.mxu0 %v1140
    %1720 = vmatpush.bf16.msra.mxu0 %v1113
    %1721 = vmatpush.bf16.msra.mxu0 %v1086
    %1722 = vmatpush.bf16.msra.mxu0 %v1059
    %1723 = vmatpush.bf16.msra.mxu0 %v1032
    %1724 = vmatpush.bf16.msra.mxu0 %v1005
    %1725 = vmatpush.bf16.msra.mxu0 %v978
    %1726 = vmatpush.bf16.msra.mxu0 %v951
    %1727 = vmatmul.bf16.gmra.mxu0 %v275
    %v1728 = vpop.f32.mrf.mxu0
    %v1729 = vadd.f32 0.0, %v1728
    %v1730 = vpop.f32.mrf.mxu0
    %v1731 = vadd.f32 0.0, %v1730
    %1732 = vmatmul.bf16.gmra.mxu0 %v276
    %v1733 = vpop.f32.mrf.mxu0
    %v1734 = vadd.f32 0.0, %v1733
    %v1735 = vpop.f32.mrf.mxu0
    %v1736 = vadd.f32 0.0, %v1735
    %1737 = vmatmul.bf16.gmra.mxu0 %v277
    %v1738 = vpop.f32.mrf.mxu0
    %v1739 = vadd.f32 0.0, %v1738
    %v1740 = vpop.f32.mrf.mxu0
    %v1741 = vadd.f32 0.0, %v1740
    %1742 = vmatmul.bf16.gmra.mxu0 %v278
    %v1743 = vpop.f32.mrf.mxu0
    %v1744 = vadd.f32 0.0, %v1743
    %v1745 = vpop.f32.mrf.mxu0
    %v1746 = vadd.f32 0.0, %v1745
    %1747 = vdwg.mxu0
    %1748 = vmatpush.bf16.msra.mxu0 %v1141
    %1749 = vmatpush.bf16.msra.mxu0 %v1114
    %1750 = vmatpush.bf16.msra.mxu0 %v1087
    %1751 = vmatpush.bf16.msra.mxu0 %v1060
    %1752 = vmatpush.bf16.msra.mxu0 %v1033
    %1753 = vmatpush.bf16.msra.mxu0 %v1006
    %1754 = vmatpush.bf16.msra.mxu0 %v979
    %1755 = vmatpush.bf16.msra.mxu0 %v952
    %1756 = vmatmul.bf16.gmra.mxu0 %v275
    %v1757 = vpop.f32.mrf.mxu0
    %v1758 = vadd.f32 0.0, %v1757
    %v1759 = vpop.f32.mrf.mxu0
    %v1760 = vadd.f32 0.0, %v1759
    %1761 = vmatmul.bf16.gmra.mxu0 %v276
    %v1762 = vpop.f32.mrf.mxu0
    %v1763 = vadd.f32 0.0, %v1762
    %v1764 = vpop.f32.mrf.mxu0
    %v1765 = vadd.f32 0.0, %v1764
    %1766 = vmatmul.bf16.gmra.mxu0 %v277
    %v1767 = vpop.f32.mrf.mxu0
    %v1768 = vadd.f32 0.0, %v1767
    %v1769 = vpop.f32.mrf.mxu0
    %v1770 = vadd.f32 0.0, %v1769
    %1771 = vmatmul.bf16.gmra.mxu0 %v278
    %v1772 = vpop.f32.mrf.mxu0
    %v1773 = vadd.f32 0.0, %v1772
    %v1774 = vpop.f32.mrf.mxu0
    %v1775 = vadd.f32 0.0, %v1774
    %1776 = vdwg.mxu0
    %1777 = vmatpush.bf16.msra.mxu0 %v1142
    %1778 = vmatpush.bf16.msra.mxu0 %v1115
    %1779 = vmatpush.bf16.msra.mxu0 %v1088
    %1780 = vmatpush.bf16.msra.mxu0 %v1061
    %1781 = vmatpush.bf16.msra.mxu0 %v1034
    %1782 = vmatpush.bf16.msra.mxu0 %v1007
    %1783 = vmatpush.bf16.msra.mxu0 %v980
    %1784 = vmatpush.bf16.msra.mxu0 %v953
    %1785 = vmatmul.bf16.gmra.mxu0 %v275
    %v1786 = vpop.f32.mrf.mxu0
    %v1787 = vadd.f32 0.0, %v1786
    %v1788 = vpop.f32.mrf.mxu0
    %v1789 = vadd.f32 0.0, %v1788
    %1790 = vmatmul.bf16.gmra.mxu0 %v276
    %v1791 = vpop.f32.mrf.mxu0
    %v1792 = vadd.f32 0.0, %v1791
    %v1793 = vpop.f32.mrf.mxu0
    %v1794 = vadd.f32 0.0, %v1793
    %1795 = vmatmul.bf16.gmra.mxu0 %v277
    %v1796 = vpop.f32.mrf.mxu0
    %v1797 = vadd.f32 0.0, %v1796
    %v1798 = vpop.f32.mrf.mxu0
    %v1799 = vadd.f32 0.0, %v1798
    %1800 = vmatmul.bf16.gmra.mxu0 %v278
    %v1801 = vpop.f32.mrf.mxu0
    %v1802 = vadd.f32 0.0, %v1801
    %v1803 = vpop.f32.mrf.mxu0
    %v1804 = vadd.f32 0.0, %v1803
    %1805 = vdwg.mxu0
    %1806 = vmatpush.bf16.msra.mxu0 %v1143
    %1807 = vmatpush.bf16.msra.mxu0 %v1116
    %1808 = vmatpush.bf16.msra.mxu0 %v1089
    %1809 = vmatpush.bf16.msra.mxu0 %v1062
    %1810 = vmatpush.bf16.msra.mxu0 %v1035
    %1811 = vmatpush.bf16.msra.mxu0 %v1008
    %1812 = vmatpush.bf16.msra.mxu0 %v981
    %1813 = vmatpush.bf16.msra.mxu0 %v954
    %1814 = vmatmul.bf16.gmra.mxu0 %v275
    %v1815 = vpop.f32.mrf.mxu0
    %v1816 = vadd.f32 0.0, %v1815
    %v1817 = vpop.f32.mrf.mxu0
    %v1818 = vadd.f32 0.0, %v1817
    %1819 = vmatmul.bf16.gmra.mxu0 %v276
    %v1820 = vpop.f32.mrf.mxu0
    %v1821 = vadd.f32 0.0, %v1820
    %v1822 = vpop.f32.mrf.mxu0
    %v1823 = vadd.f32 0.0, %v1822
    %1824 = vmatmul.bf16.gmra.mxu0 %v277
    %v1825 = vpop.f32.mrf.mxu0
    %v1826 = vadd.f32 0.0, %v1825
    %v1827 = vpop.f32.mrf.mxu0
    %v1828 = vadd.f32 0.0, %v1827
    %1829 = vmatmul.bf16.gmra.mxu0 %v278
    %v1830 = vpop.f32.mrf.mxu0
    %v1831 = vadd.f32 0.0, %v1830
    %v1832 = vpop.f32.mrf.mxu0
    %v1833 = vadd.f32 0.0, %v1832
    %1834 = vdwg.mxu0
    %1835 = vmatpush.bf16.msra.mxu0 %v1144
    %1836 = vmatpush.bf16.msra.mxu0 %v1117
    %1837 = vmatpush.bf16.msra.mxu0 %v1090
    %1838 = vmatpush.bf16.msra.mxu0 %v1063
    %1839 = vmatpush.bf16.msra.mxu0 %v1036
    %1840 = vmatpush.bf16.msra.mxu0 %v1009
    %1841 = vmatpush.bf16.msra.mxu0 %v982
    %1842 = vmatpush.bf16.msra.mxu0 %v955
    %1843 = vmatmul.bf16.gmra.mxu0 %v275
    %v1844 = vpop.f32.mrf.mxu0
    %v1845 = vadd.f32 0.0, %v1844
    %v1846 = vpop.f32.mrf.mxu0
    %v1847 = vadd.f32 0.0, %v1846
    %1848 = vmatmul.bf16.gmra.mxu0 %v276
    %v1849 = vpop.f32.mrf.mxu0
    %v1850 = vadd.f32 0.0, %v1849
    %v1851 = vpop.f32.mrf.mxu0
    %v1852 = vadd.f32 0.0, %v1851
    %1853 = vmatmul.bf16.gmra.mxu0 %v277
    %v1854 = vpop.f32.mrf.mxu0
    %v1855 = vadd.f32 0.0, %v1854
    %v1856 = vpop.f32.mrf.mxu0
    %v1857 = vadd.f32 0.0, %v1856
    %1858 = vmatmul.bf16.gmra.mxu0 %v278
    %v1859 = vpop.f32.mrf.mxu0
    %v1860 = vadd.f32 0.0, %v1859
    %v1861 = vpop.f32.mrf.mxu0
    %v1862 = vadd.f32 0.0, %v1861
    %1863 = vdwg.mxu0
    %1864 = vmatpush.bf16.msra.mxu0 %v1145
    %1865 = vmatpush.bf16.msra.mxu0 %v1118
    %1866 = vmatpush.bf16.msra.mxu0 %v1091
    %1867 = vmatpush.bf16.msra.mxu0 %v1064
    %1868 = vmatpush.bf16.msra.mxu0 %v1037
    %1869 = vmatpush.bf16.msra.mxu0 %v1010
    %1870 = vmatpush.bf16.msra.mxu0 %v983
    %1871 = vmatpush.bf16.msra.mxu0 %v956
    %1872 = vmatmul.bf16.gmra.mxu0 %v275
    %v1873 = vpop.f32.mrf.mxu0
    %v1874 = vadd.f32 0.0, %v1873
    %v1875 = vpop.f32.mrf.mxu0
    %v1876 = vadd.f32 0.0, %v1875
    %1877 = vmatmul.bf16.gmra.mxu0 %v276
    %v1878 = vpop.f32.mrf.mxu0
    %v1879 = vadd.f32 0.0, %v1878
    %v1880 = vpop.f32.mrf.mxu0
    %v1881 = vadd.f32 0.0, %v1880
    %1882 = vmatmul.bf16.gmra.mxu0 %v277
    %v1883 = vpop.f32.mrf.mxu0
    %v1884 = vadd.f32 0.0, %v1883
    %v1885 = vpop.f32.mrf.mxu0
    %v1886 = vadd.f32 0.0, %v1885
    %1887 = vmatmul.bf16.gmra.mxu0 %v278
    %v1888 = vpop.f32.mrf.mxu0
    %v1889 = vadd.f32 0.0, %v1888
    %v1890 = vpop.f32.mrf.mxu0
    %v1891 = vadd.f32 0.0, %v1890
    %1892 = vdwg.mxu0
    %1893 = vmatpush.bf16.msra.mxu0 %v1146
    %1894 = vmatpush.bf16.msra.mxu0 %v1119
    %1895 = vmatpush.bf16.msra.mxu0 %v1092
    %1896 = vmatpush.bf16.msra.mxu0 %v1065
    %1897 = vmatpush.bf16.msra.mxu0 %v1038
    %1898 = vmatpush.bf16.msra.mxu0 %v1011
    %1899 = vmatpush.bf16.msra.mxu0 %v984
    %1900 = vmatpush.bf16.msra.mxu0 %v957
    %1901 = vmatmul.bf16.gmra.mxu0 %v275
    %v1902 = vpop.f32.mrf.mxu0
    %v1903 = vadd.f32 0.0, %v1902
    %v1904 = vpop.f32.mrf.mxu0
    %v1905 = vadd.f32 0.0, %v1904
    %1906 = vmatmul.bf16.gmra.mxu0 %v276
    %v1907 = vpop.f32.mrf.mxu0
    %v1908 = vadd.f32 0.0, %v1907
    %v1909 = vpop.f32.mrf.mxu0
    %v1910 = vadd.f32 0.0, %v1909
    %1911 = vmatmul.bf16.gmra.mxu0 %v277
    %v1912 = vpop.f32.mrf.mxu0
    %v1913 = vadd.f32 0.0, %v1912
    %v1914 = vpop.f32.mrf.mxu0
    %v1915 = vadd.f32 0.0, %v1914
    %1916 = vmatmul.bf16.gmra.mxu0 %v278
    %v1917 = vpop.f32.mrf.mxu0
    %v1918 = vadd.f32 0.0, %v1917
    %v1919 = vpop.f32.mrf.mxu0
    %v1920 = vadd.f32 0.0, %v1919
    %1921 = vdwg.mxu0
    %1922 = vmatpush.bf16.msra.mxu0 %v1147
    %1923 = vmatpush.bf16.msra.mxu0 %v1120
    %1924 = vmatpush.bf16.msra.mxu0 %v1093
    %1925 = vmatpush.bf16.msra.mxu0 %v1066
    %1926 = vmatpush.bf16.msra.mxu0 %v1039
    %1927 = vmatpush.bf16.msra.mxu0 %v1012
    %1928 = vmatpush.bf16.msra.mxu0 %v985
    %1929 = vmatpush.bf16.msra.mxu0 %v958
    %1930 = vmatmul.bf16.gmra.mxu0 %v275
    %v1931 = vpop.f32.mrf.mxu0
    %v1932 = vadd.f32 0.0, %v1931
    %v1933 = vpop.f32.mrf.mxu0
    %v1934 = vadd.f32 0.0, %v1933
    %1935 = vmatmul.bf16.gmra.mxu0 %v276
    %v1936 = vpop.f32.mrf.mxu0
    %v1937 = vadd.f32 0.0, %v1936
    %v1938 = vpop.f32.mrf.mxu0
    %v1939 = vadd.f32 0.0, %v1938
    %1940 = vmatmul.bf16.gmra.mxu0 %v277
    %v1941 = vpop.f32.mrf.mxu0
    %v1942 = vadd.f32 0.0, %v1941
    %v1943 = vpop.f32.mrf.mxu0
    %v1944 = vadd.f32 0.0, %v1943
    %1945 = vmatmul.bf16.gmra.mxu0 %v278
    %v1946 = vpop.f32.mrf.mxu0
    %v1947 = vadd.f32 0.0, %v1946
    %v1948 = vpop.f32.mrf.mxu0
    %v1949 = vadd.f32 0.0, %v1948
    %1950 = vdwg.mxu0
    %1951 = vmatpush.bf16.msra.mxu0 %v1148
    %1952 = vmatpush.bf16.msra.mxu0 %v1121
    %1953 = vmatpush.bf16.msra.mxu0 %v1094
    %1954 = vmatpush.bf16.msra.mxu0 %v1067
    %1955 = vmatpush.bf16.msra.mxu0 %v1040
    %1956 = vmatpush.bf16.msra.mxu0 %v1013
    %1957 = vmatpush.bf16.msra.mxu0 %v986
    %1958 = vmatpush.bf16.msra.mxu0 %v959
    %1959 = vmatmul.bf16.gmra.mxu0 %v275
    %v1960 = vpop.f32.mrf.mxu0
    %v1961 = vadd.f32 0.0, %v1960
    %v1962 = vpop.f32.mrf.mxu0
    %v1963 = vadd.f32 0.0, %v1962
    %1964 = vmatmul.bf16.gmra.mxu0 %v276
    %v1965 = vpop.f32.mrf.mxu0
    %v1966 = vadd.f32 0.0, %v1965
    %v1967 = vpop.f32.mrf.mxu0
    %v1968 = vadd.f32 0.0, %v1967
    %1969 = vmatmul.bf16.gmra.mxu0 %v277
    %v1970 = vpop.f32.mrf.mxu0
    %v1971 = vadd.f32 0.0, %v1970
    %v1972 = vpop.f32.mrf.mxu0
    %v1973 = vadd.f32 0.0, %v1972
    %1974 = vmatmul.bf16.gmra.mxu0 %v278
    %v1975 = vpop.f32.mrf.mxu0
    %v1976 = vadd.f32 0.0, %v1975
    %v1977 = vpop.f32.mrf.mxu0
    %v1978 = vadd.f32 0.0, %v1977
    %1979 = vdwg.mxu0
    %1980 = vmatpush.bf16.msra.mxu0 %v1149
    %1981 = vmatpush.bf16.msra.mxu0 %v1122
    %1982 = vmatpush.bf16.msra.mxu0 %v1095
    %1983 = vmatpush.bf16.msra.mxu0 %v1068
    %1984 = vmatpush.bf16.msra.mxu0 %v1041
    %1985 = vmatpush.bf16.msra.mxu0 %v1014
    %1986 = vmatpush.bf16.msra.mxu0 %v987
    %1987 = vmatpush.bf16.msra.mxu0 %v960
    %1988 = vmatmul.bf16.gmra.mxu0 %v275
    %v1989 = vpop.f32.mrf.mxu0
    %v1990 = vadd.f32 0.0, %v1989
    %v1991 = vpop.f32.mrf.mxu0
    %v1992 = vadd.f32 0.0, %v1991
    %1993 = vmatmul.bf16.gmra.mxu0 %v276
    %v1994 = vpop.f32.mrf.mxu0
    %v1995 = vadd.f32 0.0, %v1994
    %v1996 = vpop.f32.mrf.mxu0
    %v1997 = vadd.f32 0.0, %v1996
    %1998 = vmatmul.bf16.gmra.mxu0 %v277
    %v1999 = vpop.f32.mrf.mxu0
    %v2000 = vadd.f32 0.0, %v1999
    %v2001 = vpop.f32.mrf.mxu0
    %v2002 = vadd.f32 0.0, %v2001
    %2003 = vmatmul.bf16.gmra.mxu0 %v278
    %v2004 = vpop.f32.mrf.mxu0
    %v2005 = vadd.f32 0.0, %v2004
    %v2006 = vpop.f32.mrf.mxu0
    %v2007 = vadd.f32 0.0, %v2006
    %2008 = vdwg.mxu0
    %2009 = vmatpush.bf16.msra.mxu0 %v1150
    %2010 = vmatpush.bf16.msra.mxu0 %v1123
    %2011 = vmatpush.bf16.msra.mxu0 %v1096
    %2012 = vmatpush.bf16.msra.mxu0 %v1069
    %2013 = vmatpush.bf16.msra.mxu0 %v1042
    %2014 = vmatpush.bf16.msra.mxu0 %v1015
    %2015 = vmatpush.bf16.msra.mxu0 %v988
    %2016 = vmatpush.bf16.msra.mxu0 %v961
    %2017 = vmatmul.bf16.gmra.mxu0 %v275
    %v2018 = vpop.f32.mrf.mxu0
    %v2019 = vadd.f32 0.0, %v2018
    %v2020 = vpop.f32.mrf.mxu0
    %v2021 = vadd.f32 0.0, %v2020
    %2022 = vmatmul.bf16.gmra.mxu0 %v276
    %v2023 = vpop.f32.mrf.mxu0
    %v2024 = vadd.f32 0.0, %v2023
    %v2025 = vpop.f32.mrf.mxu0
    %v2026 = vadd.f32 0.0, %v2025
    %2027 = vmatmul.bf16.gmra.mxu0 %v277
    %v2028 = vpop.f32.mrf.mxu0
    %v2029 = vadd.f32 0.0, %v2028
    %v2030 = vpop.f32.mrf.mxu0
    %v2031 = vadd.f32 0.0, %v2030
    %2032 = vmatmul.bf16.gmra.mxu0 %v278
    %v2033 = vpop.f32.mrf.mxu0
    %v2034 = vadd.f32 0.0, %v2033
    %v2035 = vpop.f32.mrf.mxu0
    %v2036 = vadd.f32 0.0, %v2035
    %2037 = vdwg.mxu0
    %2038 = vmatpush.bf16.msra.mxu0 %v1151
    %2039 = vmatpush.bf16.msra.mxu0 %v1124
    %2040 = vmatpush.bf16.msra.mxu0 %v1097
    %2041 = vmatpush.bf16.msra.mxu0 %v1070
    %2042 = vmatpush.bf16.msra.mxu0 %v1043
    %2043 = vmatpush.bf16.msra.mxu0 %v1016
    %2044 = vmatpush.bf16.msra.mxu0 %v989
    %2045 = vmatpush.bf16.msra.mxu0 %v962
    %2046 = vmatmul.bf16.gmra.mxu0 %v275
    %v2047 = vpop.f32.mrf.mxu0
    %v2048 = vadd.f32 0.0, %v2047
    %v2049 = vpop.f32.mrf.mxu0
    %v2050 = vadd.f32 0.0, %v2049
    %2051 = vmatmul.bf16.gmra.mxu0 %v276
    %v2052 = vpop.f32.mrf.mxu0
    %v2053 = vadd.f32 0.0, %v2052
    %v2054 = vpop.f32.mrf.mxu0
    %v2055 = vadd.f32 0.0, %v2054
    %2056 = vmatmul.bf16.gmra.mxu0 %v277
    %v2057 = vpop.f32.mrf.mxu0
    %v2058 = vadd.f32 0.0, %v2057
    %v2059 = vpop.f32.mrf.mxu0
    %v2060 = vadd.f32 0.0, %v2059
    %2061 = vmatmul.bf16.gmra.mxu0 %v278
    %v2062 = vpop.f32.mrf.mxu0
    %v2063 = vadd.f32 0.0, %v2062
    %v2064 = vpop.f32.mrf.mxu0
    %v2065 = vadd.f32 0.0, %v2064
    %2066 = vdwg.mxu0
    %2067 = vmatpush.bf16.msra.mxu0 %v1152
    %2068 = vmatpush.bf16.msra.mxu0 %v1125
    %2069 = vmatpush.bf16.msra.mxu0 %v1098
    %2070 = vmatpush.bf16.msra.mxu0 %v1071
    %2071 = vmatpush.bf16.msra.mxu0 %v1044
    %2072 = vmatpush.bf16.msra.mxu0 %v1017
    %2073 = vmatpush.bf16.msra.mxu0 %v990
    %2074 = vmatpush.bf16.msra.mxu0 %v963
    %2075 = vmatmul.bf16.gmra.mxu0 %v275
    %v2076 = vpop.f32.mrf.mxu0
    %v2077 = vadd.f32 0.0, %v2076
    %v2078 = vpop.f32.mrf.mxu0
    %v2079 = vadd.f32 0.0, %v2078
    %2080 = vmatmul.bf16.gmra.mxu0 %v276
    %v2081 = vpop.f32.mrf.mxu0
    %v2082 = vadd.f32 0.0, %v2081
    %v2083 = vpop.f32.mrf.mxu0
    %v2084 = vadd.f32 0.0, %v2083
    %2085 = vmatmul.bf16.gmra.mxu0 %v277
    %v2086 = vpop.f32.mrf.mxu0
    %v2087 = vadd.f32 0.0, %v2086
    %v2088 = vpop.f32.mrf.mxu0
    %v2089 = vadd.f32 0.0, %v2088
    %2090 = vmatmul.bf16.gmra.mxu0 %v278
    %v2091 = vpop.f32.mrf.mxu0
    %v2092 = vadd.f32 0.0, %v2091
    %v2093 = vpop.f32.mrf.mxu0
    %v2094 = vadd.f32 0.0, %v2093
    %2095 = vdwg.mxu0
    %2096 = vmatpush.bf16.msra.mxu0 %v1153
    %2097 = vmatpush.bf16.msra.mxu0 %v1126
    %2098 = vmatpush.bf16.msra.mxu0 %v1099
    %2099 = vmatpush.bf16.msra.mxu0 %v1072
    %2100 = vmatpush.bf16.msra.mxu0 %v1045
    %2101 = vmatpush.bf16.msra.mxu0 %v1018
    %2102 = vmatpush.bf16.msra.mxu0 %v991
    %2103 = vmatpush.bf16.msra.mxu0 %v964
    %2104 = vmatmul.bf16.gmra.mxu0 %v275
    %v2105 = vpop.f32.mrf.mxu0
    %v2106 = vadd.f32 0.0, %v2105
    %v2107 = vpop.f32.mrf.mxu0
    %v2108 = vadd.f32 0.0, %v2107
    %2109 = vmatmul.bf16.gmra.mxu0 %v276
    %v2110 = vpop.f32.mrf.mxu0
    %v2111 = vadd.f32 0.0, %v2110
    %v2112 = vpop.f32.mrf.mxu0
    %v2113 = vadd.f32 0.0, %v2112
    %2114 = vmatmul.bf16.gmra.mxu0 %v277
    %v2115 = vpop.f32.mrf.mxu0
    %v2116 = vadd.f32 0.0, %v2115
    %v2117 = vpop.f32.mrf.mxu0
    %v2118 = vadd.f32 0.0, %v2117
    %2119 = vmatmul.bf16.gmra.mxu0 %v278
    %v2120 = vpop.f32.mrf.mxu0
    %v2121 = vadd.f32 0.0, %v2120
    %v2122 = vpop.f32.mrf.mxu0
    %v2123 = vadd.f32 0.0, %v2122
    %2124 = vdwg.mxu0
    %2125 = vmatpush.bf16.msra.mxu0 %v1154
    %2126 = vmatpush.bf16.msra.mxu0 %v1127
    %2127 = vmatpush.bf16.msra.mxu0 %v1100
    %2128 = vmatpush.bf16.msra.mxu0 %v1073
    %2129 = vmatpush.bf16.msra.mxu0 %v1046
    %2130 = vmatpush.bf16.msra.mxu0 %v1019
    %2131 = vmatpush.bf16.msra.mxu0 %v992
    %2132 = vmatpush.bf16.msra.mxu0 %v965
    %2133 = vmatmul.bf16.gmra.mxu0 %v275
    %v2134 = vpop.f32.mrf.mxu0
    %v2135 = vadd.f32 0.0, %v2134
    %v2136 = vpop.f32.mrf.mxu0
    %v2137 = vadd.f32 0.0, %v2136
    %2138 = vmatmul.bf16.gmra.mxu0 %v276
    %v2139 = vpop.f32.mrf.mxu0
    %v2140 = vadd.f32 0.0, %v2139
    %v2141 = vpop.f32.mrf.mxu0
    %v2142 = vadd.f32 0.0, %v2141
    %2143 = vmatmul.bf16.gmra.mxu0 %v277
    %v2144 = vpop.f32.mrf.mxu0
    %v2145 = vadd.f32 0.0, %v2144
    %v2146 = vpop.f32.mrf.mxu0
    %v2147 = vadd.f32 0.0, %v2146
    %2148 = vmatmul.bf16.gmra.mxu0 %v278
    %v2149 = vpop.f32.mrf.mxu0
    %v2150 = vadd.f32 0.0, %v2149
    %v2151 = vpop.f32.mrf.mxu0
    %v2152 = vadd.f32 0.0, %v2151
    %2153 = vdwg.mxu0
    %2154 = vst [vmem:[%s2] sm:$0xff] %v1381
    %2155 = vst [vmem:[%s2 + $0x8] sm:$0xff] %v1410
    %2156 = vst [vmem:[%s2 + $0x10] sm:$0xff] %v1439
    %2157 = vst [vmem:[%s2 + $0x18] sm:$0xff] %v1468
    %2158 = vst [vmem:[%s2 + $0x20] sm:$0xff] %v1497
    %2159 = vst [vmem:[%s2 + $0x28] sm:$0xff] %v1526
    %2160 = vst [vmem:[%s2 + $0x30] sm:$0xff] %v1555
    %2161 = vst [vmem:[%s2 + $0x38] sm:$0xff] %v1584
    %2162 = vst [vmem:[%s2 + $0x40] sm:$0xff] %v1613
    %2163 = vst [vmem:[%s2 + $0x48] sm:$0xff] %v1642
    %2164 = vst [vmem:[%s2 + $0x50] sm:$0xff] %v1671
    %2165 = vst [vmem:[%s2 + $0x58] sm:$0xff] %v1700
    %2166 = vst [vmem:[%s2 + $0x60] sm:$0xff] %v1729
    %2167 = vst [vmem:[%s2 + $0x68] sm:$0xff] %v1758
    %2168 = vst [vmem:[%s2 + $0x70] sm:$0xff] %v1787
    %2169 = vst [vmem:[%s2 + $0x78] sm:$0xff] %v1816
    %2170 = vst [vmem:[%s2 + $0x80] sm:$0xff] %v1845
    %2171 = vst [vmem:[%s2 + $0x88] sm:$0xff] %v1874
    %2172 = vst [vmem:[%s2 + $0x90] sm:$0xff] %v1903
    %2173 = vst [vmem:[%s2 + $0x98] sm:$0xff] %v1932
    %2174 = vst [vmem:[%s2 + $0xa0] sm:$0xff] %v1961
    %2175 = vst [vmem:[%s2 + $0xa8] sm:$0xff] %v1990
    %2176 = vst [vmem:[%s2 + $0xb0] sm:$0xff] %v2019
    %2177 = vst [vmem:[%s2 + $0xb8] sm:$0xff] %v2048
    %2178 = vst [vmem:[%s2 + $0xc0] sm:$0xff] %v2077
    %2179 = vst [vmem:[%s2 + $0xc8] sm:$0xff] %v2106
    %2180 = vst [vmem:[%s2 + $0xd0] sm:$0xff] %v2135
    %2181 = vst [vmem:[%s2 + $0xd8] sm:$0xff] %v1383
    %2182 = vst [vmem:[%s2 + $0xe0] sm:$0xff] %v1412
    %2183 = vst [vmem:[%s2 + $0xe8] sm:$0xff] %v1441
    %2184 = vst [vmem:[%s2 + $0xf0] sm:$0xff] %v1470
    %2185 = vst [vmem:[%s2 + $0xf8] sm:$0xff] %v1499
    %2186 = vst [vmem:[%s2 + $0x100] sm:$0xff] %v1528
    %2187 = vst [vmem:[%s2 + $0x108] sm:$0xff] %v1557
    %2188 = vst [vmem:[%s2 + $0x110] sm:$0xff] %v1586
    %2189 = vst [vmem:[%s2 + $0x118] sm:$0xff] %v1615
    %2190 = vst [vmem:[%s2 + $0x120] sm:$0xff] %v1644
    %2191 = vst [vmem:[%s2 + $0x128] sm:$0xff] %v1673
    %2192 = vst [vmem:[%s2 + $0x130] sm:$0xff] %v1702
    %2193 = vst [vmem:[%s2 + $0x138] sm:$0xff] %v1731
    %2194 = vst [vmem:[%s2 + $0x140] sm:$0xff] %v1760
    %2195 = vst [vmem:[%s2 + $0x148] sm:$0xff] %v1789
    %2196 = vst [vmem:[%s2 + $0x150] sm:$0xff] %v1818
    %2197 = vst [vmem:[%s2 + $0x158] sm:$0xff] %v1847
    %2198 = vst [vmem:[%s2 + $0x160] sm:$0xff] %v1876
    %2199 = vst [vmem:[%s2 + $0x168] sm:$0xff] %v1905
    %2200 = vst [vmem:[%s2 + $0x170] sm:$0xff] %v1934
    %2201 = vst [vmem:[%s2 + $0x178] sm:$0xff] %v1963
    %2202 = vst [vmem:[%s2 + $0x180] sm:$0xff] %v1992
    %2203 = vst [vmem:[%s2 + $0x188] sm:$0xff] %v2021
    %2204 = vst [vmem:[%s2 + $0x190] sm:$0xff] %v2050
    %2205 = vst [vmem:[%s2 + $0x198] sm:$0xff] %v2079
    %2206 = vst [vmem:[%s2 + $0x1a0] sm:$0xff] %v2108
    %2207 = vst [vmem:[%s2 + $0x1a8] sm:$0xff] %v2137
    %2208 = vst [vmem:[%s2 + $0x1b0] sm:$0xff] %v1386
    %2209 = vst [vmem:[%s2 + $0x1b8] sm:$0xff] %v1415
    %2210 = vst [vmem:[%s2 + $0x1c0] sm:$0xff] %v1444
    %2211 = vst [vmem:[%s2 + $0x1c8] sm:$0xff] %v1473
    %2212 = vst [vmem:[%s2 + $0x1d0] sm:$0xff] %v1502
    %2213 = vst [vmem:[%s2 + $0x1d8] sm:$0xff] %v1531
    %2214 = vst [vmem:[%s2 + $0x1e0] sm:$0xff] %v1560
    %2215 = vst [vmem:[%s2 + $0x1e8] sm:$0xff] %v1589
    %2216 = vst [vmem:[%s2 + $0x1f0] sm:$0xff] %v1618
    %2217 = vst [vmem:[%s2 + $0x1f8] sm:$0xff] %v1647
    %2218 = vst [vmem:[%s2 + $0x200] sm:$0xff] %v1676
    %2219 = vst [vmem:[%s2 + $0x208] sm:$0xff] %v1705
    %2220 = vst [vmem:[%s2 + $0x210] sm:$0xff] %v1734
    %2221 = vst [vmem:[%s2 + $0x218] sm:$0xff] %v1763
    %2222 = vst [vmem:[%s2 + $0x220] sm:$0xff] %v1792
    %2223 = vst [vmem:[%s2 + $0x228] sm:$0xff] %v1821
    %2224 = vst [vmem:[%s2 + $0x230] sm:$0xff] %v1850
    %2225 = vst [vmem:[%s2 + $0x238] sm:$0xff] %v1879
    %2226 = vst [vmem:[%s2 + $0x240] sm:$0xff] %v1908
    %2227 = vst [vmem:[%s2 + $0x248] sm:$0xff] %v1937
    %2228 = vst [vmem:[%s2 + $0x250] sm:$0xff] %v1966
    %2229 = vst [vmem:[%s2 + $0x258] sm:$0xff] %v1995
    %2230 = vst [vmem:[%s2 + $0x260] sm:$0xff] %v2024
    %2231 = vst [vmem:[%s2 + $0x268] sm:$0xff] %v2053
    %2232 = vst [vmem:[%s2 + $0x270] sm:$0xff] %v2082
    %2233 = vst [vmem:[%s2 + $0x278] sm:$0xff] %v2111
    %2234 = vst [vmem:[%s2 + $0x280] sm:$0xff] %v2140
    %2235 = vst [vmem:[%s2 + $0x288] sm:$0xff] %v1388
    %2236 = vst [vmem:[%s2 + $0x290] sm:$0xff] %v1417
    %2237 = vst [vmem:[%s2 + $0x298] sm:$0xff] %v1446
    %2238 = vst [vmem:[%s2 + $0x2a0] sm:$0xff] %v1475
    %2239 = vst [vmem:[%s2 + $0x2a8] sm:$0xff] %v1504
    %2240 = vst [vmem:[%s2 + $0x2b0] sm:$0xff] %v1533
    %2241 = vst [vmem:[%s2 + $0x2b8] sm:$0xff] %v1562
    %2242 = vst [vmem:[%s2 + $0x2c0] sm:$0xff] %v1591
    %2243 = vst [vmem:[%s2 + $0x2c8] sm:$0xff] %v1620
    %2244 = vst [vmem:[%s2 + $0x2d0] sm:$0xff] %v1649
    %2245 = vst [vmem:[%s2 + $0x2d8] sm:$0xff] %v1678
    %2246 = vst [vmem:[%s2 + $0x2e0] sm:$0xff] %v1707
    %2247 = vst [vmem:[%s2 + $0x2e8] sm:$0xff] %v1736
    %2248 = vst [vmem:[%s2 + $0x2f0] sm:$0xff] %v1765
    %2249 = vst [vmem:[%s2 + $0x2f8] sm:$0xff] %v1794
    %2250 = vst [vmem:[%s2 + $0x300] sm:$0xff] %v1823
    %2251 = vst [vmem:[%s2 + $0x308] sm:$0xff] %v1852
    %2252 = vst [vmem:[%s2 + $0x310] sm:$0xff] %v1881
    %2253 = vst [vmem:[%s2 + $0x318] sm:$0xff] %v1910
    %2254 = vst [vmem:[%s2 + $0x320] sm:$0xff] %v1939
    %2255 = vst [vmem:[%s2 + $0x328] sm:$0xff] %v1968
    %2256 = vst [vmem:[%s2 + $0x330] sm:$0xff] %v1997
    %2257 = vst [vmem:[%s2 + $0x338] sm:$0xff] %v2026
    %2258 = vst [vmem:[%s2 + $0x340] sm:$0xff] %v2055
    %2259 = vst [vmem:[%s2 + $0x348] sm:$0xff] %v2084
    %2260 = vst [vmem:[%s2 + $0x350] sm:$0xff] %v2113
    %2261 = vst [vmem:[%s2 + $0x358] sm:$0xff] %v2142
    %2262 = vst [vmem:[%s2 + $0x360] sm:$0xff] %v1391
    %2263 = vst [vmem:[%s2 + $0x368] sm:$0xff] %v1420
    %2264 = vst [vmem:[%s2 + $0x370] sm:$0xff] %v1449
    %2265 = vst [vmem:[%s2 + $0x378] sm:$0xff] %v1478
    %2266 = vst [vmem:[%s2 + $0x380] sm:$0xff] %v1507
    %2267 = vst [vmem:[%s2 + $0x388] sm:$0xff] %v1536
    %2268 = vst [vmem:[%s2 + $0x390] sm:$0xff] %v1565
    %2269 = vst [vmem:[%s2 + $0x398] sm:$0xff] %v1594
    %2270 = vst [vmem:[%s2 + $0x3a0] sm:$0xff] %v1623
    %2271 = vst [vmem:[%s2 + $0x3a8] sm:$0xff] %v1652
    %2272 = vst [vmem:[%s2 + $0x3b0] sm:$0xff] %v1681
    %2273 = vst [vmem:[%s2 + $0x3b8] sm:$0xff] %v1710
    %2274 = vst [vmem:[%s2 + $0x3c0] sm:$0xff] %v1739
    %2275 = vst [vmem:[%s2 + $0x3c8] sm:$0xff] %v1768
    %2276 = vst [vmem:[%s2 + $0x3d0] sm:$0xff] %v1797
    %2277 = vst [vmem:[%s2 + $0x3d8] sm:$0xff] %v1826
    %2278 = vst [vmem:[%s2 + $0x3e0] sm:$0xff] %v1855
    %2279 = vst [vmem:[%s2 + $0x3e8] sm:$0xff] %v1884
    %2280 = vst [vmem:[%s2 + $0x3f0] sm:$0xff] %v1913
    %2281 = vst [vmem:[%s2 + $0x3f8] sm:$0xff] %v1942
    %2282 = vst [vmem:[%s2 + $0x400] sm:$0xff] %v1971
    %2283 = vst [vmem:[%s2 + $0x408] sm:$0xff] %v2000
    %2284 = vst [vmem:[%s2 + $0x410] sm:$0xff] %v2029
    %2285 = vst [vmem:[%s2 + $0x418] sm:$0xff] %v2058
    %2286 = vst [vmem:[%s2 + $0x420] sm:$0xff] %v2087
    %2287 = vst [vmem:[%s2 + $0x428] sm:$0xff] %v2116
    %2288 = vst [vmem:[%s2 + $0x430] sm:$0xff] %v2145
    %2289 = vst [vmem:[%s2 + $0x438] sm:$0xff] %v1393
    %2290 = vst [vmem:[%s2 + $0x440] sm:$0xff] %v1422
    %2291 = vst [vmem:[%s2 + $0x448] sm:$0xff] %v1451
    %2292 = vst [vmem:[%s2 + $0x450] sm:$0xff] %v1480
    %2293 = vst [vmem:[%s2 + $0x458] sm:$0xff] %v1509
    %2294 = vst [vmem:[%s2 + $0x460] sm:$0xff] %v1538
    %2295 = vst [vmem:[%s2 + $0x468] sm:$0xff] %v1567
    %2296 = vst [vmem:[%s2 + $0x470] sm:$0xff] %v1596
    %2297 = vst [vmem:[%s2 + $0x478] sm:$0xff] %v1625
    %2298 = vst [vmem:[%s2 + $0x480] sm:$0xff] %v1654
    %2299 = vst [vmem:[%s2 + $0x488] sm:$0xff] %v1683
    %2300 = vst [vmem:[%s2 + $0x490] sm:$0xff] %v1712
    %2301 = vst [vmem:[%s2 + $0x498] sm:$0xff] %v1741
    %2302 = vst [vmem:[%s2 + $0x4a0] sm:$0xff] %v1770
    %2303 = vst [vmem:[%s2 + $0x4a8] sm:$0xff] %v1799
    %2304 = vst [vmem:[%s2 + $0x4b0] sm:$0xff] %v1828
    %2305 = vst [vmem:[%s2 + $0x4b8] sm:$0xff] %v1857
    %2306 = vst [vmem:[%s2 + $0x4c0] sm:$0xff] %v1886
    %2307 = vst [vmem:[%s2 + $0x4c8] sm:$0xff] %v1915
    %2308 = vst [vmem:[%s2 + $0x4d0] sm:$0xff] %v1944
    %2309 = vst [vmem:[%s2 + $0x4d8] sm:$0xff] %v1973
    %2310 = vst [vmem:[%s2 + $0x4e0] sm:$0xff] %v2002
    %2311 = vst [vmem:[%s2 + $0x4e8] sm:$0xff] %v2031
    %2312 = vst [vmem:[%s2 + $0x4f0] sm:$0xff] %v2060
    %2313 = vst [vmem:[%s2 + $0x4f8] sm:$0xff] %v2089
    %2314 = vst [vmem:[%s2 + $0x500] sm:$0xff] %v2118
    %2315 = vst [vmem:[%s2 + $0x508] sm:$0xff] %v2147
    %2316 = vst [vmem:[%s2 + $0x510] sm:$0xff] %v1396
    %2317 = vst [vmem:[%s2 + $0x518] sm:$0xff] %v1425
    %2318 = vst [vmem:[%s2 + $0x520] sm:$0xff] %v1454
    %2319 = vst [vmem:[%s2 + $0x528] sm:$0xff] %v1483
    %2320 = vst [vmem:[%s2 + $0x530] sm:$0xff] %v1512
    %2321 = vst [vmem:[%s2 + $0x538] sm:$0xff] %v1541
    %2322 = vst [vmem:[%s2 + $0x540] sm:$0xff] %v1570
    %2323 = vst [vmem:[%s2 + $0x548] sm:$0xff] %v1599
    %2324 = vst [vmem:[%s2 + $0x550] sm:$0xff] %v1628
    %2325 = vst [vmem:[%s2 + $0x558] sm:$0xff] %v1657
    %2326 = vst [vmem:[%s2 + $0x560] sm:$0xff] %v1686
    %2327 = vst [vmem:[%s2 + $0x568] sm:$0xff] %v1715
    %2328 = vst [vmem:[%s2 + $0x570] sm:$0xff] %v1744
    %2329 = vst [vmem:[%s2 + $0x578] sm:$0xff] %v1773
    %2330 = vst [vmem:[%s2 + $0x580] sm:$0xff] %v1802
    %2331 = vst [vmem:[%s2 + $0x588] sm:$0xff] %v1831
    %2332 = vst [vmem:[%s2 + $0x590] sm:$0xff] %v1860
    %2333 = vst [vmem:[%s2 + $0x598] sm:$0xff] %v1889
    %2334 = vst [vmem:[%s2 + $0x5a0] sm:$0xff] %v1918
    %2335 = vst [vmem:[%s2 + $0x5a8] sm:$0xff] %v1947
    %2336 = vst [vmem:[%s2 + $0x5b0] sm:$0xff] %v1976
    %2337 = vst [vmem:[%s2 + $0x5b8] sm:$0xff] %v2005
    %2338 = vst [vmem:[%s2 + $0x5c0] sm:$0xff] %v2034
    %2339 = vst [vmem:[%s2 + $0x5c8] sm:$0xff] %v2063
    %2340 = vst [vmem:[%s2 + $0x5d0] sm:$0xff] %v2092
    %2341 = vst [vmem:[%s2 + $0x5d8] sm:$0xff] %v2121
    %2342 = vst [vmem:[%s2 + $0x5e0] sm:$0xff] %v2150
    %2343 = vst [vmem:[%s2 + $0x5e8] sm:$0xff] %v1398
    %2344 = vst [vmem:[%s2 + $0x5f0] sm:$0xff] %v1427
    %2345 = vst [vmem:[%s2 + $0x5f8] sm:$0xff] %v1456
    %2346 = vst [vmem:[%s2 + $0x600] sm:$0xff] %v1485
    %2347 = vst [vmem:[%s2 + $0x608] sm:$0xff] %v1514
    %2348 = vst [vmem:[%s2 + $0x610] sm:$0xff] %v1543
    %2349 = vst [vmem:[%s2 + $0x618] sm:$0xff] %v1572
    %2350 = vst [vmem:[%s2 + $0x620] sm:$0xff] %v1601
    %2351 = vst [vmem:[%s2 + $0x628] sm:$0xff] %v1630
    %2352 = vst [vmem:[%s2 + $0x630] sm:$0xff] %v1659
    %2353 = vst [vmem:[%s2 + $0x638] sm:$0xff] %v1688
    %2354 = vst [vmem:[%s2 + $0x640] sm:$0xff] %v1717
    %2355 = vst [vmem:[%s2 + $0x648] sm:$0xff] %v1746
    %2356 = vst [vmem:[%s2 + $0x650] sm:$0xff] %v1775
    %2357 = vst [vmem:[%s2 + $0x658] sm:$0xff] %v1804
    %2358 = vst [vmem:[%s2 + $0x660] sm:$0xff] %v1833
    %2359 = vst [vmem:[%s2 + $0x668] sm:$0xff] %v1862
    %2360 = vst [vmem:[%s2 + $0x670] sm:$0xff] %v1891
    %2361 = vst [vmem:[%s2 + $0x678] sm:$0xff] %v1920
    %2362 = vst [vmem:[%s2 + $0x680] sm:$0xff] %v1949
    %2363 = vst [vmem:[%s2 + $0x688] sm:$0xff] %v1978
    %2364 = vst [vmem:[%s2 + $0x690] sm:$0xff] %v2007
    %2365 = vst [vmem:[%s2 + $0x698] sm:$0xff] %v2036
    %2366 = vst [vmem:[%s2 + $0x6a0] sm:$0xff] %v2065
    %2367 = vst [vmem:[%s2 + $0x6a8] sm:$0xff] %v2094
    %2368 = vst [vmem:[%s2 + $0x6b0] sm:$0xff] %v2123
    %2369 = vst [vmem:[%s2 + $0x6b8] sm:$0xff] %v2152
    // Predicated region
    $region14: #{up_block_forward.11} parent=1 // pred_check
      _
    $region15: #{up_block_forward.11} parent=1 // pred_check_branch
      %2371 = sbr.rel (0) target = $region17
    $region16: #{up_block_forward.11} parent=1 // pred_region
      _
    $region17: #{up_block_forward.11} parent=1 // pred_fallthru
      _
    // Predicated region
    $region18: #{up_block_forward.11} parent=1 // pred_check
      _
    $region19: #{up_block_forward.11} parent=1 // pred_check_branch
      %2373 = sbr.rel (0) target = $region21
    $region20: #{up_block_forward.11} parent=1 // pred_region
      _
    $region21: #{up_block_forward.11} parent=1 // pred_fallthru
      _
    %2374 = vsyncpa [#allocation3], 1

// kernel: up_block_forward.9
$region0: #{up_block_forward.9}
  #allocation0 [shape = 'u32[]', space=smem, size = 0x4, offset = 0x4, fixed_abs, tag = 'smem constant byte address 0x4 - core index']
  #allocation1 [shape = 'u32[72,128]{1,0:T(1,128)}', space=vmem, size = 0x9000, scoped, tag = 'internal scratch']
  %s0 = inlined_call_operand.vmem [shape: bf16[2,4,40,128], index: 0, kind: input, shape index: {}, may-alias: {0,1,2}]
  %s1 = inlined_call_operand.vmem [shape: bf16[2,4,40,128], index: 1, kind: input, shape index: {}, may-alias: {0,1,2}]
  %s2 = inlined_call_operand.vmem [shape: bf16[2,4,40,128], index: 2, kind: input, shape index: {}, may-alias: {0,1,2}]
  %s3 = inlined_call_operand.hbm [shape: bf16[27,128,128], index: 3, kind: input, shape index: {}]
  %s4 = inlined_call_operand.vmem [shape: f32[2,2,24,128], index: 4, kind: output, shape index: {0}]
  %s5 = inlined_call_operand.vmem [shape: f32[2,2,2,128], index: 5, kind: output, shape index: {1}]
  %6 = xla_tuple %s4, %s5
  %s7 = sld [smem:[#allocation0]]
  $region61: #{up_block_forward.9} parent=0
    _
  %s9 = ssub.s32 1, %s7
  %s10 = scalar_select 0, %s9, %s7
  $region1: #{up_block_forward.9} parent=0
    #allocation2 [shape = 'u8[884736]{0}', space=vmem, size = 0xd8000, scoped, tag = 'input window, operand 3, single buffered']
    #allocation3 [shape = 's32[2]{0}', space=sflag, size = 0x8, scoped, tag = 'scoped memory for up_block_forward.9']
    %11 = vsyncpa [#allocation3], 0
    loop: start=0, step=1, limit=6
    $region2: #{up_block_forward.9} parent=1 // loop_pre_header
      _
    $region3: #{up_block_forward.9} parent=1 // loop_header
      %s13 = sphi 0, %s17
      %p14 = scmp.ge.s32.totalorder %s13, 6
      %s20 = sphi 0, %s32
      %s21 = sphi 0, %s28
      %s22 = sphi 0, %s20
      %s23 = sphi 0, %s21
      %s24 = sphi 0, %s22
      %s25 = sphi 0, %s23
      %s37 = sphi 0, %s39
      %s40 = sphi 0, %s37
      %s41 = sphi 0, %s40
      %s57 = sphi 0, %s41
      %s67 = sphi 0, %s69
      %s70 = sphi 0, %s67
      %s71 = sphi 0, %s70
      %s87 = sphi 0, %s71
      %s97 = sphi 0, %s99
      %s100 = sphi 0, %s97
      %s101 = sphi 0, %s100
      %s117 = sphi 0, %s101
      %s121 = sphi 0, %s121
      %s123 = sphi 0, %s121
      %s124 = sphi 0, %s123
      %s138 = sphi 0, %s124
      %s146 = sphi 0, %s148
      %s149 = sphi 0, %s146
      %s150 = sphi 0, %s149
      %s166 = sphi 0, %s150
      %s174 = sphi 0, %s176
      %s177 = sphi 0, %s174
      %s178 = sphi 0, %s177
      %s194 = sphi 0, %s178
    $region4: #{up_block_forward.9} parent=1 // loop_header_branch
      %16 = sbr.rel (%p14) target = $region8
    $region5: #{up_block_forward.9} parent=1 // loop_body
      %s18 = ssub.s32 %s13, 1
      %s19 = ssub.s32 %s13, 2
      %s26 = sadd.s32 1, %s21
      %p27 = scmp.ge.s32.totalorder %s26, 2
      %s28 = scalar_select %p27, 0, %s26
      %s29 = sadd.s32 1, %s20
      %s30 = scalar_select %p27, %s29, %s20
      %p31 = scmp.ge.s32.totalorder %s30, 2
      %s32 = scalar_select %p31, 0, %s30
      %s33 = ssub.s32 %s20, %s32
      %s34 = ssub.s32 %s21, %s28
      %s35 = sor.u32 %s33, %s34
      %p36 = scmp.eq.s32.totalorder %s35, 0
      %s38 = sadd.s32 %s37, 1
      %s39 = scalar_select %p36, %s37, %s38
      %p42 = pneg %p36
      %p43 = scmp.eq.s32.totalorder %s13, 3
      %p44 = por %p42, %p43
      %p45 = scmp.ne.s32.totalorder %s37, %s40
      %p46 = scmp.eq.s32.totalorder %s13, 0
      %p47 = por %p45, %p46
      %p48 = scmp.ne.s32.totalorder %s37, %s40
      %p49 = scmp.eq.s32.totalorder %s18, 3
      %p50 = por %p48, %p49
      %p51 = scmp.ne.s32.totalorder %s40, %s41
      %p52 = scmp.eq.s32.totalorder %s18, 0
      %p53 = por %p51, %p52
      %p54 = scmp.ne.s32.totalorder %s40, %s41
      %p55 = scmp.eq.s32.totalorder %s19, 3
      %p56 = por %p54, %p55
      %p58 = scmp.ne.s32.totalorder %s41, %s57
      %p59 = scmp.eq.s32.totalorder %s19, 0
      %p60 = por %p58, %p59
      %s61 = sadd.s32 %s21, 1
      %s62 = sadd.s32 %s28, 1
      %s63 = ssub.s32 %s20, %s32
      %s64 = ssub.s32 %s61, %s62
      %s65 = sor.u32 %s63, %s64
      %p66 = scmp.eq.s32.totalorder %s65, 0
      %s68 = sadd.s32 %s67, 1
      %s69 = scalar_select %p66, %s67, %s68
      %p72 = pneg %p66
      %p73 = scmp.eq.s32.totalorder %s13, 3
      %p74 = por %p72, %p73
      %p75 = scmp.ne.s32.totalorder %s67, %s70
      %p76 = scmp.eq.s32.totalorder %s13, 0
      %p77 = por %p75, %p76
      %p78 = scmp.ne.s32.totalorder %s67, %s70
      %p79 = scmp.eq.s32.totalorder %s18, 3
      %p80 = por %p78, %p79
      %p81 = scmp.ne.s32.totalorder %s70, %s71
      %p82 = scmp.eq.s32.totalorder %s18, 0
      %p83 = por %p81, %p82
      %p84 = scmp.ne.s32.totalorder %s70, %s71
      %p85 = scmp.eq.s32.totalorder %s19, 3
      %p86 = por %p84, %p85
      %p88 = scmp.ne.s32.totalorder %s71, %s87
      %p89 = scmp.eq.s32.totalorder %s19, 0
      %p90 = por %p88, %p89
      %s91 = sadd.s32 %s21, 2
      %s92 = sadd.s32 %s28, 2
      %s93 = ssub.s32 %s20, %s32
      %s94 = ssub.s32 %s91, %s92
      %s95 = sor.u32 %s93, %s94
      %p96 = scmp.eq.s32.totalorder %s95, 0
      %s98 = sadd.s32 %s97, 1
      %s99 = scalar_select %p96, %s97, %s98
      %p102 = pneg %p96
      %p103 = scmp.eq.s32.totalorder %s13, 3
      %p104 = por %p102, %p103
      %p105 = scmp.ne.s32.totalorder %s97, %s100
      %p106 = scmp.eq.s32.totalorder %s13, 0
      %p107 = por %p105, %p106
      %p108 = scmp.ne.s32.totalorder %s97, %s100
      %p109 = scmp.eq.s32.totalorder %s18, 3
      %p110 = por %p108, %p109
      %p111 = scmp.ne.s32.totalorder %s100, %s101
      %p112 = scmp.eq.s32.totalorder %s18, 0
      %p113 = por %p111, %p112
      %p114 = scmp.ne.s32.totalorder %s100, %s101
      %p115 = scmp.eq.s32.totalorder %s19, 3
      %p116 = por %p114, %p115
      %p118 = scmp.ne.s32.totalorder %s101, %s117
      %p119 = scmp.eq.s32.totalorder %s19, 0
      %p120 = por %p118, %p119
      %s122 = sadd.s32 %s121, 1
      %p125 = scmp.eq.s32.totalorder %s13, 3
      %p126 = scmp.ne.s32.totalorder %s121, %s123
      %p127 = scmp.eq.s32.totalorder %s13, 0
      %p128 = por %p126, %p127
      %p129 = scmp.ne.s32.totalorder %s121, %s123
      %p130 = scmp.eq.s32.totalorder %s18, 3
      %p131 = por %p129, %p130
      %p132 = scmp.ne.s32.totalorder %s123, %s124
      %p133 = scmp.eq.s32.totalorder %s18, 0
      %p134 = por %p132, %p133
      %p135 = scmp.ne.s32.totalorder %s123, %s124
      %p136 = scmp.eq.s32.totalorder %s19, 3
      %p137 = por %p135, %p136
      %p139 = scmp.ne.s32.totalorder %s124, %s138
      %p140 = scmp.eq.s32.totalorder %s19, 0
      %p141 = por %p139, %p140
      %s142 = ssub.s32 %s20, %s32
      %s143 = ssub.s32 %s21, %s28
      %s144 = sor.u32 %s142, %s143
      %p145 = scmp.eq.s32.totalorder %s144, 0
      %s147 = sadd.s32 %s146, 1
      %s148 = scalar_select %p145, %s146, %s147
      %p151 = pneg %p145
      %p152 = scmp.eq.s32.totalorder %s13, 3
      %p153 = por %p151, %p152
      %p154 = scmp.ne.s32.totalorder %s146, %s149
      %p155 = scmp.eq.s32.totalorder %s13, 0
      %p156 = por %p154, %p155
      %p157 = scmp.ne.s32.totalorder %s146, %s149
      %p158 = scmp.eq.s32.totalorder %s18, 3
      %p159 = por %p157, %p158
      %p160 = scmp.ne.s32.totalorder %s149, %s150
      %p161 = scmp.eq.s32.totalorder %s18, 0
      %p162 = por %p160, %p161
      %p163 = scmp.ne.s32.totalorder %s149, %s150
      %p164 = scmp.eq.s32.totalorder %s19, 3
      %p165 = por %p163, %p164
      %p167 = scmp.ne.s32.totalorder %s150, %s166
      %p168 = scmp.eq.s32.totalorder %s19, 0
      %p169 = por %p167, %p168
      %s170 = ssub.s32 %s20, %s32
      %s171 = ssub.s32 %s21, %s28
      %s172 = sor.u32 %s170, %s171
      %p173 = scmp.eq.s32.totalorder %s172, 0
      %s175 = sadd.s32 %s174, 1
      %s176 = scalar_select %p173, %s174, %s175
      %p179 = pneg %p173
      %p180 = scmp.eq.s32.totalorder %s13, 3
      %p181 = por %p179, %p180
      %p182 = scmp.ne.s32.totalorder %s174, %s177
      %p183 = scmp.eq.s32.totalorder %s13, 0
      %p184 = por %p182, %p183
      %p185 = scmp.ne.s32.totalorder %s174, %s177
      %p186 = scmp.eq.s32.totalorder %s18, 3
      %p187 = por %p185, %p186
      %p188 = scmp.ne.s32.totalorder %s177, %s178
      %p189 = scmp.eq.s32.totalorder %s18, 0
      %p190 = por %p188, %p189
      %p191 = scmp.ne.s32.totalorder %s177, %s178
      %p192 = scmp.eq.s32.totalorder %s19, 3
      %p193 = por %p191, %p192
      %p195 = scmp.ne.s32.totalorder %s178, %s194
      %p196 = scmp.eq.s32.totalorder %s19, 0
      %p197 = por %p195, %p196
      %p198 = scmp.le.s32.totalorder 1, %s13
      %p199 = scmp.lt.s32.totalorder %s13, 5
      %p200 = pnand %p198, %p199
      %p201 = pneg %p200
      // Predicated region
      $region9: #{up_block_forward.9} parent=5 // pred_check
        _
      $region10: #{up_block_forward.9} parent=5 // pred_check_branch
        %203 = sbr.rel (%p200) target = $region12
      $region11: #{up_block_forward.9} parent=5 // pred_region
        %s204 = ssub.s32 %s13, 1
        // Predicated region
        $region13: #{up_block_forward.9} parent=11 // pred_check
          %p205 = pneg %p134
        $region14: #{up_block_forward.9} parent=11 // pred_check_branch
          %207 = sbr.rel (%p205) target = $region16
        $region15: #{up_block_forward.9} parent=11 // pred_region
          %209 = vsyncadd [#allocation3], 0
          %s210 = sshll.u32 %s3, 4
          %s211 = int_to_ptr.hbm [resolvable:$true] %s210
          %s212 = sshll.u32 [#allocation2], 4
          %s213 = int_to_ptr.vmem [resolvable:$true] %s212
          %218 = dma.hbm_to_vmem [thread:$0]  %s211, 27648, %s213, [#allocation3], 64, 64, 4
        $region16: #{up_block_forward.9} parent=11 // pred_fallthru
          _
      $region12: #{up_block_forward.9} parent=5 // pred_fallthru
        _
      %p219 = scmp.lt.s32.totalorder %s13, 4
      // Predicated region
      $region17: #{up_block_forward.9} parent=5 // pred_check
        %p220 = pneg %p219
      $region18: #{up_block_forward.9} parent=5 // pred_check_branch
        %222 = sbr.rel (%p220) target = $region20
      $region19: #{up_block_forward.9} parent=5 // pred_region
        // Predicated region
        $region21: #{up_block_forward.9} parent=19 // pred_check
          %p223 = pneg %p47
        $region22: #{up_block_forward.9} parent=19 // pred_check_branch
          %225 = sbr.rel (%p223) target = $region24
        $region23: #{up_block_forward.9} parent=19 // pred_region
          %p226 = scmp.lt.s32.totalorder %s20, 1
          %s227 = scalar_select %p226, %s20, 1
          %p228 = scmp.lt.s32.totalorder %s21, 3
          %s229 = scalar_select %p228, %s21, 3
          %s230 = smul.addr %s229, 5
          %s231 = smul.addr %s227, 20
          %s232 = sadd.s32 %s230, %s231
          %s233 = smul.addr %s232, 4
          %s234 = scalar_lea.vmem %s0, %s233
        $region24: #{up_block_forward.9} parent=19 // pred_fallthru
          _
        // Predicated region
        $region25: #{up_block_forward.9} parent=19 // pred_check
          %p235 = pneg %p77
        $region26: #{up_block_forward.9} parent=19 // pred_check_branch
          %237 = sbr.rel (%p235) target = $region28
        $region27: #{up_block_forward.9} parent=19 // pred_region
          %s238 = sadd.s32 %s21, 1
          %p239 = scmp.lt.s32.totalorder %s20, 1
          %s240 = scalar_select %p239, %s20, 1
          %p241 = scmp.lt.s32.totalorder %s238, 3
          %s242 = scalar_select %p241, %s238, 3
          %s243 = smul.addr %s242, 5
          %s244 = smul.addr %s240, 20
          %s245 = sadd.s32 %s243, %s244
          %s246 = smul.addr %s245, 4
          %s247 = scalar_lea.vmem %s1, %s246
          %s248 = sadd.s32 %s21, 1
        $region28: #{up_block_forward.9} parent=19 // pred_fallthru
          _
        // Predicated region
        $region29: #{up_block_forward.9} parent=19 // pred_check
          %p249 = pneg %p107
        $region30: #{up_block_forward.9} parent=19 // pred_check_branch
          %251 = sbr.rel (%p249) target = $region32
        $region31: #{up_block_forward.9} parent=19 // pred_region
          %s252 = sadd.s32 %s21, 2
          %p253 = scmp.lt.s32.totalorder %s20, 1
          %s254 = scalar_select %p253, %s20, 1
          %p255 = scmp.lt.s32.totalorder %s252, 3
          %s256 = scalar_select %p255, %s252, 3
          %s257 = smul.addr %s256, 5
          %s258 = smul.addr %s254, 20
          %s259 = sadd.s32 %s257, %s258
          %s260 = smul.addr %s259, 4
          %s261 = scalar_lea.vmem %s2, %s260
          %s262 = sadd.s32 %s21, 2
        $region32: #{up_block_forward.9} parent=19 // pred_fallthru
          _
      $region20: #{up_block_forward.9} parent=5 // pred_fallthru
        _
      %p263 = scmp.le.s32.totalorder 1, %s13
      %p264 = scmp.lt.s32.totalorder %s13, 5
      %p265 = pnand %p263, %p264
      %p266 = pneg %p265
      // Predicated region
      $region33: #{up_block_forward.9} parent=5 // pred_check
        _
      $region34: #{up_block_forward.9} parent=5 // pred_check_branch
        %268 = sbr.rel (%p265) target = $region36
      $region35: #{up_block_forward.9} parent=5 // pred_region
        %s269 = ssub.s32 %s13, 1
        // Predicated region
        $region37: #{up_block_forward.9} parent=35 // pred_check
          %p270 = pneg %p134
        $region38: #{up_block_forward.9} parent=35 // pred_check_branch
          %272 = sbr.rel (%p270) target = $region40
        $region39: #{up_block_forward.9} parent=35 // pred_region
          %274 = dma.done [#allocation3], 27648
        $region40: #{up_block_forward.9} parent=35 // pred_fallthru
          _
        %p275 = scmp.lt.s32.totalorder %s22, 1
        %s276 = scalar_select %p275, %s22, 1
        %p277 = scmp.lt.s32.totalorder %s23, 3
        %s278 = scalar_select %p277, %s23, 3
        %s279 = smul.addr %s278, 5
        %s280 = smul.addr %s276, 20
        %s281 = sadd.s32 %s279, %s280
        %s282 = smul.addr %s281, 4
        %s283 = scalar_lea.vmem %s0, %s282
        %p284 = pneg %p53
        %p285 = pneg %p50
        %s286 = sadd.s32 %s23, 1
        %p287 = scmp.lt.s32.totalorder %s22, 1
        %s288 = scalar_select %p287, %s22, 1
        %p289 = scmp.lt.s32.totalorder %s286, 3
        %s290 = scalar_select %p289, %s286, 3
        %s291 = smul.addr %s290, 5
        %s292 = smul.addr %s288, 20
        %s293 = sadd.s32 %s291, %s292
        %s294 = smul.addr %s293, 4
        %s295 = scalar_lea.vmem %s1, %s294
        %p296 = pneg %p83
        %p297 = pneg %p80
        %s298 = sadd.s32 %s23, 2
        %p299 = scmp.lt.s32.totalorder %s22, 1
        %s300 = scalar_select %p299, %s22, 1
        %p301 = scmp.lt.s32.totalorder %s298, 3
        %s302 = scalar_select %p301, %s298, 3
        %s303 = smul.addr %s302, 5
        %s304 = smul.addr %s300, 20
        %s305 = sadd.s32 %s303, %s304
        %s306 = smul.addr %s305, 4
        %s307 = scalar_lea.vmem %s2, %s306
        %p308 = pneg %p113
        %p309 = pneg %p110
        %p310 = pneg %p134
        %p311 = pneg %p131
        %p312 = pneg %p162
        %p313 = pneg %p159
        %p314 = scmp.lt.s32.totalorder %s22, 1
        %s315 = scalar_select %p314, %s22, 1
        %p316 = scmp.lt.s32.totalorder %s23, 1
        %s317 = scalar_select %p316, %s23, 1
        %s318 = smul.addr %s317, 3
        %s319 = smul.addr %s315, 6
        %s320 = sadd.s32 %s318, %s319
        %s321 = smul.addr %s320, 8
        %s322 = scalar_lea.vmem %s4, %s321
        %p323 = pneg %p190
        %p324 = pneg %p187
        %p325 = scmp.lt.s32.totalorder %s22, 1
        %s326 = scalar_select %p325, %s22, 1
        %p327 = scmp.lt.s32.totalorder %s23, 1
        %s328 = scalar_select %p327, %s23, 1
        %s329 = smul.addr %s326, 2
        %s330 = sadd.s32 %s328, %s329
        %s331 = smul.addr %s330, 2
        %s332 = scalar_lea.vmem %s5, %s331
        %p333 = scmp.lt.s32.totalorder %s22, 1
        %s334 = scalar_select %p333, %s22, 1
        %p335 = scmp.lt.s32.totalorder %s23, 3
        %s336 = scalar_select %p335, %s23, 3
        %s337 = smul.addr %s336, 5
        %s338 = smul.addr %s334, 20
        %s339 = sadd.s32 %s337, %s338
        %s340 = smul.addr %s339, 4
        %s341 = scalar_lea.vmem %s0, %s340
        %s342 = sadd.s32 %s23, 1
        %p343 = scmp.lt.s32.totalorder %s22, 1
        %s344 = scalar_select %p343, %s22, 1
        %p345 = scmp.lt.s32.totalorder %s342, 3
        %s346 = scalar_select %p345, %s342, 3
        %s347 = smul.addr %s346, 5
        %s348 = smul.addr %s344, 20
        %s349 = sadd.s32 %s347, %s348
        %s350 = smul.addr %s349, 4
        %s351 = scalar_lea.vmem %s1, %s350
        %s352 = sadd.s32 %s23, 1
        %s353 = sadd.s32 %s23, 2
        %p354 = scmp.lt.s32.totalorder %s22, 1
        %s355 = scalar_select %p354, %s22, 1
        %p356 = scmp.lt.s32.totalorder %s353, 3
        %s357 = scalar_select %p356, %s353, 3
        %s358 = smul.addr %s357, 5
        %s359 = smul.addr %s355, 20
        %s360 = sadd.s32 %s358, %s359
        %s361 = smul.addr %s360, 4
        %s362 = scalar_lea.vmem %s2, %s361
        %s363 = sadd.s32 %s23, 2
        %p364 = scmp.lt.s32.totalorder %s22, 1
        %s365 = scalar_select %p364, %s22, 1
        %p366 = scmp.lt.s32.totalorder %s23, 1
        %s367 = scalar_select %p366, %s23, 1
        %s368 = smul.addr %s367, 3
        %s369 = smul.addr %s365, 6
        %s370 = sadd.s32 %s368, %s369
        %s371 = smul.addr %s370, 8
        %s372 = scalar_lea.vmem %s4, %s371
        %p373 = scmp.lt.s32.totalorder %s22, 1
        %s374 = scalar_select %p373, %s22, 1
        %p375 = scmp.lt.s32.totalorder %s23, 1
        %s376 = scalar_select %p375, %s23, 1
        %s377 = smul.addr %s374, 2
        %s378 = sadd.s32 %s376, %s377
        %s379 = smul.addr %s378, 2
        %s380 = scalar_lea.vmem %s5, %s379
        %v381 = vld [vmem:[%s341] sm:$0xf]
        %v382 = vld [vmem:[%s341 + $0x4] sm:$0xf]
        %v383 = vld [vmem:[%s341 + $0x8] sm:$0xf]
        %v384 = vld [vmem:[#allocation2] sm:$0xf]
        %v385 = vld [vmem:[#allocation2 + $0x4] sm:$0xf]
        %v386 = vld [vmem:[#allocation2 + $0x8] sm:$0xf]
        %v387 = vld [vmem:[#allocation2 + $0xc] sm:$0xf]
        %v388 = vld [vmem:[#allocation2 + $0x10] sm:$0xf]
        %v389 = vld [vmem:[#allocation2 + $0x14] sm:$0xf]
        %v390 = vld [vmem:[#allocation2 + $0x18] sm:$0xf]
        %v391 = vld [vmem:[#allocation2 + $0x1c] sm:$0xf]
        %v392 = vld [vmem:[#allocation2 + $0x20] sm:$0xf]
        %v393 = vld [vmem:[#allocation2 + $0x24] sm:$0xf]
        %v394 = vld [vmem:[#allocation2 + $0x28] sm:$0xf]
        %v395 = vld [vmem:[#allocation2 + $0x2c] sm:$0xf]
        %v396 = vld [vmem:[#allocation2 + $0x30] sm:$0xf]
        %v397 = vld [vmem:[#allocation2 + $0x34] sm:$0xf]
        %v398 = vld [vmem:[#allocation2 + $0x38] sm:$0xf]
        %v399 = vld [vmem:[#allocation2 + $0x3c] sm:$0xf]
        %v400 = vld [vmem:[%s341 + $0xc] sm:$0x1]
        %s401 = scalar_lea.vmem [#allocation2], 64
        %v402 = vld [vmem:[%s401] sm:$0xf]
        %v403 = vld [vmem:[%s401 + $0x4] sm:$0xf]
        %v404 = vld [vmem:[%s401 + $0x8] sm:$0xf]
        %v405 = vld [vmem:[%s401 + $0xc] sm:$0xf]
        %v406 = vld [vmem:[%s401 + $0x10] sm:$0xf]
        %v407 = vld [vmem:[%s401 + $0x14] sm:$0xf]
        %v408 = vld [vmem:[%s401 + $0x18] sm:$0xf]
        %v409 = vld [vmem:[%s401 + $0x1c] sm:$0xf]
        %v410 = vld [vmem:[%s401 + $0x20] sm:$0xf]
        %v411 = vld [vmem:[%s401 + $0x24] sm:$0xf]
        %v412 = vld [vmem:[%s401 + $0x28] sm:$0xf]
        %v413 = vld [vmem:[%s401 + $0x2c] sm:$0xf]
        %v414 = vld [vmem:[%s401 + $0x30] sm:$0xf]
        %v415 = vld [vmem:[%s401 + $0x34] sm:$0xf]
        %v416 = vld [vmem:[%s401 + $0x38] sm:$0xf]
        %v417 = vld [vmem:[%s401 + $0x3c] sm:$0xf]
        %v422 = vunpack.c.l.b16 %v381
        %v423 = vunpack.c.l.b16 %v382
        %v424 = vunpack.c.l.b16 %v383
        %v425 = vunpack.c.l.b16 %v400
        %v426 = vpack.c.b16 %v423, %v422
        %v427 = vpack.c.b16 %v425, %v424
        %vm428 = vsmask.f32 7424
        %v430 = vshrl.u32 %v426, 16
        %v432 = vshll.u32 %v426, 16
        %v434 = vrot.slane %v432, 1
        %v435 = vor.u32 %v430, %v434
        %v437 = vshll.u32 %v427, 16
        %v439 = vrot.slane %v437, 1
        %v440 = vsel %vm428, %v435, %v439
        %v441 = vshrl.u32 %v427, 16
        %v443 = vor.u32 %v441, %v439
        %v462 = vunpack.c.l.b16 %v402
        %v463 = vunpack.c.l.b16 %v403
        %v464 = vunpack.c.l.b16 %v404
        %v465 = vunpack.c.l.b16 %v405
        %v466 = vunpack.c.l.b16 %v406
        %v467 = vunpack.c.l.b16 %v407
        %v468 = vunpack.c.l.b16 %v408
        %v469 = vunpack.c.l.b16 %v409
        %v470 = vunpack.c.l.b16 %v410
        %v471 = vunpack.c.l.b16 %v411
        %v472 = vunpack.c.l.b16 %v412
        %v473 = vunpack.c.l.b16 %v413
        %v474 = vunpack.c.l.b16 %v414
        %v475 = vunpack.c.l.b16 %v415
        %v476 = vunpack.c.l.b16 %v416
        %v477 = vunpack.c.l.b16 %v417
        %v478 = vpack.c.b16 %v463, %v462
        %v479 = vpack.c.b16 %v465, %v464
        %v480 = vpack.c.b16 %v467, %v466
        %v481 = vpack.c.b16 %v469, %v468
        %v482 = vpack.c.b16 %v471, %v470
        %v483 = vpack.c.b16 %v473, %v472
        %v484 = vpack.c.b16 %v475, %v474
        %v485 = vpack.c.b16 %v477, %v476
        %494 = vmatpush.bf16.msra.mxu0 %v485
        %495 = vmatpush.bf16.msra.mxu0 %v484
        %496 = vmatpush.bf16.msra.mxu0 %v483
        %497 = vmatpush.bf16.msra.mxu0 %v482
        %498 = vmatpush.bf16.msra.mxu0 %v481
        %499 = vmatpush.bf16.msra.mxu0 %v480
        %500 = vmatpush.bf16.msra.mxu0 %v479
        %501 = vmatpush.bf16.msra.mxu0 %v478
        %502 = vmatmul.bf16.gmra.mxu0 %v440
        %v503 = vpop.f32.mrf.mxu0
        %v504 = vadd.f32 0.0, %v503
        %v505 = vpop.f32.mrf.mxu0
        %v506 = vadd.f32 0.0, %v505
        %507 = vmatmul.bf16.gmra.mxu0 %v443
        %v508 = vpop.f32.mrf.mxu0
        %v509 = vadd.f32 0.0, %v508
        %v510 = vpop.f32.mrf.mxu0
        %511 = vdwg.mxu0
        %v512 = vpack.c.b16 %v424, %v424
        %v531 = vunpack.c.l.b16 %v384
        %v532 = vunpack.c.l.b16 %v385
        %v533 = vunpack.c.l.b16 %v386
        %v534 = vunpack.c.l.b16 %v387
        %v535 = vunpack.c.l.b16 %v388
        %v536 = vunpack.c.l.b16 %v389
        %v537 = vunpack.c.l.b16 %v390
        %v538 = vunpack.c.l.b16 %v391
        %v539 = vunpack.c.l.b16 %v392
        %v540 = vunpack.c.l.b16 %v393
        %v541 = vunpack.c.l.b16 %v394
        %v542 = vunpack.c.l.b16 %v395
        %v543 = vunpack.c.l.b16 %v396
        %v544 = vunpack.c.l.b16 %v397
        %v545 = vunpack.c.l.b16 %v398
        %v546 = vunpack.c.l.b16 %v399
        %v547 = vpack.c.b16 %v532, %v531
        %v548 = vpack.c.b16 %v534, %v533
        %v549 = vpack.c.b16 %v536, %v535
        %v550 = vpack.c.b16 %v538, %v537
        %v551 = vpack.c.b16 %v540, %v539
        %v552 = vpack.c.b16 %v542, %v541
        %v553 = vpack.c.b16 %v544, %v543
        %v554 = vpack.c.b16 %v546, %v545
        %563 = vmatpush.bf16.msra.mxu0 %v554
        %564 = vmatpush.bf16.msra.mxu0 %v553
        %565 = vmatpush.bf16.msra.mxu0 %v552
        %566 = vmatpush.bf16.msra.mxu0 %v551
        %567 = vmatpush.bf16.msra.mxu0 %v550
        %568 = vmatpush.bf16.msra.mxu0 %v549
        %569 = vmatpush.bf16.msra.mxu0 %v548
        %570 = vmatpush.bf16.msra.mxu0 %v547
        %571 = vmatmul.bf16.gmra.mxu0 %v426
        %v572 = vpop.f32.mrf.mxu0
        %v573 = vadd.f32 %v504, %v572
        %v574 = vpop.f32.mrf.mxu0
        %v575 = vadd.f32 %v506, %v574
        %576 = vmatmul.bf16.gmra.mxu0 %v512
        %v577 = vpop.f32.mrf.mxu0
        %v578 = vadd.f32 %v509, %v577
        %v579 = vpop.f32.mrf.mxu0
        %580 = vdwg.mxu0
        %v581 = vld [vmem:[%s341] sm:$0xe]
        %s582 = scalar_lea.vmem [#allocation2], 128
        %v583 = vld [vmem:[%s582] sm:$0xf]
        %v584 = vld [vmem:[%s582 + $0x4] sm:$0xf]
        %v585 = vld [vmem:[%s582 + $0x8] sm:$0xf]
        %v586 = vld [vmem:[%s582 + $0xc] sm:$0xf]
        %v587 = vld [vmem:[%s582 + $0x10] sm:$0xf]
        %v588 = vld [vmem:[%s582 + $0x14] sm:$0xf]
        %v589 = vld [vmem:[%s582 + $0x18] sm:$0xf]
        %v590 = vld [vmem:[%s582 + $0x1c] sm:$0xf]
        %v591 = vld [vmem:[%s582 + $0x20] sm:$0xf]
        %v592 = vld [vmem:[%s582 + $0x24] sm:$0xf]
        %v593 = vld [vmem:[%s582 + $0x28] sm:$0xf]
        %v594 = vld [vmem:[%s582 + $0x2c] sm:$0xf]
        %v595 = vld [vmem:[%s582 + $0x30] sm:$0xf]
        %v596 = vld [vmem:[%s582 + $0x34] sm:$0xf]
        %v597 = vld [vmem:[%s582 + $0x38] sm:$0xf]
        %v598 = vld [vmem:[%s582 + $0x3c] sm:$0xf]
        %v600 = vunpack.c.l.b16 %v581
        %v601 = vpack.c.b16 %v423, %v600
        %vm602 = vcmask 1046528
        %v603 = vrot.slane %v601, 1
        %v604 = vrot.slane %v427, 1
        %v605 = vsel %vm602, %v603, %v604
        %v624 = vunpack.c.l.b16 %v583
        %v625 = vunpack.c.l.b16 %v584
        %v626 = vunpack.c.l.b16 %v585
        %v627 = vunpack.c.l.b16 %v586
        %v628 = vunpack.c.l.b16 %v587
        %v629 = vunpack.c.l.b16 %v588
        %v630 = vunpack.c.l.b16 %v589
        %v631 = vunpack.c.l.b16 %v590
        %v632 = vunpack.c.l.b16 %v591
        %v633 = vunpack.c.l.b16 %v592
        %v634 = vunpack.c.l.b16 %v593
        %v635 = vunpack.c.l.b16 %v594
        %v636 = vunpack.c.l.b16 %v595
        %v637 = vunpack.c.l.b16 %v596
        %v638 = vunpack.c.l.b16 %v597
        %v639 = vunpack.c.l.b16 %v598
        %v640 = vpack.c.b16 %v625, %v624
        %v641 = vpack.c.b16 %v627, %v626
        %v642 = vpack.c.b16 %v629, %v628
        %v643 = vpack.c.b16 %v631, %v630
        %v644 = vpack.c.b16 %v633, %v632
        %v645 = vpack.c.b16 %v635, %v634
        %v646 = vpack.c.b16 %v637, %v636
        %v647 = vpack.c.b16 %v639, %v638
        %656 = vmatpush.bf16.msra.mxu0 %v647
        %657 = vmatpush.bf16.msra.mxu0 %v646
        %658 = vmatpush.bf16.msra.mxu0 %v645
        %659 = vmatpush.bf16.msra.mxu0 %v644
        %660 = vmatpush.bf16.msra.mxu0 %v643
        %661 = vmatpush.bf16.msra.mxu0 %v642
        %662 = vmatpush.bf16.msra.mxu0 %v641
        %663 = vmatpush.bf16.msra.mxu0 %v640
        %664 = vmatmul.bf16.gmra.mxu0 %v605
        %v665 = vpop.f32.mrf.mxu0
        %v666 = vadd.f32 0.0, %v665
        %v667 = vpop.f32.mrf.mxu0
        %v668 = vadd.f32 0.0, %v667
        %669 = vmatmul.bf16.gmra.mxu0 %v604
        %v670 = vpop.f32.mrf.mxu0
        %v671 = vadd.f32 0.0, %v670
        %v672 = vpop.f32.mrf.mxu0
        %673 = vdwg.mxu0
        %v674 = vadd.f32 %v573, %v666
        %v675 = vadd.f32 %v575, %v668
        %v676 = vadd.f32 %v578, %v671
        %v677 = vld [vmem:[%s341] sm:$0x8]
        %v678 = vld [vmem:[%s341 + $0xc] sm:$0x7]
        %s679 = scalar_lea.vmem [#allocation2], 192
        %v680 = vld [vmem:[%s679] sm:$0xf]
        %v681 = vld [vmem:[%s679 + $0x4] sm:$0xf]
        %v682 = vld [vmem:[%s679 + $0x8] sm:$0xf]
        %v683 = vld [vmem:[%s679 + $0xc] sm:$0xf]
        %v684 = vld [vmem:[%s679 + $0x10] sm:$0xf]
        %v685 = vld [vmem:[%s679 + $0x14] sm:$0xf]
        %v686 = vld [vmem:[%s679 + $0x18] sm:$0xf]
        %v687 = vld [vmem:[%s679 + $0x1c] sm:$0xf]
        %v688 = vld [vmem:[%s679 + $0x20] sm:$0xf]
        %v689 = vld [vmem:[%s679 + $0x24] sm:$0xf]
        %v690 = vld [vmem:[%s679 + $0x28] sm:$0xf]
        %v691 = vld [vmem:[%s679 + $0x2c] sm:$0xf]
        %v692 = vld [vmem:[%s679 + $0x30] sm:$0xf]
        %v693 = vld [vmem:[%s679 + $0x34] sm:$0xf]
        %v694 = vld [vmem:[%s679 + $0x38] sm:$0xf]
        %v695 = vld [vmem:[%s679 + $0x3c] sm:$0xf]
        %v698 = vunpack.c.l.b16 %v677
        %v699 = vunpack.c.l.b16 %v678
        %v700 = vpack.c.b16 %v423, %v698
        %v701 = vpack.c.b16 %v699, %v424
        %vm702 = vcmask 1044480
        %v703 = vrot.slane %v700, 3
        %v704 = vrot.slane %v701, 3
        %v705 = vsel %vm702, %v703, %v704
        %v724 = vunpack.c.l.b16 %v680
        %v725 = vunpack.c.l.b16 %v681
        %v726 = vunpack.c.l.b16 %v682
        %v727 = vunpack.c.l.b16 %v683
        %v728 = vunpack.c.l.b16 %v684
        %v729 = vunpack.c.l.b16 %v685
        %v730 = vunpack.c.l.b16 %v686
        %v731 = vunpack.c.l.b16 %v687
        %v732 = vunpack.c.l.b16 %v688
        %v733 = vunpack.c.l.b16 %v689
        %v734 = vunpack.c.l.b16 %v690
        %v735 = vunpack.c.l.b16 %v691
        %v736 = vunpack.c.l.b16 %v692
        %v737 = vunpack.c.l.b16 %v693
        %v738 = vunpack.c.l.b16 %v694
        %v739 = vunpack.c.l.b16 %v695
        %v740 = vpack.c.b16 %v725, %v724
        %v741 = vpack.c.b16 %v727, %v726
        %v742 = vpack.c.b16 %v729, %v728
        %v743 = vpack.c.b16 %v731, %v730
        %v744 = vpack.c.b16 %v733, %v732
        %v745 = vpack.c.b16 %v735, %v734
        %v746 = vpack.c.b16 %v737, %v736
        %v747 = vpack.c.b16 %v739, %v738
        %756 = vmatpush.bf16.msra.mxu0 %v747
        %757 = vmatpush.bf16.msra.mxu0 %v746
        %758 = vmatpush.bf16.msra.mxu0 %v745
        %759 = vmatpush.bf16.msra.mxu0 %v744
        %760 = vmatpush.bf16.msra.mxu0 %v743
        %761 = vmatpush.bf16.msra.mxu0 %v742
        %762 = vmatpush.bf16.msra.mxu0 %v741
        %763 = vmatpush.bf16.msra.mxu0 %v740
        %764 = vmatmul.bf16.gmra.mxu0 %v705
        %v765 = vpop.f32.mrf.mxu0
        %v766 = vadd.f32 0.0, %v765
        %v767 = vpop.f32.mrf.mxu0
        %v768 = vadd.f32 0.0, %v767
        %769 = vmatmul.bf16.gmra.mxu0 %v704
        %v770 = vpop.f32.mrf.mxu0
        %v771 = vadd.f32 0.0, %v770
        %v772 = vpop.f32.mrf.mxu0
        %773 = vdwg.mxu0
        %v774 = vadd.f32 %v674, %v766
        %v775 = vadd.f32 %v675, %v768
        %v776 = vadd.f32 %v676, %v771
        %v777 = vld [vmem:[%s341 + $0xc] sm:$0xf]
        %s778 = scalar_lea.vmem [#allocation2], 256
        %v779 = vld [vmem:[%s778] sm:$0xf]
        %v780 = vld [vmem:[%s778 + $0x4] sm:$0xf]
        %v781 = vld [vmem:[%s778 + $0x8] sm:$0xf]
        %v782 = vld [vmem:[%s778 + $0xc] sm:$0xf]
        %v783 = vld [vmem:[%s778 + $0x10] sm:$0xf]
        %v784 = vld [vmem:[%s778 + $0x14] sm:$0xf]
        %v785 = vld [vmem:[%s778 + $0x18] sm:$0xf]
        %v786 = vld [vmem:[%s778 + $0x1c] sm:$0xf]
        %v787 = vld [vmem:[%s778 + $0x20] sm:$0xf]
        %v788 = vld [vmem:[%s778 + $0x24] sm:$0xf]
        %v789 = vld [vmem:[%s778 + $0x28] sm:$0xf]
        %v790 = vld [vmem:[%s778 + $0x2c] sm:$0xf]
        %v791 = vld [vmem:[%s778 + $0x30] sm:$0xf]
        %v792 = vld [vmem:[%s778 + $0x34] sm:$0xf]
        %v793 = vld [vmem:[%s778 + $0x38] sm:$0xf]
        %v794 = vld [vmem:[%s778 + $0x3c] sm:$0xf]
        %v796 = vunpack.c.l.b16 %v777
        %v797 = vpack.c.b16 %v796, %v424
        %vm798 = vsmask.f32 4352
        %v800 = vshrl.u32 %v700, 16
        %v802 = vrot.slane %v800, 3
        %v803 = vshll.u32 %v700, 16
        %v805 = vrot.slane %v803, 4
        %v806 = vor.u32 %v802, %v805
        %v808 = vshrl.u32 %v797, 16
        %v810 = vrot.slane %v808, 3
        %v811 = vshll.u32 %v797, 16
        %v813 = vrot.slane %v811, 4
        %v814 = vor.u32 %v810, %v813
        %v815 = vsel %vm798, %v806, %v814
        %v834 = vunpack.c.l.b16 %v779
        %v835 = vunpack.c.l.b16 %v780
        %v836 = vunpack.c.l.b16 %v781
        %v837 = vunpack.c.l.b16 %v782
        %v838 = vunpack.c.l.b16 %v783
        %v839 = vunpack.c.l.b16 %v784
        %v840 = vunpack.c.l.b16 %v785
        %v841 = vunpack.c.l.b16 %v786
        %v842 = vunpack.c.l.b16 %v787
        %v843 = vunpack.c.l.b16 %v788
        %v844 = vunpack.c.l.b16 %v789
        %v845 = vunpack.c.l.b16 %v790
        %v846 = vunpack.c.l.b16 %v791
        %v847 = vunpack.c.l.b16 %v792
        %v848 = vunpack.c.l.b16 %v793
        %v849 = vunpack.c.l.b16 %v794
        %v850 = vpack.c.b16 %v835, %v834
        %v851 = vpack.c.b16 %v837, %v836
        %v852 = vpack.c.b16 %v839, %v838
        %v853 = vpack.c.b16 %v841, %v840
        %v854 = vpack.c.b16 %v843, %v842
        %v855 = vpack.c.b16 %v845, %v844
        %v856 = vpack.c.b16 %v847, %v846
        %v857 = vpack.c.b16 %v849, %v848
        %866 = vmatpush.bf16.msra.mxu0 %v857
        %867 = vmatpush.bf16.msra.mxu0 %v856
        %868 = vmatpush.bf16.msra.mxu0 %v855
        %869 = vmatpush.bf16.msra.mxu0 %v854
        %870 = vmatpush.bf16.msra.mxu0 %v853
        %871 = vmatpush.bf16.msra.mxu0 %v852
        %872 = vmatpush.bf16.msra.mxu0 %v851
        %873 = vmatpush.bf16.msra.mxu0 %v850
        %874 = vmatmul.bf16.gmra.mxu0 %v815
        %v875 = vpop.f32.mrf.mxu0
        %v876 = vadd.f32 0.0, %v875
        %v877 = vpop.f32.mrf.mxu0
        %v878 = vadd.f32 0.0, %v877
        %879 = vmatmul.bf16.gmra.mxu0 %v814
        %v880 = vpop.f32.mrf.mxu0
        %v881 = vadd.f32 0.0, %v880
        %v882 = vpop.f32.mrf.mxu0
        %883 = vdwg.mxu0
        %v884 = vadd.f32 %v774, %v876
        %v885 = vadd.f32 %v775, %v878
        %v886 = vadd.f32 %v776, %v881
        %s887 = scalar_lea.vmem [#allocation2], 320
        %v888 = vld [vmem:[%s887] sm:$0xf]
        %v889 = vld [vmem:[%s887 + $0x4] sm:$0xf]
        %v890 = vld [vmem:[%s887 + $0x8] sm:$0xf]
        %v891 = vld [vmem:[%s887 + $0xc] sm:$0xf]
        %v892 = vld [vmem:[%s887 + $0x10] sm:$0xf]
        %v893 = vld [vmem:[%s887 + $0x14] sm:$0xf]
        %v894 = vld [vmem:[%s887 + $0x18] sm:$0xf]
        %v895 = vld [vmem:[%s887 + $0x1c] sm:$0xf]
        %v896 = vld [vmem:[%s887 + $0x20] sm:$0xf]
        %v897 = vld [vmem:[%s887 + $0x24] sm:$0xf]
        %v898 = vld [vmem:[%s887 + $0x28] sm:$0xf]
        %v899 = vld [vmem:[%s887 + $0x2c] sm:$0xf]
        %v900 = vld [vmem:[%s887 + $0x30] sm:$0xf]
        %v901 = vld [vmem:[%s887 + $0x34] sm:$0xf]
        %v902 = vld [vmem:[%s887 + $0x38] sm:$0xf]
        %v903 = vld [vmem:[%s887 + $0x3c] sm:$0xf]
        %v904 = vpack.c.b16 %v424, %v423
        %v905 = vpack.c.b16 %v796, %v796
        %v924 = vunpack.c.l.b16 %v888
        %v925 = vunpack.c.l.b16 %v889
        %v926 = vunpack.c.l.b16 %v890
        %v927 = vunpack.c.l.b16 %v891
        %v928 = vunpack.c.l.b16 %v892
        %v929 = vunpack.c.l.b16 %v893
        %v930 = vunpack.c.l.b16 %v894
        %v931 = vunpack.c.l.b16 %v895
        %v932 = vunpack.c.l.b16 %v896
        %v933 = vunpack.c.l.b16 %v897
        %v934 = vunpack.c.l.b16 %v898
        %v935 = vunpack.c.l.b16 %v899
        %v936 = vunpack.c.l.b16 %v900
        %v937 = vunpack.c.l.b16 %v901
        %v938 = vunpack.c.l.b16 %v902
        %v939 = vunpack.c.l.b16 %v903
        %v940 = vpack.c.b16 %v925, %v924
        %v941 = vpack.c.b16 %v927, %v926
        %v942 = vpack.c.b16 %v929, %v928
        %v943 = vpack.c.b16 %v931, %v930
        %v944 = vpack.c.b16 %v933, %v932
        %v945 = vpack.c.b16 %v935, %v934
        %v946 = vpack.c.b16 %v937, %v936
        %v947 = vpack.c.b16 %v939, %v938
        %956 = vmatpush.bf16.msra.mxu0 %v947
        %957 = vmatpush.bf16.msra.mxu0 %v946
        %958 = vmatpush.bf16.msra.mxu0 %v945
        %959 = vmatpush.bf16.msra.mxu0 %v944
        %960 = vmatpush.bf16.msra.mxu0 %v943
        %961 = vmatpush.bf16.msra.mxu0 %v942
        %962 = vmatpush.bf16.msra.mxu0 %v941
        %963 = vmatpush.bf16.msra.mxu0 %v940
        %964 = vmatmul.bf16.gmra.mxu0 %v904
        %v965 = vpop.f32.mrf.mxu0
        %v966 = vadd.f32 0.0, %v965
        %v967 = vpop.f32.mrf.mxu0
        %v968 = vadd.f32 0.0, %v967
        %969 = vmatmul.bf16.gmra.mxu0 %v905
        %v970 = vpop.f32.mrf.mxu0
        %v971 = vadd.f32 0.0, %v970
        %v972 = vpop.f32.mrf.mxu0
        %973 = vdwg.mxu0
        %v974 = vadd.f32 %v884, %v966
        %v975 = vadd.f32 %v885, %v968
        %v976 = vadd.f32 %v886, %v971
        %v977 = vld [vmem:[%s341 + $0x4] sm:$0xc]
        %v978 = vld [vmem:[%s341 + $0x8] sm:$0xf]
        %v979 = vld [vmem:[%s341 + $0xc] sm:$0xf]
        %v980 = vld [vmem:[%s341 + $0x10] sm:$0x3]
        %s981 = scalar_lea.vmem [#allocation2], 384
        %v982 = vld [vmem:[%s981] sm:$0xf]
        %v983 = vld [vmem:[%s981 + $0x4] sm:$0xf]
        %v984 = vld [vmem:[%s981 + $0x8] sm:$0xf]
        %v985 = vld [vmem:[%s981 + $0xc] sm:$0xf]
        %v986 = vld [vmem:[%s981 + $0x10] sm:$0xf]
        %v987 = vld [vmem:[%s981 + $0x14] sm:$0xf]
        %v988 = vld [vmem:[%s981 + $0x18] sm:$0xf]
        %v989 = vld [vmem:[%s981 + $0x1c] sm:$0xf]
        %v990 = vld [vmem:[%s981 + $0x20] sm:$0xf]
        %v991 = vld [vmem:[%s981 + $0x24] sm:$0xf]
        %v992 = vld [vmem:[%s981 + $0x28] sm:$0xf]
        %v993 = vld [vmem:[%s981 + $0x2c] sm:$0xf]
        %v994 = vld [vmem:[%s981 + $0x30] sm:$0xf]
        %v995 = vld [vmem:[%s981 + $0x34] sm:$0xf]
        %v996 = vld [vmem:[%s981 + $0x38] sm:$0xf]
        %v997 = vld [vmem:[%s981 + $0x3c] sm:$0xf]
        %v1002 = vunpack.c.l.b16 %v977
        %v1003 = vunpack.c.l.b16 %v978
        %v1004 = vunpack.c.l.b16 %v979
        %v1005 = vunpack.c.l.b16 %v980
        %v1006 = vpack.c.b16 %v1003, %v1002
        %v1007 = vpack.c.b16 %v1005, %v1004
        %vm1008 = vcmask 1045504
        %v1009 = vrot.slane %v1006, 2
        %v1010 = vrot.slane %v1007, 2
        %v1011 = vsel %vm1008, %v1009, %v1010
        %v1030 = vunpack.c.l.b16 %v982
        %v1031 = vunpack.c.l.b16 %v983
        %v1032 = vunpack.c.l.b16 %v984
        %v1033 = vunpack.c.l.b16 %v985
        %v1034 = vunpack.c.l.b16 %v986
        %v1035 = vunpack.c.l.b16 %v987
        %v1036 = vunpack.c.l.b16 %v988
        %v1037 = vunpack.c.l.b16 %v989
        %v1038 = vunpack.c.l.b16 %v990
        %v1039 = vunpack.c.l.b16 %v991
        %v1040 = vunpack.c.l.b16 %v992
        %v1041 = vunpack.c.l.b16 %v993
        %v1042 = vunpack.c.l.b16 %v994
        %v1043 = vunpack.c.l.b16 %v995
        %v1044 = vunpack.c.l.b16 %v996
        %v1045 = vunpack.c.l.b16 %v997
        %v1046 = vpack.c.b16 %v1031, %v1030
        %v1047 = vpack.c.b16 %v1033, %v1032
        %v1048 = vpack.c.b16 %v1035, %v1034
        %v1049 = vpack.c.b16 %v1037, %v1036
        %v1050 = vpack.c.b16 %v1039, %v1038
        %v1051 = vpack.c.b16 %v1041, %v1040
        %v1052 = vpack.c.b16 %v1043, %v1042
        %v1053 = vpack.c.b16 %v1045, %v1044
        %1062 = vmatpush.bf16.msra.mxu0 %v1053
        %1063 = vmatpush.bf16.msra.mxu0 %v1052
        %1064 = vmatpush.bf16.msra.mxu0 %v1051
        %1065 = vmatpush.bf16.msra.mxu0 %v1050
        %1066 = vmatpush.bf16.msra.mxu0 %v1049
        %1067 = vmatpush.bf16.msra.mxu0 %v1048
        %1068 = vmatpush.bf16.msra.mxu0 %v1047
        %1069 = vmatpush.bf16.msra.mxu0 %v1046
        %1070 = vmatmul.bf16.gmra.mxu0 %v1011
        %v1071 = vpop.f32.mrf.mxu0
        %v1072 = vadd.f32 0.0, %v1071
        %v1073 = vpop.f32.mrf.mxu0
        %v1074 = vadd.f32 0.0, %v1073
        %1075 = vmatmul.bf16.gmra.mxu0 %v1010
        %v1076 = vpop.f32.mrf.mxu0
        %v1077 = vadd.f32 0.0, %v1076
        %v1078 = vpop.f32.mrf.mxu0
        %1079 = vdwg.mxu0
        %v1080 = vadd.f32 %v974, %v1072
        %v1081 = vadd.f32 %v975, %v1074
        %v1082 = vadd.f32 %v976, %v1077
        %v1083 = vld [vmem:[%s341 + $0x10] sm:$0x7]
        %s1084 = scalar_lea.vmem [#allocation2], 448
        %v1085 = vld [vmem:[%s1084] sm:$0xf]
        %v1086 = vld [vmem:[%s1084 + $0x4] sm:$0xf]
        %v1087 = vld [vmem:[%s1084 + $0x8] sm:$0xf]
        %v1088 = vld [vmem:[%s1084 + $0xc] sm:$0xf]
        %v1089 = vld [vmem:[%s1084 + $0x10] sm:$0xf]
        %v1090 = vld [vmem:[%s1084 + $0x14] sm:$0xf]
        %v1091 = vld [vmem:[%s1084 + $0x18] sm:$0xf]
        %v1092 = vld [vmem:[%s1084 + $0x1c] sm:$0xf]
        %v1093 = vld [vmem:[%s1084 + $0x20] sm:$0xf]
        %v1094 = vld [vmem:[%s1084 + $0x24] sm:$0xf]
        %v1095 = vld [vmem:[%s1084 + $0x28] sm:$0xf]
        %v1096 = vld [vmem:[%s1084 + $0x2c] sm:$0xf]
        %v1097 = vld [vmem:[%s1084 + $0x30] sm:$0xf]
        %v1098 = vld [vmem:[%s1084 + $0x34] sm:$0xf]
        %v1099 = vld [vmem:[%s1084 + $0x38] sm:$0xf]
        %v1100 = vld [vmem:[%s1084 + $0x3c] sm:$0xf]
        %v1102 = vunpack.c.l.b16 %v1083
        %v1103 = vpack.c.b16 %v1102, %v1004
        %vm1104 = vsmask.f32 5376
        %v1106 = vshrl.u32 %v1006, 16
        %v1108 = vrot.slane %v1106, 2
        %v1109 = vshll.u32 %v1006, 16
        %v1111 = vrot.slane %v1109, 3
        %v1112 = vor.u32 %v1108, %v1111
        %v1114 = vshrl.u32 %v1103, 16
        %v1116 = vrot.slane %v1114, 2
        %v1117 = vshll.u32 %v1103, 16
        %v1119 = vrot.slane %v1117, 3
        %v1120 = vor.u32 %v1116, %v1119
        %v1121 = vsel %vm1104, %v1112, %v1120
        %v1140 = vunpack.c.l.b16 %v1085
        %v1141 = vunpack.c.l.b16 %v1086
        %v1142 = vunpack.c.l.b16 %v1087
        %v1143 = vunpack.c.l.b16 %v1088
        %v1144 = vunpack.c.l.b16 %v1089
        %v1145 = vunpack.c.l.b16 %v1090
        %v1146 = vunpack.c.l.b16 %v1091
        %v1147 = vunpack.c.l.b16 %v1092
        %v1148 = vunpack.c.l.b16 %v1093
        %v1149 = vunpack.c.l.b16 %v1094
        %v1150 = vunpack.c.l.b16 %v1095
        %v1151 = vunpack.c.l.b16 %v1096
        %v1152 = vunpack.c.l.b16 %v1097
        %v1153 = vunpack.c.l.b16 %v1098
        %v1154 = vunpack.c.l.b16 %v1099
        %v1155 = vunpack.c.l.b16 %v1100
        %v1156 = vpack.c.b16 %v1141, %v1140
        %v1157 = vpack.c.b16 %v1143, %v1142
        %v1158 = vpack.c.b16 %v1145, %v1144
        %v1159 = vpack.c.b16 %v1147, %v1146
        %v1160 = vpack.c.b16 %v1149, %v1148
        %v1161 = vpack.c.b16 %v1151, %v1150
        %v1162 = vpack.c.b16 %v1153, %v1152
        %v1163 = vpack.c.b16 %v1155, %v1154
        %1172 = vmatpush.bf16.msra.mxu0 %v1163
        %1173 = vmatpush.bf16.msra.mxu0 %v1162
        %1174 = vmatpush.bf16.msra.mxu0 %v1161
        %1175 = vmatpush.bf16.msra.mxu0 %v1160
        %1176 = vmatpush.bf16.msra.mxu0 %v1159
        %1177 = vmatpush.bf16.msra.mxu0 %v1158
        %1178 = vmatpush.bf16.msra.mxu0 %v1157
        %1179 = vmatpush.bf16.msra.mxu0 %v1156
        %1180 = vmatmul.bf16.gmra.mxu0 %v1121
        %v1181 = vpop.f32.mrf.mxu0
        %v1182 = vadd.f32 0.0, %v1181
        %v1183 = vpop.f32.mrf.mxu0
        %v1184 = vadd.f32 0.0, %v1183
        %1185 = vmatmul.bf16.gmra.mxu0 %v1120
        %v1186 = vpop.f32.mrf.mxu0
        %v1187 = vadd.f32 0.0, %v1186
        %v1188 = vpop.f32.mrf.mxu0
        %1189 = vdwg.mxu0
        %v1190 = vadd.f32 %v1080, %v1182
        %v1191 = vadd.f32 %v1081, %v1184
        %v1192 = vadd.f32 %v1082, %v1187
        %v1193 = vld [vmem:[%s341 + $0x4] sm:$0x8]
        %s1194 = scalar_lea.vmem [#allocation2], 512
        %v1195 = vld [vmem:[%s1194] sm:$0xf]
        %v1196 = vld [vmem:[%s1194 + $0x4] sm:$0xf]
        %v1197 = vld [vmem:[%s1194 + $0x8] sm:$0xf]
        %v1198 = vld [vmem:[%s1194 + $0xc] sm:$0xf]
        %v1199 = vld [vmem:[%s1194 + $0x10] sm:$0xf]
        %v1200 = vld [vmem:[%s1194 + $0x14] sm:$0xf]
        %v1201 = vld [vmem:[%s1194 + $0x18] sm:$0xf]
        %v1202 = vld [vmem:[%s1194 + $0x1c] sm:$0xf]
        %v1203 = vld [vmem:[%s1194 + $0x20] sm:$0xf]
        %v1204 = vld [vmem:[%s1194 + $0x24] sm:$0xf]
        %v1205 = vld [vmem:[%s1194 + $0x28] sm:$0xf]
        %v1206 = vld [vmem:[%s1194 + $0x2c] sm:$0xf]
        %v1207 = vld [vmem:[%s1194 + $0x30] sm:$0xf]
        %v1208 = vld [vmem:[%s1194 + $0x34] sm:$0xf]
        %v1209 = vld [vmem:[%s1194 + $0x38] sm:$0xf]
        %v1210 = vld [vmem:[%s1194 + $0x3c] sm:$0xf]
        %v1212 = vunpack.c.l.b16 %v1193
        %v1213 = vpack.c.b16 %v1003, %v1212
        %v1214 = vrot.slane %v1213, 3
        %v1215 = vrot.slane %v1103, 3
        %v1216 = vsel %vm702, %v1214, %v1215
        %v1235 = vunpack.c.l.b16 %v1195
        %v1236 = vunpack.c.l.b16 %v1196
        %v1237 = vunpack.c.l.b16 %v1197
        %v1238 = vunpack.c.l.b16 %v1198
        %v1239 = vunpack.c.l.b16 %v1199
        %v1240 = vunpack.c.l.b16 %v1200
        %v1241 = vunpack.c.l.b16 %v1201
        %v1242 = vunpack.c.l.b16 %v1202
        %v1243 = vunpack.c.l.b16 %v1203
        %v1244 = vunpack.c.l.b16 %v1204
        %v1245 = vunpack.c.l.b16 %v1205
        %v1246 = vunpack.c.l.b16 %v1206
        %v1247 = vunpack.c.l.b16 %v1207
        %v1248 = vunpack.c.l.b16 %v1208
        %v1249 = vunpack.c.l.b16 %v1209
        %v1250 = vunpack.c.l.b16 %v1210
        %v1251 = vpack.c.b16 %v1236, %v1235
        %v1252 = vpack.c.b16 %v1238, %v1237
        %v1253 = vpack.c.b16 %v1240, %v1239
        %v1254 = vpack.c.b16 %v1242, %v1241
        %v1255 = vpack.c.b16 %v1244, %v1243
        %v1256 = vpack.c.b16 %v1246, %v1245
        %v1257 = vpack.c.b16 %v1248, %v1247
        %v1258 = vpack.c.b16 %v1250, %v1249
        %1267 = vmatpush.bf16.msra.mxu0 %v1258
        %1268 = vmatpush.bf16.msra.mxu0 %v1257
        %1269 = vmatpush.bf16.msra.mxu0 %v1256
        %1270 = vmatpush.bf16.msra.mxu0 %v1255
        %1271 = vmatpush.bf16.msra.mxu0 %v1254
        %1272 = vmatpush.bf16.msra.mxu0 %v1253
        %1273 = vmatpush.bf16.msra.mxu0 %v1252
        %1274 = vmatpush.bf16.msra.mxu0 %v1251
        %1275 = vmatmul.bf16.gmra.mxu0 %v1216
        %v1276 = vpop.f32.mrf.mxu0
        %v1277 = vadd.f32 0.0, %v1276
        %v1278 = vpop.f32.mrf.mxu0
        %v1279 = vadd.f32 0.0, %v1278
        %1280 = vmatmul.bf16.gmra.mxu0 %v1215
        %v1281 = vpop.f32.mrf.mxu0
        %v1282 = vadd.f32 0.0, %v1281
        %v1283 = vpop.f32.mrf.mxu0
        %1284 = vdwg.mxu0
        %v1285 = vadd.f32 %v1190, %v1277
        %v1286 = vadd.f32 %v1191, %v1279
        %v1287 = vadd.f32 %v1192, %v1282
        %v1288 = vld [vmem:[%s351] sm:$0xf]
        %v1289 = vld [vmem:[%s351 + $0x4] sm:$0xf]
        %v1290 = vld [vmem:[%s351 + $0x8] sm:$0xf]
        %s1291 = scalar_lea.vmem [#allocation2], 576
        %v1292 = vld [vmem:[%s1291] sm:$0xf]
        %v1293 = vld [vmem:[%s1291 + $0x4] sm:$0xf]
        %v1294 = vld [vmem:[%s1291 + $0x8] sm:$0xf]
        %v1295 = vld [vmem:[%s1291 + $0xc] sm:$0xf]
        %v1296 = vld [vmem:[%s1291 + $0x10] sm:$0xf]
        %v1297 = vld [vmem:[%s1291 + $0x14] sm:$0xf]
        %v1298 = vld [vmem:[%s1291 + $0x18] sm:$0xf]
        %v1299 = vld [vmem:[%s1291 + $0x1c] sm:$0xf]
        %v1300 = vld [vmem:[%s1291 + $0x20] sm:$0xf]
        %v1301 = vld [vmem:[%s1291 + $0x24] sm:$0xf]
        %v1302 = vld [vmem:[%s1291 + $0x28] sm:$0xf]
        %v1303 = vld [vmem:[%s1291 + $0x2c] sm:$0xf]
        %v1304 = vld [vmem:[%s1291 + $0x30] sm:$0xf]
        %v1305 = vld [vmem:[%s1291 + $0x34] sm:$0xf]
        %v1306 = vld [vmem:[%s1291 + $0x38] sm:$0xf]
        %v1307 = vld [vmem:[%s1291 + $0x3c] sm:$0xf]
        %v1311 = vunpack.c.l.b16 %v1288
        %v1312 = vunpack.c.l.b16 %v1289
        %v1313 = vunpack.c.l.b16 %v1290
        %v1314 = vpack.c.b16 %v1312, %v1311
        %v1315 = vpack.c.b16 %v1313, %v1313
        %v1334 = vunpack.c.l.b16 %v1292
        %v1335 = vunpack.c.l.b16 %v1293
        %v1336 = vunpack.c.l.b16 %v1294
        %v1337 = vunpack.c.l.b16 %v1295
        %v1338 = vunpack.c.l.b16 %v1296
        %v1339 = vunpack.c.l.b16 %v1297
        %v1340 = vunpack.c.l.b16 %v1298
        %v1341 = vunpack.c.l.b16 %v1299
        %v1342 = vunpack.c.l.b16 %v1300
        %v1343 = vunpack.c.l.b16 %v1301
        %v1344 = vunpack.c.l.b16 %v1302
        %v1345 = vunpack.c.l.b16 %v1303
        %v1346 = vunpack.c.l.b16 %v1304
        %v1347 = vunpack.c.l.b16 %v1305
        %v1348 = vunpack.c.l.b16 %v1306
        %v1349 = vunpack.c.l.b16 %v1307
        %v1350 = vpack.c.b16 %v1335, %v1334
        %v1351 = vpack.c.b16 %v1337, %v1336
        %v1352 = vpack.c.b16 %v1339, %v1338
        %v1353 = vpack.c.b16 %v1341, %v1340
        %v1354 = vpack.c.b16 %v1343, %v1342
        %v1355 = vpack.c.b16 %v1345, %v1344
        %v1356 = vpack.c.b16 %v1347, %v1346
        %v1357 = vpack.c.b16 %v1349, %v1348
        %1366 = vmatpush.bf16.msra.mxu0 %v1357
        %1367 = vmatpush.bf16.msra.mxu0 %v1356
        %1368 = vmatpush.bf16.msra.mxu0 %v1355
        %1369 = vmatpush.bf16.msra.mxu0 %v1354
        %1370 = vmatpush.bf16.msra.mxu0 %v1353
        %1371 = vmatpush.bf16.msra.mxu0 %v1352
        %1372 = vmatpush.bf16.msra.mxu0 %v1351
        %1373 = vmatpush.bf16.msra.mxu0 %v1350
        %1374 = vmatmul.bf16.gmra.mxu0 %v1314
        %v1375 = vpop.f32.mrf.mxu0
        %v1376 = vadd.f32 0.0, %v1375
        %v1377 = vpop.f32.mrf.mxu0
        %v1378 = vadd.f32 0.0, %v1377
        %1379 = vmatmul.bf16.gmra.mxu0 %v1315
        %v1380 = vpop.f32.mrf.mxu0
        %v1381 = vadd.f32 0.0, %v1380
        %v1382 = vpop.f32.mrf.mxu0
        %1383 = vdwg.mxu0
        %v1384 = vadd.f32 %v1285, %v1376
        %v1385 = vadd.f32 %v1286, %v1378
        %v1386 = vadd.f32 %v1287, %v1381
        %v1387 = vld [vmem:[%s351] sm:$0xf]
        %v1388 = vld [vmem:[%s351 + $0x4] sm:$0xf]
        %v1389 = vld [vmem:[%s351 + $0x8] sm:$0xf]
        %v1390 = vld [vmem:[%s351 + $0xc] sm:$0x1]
        %s1391 = scalar_lea.vmem [#allocation2], 640
        %v1392 = vld [vmem:[%s1391] sm:$0xf]
        %v1393 = vld [vmem:[%s1391 + $0x4] sm:$0xf]
        %v1394 = vld [vmem:[%s1391 + $0x8] sm:$0xf]
        %v1395 = vld [vmem:[%s1391 + $0xc] sm:$0xf]
        %v1396 = vld [vmem:[%s1391 + $0x10] sm:$0xf]
        %v1397 = vld [vmem:[%s1391 + $0x14] sm:$0xf]
        %v1398 = vld [vmem:[%s1391 + $0x18] sm:$0xf]
        %v1399 = vld [vmem:[%s1391 + $0x1c] sm:$0xf]
        %v1400 = vld [vmem:[%s1391 + $0x20] sm:$0xf]
        %v1401 = vld [vmem:[%s1391 + $0x24] sm:$0xf]
        %v1402 = vld [vmem:[%s1391 + $0x28] sm:$0xf]
        %v1403 = vld [vmem:[%s1391 + $0x2c] sm:$0xf]
        %v1404 = vld [vmem:[%s1391 + $0x30] sm:$0xf]
        %v1405 = vld [vmem:[%s1391 + $0x34] sm:$0xf]
        %v1406 = vld [vmem:[%s1391 + $0x38] sm:$0xf]
        %v1407 = vld [vmem:[%s1391 + $0x3c] sm:$0xf]
        %v1412 = vunpack.c.l.b16 %v1387
        %v1413 = vunpack.c.l.b16 %v1388
        %v1414 = vunpack.c.l.b16 %v1389
        %v1415 = vunpack.c.l.b16 %v1390
        %v1416 = vpack.c.b16 %v1413, %v1412
        %v1417 = vpack.c.b16 %v1415, %v1414
        %v1419 = vshrl.u32 %v1416, 16
        %v1421 = vshll.u32 %v1416, 16
        %v1423 = vrot.slane %v1421, 1
        %v1424 = vor.u32 %v1419, %v1423
        %v1426 = vshll.u32 %v1417, 16
        %v1428 = vrot.slane %v1426, 1
        %v1429 = vsel %vm428, %v1424, %v1428
        %v1430 = vshrl.u32 %v1417, 16
        %v1432 = vor.u32 %v1430, %v1428
        %v1451 = vunpack.c.l.b16 %v1392
        %v1452 = vunpack.c.l.b16 %v1393
        %v1453 = vunpack.c.l.b16 %v1394
        %v1454 = vunpack.c.l.b16 %v1395
        %v1455 = vunpack.c.l.b16 %v1396
        %v1456 = vunpack.c.l.b16 %v1397
        %v1457 = vunpack.c.l.b16 %v1398
        %v1458 = vunpack.c.l.b16 %v1399
        %v1459 = vunpack.c.l.b16 %v1400
        %v1460 = vunpack.c.l.b16 %v1401
        %v1461 = vunpack.c.l.b16 %v1402
        %v1462 = vunpack.c.l.b16 %v1403
        %v1463 = vunpack.c.l.b16 %v1404
        %v1464 = vunpack.c.l.b16 %v1405
        %v1465 = vunpack.c.l.b16 %v1406
        %v1466 = vunpack.c.l.b16 %v1407
        %v1467 = vpack.c.b16 %v1452, %v1451
        %v1468 = vpack.c.b16 %v1454, %v1453
        %v1469 = vpack.c.b16 %v1456, %v1455
        %v1470 = vpack.c.b16 %v1458, %v1457
        %v1471 = vpack.c.b16 %v1460, %v1459
        %v1472 = vpack.c.b16 %v1462, %v1461
        %v1473 = vpack.c.b16 %v1464, %v1463
        %v1474 = vpack.c.b16 %v1466, %v1465
        %1483 = vmatpush.bf16.msra.mxu0 %v1474
        %1484 = vmatpush.bf16.msra.mxu0 %v1473
        %1485 = vmatpush.bf16.msra.mxu0 %v1472
        %1486 = vmatpush.bf16.msra.mxu0 %v1471
        %1487 = vmatpush.bf16.msra.mxu0 %v1470
        %1488 = vmatpush.bf16.msra.mxu0 %v1469
        %1489 = vmatpush.bf16.msra.mxu0 %v1468
        %1490 = vmatpush.bf16.msra.mxu0 %v1467
        %1491 = vmatmul.bf16.gmra.mxu0 %v1429
        %v1492 = vpop.f32.mrf.mxu0
        %v1493 = vadd.f32 0.0, %v1492
        %v1494 = vpop.f32.mrf.mxu0
        %v1495 = vadd.f32 0.0, %v1494
        %1496 = vmatmul.bf16.gmra.mxu0 %v1432
        %v1497 = vpop.f32.mrf.mxu0
        %v1498 = vadd.f32 0.0, %v1497
        %v1499 = vpop.f32.mrf.mxu0
        %1500 = vdwg.mxu0
        %v1501 = vadd.f32 %v1384, %v1493
        %v1502 = vadd.f32 %v1385, %v1495
        %v1503 = vadd.f32 %v1386, %v1498
        %v1504 = vld [vmem:[%s351] sm:$0xe]
        %s1505 = scalar_lea.vmem [#allocation2], 704
        %v1506 = vld [vmem:[%s1505] sm:$0xf]
        %v1507 = vld [vmem:[%s1505 + $0x4] sm:$0xf]
        %v1508 = vld [vmem:[%s1505 + $0x8] sm:$0xf]
        %v1509 = vld [vmem:[%s1505 + $0xc] sm:$0xf]
        %v1510 = vld [vmem:[%s1505 + $0x10] sm:$0xf]
        %v1511 = vld [vmem:[%s1505 + $0x14] sm:$0xf]
        %v1512 = vld [vmem:[%s1505 + $0x18] sm:$0xf]
        %v1513 = vld [vmem:[%s1505 + $0x1c] sm:$0xf]
        %v1514 = vld [vmem:[%s1505 + $0x20] sm:$0xf]
        %v1515 = vld [vmem:[%s1505 + $0x24] sm:$0xf]
        %v1516 = vld [vmem:[%s1505 + $0x28] sm:$0xf]
        %v1517 = vld [vmem:[%s1505 + $0x2c] sm:$0xf]
        %v1518 = vld [vmem:[%s1505 + $0x30] sm:$0xf]
        %v1519 = vld [vmem:[%s1505 + $0x34] sm:$0xf]
        %v1520 = vld [vmem:[%s1505 + $0x38] sm:$0xf]
        %v1521 = vld [vmem:[%s1505 + $0x3c] sm:$0xf]
        %v1523 = vunpack.c.l.b16 %v1504
        %v1524 = vpack.c.b16 %v1413, %v1523
        %v1525 = vrot.slane %v1524, 1
        %v1526 = vrot.slane %v1417, 1
        %v1527 = vsel %vm602, %v1525, %v1526
        %v1546 = vunpack.c.l.b16 %v1506
        %v1547 = vunpack.c.l.b16 %v1507
        %v1548 = vunpack.c.l.b16 %v1508
        %v1549 = vunpack.c.l.b16 %v1509
        %v1550 = vunpack.c.l.b16 %v1510
        %v1551 = vunpack.c.l.b16 %v1511
        %v1552 = vunpack.c.l.b16 %v1512
        %v1553 = vunpack.c.l.b16 %v1513
        %v1554 = vunpack.c.l.b16 %v1514
        %v1555 = vunpack.c.l.b16 %v1515
        %v1556 = vunpack.c.l.b16 %v1516
        %v1557 = vunpack.c.l.b16 %v1517
        %v1558 = vunpack.c.l.b16 %v1518
        %v1559 = vunpack.c.l.b16 %v1519
        %v1560 = vunpack.c.l.b16 %v1520
        %v1561 = vunpack.c.l.b16 %v1521
        %v1562 = vpack.c.b16 %v1547, %v1546
        %v1563 = vpack.c.b16 %v1549, %v1548
        %v1564 = vpack.c.b16 %v1551, %v1550
        %v1565 = vpack.c.b16 %v1553, %v1552
        %v1566 = vpack.c.b16 %v1555, %v1554
        %v1567 = vpack.c.b16 %v1557, %v1556
        %v1568 = vpack.c.b16 %v1559, %v1558
        %v1569 = vpack.c.b16 %v1561, %v1560
        %1578 = vmatpush.bf16.msra.mxu0 %v1569
        %1579 = vmatpush.bf16.msra.mxu0 %v1568
        %1580 = vmatpush.bf16.msra.mxu0 %v1567
        %1581 = vmatpush.bf16.msra.mxu0 %v1566
        %1582 = vmatpush.bf16.msra.mxu0 %v1565
        %1583 = vmatpush.bf16.msra.mxu0 %v1564
        %1584 = vmatpush.bf16.msra.mxu0 %v1563
        %1585 = vmatpush.bf16.msra.mxu0 %v1562
        %1586 = vmatmul.bf16.gmra.mxu0 %v1527
        %v1587 = vpop.f32.mrf.mxu0
        %v1588 = vadd.f32 0.0, %v1587
        %v1589 = vpop.f32.mrf.mxu0
        %v1590 = vadd.f32 0.0, %v1589
        %1591 = vmatmul.bf16.gmra.mxu0 %v1526
        %v1592 = vpop.f32.mrf.mxu0
        %v1593 = vadd.f32 0.0, %v1592
        %v1594 = vpop.f32.mrf.mxu0
        %1595 = vdwg.mxu0
        %v1596 = vadd.f32 %v1501, %v1588
        %v1597 = vadd.f32 %v1502, %v1590
        %v1598 = vadd.f32 %v1503, %v1593
        %v1599 = vld [vmem:[%s351] sm:$0x8]
        %v1600 = vld [vmem:[%s351 + $0xc] sm:$0x7]
        %s1601 = scalar_lea.vmem [#allocation2], 768
        %v1602 = vld [vmem:[%s1601] sm:$0xf]
        %v1603 = vld [vmem:[%s1601 + $0x4] sm:$0xf]
        %v1604 = vld [vmem:[%s1601 + $0x8] sm:$0xf]
        %v1605 = vld [vmem:[%s1601 + $0xc] sm:$0xf]
        %v1606 = vld [vmem:[%s1601 + $0x10] sm:$0xf]
        %v1607 = vld [vmem:[%s1601 + $0x14] sm:$0xf]
        %v1608 = vld [vmem:[%s1601 + $0x18] sm:$0xf]
        %v1609 = vld [vmem:[%s1601 + $0x1c] sm:$0xf]
        %v1610 = vld [vmem:[%s1601 + $0x20] sm:$0xf]
        %v1611 = vld [vmem:[%s1601 + $0x24] sm:$0xf]
        %v1612 = vld [vmem:[%s1601 + $0x28] sm:$0xf]
        %v1613 = vld [vmem:[%s1601 + $0x2c] sm:$0xf]
        %v1614 = vld [vmem:[%s1601 + $0x30] sm:$0xf]
        %v1615 = vld [vmem:[%s1601 + $0x34] sm:$0xf]
        %v1616 = vld [vmem:[%s1601 + $0x38] sm:$0xf]
        %v1617 = vld [vmem:[%s1601 + $0x3c] sm:$0xf]
        %v1620 = vunpack.c.l.b16 %v1599
        %v1621 = vunpack.c.l.b16 %v1600
        %v1622 = vpack.c.b16 %v1413, %v1620
        %v1623 = vpack.c.b16 %v1621, %v1414
        %v1624 = vrot.slane %v1622, 3
        %v1625 = vrot.slane %v1623, 3
        %v1626 = vsel %vm702, %v1624, %v1625
        %v1645 = vunpack.c.l.b16 %v1602
        %v1646 = vunpack.c.l.b16 %v1603
        %v1647 = vunpack.c.l.b16 %v1604
        %v1648 = vunpack.c.l.b16 %v1605
        %v1649 = vunpack.c.l.b16 %v1606
        %v1650 = vunpack.c.l.b16 %v1607
        %v1651 = vunpack.c.l.b16 %v1608
        %v1652 = vunpack.c.l.b16 %v1609
        %v1653 = vunpack.c.l.b16 %v1610
        %v1654 = vunpack.c.l.b16 %v1611
        %v1655 = vunpack.c.l.b16 %v1612
        %v1656 = vunpack.c.l.b16 %v1613
        %v1657 = vunpack.c.l.b16 %v1614
        %v1658 = vunpack.c.l.b16 %v1615
        %v1659 = vunpack.c.l.b16 %v1616
        %v1660 = vunpack.c.l.b16 %v1617
        %v1661 = vpack.c.b16 %v1646, %v1645
        %v1662 = vpack.c.b16 %v1648, %v1647
        %v1663 = vpack.c.b16 %v1650, %v1649
        %v1664 = vpack.c.b16 %v1652, %v1651
        %v1665 = vpack.c.b16 %v1654, %v1653
        %v1666 = vpack.c.b16 %v1656, %v1655
        %v1667 = vpack.c.b16 %v1658, %v1657
        %v1668 = vpack.c.b16 %v1660, %v1659
        %1677 = vmatpush.bf16.msra.mxu0 %v1668
        %1678 = vmatpush.bf16.msra.mxu0 %v1667
        %1679 = vmatpush.bf16.msra.mxu0 %v1666
        %1680 = vmatpush.bf16.msra.mxu0 %v1665
        %1681 = vmatpush.bf16.msra.mxu0 %v1664
        %1682 = vmatpush.bf16.msra.mxu0 %v1663
        %1683 = vmatpush.bf16.msra.mxu0 %v1662
        %1684 = vmatpush.bf16.msra.mxu0 %v1661
        %1685 = vmatmul.bf16.gmra.mxu0 %v1626
        %v1686 = vpop.f32.mrf.mxu0
        %v1687 = vadd.f32 0.0, %v1686
        %v1688 = vpop.f32.mrf.mxu0
        %v1689 = vadd.f32 0.0, %v1688
        %1690 = vmatmul.bf16.gmra.mxu0 %v1625
        %v1691 = vpop.f32.mrf.mxu0
        %v1692 = vadd.f32 0.0, %v1691
        %v1693 = vpop.f32.mrf.mxu0
        %1694 = vdwg.mxu0
        %v1695 = vadd.f32 %v1596, %v1687
        %v1696 = vadd.f32 %v1597, %v1689
        %v1697 = vadd.f32 %v1598, %v1692
        %v1698 = vld [vmem:[%s351 + $0xc] sm:$0xf]
        %s1699 = scalar_lea.vmem [#allocation2], 832
        %v1700 = vld [vmem:[%s1699] sm:$0xf]
        %v1701 = vld [vmem:[%s1699 + $0x4] sm:$0xf]
        %v1702 = vld [vmem:[%s1699 + $0x8] sm:$0xf]
        %v1703 = vld [vmem:[%s1699 + $0xc] sm:$0xf]
        %v1704 = vld [vmem:[%s1699 + $0x10] sm:$0xf]
        %v1705 = vld [vmem:[%s1699 + $0x14] sm:$0xf]
        %v1706 = vld [vmem:[%s1699 + $0x18] sm:$0xf]
        %v1707 = vld [vmem:[%s1699 + $0x1c] sm:$0xf]
        %v1708 = vld [vmem:[%s1699 + $0x20] sm:$0xf]
        %v1709 = vld [vmem:[%s1699 + $0x24] sm:$0xf]
        %v1710 = vld [vmem:[%s1699 + $0x28] sm:$0xf]
        %v1711 = vld [vmem:[%s1699 + $0x2c] sm:$0xf]
        %v1712 = vld [vmem:[%s1699 + $0x30] sm:$0xf]
        %v1713 = vld [vmem:[%s1699 + $0x34] sm:$0xf]
        %v1714 = vld [vmem:[%s1699 + $0x38] sm:$0xf]
        %v1715 = vld [vmem:[%s1699 + $0x3c] sm:$0xf]
        %v1717 = vunpack.c.l.b16 %v1698
        %v1718 = vpack.c.b16 %v1717, %v1414
        %v1720 = vshrl.u32 %v1622, 16
        %v1722 = vrot.slane %v1720, 3
        %v1723 = vshll.u32 %v1622, 16
        %v1725 = vrot.slane %v1723, 4
        %v1726 = vor.u32 %v1722, %v1725
        %v1728 = vshrl.u32 %v1718, 16
        %v1730 = vrot.slane %v1728, 3
        %v1731 = vshll.u32 %v1718, 16
        %v1733 = vrot.slane %v1731, 4
        %v1734 = vor.u32 %v1730, %v1733
        %v1735 = vsel %vm798, %v1726, %v1734
        %v1754 = vunpack.c.l.b16 %v1700
        %v1755 = vunpack.c.l.b16 %v1701
        %v1756 = vunpack.c.l.b16 %v1702
        %v1757 = vunpack.c.l.b16 %v1703
        %v1758 = vunpack.c.l.b16 %v1704
        %v1759 = vunpack.c.l.b16 %v1705
        %v1760 = vunpack.c.l.b16 %v1706
        %v1761 = vunpack.c.l.b16 %v1707
        %v1762 = vunpack.c.l.b16 %v1708
        %v1763 = vunpack.c.l.b16 %v1709
        %v1764 = vunpack.c.l.b16 %v1710
        %v1765 = vunpack.c.l.b16 %v1711
        %v1766 = vunpack.c.l.b16 %v1712
        %v1767 = vunpack.c.l.b16 %v1713
        %v1768 = vunpack.c.l.b16 %v1714
        %v1769 = vunpack.c.l.b16 %v1715
        %v1770 = vpack.c.b16 %v1755, %v1754
        %v1771 = vpack.c.b16 %v1757, %v1756
        %v1772 = vpack.c.b16 %v1759, %v1758
        %v1773 = vpack.c.b16 %v1761, %v1760
        %v1774 = vpack.c.b16 %v1763, %v1762
        %v1775 = vpack.c.b16 %v1765, %v1764
        %v1776 = vpack.c.b16 %v1767, %v1766
        %v1777 = vpack.c.b16 %v1769, %v1768
        %1786 = vmatpush.bf16.msra.mxu0 %v1777
        %1787 = vmatpush.bf16.msra.mxu0 %v1776
        %1788 = vmatpush.bf16.msra.mxu0 %v1775
        %1789 = vmatpush.bf16.msra.mxu0 %v1774
        %1790 = vmatpush.bf16.msra.mxu0 %v1773
        %1791 = vmatpush.bf16.msra.mxu0 %v1772
        %1792 = vmatpush.bf16.msra.mxu0 %v1771
        %1793 = vmatpush.bf16.msra.mxu0 %v1770
        %1794 = vmatmul.bf16.gmra.mxu0 %v1735
        %v1795 = vpop.f32.mrf.mxu0
        %v1796 = vadd.f32 0.0, %v1795
        %v1797 = vpop.f32.mrf.mxu0
        %v1798 = vadd.f32 0.0, %v1797
        %1799 = vmatmul.bf16.gmra.mxu0 %v1734
        %v1800 = vpop.f32.mrf.mxu0
        %v1801 = vadd.f32 0.0, %v1800
        %v1802 = vpop.f32.mrf.mxu0
        %1803 = vdwg.mxu0
        %v1804 = vadd.f32 %v1695, %v1796
        %v1805 = vadd.f32 %v1696, %v1798
        %v1806 = vadd.f32 %v1697, %v1801
        %s1807 = scalar_lea.vmem [#allocation2], 896
        %v1808 = vld [vmem:[%s1807] sm:$0xf]
        %v1809 = vld [vmem:[%s1807 + $0x4] sm:$0xf]
        %v1810 = vld [vmem:[%s1807 + $0x8] sm:$0xf]
        %v1811 = vld [vmem:[%s1807 + $0xc] sm:$0xf]
        %v1812 = vld [vmem:[%s1807 + $0x10] sm:$0xf]
        %v1813 = vld [vmem:[%s1807 + $0x14] sm:$0xf]
        %v1814 = vld [vmem:[%s1807 + $0x18] sm:$0xf]
        %v1815 = vld [vmem:[%s1807 + $0x1c] sm:$0xf]
        %v1816 = vld [vmem:[%s1807 + $0x20] sm:$0xf]
        %v1817 = vld [vmem:[%s1807 + $0x24] sm:$0xf]
        %v1818 = vld [vmem:[%s1807 + $0x28] sm:$0xf]
        %v1819 = vld [vmem:[%s1807 + $0x2c] sm:$0xf]
        %v1820 = vld [vmem:[%s1807 + $0x30] sm:$0xf]
        %v1821 = vld [vmem:[%s1807 + $0x34] sm:$0xf]
        %v1822 = vld [vmem:[%s1807 + $0x38] sm:$0xf]
        %v1823 = vld [vmem:[%s1807 + $0x3c] sm:$0xf]
        %v1824 = vpack.c.b16 %v1414, %v1413
        %v1825 = vpack.c.b16 %v1717, %v1717
        %v1844 = vunpack.c.l.b16 %v1808
        %v1845 = vunpack.c.l.b16 %v1809
        %v1846 = vunpack.c.l.b16 %v1810
        %v1847 = vunpack.c.l.b16 %v1811
        %v1848 = vunpack.c.l.b16 %v1812
        %v1849 = vunpack.c.l.b16 %v1813
        %v1850 = vunpack.c.l.b16 %v1814
        %v1851 = vunpack.c.l.b16 %v1815
        %v1852 = vunpack.c.l.b16 %v1816
        %v1853 = vunpack.c.l.b16 %v1817
        %v1854 = vunpack.c.l.b16 %v1818
        %v1855 = vunpack.c.l.b16 %v1819
        %v1856 = vunpack.c.l.b16 %v1820
        %v1857 = vunpack.c.l.b16 %v1821
        %v1858 = vunpack.c.l.b16 %v1822
        %v1859 = vunpack.c.l.b16 %v1823
        %v1860 = vpack.c.b16 %v1845, %v1844
        %v1861 = vpack.c.b16 %v1847, %v1846
        %v1862 = vpack.c.b16 %v1849, %v1848
        %v1863 = vpack.c.b16 %v1851, %v1850
        %v1864 = vpack.c.b16 %v1853, %v1852
        %v1865 = vpack.c.b16 %v1855, %v1854
        %v1866 = vpack.c.b16 %v1857, %v1856
        %v1867 = vpack.c.b16 %v1859, %v1858
        %1876 = vmatpush.bf16.msra.mxu0 %v1867
        %1877 = vmatpush.bf16.msra.mxu0 %v1866
        %1878 = vmatpush.bf16.msra.mxu0 %v1865
        %1879 = vmatpush.bf16.msra.mxu0 %v1864
        %1880 = vmatpush.bf16.msra.mxu0 %v1863
        %1881 = vmatpush.bf16.msra.mxu0 %v1862
        %1882 = vmatpush.bf16.msra.mxu0 %v1861
        %1883 = vmatpush.bf16.msra.mxu0 %v1860
        %1884 = vmatmul.bf16.gmra.mxu0 %v1824
        %v1885 = vpop.f32.mrf.mxu0
        %v1886 = vadd.f32 0.0, %v1885
        %v1887 = vpop.f32.mrf.mxu0
        %v1888 = vadd.f32 0.0, %v1887
        %1889 = vmatmul.bf16.gmra.mxu0 %v1825
        %v1890 = vpop.f32.mrf.mxu0
        %v1891 = vadd.f32 0.0, %v1890
        %v1892 = vpop.f32.mrf.mxu0
        %1893 = vdwg.mxu0
        %v1894 = vadd.f32 %v1804, %v1886
        %v1895 = vadd.f32 %v1805, %v1888
        %v1896 = vadd.f32 %v1806, %v1891
        %v1897 = vld [vmem:[%s351 + $0x4] sm:$0xc]
        %v1898 = vld [vmem:[%s351 + $0x8] sm:$0xf]
        %v1899 = vld [vmem:[%s351 + $0xc] sm:$0xf]
        %v1900 = vld [vmem:[%s351 + $0x10] sm:$0x3]
        %s1901 = scalar_lea.vmem [#allocation2], 960
        %v1902 = vld [vmem:[%s1901] sm:$0xf]
        %v1903 = vld [vmem:[%s1901 + $0x4] sm:$0xf]
        %v1904 = vld [vmem:[%s1901 + $0x8] sm:$0xf]
        %v1905 = vld [vmem:[%s1901 + $0xc] sm:$0xf]
        %v1906 = vld [vmem:[%s1901 + $0x10] sm:$0xf]
        %v1907 = vld [vmem:[%s1901 + $0x14] sm:$0xf]
        %v1908 = vld [vmem:[%s1901 + $0x18] sm:$0xf]
        %v1909 = vld [vmem:[%s1901 + $0x1c] sm:$0xf]
        %v1910 = vld [vmem:[%s1901 + $0x20] sm:$0xf]
        %v1911 = vld [vmem:[%s1901 + $0x24] sm:$0xf]
        %v1912 = vld [vmem:[%s1901 + $0x28] sm:$0xf]
        %v1913 = vld [vmem:[%s1901 + $0x2c] sm:$0xf]
        %v1914 = vld [vmem:[%s1901 + $0x30] sm:$0xf]
        %v1915 = vld [vmem:[%s1901 + $0x34] sm:$0xf]
        %v1916 = vld [vmem:[%s1901 + $0x38] sm:$0xf]
        %v1917 = vld [vmem:[%s1901 + $0x3c] sm:$0xf]
        %v1922 = vunpack.c.l.b16 %v1897
        %v1923 = vunpack.c.l.b16 %v1898
        %v1924 = vunpack.c.l.b16 %v1899
        %v1925 = vunpack.c.l.b16 %v1900
        %v1926 = vpack.c.b16 %v1923, %v1922
        %v1927 = vpack.c.b16 %v1925, %v1924
        %v1928 = vrot.slane %v1926, 2
        %v1929 = vrot.slane %v1927, 2
        %v1930 = vsel %vm1008, %v1928, %v1929
        %v1949 = vunpack.c.l.b16 %v1902
        %v1950 = vunpack.c.l.b16 %v1903
        %v1951 = vunpack.c.l.b16 %v1904
        %v1952 = vunpack.c.l.b16 %v1905
        %v1953 = vunpack.c.l.b16 %v1906
        %v1954 = vunpack.c.l.b16 %v1907
        %v1955 = vunpack.c.l.b16 %v1908
        %v1956 = vunpack.c.l.b16 %v1909
        %v1957 = vunpack.c.l.b16 %v1910
        %v1958 = vunpack.c.l.b16 %v1911
        %v1959 = vunpack.c.l.b16 %v1912
        %v1960 = vunpack.c.l.b16 %v1913
        %v1961 = vunpack.c.l.b16 %v1914
        %v1962 = vunpack.c.l.b16 %v1915
        %v1963 = vunpack.c.l.b16 %v1916
        %v1964 = vunpack.c.l.b16 %v1917
        %v1965 = vpack.c.b16 %v1950, %v1949
        %v1966 = vpack.c.b16 %v1952, %v1951
        %v1967 = vpack.c.b16 %v1954, %v1953
        %v1968 = vpack.c.b16 %v1956, %v1955
        %v1969 = vpack.c.b16 %v1958, %v1957
        %v1970 = vpack.c.b16 %v1960, %v1959
        %v1971 = vpack.c.b16 %v1962, %v1961
        %v1972 = vpack.c.b16 %v1964, %v1963
        %1981 = vmatpush.bf16.msra.mxu0 %v1972
        %1982 = vmatpush.bf16.msra.mxu0 %v1971
        %1983 = vmatpush.bf16.msra.mxu0 %v1970
        %1984 = vmatpush.bf16.msra.mxu0 %v1969
        %1985 = vmatpush.bf16.msra.mxu0 %v1968
        %1986 = vmatpush.bf16.msra.mxu0 %v1967
        %1987 = vmatpush.bf16.msra.mxu0 %v1966
        %1988 = vmatpush.bf16.msra.mxu0 %v1965
        %1989 = vmatmul.bf16.gmra.mxu0 %v1930
        %v1990 = vpop.f32.mrf.mxu0
        %v1991 = vadd.f32 0.0, %v1990
        %v1992 = vpop.f32.mrf.mxu0
        %v1993 = vadd.f32 0.0, %v1992
        %1994 = vmatmul.bf16.gmra.mxu0 %v1929
        %v1995 = vpop.f32.mrf.mxu0
        %v1996 = vadd.f32 0.0, %v1995
        %v1997 = vpop.f32.mrf.mxu0
        %1998 = vdwg.mxu0
        %v1999 = vadd.f32 %v1894, %v1991
        %v2000 = vadd.f32 %v1895, %v1993
        %v2001 = vadd.f32 %v1896, %v1996
        %v2002 = vld [vmem:[%s351 + $0x10] sm:$0x7]
        %s2003 = scalar_lea.vmem [#allocation2], 1024
        %v2004 = vld [vmem:[%s2003] sm:$0xf]
        %v2005 = vld [vmem:[%s2003 + $0x4] sm:$0xf]
        %v2006 = vld [vmem:[%s2003 + $0x8] sm:$0xf]
        %v2007 = vld [vmem:[%s2003 + $0xc] sm:$0xf]
        %v2008 = vld [vmem:[%s2003 + $0x10] sm:$0xf]
        %v2009 = vld [vmem:[%s2003 + $0x14] sm:$0xf]
        %v2010 = vld [vmem:[%s2003 + $0x18] sm:$0xf]
        %v2011 = vld [vmem:[%s2003 + $0x1c] sm:$0xf]
        %v2012 = vld [vmem:[%s2003 + $0x20] sm:$0xf]
        %v2013 = vld [vmem:[%s2003 + $0x24] sm:$0xf]
        %v2014 = vld [vmem:[%s2003 + $0x28] sm:$0xf]
        %v2015 = vld [vmem:[%s2003 + $0x2c] sm:$0xf]
        %v2016 = vld [vmem:[%s2003 + $0x30] sm:$0xf]
        %v2017 = vld [vmem:[%s2003 + $0x34] sm:$0xf]
        %v2018 = vld [vmem:[%s2003 + $0x38] sm:$0xf]
        %v2019 = vld [vmem:[%s2003 + $0x3c] sm:$0xf]
        %v2021 = vunpack.c.l.b16 %v2002
        %v2022 = vpack.c.b16 %v2021, %v1924
        %v2024 = vshrl.u32 %v1926, 16
        %v2026 = vrot.slane %v2024, 2
        %v2027 = vshll.u32 %v1926, 16
        %v2029 = vrot.slane %v2027, 3
        %v2030 = vor.u32 %v2026, %v2029
        %v2032 = vshrl.u32 %v2022, 16
        %v2034 = vrot.slane %v2032, 2
        %v2035 = vshll.u32 %v2022, 16
        %v2037 = vrot.slane %v2035, 3
        %v2038 = vor.u32 %v2034, %v2037
        %v2039 = vsel %vm1104, %v2030, %v2038
        %v2058 = vunpack.c.l.b16 %v2004
        %v2059 = vunpack.c.l.b16 %v2005
        %v2060 = vunpack.c.l.b16 %v2006
        %v2061 = vunpack.c.l.b16 %v2007
        %v2062 = vunpack.c.l.b16 %v2008
        %v2063 = vunpack.c.l.b16 %v2009
        %v2064 = vunpack.c.l.b16 %v2010
        %v2065 = vunpack.c.l.b16 %v2011
        %v2066 = vunpack.c.l.b16 %v2012
        %v2067 = vunpack.c.l.b16 %v2013
        %v2068 = vunpack.c.l.b16 %v2014
        %v2069 = vunpack.c.l.b16 %v2015
        %v2070 = vunpack.c.l.b16 %v2016
        %v2071 = vunpack.c.l.b16 %v2017
        %v2072 = vunpack.c.l.b16 %v2018
        %v2073 = vunpack.c.l.b16 %v2019
        %v2074 = vpack.c.b16 %v2059, %v2058
        %v2075 = vpack.c.b16 %v2061, %v2060
        %v2076 = vpack.c.b16 %v2063, %v2062
        %v2077 = vpack.c.b16 %v2065, %v2064
        %v2078 = vpack.c.b16 %v2067, %v2066
        %v2079 = vpack.c.b16 %v2069, %v2068
        %v2080 = vpack.c.b16 %v2071, %v2070
        %v2081 = vpack.c.b16 %v2073, %v2072
        %2090 = vmatpush.bf16.msra.mxu0 %v2081
        %2091 = vmatpush.bf16.msra.mxu0 %v2080
        %2092 = vmatpush.bf16.msra.mxu0 %v2079
        %2093 = vmatpush.bf16.msra.mxu0 %v2078
        %2094 = vmatpush.bf16.msra.mxu0 %v2077
        %2095 = vmatpush.bf16.msra.mxu0 %v2076
        %2096 = vmatpush.bf16.msra.mxu0 %v2075
        %2097 = vmatpush.bf16.msra.mxu0 %v2074
        %2098 = vmatmul.bf16.gmra.mxu0 %v2039
        %v2099 = vpop.f32.mrf.mxu0
        %v2100 = vadd.f32 0.0, %v2099
        %v2101 = vpop.f32.mrf.mxu0
        %v2102 = vadd.f32 0.0, %v2101
        %2103 = vmatmul.bf16.gmra.mxu0 %v2038
        %v2104 = vpop.f32.mrf.mxu0
        %v2105 = vadd.f32 0.0, %v2104
        %v2106 = vpop.f32.mrf.mxu0
        %2107 = vdwg.mxu0
        %v2108 = vadd.f32 %v1999, %v2100
        %v2109 = vadd.f32 %v2000, %v2102
        %v2110 = vadd.f32 %v2001, %v2105
        %v2111 = vld [vmem:[%s351 + $0x4] sm:$0x8]
        %s2112 = scalar_lea.vmem [#allocation2], 1088
        %v2113 = vld [vmem:[%s2112] sm:$0xf]
        %v2114 = vld [vmem:[%s2112 + $0x4] sm:$0xf]
        %v2115 = vld [vmem:[%s2112 + $0x8] sm:$0xf]
        %v2116 = vld [vmem:[%s2112 + $0xc] sm:$0xf]
        %v2117 = vld [vmem:[%s2112 + $0x10] sm:$0xf]
        %v2118 = vld [vmem:[%s2112 + $0x14] sm:$0xf]
        %v2119 = vld [vmem:[%s2112 + $0x18] sm:$0xf]
        %v2120 = vld [vmem:[%s2112 + $0x1c] sm:$0xf]
        %v2121 = vld [vmem:[%s2112 + $0x20] sm:$0xf]
        %v2122 = vld [vmem:[%s2112 + $0x24] sm:$0xf]
        %v2123 = vld [vmem:[%s2112 + $0x28] sm:$0xf]
        %v2124 = vld [vmem:[%s2112 + $0x2c] sm:$0xf]
        %v2125 = vld [vmem:[%s2112 + $0x30] sm:$0xf]
        %v2126 = vld [vmem:[%s2112 + $0x34] sm:$0xf]
        %v2127 = vld [vmem:[%s2112 + $0x38] sm:$0xf]
        %v2128 = vld [vmem:[%s2112 + $0x3c] sm:$0xf]
        %v2130 = vunpack.c.l.b16 %v2111
        %v2131 = vpack.c.b16 %v1923, %v2130
        %v2132 = vrot.slane %v2131, 3
        %v2133 = vrot.slane %v2022, 3
        %v2134 = vsel %vm702, %v2132, %v2133
        %v2153 = vunpack.c.l.b16 %v2113
        %v2154 = vunpack.c.l.b16 %v2114
        %v2155 = vunpack.c.l.b16 %v2115
        %v2156 = vunpack.c.l.b16 %v2116
        %v2157 = vunpack.c.l.b16 %v2117
        %v2158 = vunpack.c.l.b16 %v2118
        %v2159 = vunpack.c.l.b16 %v2119
        %v2160 = vunpack.c.l.b16 %v2120
        %v2161 = vunpack.c.l.b16 %v2121
        %v2162 = vunpack.c.l.b16 %v2122
        %v2163 = vunpack.c.l.b16 %v2123
        %v2164 = vunpack.c.l.b16 %v2124
        %v2165 = vunpack.c.l.b16 %v2125
        %v2166 = vunpack.c.l.b16 %v2126
        %v2167 = vunpack.c.l.b16 %v2127
        %v2168 = vunpack.c.l.b16 %v2128
        %v2169 = vpack.c.b16 %v2154, %v2153
        %v2170 = vpack.c.b16 %v2156, %v2155
        %v2171 = vpack.c.b16 %v2158, %v2157
        %v2172 = vpack.c.b16 %v2160, %v2159
        %v2173 = vpack.c.b16 %v2162, %v2161
        %v2174 = vpack.c.b16 %v2164, %v2163
        %v2175 = vpack.c.b16 %v2166, %v2165
        %v2176 = vpack.c.b16 %v2168, %v2167
        %2185 = vmatpush.bf16.msra.mxu0 %v2176
        %2186 = vmatpush.bf16.msra.mxu0 %v2175
        %2187 = vmatpush.bf16.msra.mxu0 %v2174
        %2188 = vmatpush.bf16.msra.mxu0 %v2173
        %2189 = vmatpush.bf16.msra.mxu0 %v2172
        %2190 = vmatpush.bf16.msra.mxu0 %v2171
        %2191 = vmatpush.bf16.msra.mxu0 %v2170
        %2192 = vmatpush.bf16.msra.mxu0 %v2169
        %2193 = vmatmul.bf16.gmra.mxu0 %v2134
        %v2194 = vpop.f32.mrf.mxu0
        %v2195 = vadd.f32 0.0, %v2194
        %v2196 = vpop.f32.mrf.mxu0
        %v2197 = vadd.f32 0.0, %v2196
        %2198 = vmatmul.bf16.gmra.mxu0 %v2133
        %v2199 = vpop.f32.mrf.mxu0
        %v2200 = vadd.f32 0.0, %v2199
        %v2201 = vpop.f32.mrf.mxu0
        %2202 = vdwg.mxu0
        %v2203 = vadd.f32 %v2108, %v2195
        %v2204 = vadd.f32 %v2109, %v2197
        %v2205 = vadd.f32 %v2110, %v2200
        %v2206 = vld [vmem:[%s362] sm:$0xf]
        %v2207 = vld [vmem:[%s362 + $0x4] sm:$0xf]
        %v2208 = vld [vmem:[%s362 + $0x8] sm:$0xf]
        %s2209 = scalar_lea.vmem [#allocation2], 1152
        %v2210 = vld [vmem:[%s2209] sm:$0xf]
        %v2211 = vld [vmem:[%s2209 + $0x4] sm:$0xf]
        %v2212 = vld [vmem:[%s2209 + $0x8] sm:$0xf]
        %v2213 = vld [vmem:[%s2209 + $0xc] sm:$0xf]
        %v2214 = vld [vmem:[%s2209 + $0x10] sm:$0xf]
        %v2215 = vld [vmem:[%s2209 + $0x14] sm:$0xf]
        %v2216 = vld [vmem:[%s2209 + $0x18] sm:$0xf]
        %v2217 = vld [vmem:[%s2209 + $0x1c] sm:$0xf]
        %v2218 = vld [vmem:[%s2209 + $0x20] sm:$0xf]
        %v2219 = vld [vmem:[%s2209 + $0x24] sm:$0xf]
        %v2220 = vld [vmem:[%s2209 + $0x28] sm:$0xf]
        %v2221 = vld [vmem:[%s2209 + $0x2c] sm:$0xf]
        %v2222 = vld [vmem:[%s2209 + $0x30] sm:$0xf]
        %v2223 = vld [vmem:[%s2209 + $0x34] sm:$0xf]
        %v2224 = vld [vmem:[%s2209 + $0x38] sm:$0xf]
        %v2225 = vld [vmem:[%s2209 + $0x3c] sm:$0xf]
        %v2229 = vunpack.c.l.b16 %v2206
        %v2230 = vunpack.c.l.b16 %v2207
        %v2231 = vunpack.c.l.b16 %v2208
        %v2232 = vpack.c.b16 %v2230, %v2229
        %v2233 = vpack.c.b16 %v2231, %v2231
        %v2252 = vunpack.c.l.b16 %v2210
        %v2253 = vunpack.c.l.b16 %v2211
        %v2254 = vunpack.c.l.b16 %v2212
        %v2255 = vunpack.c.l.b16 %v2213
        %v2256 = vunpack.c.l.b16 %v2214
        %v2257 = vunpack.c.l.b16 %v2215
        %v2258 = vunpack.c.l.b16 %v2216
        %v2259 = vunpack.c.l.b16 %v2217
        %v2260 = vunpack.c.l.b16 %v2218
        %v2261 = vunpack.c.l.b16 %v2219
        %v2262 = vunpack.c.l.b16 %v2220
        %v2263 = vunpack.c.l.b16 %v2221
        %v2264 = vunpack.c.l.b16 %v2222
        %v2265 = vunpack.c.l.b16 %v2223
        %v2266 = vunpack.c.l.b16 %v2224
        %v2267 = vunpack.c.l.b16 %v2225
        %v2268 = vpack.c.b16 %v2253, %v2252
        %v2269 = vpack.c.b16 %v2255, %v2254
        %v2270 = vpack.c.b16 %v2257, %v2256
        %v2271 = vpack.c.b16 %v2259, %v2258
        %v2272 = vpack.c.b16 %v2261, %v2260
        %v2273 = vpack.c.b16 %v2263, %v2262
        %v2274 = vpack.c.b16 %v2265, %v2264
        %v2275 = vpack.c.b16 %v2267, %v2266
        %2284 = vmatpush.bf16.msra.mxu0 %v2275
        %2285 = vmatpush.bf16.msra.mxu0 %v2274
        %2286 = vmatpush.bf16.msra.mxu0 %v2273
        %2287 = vmatpush.bf16.msra.mxu0 %v2272
        %2288 = vmatpush.bf16.msra.mxu0 %v2271
        %2289 = vmatpush.bf16.msra.mxu0 %v2270
        %2290 = vmatpush.bf16.msra.mxu0 %v2269
        %2291 = vmatpush.bf16.msra.mxu0 %v2268
        %2292 = vmatmul.bf16.gmra.mxu0 %v2232
        %v2293 = vpop.f32.mrf.mxu0
        %v2294 = vadd.f32 0.0, %v2293
        %v2295 = vpop.f32.mrf.mxu0
        %v2296 = vadd.f32 0.0, %v2295
        %2297 = vmatmul.bf16.gmra.mxu0 %v2233
        %v2298 = vpop.f32.mrf.mxu0
        %v2299 = vadd.f32 0.0, %v2298
        %v2300 = vpop.f32.mrf.mxu0
        %2301 = vdwg.mxu0
        %v2302 = vadd.f32 %v2203, %v2294
        %v2303 = vadd.f32 %v2204, %v2296
        %v2304 = vadd.f32 %v2205, %v2299
        %v2305 = vld [vmem:[%s362] sm:$0xf]
        %v2306 = vld [vmem:[%s362 + $0x4] sm:$0xf]
        %v2307 = vld [vmem:[%s362 + $0x8] sm:$0xf]
        %v2308 = vld [vmem:[%s362 + $0xc] sm:$0x1]
        %s2309 = scalar_lea.vmem [#allocation2], 1216
        %v2310 = vld [vmem:[%s2309] sm:$0xf]
        %v2311 = vld [vmem:[%s2309 + $0x4] sm:$0xf]
        %v2312 = vld [vmem:[%s2309 + $0x8] sm:$0xf]
        %v2313 = vld [vmem:[%s2309 + $0xc] sm:$0xf]
        %v2314 = vld [vmem:[%s2309 + $0x10] sm:$0xf]
        %v2315 = vld [vmem:[%s2309 + $0x14] sm:$0xf]
        %v2316 = vld [vmem:[%s2309 + $0x18] sm:$0xf]
        %v2317 = vld [vmem:[%s2309 + $0x1c] sm:$0xf]
        %v2318 = vld [vmem:[%s2309 + $0x20] sm:$0xf]
        %v2319 = vld [vmem:[%s2309 + $0x24] sm:$0xf]
        %v2320 = vld [vmem:[%s2309 + $0x28] sm:$0xf]
        %v2321 = vld [vmem:[%s2309 + $0x2c] sm:$0xf]
        %v2322 = vld [vmem:[%s2309 + $0x30] sm:$0xf]
        %v2323 = vld [vmem:[%s2309 + $0x34] sm:$0xf]
        %v2324 = vld [vmem:[%s2309 + $0x38] sm:$0xf]
        %v2325 = vld [vmem:[%s2309 + $0x3c] sm:$0xf]
        %v2330 = vunpack.c.l.b16 %v2305
        %v2331 = vunpack.c.l.b16 %v2306
        %v2332 = vunpack.c.l.b16 %v2307
        %v2333 = vunpack.c.l.b16 %v2308
        %v2334 = vpack.c.b16 %v2331, %v2330
        %v2335 = vpack.c.b16 %v2333, %v2332
        %v2337 = vshrl.u32 %v2334, 16
        %v2339 = vshll.u32 %v2334, 16
        %v2341 = vrot.slane %v2339, 1
        %v2342 = vor.u32 %v2337, %v2341
        %v2344 = vshll.u32 %v2335, 16
        %v2346 = vrot.slane %v2344, 1
        %v2347 = vsel %vm428, %v2342, %v2346
        %v2348 = vshrl.u32 %v2335, 16
        %v2350 = vor.u32 %v2348, %v2346
        %v2369 = vunpack.c.l.b16 %v2310
        %v2370 = vunpack.c.l.b16 %v2311
        %v2371 = vunpack.c.l.b16 %v2312
        %v2372 = vunpack.c.l.b16 %v2313
        %v2373 = vunpack.c.l.b16 %v2314
        %v2374 = vunpack.c.l.b16 %v2315
        %v2375 = vunpack.c.l.b16 %v2316
        %v2376 = vunpack.c.l.b16 %v2317
        %v2377 = vunpack.c.l.b16 %v2318
        %v2378 = vunpack.c.l.b16 %v2319
        %v2379 = vunpack.c.l.b16 %v2320
        %v2380 = vunpack.c.l.b16 %v2321
        %v2381 = vunpack.c.l.b16 %v2322
        %v2382 = vunpack.c.l.b16 %v2323
        %v2383 = vunpack.c.l.b16 %v2324
        %v2384 = vunpack.c.l.b16 %v2325
        %v2385 = vpack.c.b16 %v2370, %v2369
        %v2386 = vpack.c.b16 %v2372, %v2371
        %v2387 = vpack.c.b16 %v2374, %v2373
        %v2388 = vpack.c.b16 %v2376, %v2375
        %v2389 = vpack.c.b16 %v2378, %v2377
        %v2390 = vpack.c.b16 %v2380, %v2379
        %v2391 = vpack.c.b16 %v2382, %v2381
        %v2392 = vpack.c.b16 %v2384, %v2383
        %2401 = vmatpush.bf16.msra.mxu0 %v2392
        %2402 = vmatpush.bf16.msra.mxu0 %v2391
        %2403 = vmatpush.bf16.msra.mxu0 %v2390
        %2404 = vmatpush.bf16.msra.mxu0 %v2389
        %2405 = vmatpush.bf16.msra.mxu0 %v2388
        %2406 = vmatpush.bf16.msra.mxu0 %v2387
        %2407 = vmatpush.bf16.msra.mxu0 %v2386
        %2408 = vmatpush.bf16.msra.mxu0 %v2385
        %2409 = vmatmul.bf16.gmra.mxu0 %v2347
        %v2410 = vpop.f32.mrf.mxu0
        %v2411 = vadd.f32 0.0, %v2410
        %v2412 = vpop.f32.mrf.mxu0
        %v2413 = vadd.f32 0.0, %v2412
        %2414 = vmatmul.bf16.gmra.mxu0 %v2350
        %v2415 = vpop.f32.mrf.mxu0
        %v2416 = vadd.f32 0.0, %v2415
        %v2417 = vpop.f32.mrf.mxu0
        %2418 = vdwg.mxu0
        %v2419 = vadd.f32 %v2302, %v2411
        %v2420 = vadd.f32 %v2303, %v2413
        %v2421 = vadd.f32 %v2304, %v2416
        %v2422 = vld [vmem:[%s362] sm:$0xe]
        %s2423 = scalar_lea.vmem [#allocation2], 1280
        %v2424 = vld [vmem:[%s2423] sm:$0xf]
        %v2425 = vld [vmem:[%s2423 + $0x4] sm:$0xf]
        %v2426 = vld [vmem:[%s2423 + $0x8] sm:$0xf]
        %v2427 = vld [vmem:[%s2423 + $0xc] sm:$0xf]
        %v2428 = vld [vmem:[%s2423 + $0x10] sm:$0xf]
        %v2429 = vld [vmem:[%s2423 + $0x14] sm:$0xf]
        %v2430 = vld [vmem:[%s2423 + $0x18] sm:$0xf]
        %v2431 = vld [vmem:[%s2423 + $0x1c] sm:$0xf]
        %v2432 = vld [vmem:[%s2423 + $0x20] sm:$0xf]
        %v2433 = vld [vmem:[%s2423 + $0x24] sm:$0xf]
        %v2434 = vld [vmem:[%s2423 + $0x28] sm:$0xf]
        %v2435 = vld [vmem:[%s2423 + $0x2c] sm:$0xf]
        %v2436 = vld [vmem:[%s2423 + $0x30] sm:$0xf]
        %v2437 = vld [vmem:[%s2423 + $0x34] sm:$0xf]
        %v2438 = vld [vmem:[%s2423 + $0x38] sm:$0xf]
        %v2439 = vld [vmem:[%s2423 + $0x3c] sm:$0xf]
        %v2441 = vunpack.c.l.b16 %v2422
        %v2442 = vpack.c.b16 %v2331, %v2441
        %v2443 = vrot.slane %v2442, 1
        %v2444 = vrot.slane %v2335, 1
        %v2445 = vsel %vm602, %v2443, %v2444
        %v2464 = vunpack.c.l.b16 %v2424
        %v2465 = vunpack.c.l.b16 %v2425
        %v2466 = vunpack.c.l.b16 %v2426
        %v2467 = vunpack.c.l.b16 %v2427
        %v2468 = vunpack.c.l.b16 %v2428
        %v2469 = vunpack.c.l.b16 %v2429
        %v2470 = vunpack.c.l.b16 %v2430
        %v2471 = vunpack.c.l.b16 %v2431
        %v2472 = vunpack.c.l.b16 %v2432
        %v2473 = vunpack.c.l.b16 %v2433
        %v2474 = vunpack.c.l.b16 %v2434
        %v2475 = vunpack.c.l.b16 %v2435
        %v2476 = vunpack.c.l.b16 %v2436
        %v2477 = vunpack.c.l.b16 %v2437
        %v2478 = vunpack.c.l.b16 %v2438
        %v2479 = vunpack.c.l.b16 %v2439
        %v2480 = vpack.c.b16 %v2465, %v2464
        %v2481 = vpack.c.b16 %v2467, %v2466
        %v2482 = vpack.c.b16 %v2469, %v2468
        %v2483 = vpack.c.b16 %v2471, %v2470
        %v2484 = vpack.c.b16 %v2473, %v2472
        %v2485 = vpack.c.b16 %v2475, %v2474
        %v2486 = vpack.c.b16 %v2477, %v2476
        %v2487 = vpack.c.b16 %v2479, %v2478
        %2496 = vmatpush.bf16.msra.mxu0 %v2487
        %2497 = vmatpush.bf16.msra.mxu0 %v2486
        %2498 = vmatpush.bf16.msra.mxu0 %v2485
        %2499 = vmatpush.bf16.msra.mxu0 %v2484
        %2500 = vmatpush.bf16.msra.mxu0 %v2483
        %2501 = vmatpush.bf16.msra.mxu0 %v2482
        %2502 = vmatpush.bf16.msra.mxu0 %v2481
        %2503 = vmatpush.bf16.msra.mxu0 %v2480
        %2504 = vmatmul.bf16.gmra.mxu0 %v2445
        %v2505 = vpop.f32.mrf.mxu0
        %v2506 = vadd.f32 0.0, %v2505
        %v2507 = vpop.f32.mrf.mxu0
        %v2508 = vadd.f32 0.0, %v2507
        %2509 = vmatmul.bf16.gmra.mxu0 %v2444
        %v2510 = vpop.f32.mrf.mxu0
        %v2511 = vadd.f32 0.0, %v2510
        %v2512 = vpop.f32.mrf.mxu0
        %2513 = vdwg.mxu0
        %v2514 = vadd.f32 %v2419, %v2506
        %v2515 = vadd.f32 %v2420, %v2508
        %v2516 = vadd.f32 %v2421, %v2511
        %v2517 = vld [vmem:[%s362] sm:$0x8]
        %v2518 = vld [vmem:[%s362 + $0xc] sm:$0x7]
        %s2519 = scalar_lea.vmem [#allocation2], 1344
        %v2520 = vld [vmem:[%s2519] sm:$0xf]
        %v2521 = vld [vmem:[%s2519 + $0x4] sm:$0xf]
        %v2522 = vld [vmem:[%s2519 + $0x8] sm:$0xf]
        %v2523 = vld [vmem:[%s2519 + $0xc] sm:$0xf]
        %v2524 = vld [vmem:[%s2519 + $0x10] sm:$0xf]
        %v2525 = vld [vmem:[%s2519 + $0x14] sm:$0xf]
        %v2526 = vld [vmem:[%s2519 + $0x18] sm:$0xf]
        %v2527 = vld [vmem:[%s2519 + $0x1c] sm:$0xf]
        %v2528 = vld [vmem:[%s2519 + $0x20] sm:$0xf]
        %v2529 = vld [vmem:[%s2519 + $0x24] sm:$0xf]
        %v2530 = vld [vmem:[%s2519 + $0x28] sm:$0xf]
        %v2531 = vld [vmem:[%s2519 + $0x2c] sm:$0xf]
        %v2532 = vld [vmem:[%s2519 + $0x30] sm:$0xf]
        %v2533 = vld [vmem:[%s2519 + $0x34] sm:$0xf]
        %v2534 = vld [vmem:[%s2519 + $0x38] sm:$0xf]
        %v2535 = vld [vmem:[%s2519 + $0x3c] sm:$0xf]
        %v2538 = vunpack.c.l.b16 %v2517
        %v2539 = vunpack.c.l.b16 %v2518
        %v2540 = vpack.c.b16 %v2331, %v2538
        %v2541 = vpack.c.b16 %v2539, %v2332
        %v2542 = vrot.slane %v2540, 3
        %v2543 = vrot.slane %v2541, 3
        %v2544 = vsel %vm702, %v2542, %v2543
        %v2563 = vunpack.c.l.b16 %v2520
        %v2564 = vunpack.c.l.b16 %v2521
        %v2565 = vunpack.c.l.b16 %v2522
        %v2566 = vunpack.c.l.b16 %v2523
        %v2567 = vunpack.c.l.b16 %v2524
        %v2568 = vunpack.c.l.b16 %v2525
        %v2569 = vunpack.c.l.b16 %v2526
        %v2570 = vunpack.c.l.b16 %v2527
        %v2571 = vunpack.c.l.b16 %v2528
        %v2572 = vunpack.c.l.b16 %v2529
        %v2573 = vunpack.c.l.b16 %v2530
        %v2574 = vunpack.c.l.b16 %v2531
        %v2575 = vunpack.c.l.b16 %v2532
        %v2576 = vunpack.c.l.b16 %v2533
        %v2577 = vunpack.c.l.b16 %v2534
        %v2578 = vunpack.c.l.b16 %v2535
        %v2579 = vpack.c.b16 %v2564, %v2563
        %v2580 = vpack.c.b16 %v2566, %v2565
        %v2581 = vpack.c.b16 %v2568, %v2567
        %v2582 = vpack.c.b16 %v2570, %v2569
        %v2583 = vpack.c.b16 %v2572, %v2571
        %v2584 = vpack.c.b16 %v2574, %v2573
        %v2585 = vpack.c.b16 %v2576, %v2575
        %v2586 = vpack.c.b16 %v2578, %v2577
        %2595 = vmatpush.bf16.msra.mxu0 %v2586
        %2596 = vmatpush.bf16.msra.mxu0 %v2585
        %2597 = vmatpush.bf16.msra.mxu0 %v2584
        %2598 = vmatpush.bf16.msra.mxu0 %v2583
        %2599 = vmatpush.bf16.msra.mxu0 %v2582
        %2600 = vmatpush.bf16.msra.mxu0 %v2581
        %2601 = vmatpush.bf16.msra.mxu0 %v2580
        %2602 = vmatpush.bf16.msra.mxu0 %v2579
        %2603 = vmatmul.bf16.gmra.mxu0 %v2544
        %v2604 = vpop.f32.mrf.mxu0
        %v2605 = vadd.f32 0.0, %v2604
        %v2606 = vpop.f32.mrf.mxu0
        %v2607 = vadd.f32 0.0, %v2606
        %2608 = vmatmul.bf16.gmra.mxu0 %v2543
        %v2609 = vpop.f32.mrf.mxu0
        %v2610 = vadd.f32 0.0, %v2609
        %v2611 = vpop.f32.mrf.mxu0
        %2612 = vdwg.mxu0
        %v2613 = vadd.f32 %v2514, %v2605
        %v2614 = vadd.f32 %v2515, %v2607
        %v2615 = vadd.f32 %v2516, %v2610
        %v2616 = vld [vmem:[%s362 + $0xc] sm:$0xf]
        %s2617 = scalar_lea.vmem [#allocation2], 1408
        %v2618 = vld [vmem:[%s2617] sm:$0xf]
        %v2619 = vld [vmem:[%s2617 + $0x4] sm:$0xf]
        %v2620 = vld [vmem:[%s2617 + $0x8] sm:$0xf]
        %v2621 = vld [vmem:[%s2617 + $0xc] sm:$0xf]
        %v2622 = vld [vmem:[%s2617 + $0x10] sm:$0xf]
        %v2623 = vld [vmem:[%s2617 + $0x14] sm:$0xf]
        %v2624 = vld [vmem:[%s2617 + $0x18] sm:$0xf]
        %v2625 = vld [vmem:[%s2617 + $0x1c] sm:$0xf]
        %v2626 = vld [vmem:[%s2617 + $0x20] sm:$0xf]
        %v2627 = vld [vmem:[%s2617 + $0x24] sm:$0xf]
        %v2628 = vld [vmem:[%s2617 + $0x28] sm:$0xf]
        %v2629 = vld [vmem:[%s2617 + $0x2c] sm:$0xf]
        %v2630 = vld [vmem:[%s2617 + $0x30] sm:$0xf]
        %v2631 = vld [vmem:[%s2617 + $0x34] sm:$0xf]
        %v2632 = vld [vmem:[%s2617 + $0x38] sm:$0xf]
        %v2633 = vld [vmem:[%s2617 + $0x3c] sm:$0xf]
        %v2635 = vunpack.c.l.b16 %v2616
        %v2636 = vpack.c.b16 %v2635, %v2332
        %v2638 = vshrl.u32 %v2540, 16
        %v2640 = vrot.slane %v2638, 3
        %v2641 = vshll.u32 %v2540, 16
        %v2643 = vrot.slane %v2641, 4
        %v2644 = vor.u32 %v2640, %v2643
        %v2646 = vshrl.u32 %v2636, 16
        %v2648 = vrot.slane %v2646, 3
        %v2649 = vshll.u32 %v2636, 16
        %v2651 = vrot.slane %v2649, 4
        %v2652 = vor.u32 %v2648, %v2651
        %v2653 = vsel %vm798, %v2644, %v2652
        %v2672 = vunpack.c.l.b16 %v2618
        %v2673 = vunpack.c.l.b16 %v2619
        %v2674 = vunpack.c.l.b16 %v2620
        %v2675 = vunpack.c.l.b16 %v2621
        %v2676 = vunpack.c.l.b16 %v2622
        %v2677 = vunpack.c.l.b16 %v2623
        %v2678 = vunpack.c.l.b16 %v2624
        %v2679 = vunpack.c.l.b16 %v2625
        %v2680 = vunpack.c.l.b16 %v2626
        %v2681 = vunpack.c.l.b16 %v2627
        %v2682 = vunpack.c.l.b16 %v2628
        %v2683 = vunpack.c.l.b16 %v2629
        %v2684 = vunpack.c.l.b16 %v2630
        %v2685 = vunpack.c.l.b16 %v2631
        %v2686 = vunpack.c.l.b16 %v2632
        %v2687 = vunpack.c.l.b16 %v2633
        %v2688 = vpack.c.b16 %v2673, %v2672
        %v2689 = vpack.c.b16 %v2675, %v2674
        %v2690 = vpack.c.b16 %v2677, %v2676
        %v2691 = vpack.c.b16 %v2679, %v2678
        %v2692 = vpack.c.b16 %v2681, %v2680
        %v2693 = vpack.c.b16 %v2683, %v2682
        %v2694 = vpack.c.b16 %v2685, %v2684
        %v2695 = vpack.c.b16 %v2687, %v2686
        %2704 = vmatpush.bf16.msra.mxu0 %v2695
        %2705 = vmatpush.bf16.msra.mxu0 %v2694
        %2706 = vmatpush.bf16.msra.mxu0 %v2693
        %2707 = vmatpush.bf16.msra.mxu0 %v2692
        %2708 = vmatpush.bf16.msra.mxu0 %v2691
        %2709 = vmatpush.bf16.msra.mxu0 %v2690
        %2710 = vmatpush.bf16.msra.mxu0 %v2689
        %2711 = vmatpush.bf16.msra.mxu0 %v2688
        %2712 = vmatmul.bf16.gmra.mxu0 %v2653
        %v2713 = vpop.f32.mrf.mxu0
        %v2714 = vadd.f32 0.0, %v2713
        %v2715 = vpop.f32.mrf.mxu0
        %v2716 = vadd.f32 0.0, %v2715
        %2717 = vmatmul.bf16.gmra.mxu0 %v2652
        %v2718 = vpop.f32.mrf.mxu0
        %v2719 = vadd.f32 0.0, %v2718
        %v2720 = vpop.f32.mrf.mxu0
        %2721 = vdwg.mxu0
        %v2722 = vadd.f32 %v2613, %v2714
        %v2723 = vadd.f32 %v2614, %v2716
        %v2724 = vadd.f32 %v2615, %v2719
        %s2725 = scalar_lea.vmem [#allocation2], 1472
        %v2726 = vld [vmem:[%s2725] sm:$0xf]
        %v2727 = vld [vmem:[%s2725 + $0x4] sm:$0xf]
        %v2728 = vld [vmem:[%s2725 + $0x8] sm:$0xf]
        %v2729 = vld [vmem:[%s2725 + $0xc] sm:$0xf]
        %v2730 = vld [vmem:[%s2725 + $0x10] sm:$0xf]
        %v2731 = vld [vmem:[%s2725 + $0x14] sm:$0xf]
        %v2732 = vld [vmem:[%s2725 + $0x18] sm:$0xf]
        %v2733 = vld [vmem:[%s2725 + $0x1c] sm:$0xf]
        %v2734 = vld [vmem:[%s2725 + $0x20] sm:$0xf]
        %v2735 = vld [vmem:[%s2725 + $0x24] sm:$0xf]
        %v2736 = vld [vmem:[%s2725 + $0x28] sm:$0xf]
        %v2737 = vld [vmem:[%s2725 + $0x2c] sm:$0xf]
        %v2738 = vld [vmem:[%s2725 + $0x30] sm:$0xf]
        %v2739 = vld [vmem:[%s2725 + $0x34] sm:$0xf]
        %v2740 = vld [vmem:[%s2725 + $0x38] sm:$0xf]
        %v2741 = vld [vmem:[%s2725 + $0x3c] sm:$0xf]
        %v2742 = vpack.c.b16 %v2332, %v2331
        %v2743 = vpack.c.b16 %v2635, %v2635
        %v2762 = vunpack.c.l.b16 %v2726
        %v2763 = vunpack.c.l.b16 %v2727
        %v2764 = vunpack.c.l.b16 %v2728
        %v2765 = vunpack.c.l.b16 %v2729
        %v2766 = vunpack.c.l.b16 %v2730
        %v2767 = vunpack.c.l.b16 %v2731
        %v2768 = vunpack.c.l.b16 %v2732
        %v2769 = vunpack.c.l.b16 %v2733
        %v2770 = vunpack.c.l.b16 %v2734
        %v2771 = vunpack.c.l.b16 %v2735
        %v2772 = vunpack.c.l.b16 %v2736
        %v2773 = vunpack.c.l.b16 %v2737
        %v2774 = vunpack.c.l.b16 %v2738
        %v2775 = vunpack.c.l.b16 %v2739
        %v2776 = vunpack.c.l.b16 %v2740
        %v2777 = vunpack.c.l.b16 %v2741
        %v2778 = vpack.c.b16 %v2763, %v2762
        %v2779 = vpack.c.b16 %v2765, %v2764
        %v2780 = vpack.c.b16 %v2767, %v2766
        %v2781 = vpack.c.b16 %v2769, %v2768
        %v2782 = vpack.c.b16 %v2771, %v2770
        %v2783 = vpack.c.b16 %v2773, %v2772
        %v2784 = vpack.c.b16 %v2775, %v2774
        %v2785 = vpack.c.b16 %v2777, %v2776
        %2794 = vmatpush.bf16.msra.mxu0 %v2785
        %2795 = vmatpush.bf16.msra.mxu0 %v2784
        %2796 = vmatpush.bf16.msra.mxu0 %v2783
        %2797 = vmatpush.bf16.msra.mxu0 %v2782
        %2798 = vmatpush.bf16.msra.mxu0 %v2781
        %2799 = vmatpush.bf16.msra.mxu0 %v2780
        %2800 = vmatpush.bf16.msra.mxu0 %v2779
        %2801 = vmatpush.bf16.msra.mxu0 %v2778
        %2802 = vmatmul.bf16.gmra.mxu0 %v2742
        %v2803 = vpop.f32.mrf.mxu0
        %v2804 = vadd.f32 0.0, %v2803
        %v2805 = vpop.f32.mrf.mxu0
        %v2806 = vadd.f32 0.0, %v2805
        %2807 = vmatmul.bf16.gmra.mxu0 %v2743
        %v2808 = vpop.f32.mrf.mxu0
        %v2809 = vadd.f32 0.0, %v2808
        %v2810 = vpop.f32.mrf.mxu0
        %2811 = vdwg.mxu0
        %v2812 = vadd.f32 %v2722, %v2804
        %v2813 = vadd.f32 %v2723, %v2806
        %v2814 = vadd.f32 %v2724, %v2809
        %v2815 = vld [vmem:[%s362 + $0x4] sm:$0xc]
        %v2816 = vld [vmem:[%s362 + $0x8] sm:$0xf]
        %v2817 = vld [vmem:[%s362 + $0xc] sm:$0xf]
        %v2818 = vld [vmem:[%s362 + $0x10] sm:$0x3]
        %s2819 = scalar_lea.vmem [#allocation2], 1536
        %v2820 = vld [vmem:[%s2819] sm:$0xf]
        %v2821 = vld [vmem:[%s2819 + $0x4] sm:$0xf]
        %v2822 = vld [vmem:[%s2819 + $0x8] sm:$0xf]
        %v2823 = vld [vmem:[%s2819 + $0xc] sm:$0xf]
        %v2824 = vld [vmem:[%s2819 + $0x10] sm:$0xf]
        %v2825 = vld [vmem:[%s2819 + $0x14] sm:$0xf]
        %v2826 = vld [vmem:[%s2819 + $0x18] sm:$0xf]
        %v2827 = vld [vmem:[%s2819 + $0x1c] sm:$0xf]
        %v2828 = vld [vmem:[%s2819 + $0x20] sm:$0xf]
        %v2829 = vld [vmem:[%s2819 + $0x24] sm:$0xf]
        %v2830 = vld [vmem:[%s2819 + $0x28] sm:$0xf]
        %v2831 = vld [vmem:[%s2819 + $0x2c] sm:$0xf]
        %v2832 = vld [vmem:[%s2819 + $0x30] sm:$0xf]
        %v2833 = vld [vmem:[%s2819 + $0x34] sm:$0xf]
        %v2834 = vld [vmem:[%s2819 + $0x38] sm:$0xf]
        %v2835 = vld [vmem:[%s2819 + $0x3c] sm:$0xf]
        %v2840 = vunpack.c.l.b16 %v2815
        %v2841 = vunpack.c.l.b16 %v2816
        %v2842 = vunpack.c.l.b16 %v2817
        %v2843 = vunpack.c.l.b16 %v2818
        %v2844 = vpack.c.b16 %v2841, %v2840
        %v2845 = vpack.c.b16 %v2843, %v2842
        %v2846 = vrot.slane %v2844, 2
        %v2847 = vrot.slane %v2845, 2
        %v2848 = vsel %vm1008, %v2846, %v2847
        %v2867 = vunpack.c.l.b16 %v2820
        %v2868 = vunpack.c.l.b16 %v2821
        %v2869 = vunpack.c.l.b16 %v2822
        %v2870 = vunpack.c.l.b16 %v2823
        %v2871 = vunpack.c.l.b16 %v2824
        %v2872 = vunpack.c.l.b16 %v2825
        %v2873 = vunpack.c.l.b16 %v2826
        %v2874 = vunpack.c.l.b16 %v2827
        %v2875 = vunpack.c.l.b16 %v2828
        %v2876 = vunpack.c.l.b16 %v2829
        %v2877 = vunpack.c.l.b16 %v2830
        %v2878 = vunpack.c.l.b16 %v2831
        %v2879 = vunpack.c.l.b16 %v2832
        %v2880 = vunpack.c.l.b16 %v2833
        %v2881 = vunpack.c.l.b16 %v2834
        %v2882 = vunpack.c.l.b16 %v2835
        %v2883 = vpack.c.b16 %v2868, %v2867
        %v2884 = vpack.c.b16 %v2870, %v2869
        %v2885 = vpack.c.b16 %v2872, %v2871
        %v2886 = vpack.c.b16 %v2874, %v2873
        %v2887 = vpack.c.b16 %v2876, %v2875
        %v2888 = vpack.c.b16 %v2878, %v2877
        %v2889 = vpack.c.b16 %v2880, %v2879
        %v2890 = vpack.c.b16 %v2882, %v2881
        %2899 = vmatpush.bf16.msra.mxu0 %v2890
        %2900 = vmatpush.bf16.msra.mxu0 %v2889
        %2901 = vmatpush.bf16.msra.mxu0 %v2888
        %2902 = vmatpush.bf16.msra.mxu0 %v2887
        %2903 = vmatpush.bf16.msra.mxu0 %v2886
        %2904 = vmatpush.bf16.msra.mxu0 %v2885
        %2905 = vmatpush.bf16.msra.mxu0 %v2884
        %2906 = vmatpush.bf16.msra.mxu0 %v2883
        %2907 = vmatmul.bf16.gmra.mxu0 %v2848
        %v2908 = vpop.f32.mrf.mxu0
        %v2909 = vadd.f32 0.0, %v2908
        %v2910 = vpop.f32.mrf.mxu0
        %v2911 = vadd.f32 0.0, %v2910
        %2912 = vmatmul.bf16.gmra.mxu0 %v2847
        %v2913 = vpop.f32.mrf.mxu0
        %v2914 = vadd.f32 0.0, %v2913
        %v2915 = vpop.f32.mrf.mxu0
        %2916 = vdwg.mxu0
        %v2917 = vadd.f32 %v2812, %v2909
        %v2918 = vadd.f32 %v2813, %v2911
        %v2919 = vadd.f32 %v2814, %v2914
        %v2920 = vld [vmem:[%s362 + $0x10] sm:$0x7]
        %s2921 = scalar_lea.vmem [#allocation2], 1600
        %v2922 = vld [vmem:[%s2921] sm:$0xf]
        %v2923 = vld [vmem:[%s2921 + $0x4] sm:$0xf]
        %v2924 = vld [vmem:[%s2921 + $0x8] sm:$0xf]
        %v2925 = vld [vmem:[%s2921 + $0xc] sm:$0xf]
        %v2926 = vld [vmem:[%s2921 + $0x10] sm:$0xf]
        %v2927 = vld [vmem:[%s2921 + $0x14] sm:$0xf]
        %v2928 = vld [vmem:[%s2921 + $0x18] sm:$0xf]
        %v2929 = vld [vmem:[%s2921 + $0x1c] sm:$0xf]
        %v2930 = vld [vmem:[%s2921 + $0x20] sm:$0xf]
        %v2931 = vld [vmem:[%s2921 + $0x24] sm:$0xf]
        %v2932 = vld [vmem:[%s2921 + $0x28] sm:$0xf]
        %v2933 = vld [vmem:[%s2921 + $0x2c] sm:$0xf]
        %v2934 = vld [vmem:[%s2921 + $0x30] sm:$0xf]
        %v2935 = vld [vmem:[%s2921 + $0x34] sm:$0xf]
        %v2936 = vld [vmem:[%s2921 + $0x38] sm:$0xf]
        %v2937 = vld [vmem:[%s2921 + $0x3c] sm:$0xf]
        %v2939 = vunpack.c.l.b16 %v2920
        %v2940 = vpack.c.b16 %v2939, %v2842
        %v2942 = vshrl.u32 %v2844, 16
        %v2944 = vrot.slane %v2942, 2
        %v2945 = vshll.u32 %v2844, 16
        %v2947 = vrot.slane %v2945, 3
        %v2948 = vor.u32 %v2944, %v2947
        %v2950 = vshrl.u32 %v2940, 16
        %v2952 = vrot.slane %v2950, 2
        %v2953 = vshll.u32 %v2940, 16
        %v2955 = vrot.slane %v2953, 3
        %v2956 = vor.u32 %v2952, %v2955
        %v2957 = vsel %vm1104, %v2948, %v2956
        %v2976 = vunpack.c.l.b16 %v2922
        %v2977 = vunpack.c.l.b16 %v2923
        %v2978 = vunpack.c.l.b16 %v2924
        %v2979 = vunpack.c.l.b16 %v2925
        %v2980 = vunpack.c.l.b16 %v2926
        %v2981 = vunpack.c.l.b16 %v2927
        %v2982 = vunpack.c.l.b16 %v2928
        %v2983 = vunpack.c.l.b16 %v2929
        %v2984 = vunpack.c.l.b16 %v2930
        %v2985 = vunpack.c.l.b16 %v2931
        %v2986 = vunpack.c.l.b16 %v2932
        %v2987 = vunpack.c.l.b16 %v2933
        %v2988 = vunpack.c.l.b16 %v2934
        %v2989 = vunpack.c.l.b16 %v2935
        %v2990 = vunpack.c.l.b16 %v2936
        %v2991 = vunpack.c.l.b16 %v2937
        %v2992 = vpack.c.b16 %v2977, %v2976
        %v2993 = vpack.c.b16 %v2979, %v2978
        %v2994 = vpack.c.b16 %v2981, %v2980
        %v2995 = vpack.c.b16 %v2983, %v2982
        %v2996 = vpack.c.b16 %v2985, %v2984
        %v2997 = vpack.c.b16 %v2987, %v2986
        %v2998 = vpack.c.b16 %v2989, %v2988
        %v2999 = vpack.c.b16 %v2991, %v2990
        %3008 = vmatpush.bf16.msra.mxu0 %v2999
        %3009 = vmatpush.bf16.msra.mxu0 %v2998
        %3010 = vmatpush.bf16.msra.mxu0 %v2997
        %3011 = vmatpush.bf16.msra.mxu0 %v2996
        %3012 = vmatpush.bf16.msra.mxu0 %v2995
        %3013 = vmatpush.bf16.msra.mxu0 %v2994
        %3014 = vmatpush.bf16.msra.mxu0 %v2993
        %3015 = vmatpush.bf16.msra.mxu0 %v2992
        %3016 = vmatmul.bf16.gmra.mxu0 %v2957
        %v3017 = vpop.f32.mrf.mxu0
        %v3018 = vadd.f32 0.0, %v3017
        %v3019 = vpop.f32.mrf.mxu0
        %v3020 = vadd.f32 0.0, %v3019
        %3021 = vmatmul.bf16.gmra.mxu0 %v2956
        %v3022 = vpop.f32.mrf.mxu0
        %v3023 = vadd.f32 0.0, %v3022
        %v3024 = vpop.f32.mrf.mxu0
        %3025 = vdwg.mxu0
        %v3026 = vadd.f32 %v2917, %v3018
        %v3027 = vadd.f32 %v2918, %v3020
        %v3028 = vadd.f32 %v2919, %v3023
        %v3029 = vld [vmem:[%s362 + $0x4] sm:$0x8]
        %s3030 = scalar_lea.vmem [#allocation2], 1664
        %v3031 = vld [vmem:[%s3030] sm:$0xf]
        %v3032 = vld [vmem:[%s3030 + $0x4] sm:$0xf]
        %v3033 = vld [vmem:[%s3030 + $0x8] sm:$0xf]
        %v3034 = vld [vmem:[%s3030 + $0xc] sm:$0xf]
        %v3035 = vld [vmem:[%s3030 + $0x10] sm:$0xf]
        %v3036 = vld [vmem:[%s3030 + $0x14] sm:$0xf]
        %v3037 = vld [vmem:[%s3030 + $0x18] sm:$0xf]
        %v3038 = vld [vmem:[%s3030 + $0x1c] sm:$0xf]
        %v3039 = vld [vmem:[%s3030 + $0x20] sm:$0xf]
        %v3040 = vld [vmem:[%s3030 + $0x24] sm:$0xf]
        %v3041 = vld [vmem:[%s3030 + $0x28] sm:$0xf]
        %v3042 = vld [vmem:[%s3030 + $0x2c] sm:$0xf]
        %v3043 = vld [vmem:[%s3030 + $0x30] sm:$0xf]
        %v3044 = vld [vmem:[%s3030 + $0x34] sm:$0xf]
        %v3045 = vld [vmem:[%s3030 + $0x38] sm:$0xf]
        %v3046 = vld [vmem:[%s3030 + $0x3c] sm:$0xf]
        %v3048 = vunpack.c.l.b16 %v3029
        %v3049 = vpack.c.b16 %v2841, %v3048
        %v3050 = vrot.slane %v3049, 3
        %v3051 = vrot.slane %v2940, 3
        %v3052 = vsel %vm702, %v3050, %v3051
        %v3071 = vunpack.c.l.b16 %v3031
        %v3072 = vunpack.c.l.b16 %v3032
        %v3073 = vunpack.c.l.b16 %v3033
        %v3074 = vunpack.c.l.b16 %v3034
        %v3075 = vunpack.c.l.b16 %v3035
        %v3076 = vunpack.c.l.b16 %v3036
        %v3077 = vunpack.c.l.b16 %v3037
        %v3078 = vunpack.c.l.b16 %v3038
        %v3079 = vunpack.c.l.b16 %v3039
        %v3080 = vunpack.c.l.b16 %v3040
        %v3081 = vunpack.c.l.b16 %v3041
        %v3082 = vunpack.c.l.b16 %v3042
        %v3083 = vunpack.c.l.b16 %v3043
        %v3084 = vunpack.c.l.b16 %v3044
        %v3085 = vunpack.c.l.b16 %v3045
        %v3086 = vunpack.c.l.b16 %v3046
        %v3087 = vpack.c.b16 %v3072, %v3071
        %v3088 = vpack.c.b16 %v3074, %v3073
        %v3089 = vpack.c.b16 %v3076, %v3075
        %v3090 = vpack.c.b16 %v3078, %v3077
        %v3091 = vpack.c.b16 %v3080, %v3079
        %v3092 = vpack.c.b16 %v3082, %v3081
        %v3093 = vpack.c.b16 %v3084, %v3083
        %v3094 = vpack.c.b16 %v3086, %v3085
        %3103 = vmatpush.bf16.msra.mxu0 %v3094
        %3104 = vmatpush.bf16.msra.mxu0 %v3093
        %3105 = vmatpush.bf16.msra.mxu0 %v3092
        %3106 = vmatpush.bf16.msra.mxu0 %v3091
        %3107 = vmatpush.bf16.msra.mxu0 %v3090
        %3108 = vmatpush.bf16.msra.mxu0 %v3089
        %3109 = vmatpush.bf16.msra.mxu0 %v3088
        %3110 = vmatpush.bf16.msra.mxu0 %v3087
        %3111 = vmatmul.bf16.gmra.mxu0 %v3052
        %v3112 = vpop.f32.mrf.mxu0
        %v3113 = vadd.f32 0.0, %v3112
        %v3114 = vpop.f32.mrf.mxu0
        %v3115 = vadd.f32 0.0, %v3114
        %3116 = vmatmul.bf16.gmra.mxu0 %v3051
        %v3117 = vpop.f32.mrf.mxu0
        %v3118 = vadd.f32 0.0, %v3117
        %v3119 = vpop.f32.mrf.mxu0
        %3120 = vdwg.mxu0
        %v3121 = vadd.f32 %v3026, %v3113
        %v3122 = vadd.f32 %v3027, %v3115
        %v3123 = vadd.f32 %v3028, %v3118
        %vm3124 = vcmp.ge.f32.partialorder %v3121, 0.0
        %vm3125 = vcmp.ge.f32.partialorder %v3122, 0.0
        %vm3126 = vcmp.ge.f32.partialorder %v3123, 0.0
        %v3127 = vmul.f32 %v3121, 0.01
        %v3128 = vmul.f32 %v3122, 0.01
        %v3129 = vmul.f32 %v3123, 0.01
        %v3130 = vsel %vm3124, %v3121, %v3127
        %v3131 = vsel %vm3125, %v3122, %v3128
        %v3132 = vsel %vm3126, %v3123, %v3129
        %v3133 = vlaneseq
        %v3134 = vshrl.u32 %v3133, 7
        %v3135 = vadd.s32 %v3134, 8
        %v3136 = vadd.s32 %v3134, 16
        %vm3137 = vcmp.lt.s32.totalorder %v3134, 0
        %v3138 = vsub.s32 0, %v3134
        %v3139 = vsel %vm3137, %v3138, %v3134
        %v3140 = vand.u32 %v3139, 65535
        %v3141 = vshrl.u32 %v3139, 16
        %v3143 = vmul.u32 %v3140, 43691
        %v3144 = vmul.u32 %v3140, 43690
        %v3145 = vmul.u32 %v3141, 43691
        %v3146 = vmul.u32 %v3141, 43690
        %v3147 = vshll.u32 %v3144, 16
        %v3148 = vshrl.u32 %v3144, 16
        %v3149 = vshll.u32 %v3145, 16
        %v3150 = vshrl.u32 %v3145, 16
        %vm3151 = vc.u32 %v3143, %v3147
        %v3152 = vsel %vm3151, 1, 0
        %v3153 = vadd.s32 %v3143, %v3147
        %v3154 = vadd.s32 %v3146, %v3152
        %vm3155 = vc.u32 %v3153, %v3149
        %v3156 = vsel %vm3155, 1, 0
        %v3157 = vadd.s32 %v3153, %v3149
        %v3158 = vadd.s32 %v3154, %v3156
        %v3159 = vadd.s32 %v3158, %v3148
        %v3160 = vadd.s32 %v3159, %v3150
        %v3161 = vshrl.u32 %v3160, 2
        %v3162 = vmul.u32 %v3161, 6
        %v3163 = vsub.s32 %v3139, %v3162
        %v3164 = vsub.s32 0, %v3163
        %v3165 = vsel %vm3137, %v3164, %v3163
        %vm3166 = vcmp.lt.s32.totalorder %v3135, 0
        %v3167 = vsub.s32 0, %v3135
        %v3168 = vsel %vm3166, %v3167, %v3135
        %v3169 = vand.u32 %v3168, 65535
        %v3170 = vshrl.u32 %v3168, 16
        %v3172 = vmul.u32 %v3169, 43691
        %v3173 = vmul.u32 %v3169, 43690
        %v3174 = vmul.u32 %v3170, 43691
        %v3175 = vmul.u32 %v3170, 43690
        %v3176 = vshll.u32 %v3173, 16
        %v3177 = vshrl.u32 %v3173, 16
        %v3178 = vshll.u32 %v3174, 16
        %v3179 = vshrl.u32 %v3174, 16
        %vm3180 = vc.u32 %v3172, %v3176
        %v3181 = vsel %vm3180, 1, 0
        %v3182 = vadd.s32 %v3172, %v3176
        %v3183 = vadd.s32 %v3175, %v3181
        %vm3184 = vc.u32 %v3182, %v3178
        %v3185 = vsel %vm3184, 1, 0
        %v3186 = vadd.s32 %v3182, %v3178
        %v3187 = vadd.s32 %v3183, %v3185
        %v3188 = vadd.s32 %v3187, %v3177
        %v3189 = vadd.s32 %v3188, %v3179
        %v3190 = vshrl.u32 %v3189, 2
        %v3191 = vmul.u32 %v3190, 6
        %v3192 = vsub.s32 %v3168, %v3191
        %v3193 = vsub.s32 0, %v3192
        %v3194 = vsel %vm3166, %v3193, %v3192
        %vm3195 = vcmp.lt.s32.totalorder %v3136, 0
        %v3196 = vsub.s32 0, %v3136
        %v3197 = vsel %vm3195, %v3196, %v3136
        %v3198 = vand.u32 %v3197, 65535
        %v3199 = vshrl.u32 %v3197, 16
        %v3201 = vmul.u32 %v3198, 43691
        %v3202 = vmul.u32 %v3198, 43690
        %v3203 = vmul.u32 %v3199, 43691
        %v3204 = vmul.u32 %v3199, 43690
        %v3205 = vshll.u32 %v3202, 16
        %v3206 = vshrl.u32 %v3202, 16
        %v3207 = vshll.u32 %v3203, 16
        %v3208 = vshrl.u32 %v3203, 16
        %vm3209 = vc.u32 %v3201, %v3205
        %v3210 = vsel %vm3209, 1, 0
        %v3211 = vadd.s32 %v3201, %v3205
        %v3212 = vadd.s32 %v3204, %v3210
        %vm3213 = vc.u32 %v3211, %v3207
        %v3214 = vsel %vm3213, 1, 0
        %v3215 = vadd.s32 %v3211, %v3207
        %v3216 = vadd.s32 %v3212, %v3214
        %v3217 = vadd.s32 %v3216, %v3206
        %v3218 = vadd.s32 %v3217, %v3208
        %v3219 = vshrl.u32 %v3218, 2
        %v3220 = vmul.u32 %v3219, 6
        %v3221 = vsub.s32 %v3197, %v3220
        %v3222 = vsub.s32 0, %v3221
        %v3223 = vsel %vm3195, %v3222, %v3221
        %vm3224 = vcmp.ne.s32.totalorder %v3165, 0
        %vm3225 = vcmp.ne.s32.totalorder %v3194, 0
        %vm3226 = vcmp.ne.s32.totalorder %v3223, 0
        %vm3227 = vcmp.lt.s32.totalorder %v3165, 0
        %vm3228 = vcmp.lt.s32.totalorder %v3194, 0
        %vm3229 = vcmp.lt.s32.totalorder %v3223, 0
        %vm3230 = vmand %vm3227, %vm3224
        %vm3231 = vmand %vm3228, %vm3225
        %vm3232 = vmand %vm3229, %vm3226
        %v3233 = vadd.s32 %v3165, 6
        %v3234 = vadd.s32 %v3194, 6
        %v3235 = vadd.s32 %v3223, 6
        %v3236 = vsel %vm3230, %v3233, %v3165
        %v3237 = vsel %vm3231, %v3234, %v3194
        %v3238 = vsel %vm3232, %v3235, %v3223
        %vm3239 = vcmp.lt.s32.totalorder %v3236, 4
        %vm3240 = vcmp.lt.s32.totalorder %v3237, 4
        %vm3241 = vcmp.lt.s32.totalorder %v3238, 4
        %v3242 = vsel %vm3239, 1, 0
        %v3243 = vsel %vm3240, 1, 0
        %v3244 = vsel %vm3241, 1, 0
        %vm3245 = vcmp.eq.s32.totalorder %v3242, 1
        %vm3246 = vcmp.eq.s32.totalorder %v3243, 1
        %vm3247 = vcmp.eq.s32.totalorder %v3244, 1
        %v3248 = vsel %vm3245, %v3130, 0.0
        %v3249 = vsel %vm3246, %v3131, 0.0
        %v3250 = vsel %vm3247, %v3132, 0.0
        %3251 = vst [vmem:[%s372] sm:$0xff] %v3248
        %3252 = vst [vmem:[%s372 + $0x8] sm:$0xff] %v3249
        %3253 = vst [vmem:[%s372 + $0x10] sm:$0xff] %v3250
        %v3254 = vadd.f32 %v3248, %v3249
        %v3255 = vadd.f32 %v3254, %v3250
        %v3256 = vrot.slane %v3255, 4
        %v3257 = vadd.f32 %v3255, %v3256
        %v3258 = vrot.slane %v3257, 2
        %v3259 = vadd.f32 %v3257, %v3258
        %v3260 = vrot.slane %v3259, 1
        %v3261 = vadd.f32 %v3259, %v3260
        %v3262 = vmul.f32 %v3248, %v3248
        %v3263 = vmul.f32 %v3249, %v3249
        %v3264 = vmul.f32 %v3250, %v3250
        %v3265 = vadd.f32 %v3262, %v3263
        %v3266 = vadd.f32 %v3265, %v3264
        %v3267 = vrot.slane %v3266, 4
        %v3268 = vadd.f32 %v3266, %v3267
        %v3269 = vrot.slane %v3268, 2
        %v3270 = vadd.f32 %v3268, %v3269
        %v3271 = vrot.slane %v3270, 1
        %v3272 = vadd.f32 %v3270, %v3271
        %vm3273 = vcmask 1040384
        %v3274 = vsel %vm3273, %v3261, %v3272
        %3275 = vst [vmem:[%s380] sm:$0x3] %v3274
        %p3276 = scmp.lt.s32.totalorder %s22, 1
        %s3277 = scalar_select %p3276, %s22, 1
        %p3278 = scmp.lt.s32.totalorder %s23, 1
        %s3279 = scalar_select %p3278, %s23, 1
        %s3280 = smul.addr %s3279, 3
        %s3281 = smul.addr %s3277, 6
        %s3282 = sadd.s32 %s3280, %s3281
        %s3283 = smul.addr %s3282, 8
        %s3284 = scalar_lea.vmem %s4, %s3283
        %p3285 = scmp.lt.s32.totalorder %s22, 1
        %s3286 = scalar_select %p3285, %s22, 1
        %p3287 = scmp.lt.s32.totalorder %s23, 1
        %s3288 = scalar_select %p3287, %s23, 1
        %s3289 = smul.addr %s3286, 2
        %s3290 = sadd.s32 %s3288, %s3289
        %s3291 = smul.addr %s3290, 2
        %s3292 = scalar_lea.vmem %s5, %s3291
        // Predicated region
        $region41: #{up_block_forward.9} parent=35 // pred_check
          %p3293 = pneg %p159
        $region42: #{up_block_forward.9} parent=35 // pred_check_branch
          %3295 = sbr.rel (%p3293) target = $region44
        $region43: #{up_block_forward.9} parent=35 // pred_region
          _
        $region44: #{up_block_forward.9} parent=35 // pred_fallthru
          _
        // Predicated region
        $region45: #{up_block_forward.9} parent=35 // pred_check
          %p3296 = pneg %p187
        $region46: #{up_block_forward.9} parent=35 // pred_check_branch
          %3298 = sbr.rel (%p3296) target = $region48
        $region47: #{up_block_forward.9} parent=35 // pred_region
          _
        $region48: #{up_block_forward.9} parent=35 // pred_fallthru
          _
      $region36: #{up_block_forward.9} parent=5 // pred_fallthru
        _
      %p3299 = scmp.le.s32.totalorder 2, %s13
      // Predicated region
      $region49: #{up_block_forward.9} parent=5 // pred_check
        %p3300 = pneg %p3299
      $region50: #{up_block_forward.9} parent=5 // pred_check_branch
        %3302 = sbr.rel (%p3300) target = $region52
      $region51: #{up_block_forward.9} parent=5 // pred_region
        %s3303 = ssub.s32 %s13, 2
        // Predicated region
        $region53: #{up_block_forward.9} parent=51 // pred_check
          %p3304 = pneg %p165
        $region54: #{up_block_forward.9} parent=51 // pred_check_branch
          %3306 = sbr.rel (%p3304) target = $region56
        $region55: #{up_block_forward.9} parent=51 // pred_region
          %p3307 = scmp.lt.s32.totalorder %s24, 1
          %s3308 = scalar_select %p3307, %s24, 1
          %p3309 = scmp.lt.s32.totalorder %s25, 1
          %s3310 = scalar_select %p3309, %s25, 1
          %s3311 = smul.addr %s3310, 3
          %s3312 = smul.addr %s3308, 6
          %s3313 = sadd.s32 %s3311, %s3312
          %s3314 = smul.addr %s3313, 8
          %s3315 = scalar_lea.vmem %s4, %s3314
        $region56: #{up_block_forward.9} parent=51 // pred_fallthru
          _
        // Predicated region
        $region57: #{up_block_forward.9} parent=51 // pred_check
          %p3316 = pneg %p193
        $region58: #{up_block_forward.9} parent=51 // pred_check_branch
          %3318 = sbr.rel (%p3316) target = $region60
        $region59: #{up_block_forward.9} parent=51 // pred_region
          %p3319 = scmp.lt.s32.totalorder %s24, 1
          %s3320 = scalar_select %p3319, %s24, 1
          %p3321 = scmp.lt.s32.totalorder %s25, 1
          %s3322 = scalar_select %p3321, %s25, 1
          %s3323 = smul.addr %s3320, 2
          %s3324 = sadd.s32 %s3322, %s3323
          %s3325 = smul.addr %s3324, 2
          %s3326 = scalar_lea.vmem %s5, %s3325
        $region60: #{up_block_forward.9} parent=51 // pred_fallthru
          _
      $region52: #{up_block_forward.9} parent=5 // pred_fallthru
        _
    $region6: #{up_block_forward.9} parent=1 // loop_footer
      %s17 = sadd.s32 1, %s13
    $region7: #{up_block_forward.9} parent=1 // loop_footer_branch
      %12 = sbr.rel target = $region3
    $region8: #{up_block_forward.9} parent=1 // loop_exit
      _
    %3327 = vsyncpa [#allocation3], 1
    %s3328 = scalar_lea.sflag [#allocation3], 1
    %3329 = vsyncpa %s3328, 1

// kernel: up_block_forward.13
$region0: #{up_block_forward.13}
  #allocation0 [shape = 'u32[]', space=smem, size = 0x4, offset = 0x4, fixed_abs, tag = 'smem constant byte address 0x4 - core index']
  #allocation1 [shape = 'u32[72,128]{1,0:T(1,128)}', space=vmem, size = 0x9000, scoped, tag = 'internal scratch']
  %s0 = inlined_call_operand.vmem [shape: f32[512,128], index: 0, kind: input, shape index: {}]
  %s1 = inlined_call_operand.vmem [shape: f32[1,128], index: 1, kind: input, shape index: {}]
  %s2 = inlined_call_operand.vmem [shape: f32[1,128], index: 2, kind: input, shape index: {}]
  %s3 = inlined_call_operand.vmem [shape: bf16[512,128], index: 3, kind: output, shape index: {}]
  %s4 = sld [smem:[#allocation0]]
  $region22: #{up_block_forward.13} parent=0
    _
  %s6 = ssub.s32 1, %s4
  %s7 = scalar_select 0, %s6, %s4
  // Predicated region
  $region2: #{up_block_forward.13} parent=0 // pred_check
    _
  $region3: #{up_block_forward.13} parent=0 // pred_check_branch
    %9 = sbr.rel (0) target = $region5
  $region4: #{up_block_forward.13} parent=0 // pred_region
    _
  $region5: #{up_block_forward.13} parent=0 // pred_fallthru
    _
  // Predicated region
  $region6: #{up_block_forward.13} parent=0 // pred_check
    _
  $region7: #{up_block_forward.13} parent=0 // pred_check_branch
    %11 = sbr.rel (0) target = $region9
  $region8: #{up_block_forward.13} parent=0 // pred_region
    _
  $region9: #{up_block_forward.13} parent=0 // pred_fallthru
    _
  // Predicated region
  $region10: #{up_block_forward.13} parent=0 // pred_check
    _
  $region11: #{up_block_forward.13} parent=0 // pred_check_branch
    %13 = sbr.rel (0) target = $region13
  $region12: #{up_block_forward.13} parent=0 // pred_region
    _
  $region13: #{up_block_forward.13} parent=0 // pred_fallthru
    _
  %v14 = vld [vmem:[%s0] sm:$0xff]
  %v15 = vld [vmem:[%s0 + $0x8] sm:$0xff]
  %v16 = vld [vmem:[%s0 + $0x10] sm:$0xff]
  %v17 = vld [vmem:[%s0 + $0x18] sm:$0xff]
  %v18 = vld [vmem:[%s0 + $0x20] sm:$0xff]
  %v19 = vld [vmem:[%s0 + $0x28] sm:$0xff]
  %v20 = vld [vmem:[%s0 + $0x30] sm:$0xff]
  %v21 = vld [vmem:[%s0 + $0x38] sm:$0xff]
  %v22 = vld [vmem:[%s0 + $0x40] sm:$0xff]
  %v23 = vld [vmem:[%s0 + $0x48] sm:$0xff]
  %v24 = vld [vmem:[%s0 + $0x50] sm:$0xff]
  %v25 = vld [vmem:[%s0 + $0x58] sm:$0xff]
  %v26 = vld [vmem:[%s0 + $0x60] sm:$0xff]
  %v27 = vld [vmem:[%s0 + $0x68] sm:$0xff]
  %v28 = vld [vmem:[%s0 + $0x70] sm:$0xff]
  %v29 = vld [vmem:[%s0 + $0x78] sm:$0xff]
  %v30 = vld [vmem:[%s0 + $0x80] sm:$0xff]
  %v31 = vld [vmem:[%s0 + $0x88] sm:$0xff]
  %v32 = vld [vmem:[%s0 + $0x90] sm:$0xff]
  %v33 = vld [vmem:[%s0 + $0x98] sm:$0xff]
  %v34 = vld [vmem:[%s0 + $0xa0] sm:$0xff]
  %v35 = vld [vmem:[%s0 + $0xa8] sm:$0xff]
  %v36 = vld [vmem:[%s0 + $0xb0] sm:$0xff]
  %v37 = vld [vmem:[%s0 + $0xb8] sm:$0xff]
  %v38 = vld [vmem:[%s0 + $0xc0] sm:$0xff]
  %v39 = vld [vmem:[%s0 + $0xc8] sm:$0xff]
  %v40 = vld [vmem:[%s0 + $0xd0] sm:$0xff]
  %v41 = vld [vmem:[%s0 + $0xd8] sm:$0xff]
  %v42 = vld [vmem:[%s0 + $0xe0] sm:$0xff]
  %v43 = vld [vmem:[%s0 + $0xe8] sm:$0xff]
  %v44 = vld [vmem:[%s0 + $0xf0] sm:$0xff]
  %v45 = vld [vmem:[%s0 + $0xf8] sm:$0xff]
  %v46 = vld [vmem:[%s0 + $0x100] sm:$0xff]
  %v47 = vld [vmem:[%s0 + $0x108] sm:$0xff]
  %v48 = vld [vmem:[%s0 + $0x110] sm:$0xff]
  %v49 = vld [vmem:[%s0 + $0x118] sm:$0xff]
  %v50 = vld [vmem:[%s0 + $0x120] sm:$0xff]
  %v51 = vld [vmem:[%s0 + $0x128] sm:$0xff]
  %v52 = vld [vmem:[%s0 + $0x130] sm:$0xff]
  %v53 = vld [vmem:[%s0 + $0x138] sm:$0xff]
  %v54 = vld [vmem:[%s0 + $0x140] sm:$0xff]
  %v55 = vld [vmem:[%s0 + $0x148] sm:$0xff]
  %v56 = vld [vmem:[%s0 + $0x150] sm:$0xff]
  %v57 = vld [vmem:[%s0 + $0x158] sm:$0xff]
  %v58 = vld [vmem:[%s0 + $0x160] sm:$0xff]
  %v59 = vld [vmem:[%s0 + $0x168] sm:$0xff]
  %v60 = vld [vmem:[%s0 + $0x170] sm:$0xff]
  %v61 = vld [vmem:[%s0 + $0x178] sm:$0xff]
  %v62 = vld [vmem:[%s0 + $0x180] sm:$0xff]
  %v63 = vld [vmem:[%s0 + $0x188] sm:$0xff]
  %v64 = vld [vmem:[%s0 + $0x190] sm:$0xff]
  %v65 = vld [vmem:[%s0 + $0x198] sm:$0xff]
  %v66 = vld [vmem:[%s0 + $0x1a0] sm:$0xff]
  %v67 = vld [vmem:[%s0 + $0x1a8] sm:$0xff]
  %v68 = vld [vmem:[%s0 + $0x1b0] sm:$0xff]
  %v69 = vld [vmem:[%s0 + $0x1b8] sm:$0xff]
  %v70 = vld [vmem:[%s0 + $0x1c0] sm:$0xff]
  %v71 = vld [vmem:[%s0 + $0x1c8] sm:$0xff]
  %v72 = vld [vmem:[%s0 + $0x1d0] sm:$0xff]
  %v73 = vld [vmem:[%s0 + $0x1d8] sm:$0xff]
  %v74 = vld [vmem:[%s0 + $0x1e0] sm:$0xff]
  %v75 = vld [vmem:[%s0 + $0x1e8] sm:$0xff]
  %v76 = vld [vmem:[%s0 + $0x1f0] sm:$0xff]
  %v77 = vld [vmem:[%s0 + $0x1f8] sm:$0xff]
  %v78 = vld [vmem:[%s1] sm:$0x1]
  %v80 = vperm.slane %v78, 0
  %v82 = vmul.f32 %v14, %v80
  %v83 = vmul.f32 %v15, %v80
  %v84 = vmul.f32 %v16, %v80
  %v85 = vmul.f32 %v17, %v80
  %v86 = vmul.f32 %v18, %v80
  %v87 = vmul.f32 %v19, %v80
  %v88 = vmul.f32 %v20, %v80
  %v89 = vmul.f32 %v21, %v80
  %v90 = vmul.f32 %v22, %v80
  %v91 = vmul.f32 %v23, %v80
  %v92 = vmul.f32 %v24, %v80
  %v93 = vmul.f32 %v25, %v80
  %v94 = vmul.f32 %v26, %v80
  %v95 = vmul.f32 %v27, %v80
  %v96 = vmul.f32 %v28, %v80
  %v97 = vmul.f32 %v29, %v80
  %v98 = vmul.f32 %v30, %v80
  %v99 = vmul.f32 %v31, %v80
  %v100 = vmul.f32 %v32, %v80
  %v101 = vmul.f32 %v33, %v80
  %v102 = vmul.f32 %v34, %v80
  %v103 = vmul.f32 %v35, %v80
  %v104 = vmul.f32 %v36, %v80
  %v105 = vmul.f32 %v37, %v80
  %v106 = vmul.f32 %v38, %v80
  %v107 = vmul.f32 %v39, %v80
  %v108 = vmul.f32 %v40, %v80
  %v109 = vmul.f32 %v41, %v80
  %v110 = vmul.f32 %v42, %v80
  %v111 = vmul.f32 %v43, %v80
  %v112 = vmul.f32 %v44, %v80
  %v113 = vmul.f32 %v45, %v80
  %v114 = vmul.f32 %v46, %v80
  %v115 = vmul.f32 %v47, %v80
  %v116 = vmul.f32 %v48, %v80
  %v117 = vmul.f32 %v49, %v80
  %v118 = vmul.f32 %v50, %v80
  %v119 = vmul.f32 %v51, %v80
  %v120 = vmul.f32 %v52, %v80
  %v121 = vmul.f32 %v53, %v80
  %v122 = vmul.f32 %v54, %v80
  %v123 = vmul.f32 %v55, %v80
  %v124 = vmul.f32 %v56, %v80
  %v125 = vmul.f32 %v57, %v80
  %v126 = vmul.f32 %v58, %v80
  %v127 = vmul.f32 %v59, %v80
  %v128 = vmul.f32 %v60, %v80
  %v129 = vmul.f32 %v61, %v80
  %v130 = vmul.f32 %v62, %v80
  %v131 = vmul.f32 %v63, %v80
  %v132 = vmul.f32 %v64, %v80
  %v133 = vmul.f32 %v65, %v80
  %v134 = vmul.f32 %v66, %v80
  %v135 = vmul.f32 %v67, %v80
  %v136 = vmul.f32 %v68, %v80
  %v137 = vmul.f32 %v69, %v80
  %v138 = vmul.f32 %v70, %v80
  %v139 = vmul.f32 %v71, %v80
  %v140 = vmul.f32 %v72, %v80
  %v141 = vmul.f32 %v73, %v80
  %v142 = vmul.f32 %v74, %v80
  %v143 = vmul.f32 %v75, %v80
  %v144 = vmul.f32 %v76, %v80
  %v145 = vmul.f32 %v77, %v80
  %v146 = vld [vmem:[%s2] sm:$0x1]
  %v148 = vperm.slane %v146, 0
  %v150 = vadd.f32 %v82, %v148
  %v151 = vadd.f32 %v83, %v148
  %v152 = vadd.f32 %v84, %v148
  %v153 = vadd.f32 %v85, %v148
  %v154 = vadd.f32 %v86, %v148
  %v155 = vadd.f32 %v87, %v148
  %v156 = vadd.f32 %v88, %v148
  %v157 = vadd.f32 %v89, %v148
  %v158 = vadd.f32 %v90, %v148
  %v159 = vadd.f32 %v91, %v148
  %v160 = vadd.f32 %v92, %v148
  %v161 = vadd.f32 %v93, %v148
  %v162 = vadd.f32 %v94, %v148
  %v163 = vadd.f32 %v95, %v148
  %v164 = vadd.f32 %v96, %v148
  %v165 = vadd.f32 %v97, %v148
  %v166 = vadd.f32 %v98, %v148
  %v167 = vadd.f32 %v99, %v148
  %v168 = vadd.f32 %v100, %v148
  %v169 = vadd.f32 %v101, %v148
  %v170 = vadd.f32 %v102, %v148
  %v171 = vadd.f32 %v103, %v148
  %v172 = vadd.f32 %v104, %v148
  %v173 = vadd.f32 %v105, %v148
  %v174 = vadd.f32 %v106, %v148
  %v175 = vadd.f32 %v107, %v148
  %v176 = vadd.f32 %v108, %v148
  %v177 = vadd.f32 %v109, %v148
  %v178 = vadd.f32 %v110, %v148
  %v179 = vadd.f32 %v111, %v148
  %v180 = vadd.f32 %v112, %v148
  %v181 = vadd.f32 %v113, %v148
  %v182 = vadd.f32 %v114, %v148
  %v183 = vadd.f32 %v115, %v148
  %v184 = vadd.f32 %v116, %v148
  %v185 = vadd.f32 %v117, %v148
  %v186 = vadd.f32 %v118, %v148
  %v187 = vadd.f32 %v119, %v148
  %v188 = vadd.f32 %v120, %v148
  %v189 = vadd.f32 %v121, %v148
  %v190 = vadd.f32 %v122, %v148
  %v191 = vadd.f32 %v123, %v148
  %v192 = vadd.f32 %v124, %v148
  %v193 = vadd.f32 %v125, %v148
  %v194 = vadd.f32 %v126, %v148
  %v195 = vadd.f32 %v127, %v148
  %v196 = vadd.f32 %v128, %v148
  %v197 = vadd.f32 %v129, %v148
  %v198 = vadd.f32 %v130, %v148
  %v199 = vadd.f32 %v131, %v148
  %v200 = vadd.f32 %v132, %v148
  %v201 = vadd.f32 %v133, %v148
  %v202 = vadd.f32 %v134, %v148
  %v203 = vadd.f32 %v135, %v148
  %v204 = vadd.f32 %v136, %v148
  %v205 = vadd.f32 %v137, %v148
  %v206 = vadd.f32 %v138, %v148
  %v207 = vadd.f32 %v139, %v148
  %v208 = vadd.f32 %v140, %v148
  %v209 = vadd.f32 %v141, %v148
  %v210 = vadd.f32 %v142, %v148
  %v211 = vadd.f32 %v143, %v148
  %v212 = vadd.f32 %v144, %v148
  %v213 = vadd.f32 %v145, %v148
  %v214 = vpack.c.bf16 %v150, %v150
  %v215 = vpack.c.bf16 %v151, %v151
  %v216 = vpack.c.bf16 %v152, %v152
  %v217 = vpack.c.bf16 %v153, %v153
  %v218 = vpack.c.bf16 %v154, %v154
  %v219 = vpack.c.bf16 %v155, %v155
  %v220 = vpack.c.bf16 %v156, %v156
  %v221 = vpack.c.bf16 %v157, %v157
  %v222 = vpack.c.bf16 %v158, %v158
  %v223 = vpack.c.bf16 %v159, %v159
  %v224 = vpack.c.bf16 %v160, %v160
  %v225 = vpack.c.bf16 %v161, %v161
  %v226 = vpack.c.bf16 %v162, %v162
  %v227 = vpack.c.bf16 %v163, %v163
  %v228 = vpack.c.bf16 %v164, %v164
  %v229 = vpack.c.bf16 %v165, %v165
  %v230 = vpack.c.bf16 %v166, %v166
  %v231 = vpack.c.bf16 %v167, %v167
  %v232 = vpack.c.bf16 %v168, %v168
  %v233 = vpack.c.bf16 %v169, %v169
  %v234 = vpack.c.bf16 %v170, %v170
  %v235 = vpack.c.bf16 %v171, %v171
  %v236 = vpack.c.bf16 %v172, %v172
  %v237 = vpack.c.bf16 %v173, %v173
  %v238 = vpack.c.bf16 %v174, %v174
  %v239 = vpack.c.bf16 %v175, %v175
  %v240 = vpack.c.bf16 %v176, %v176
  %v241 = vpack.c.bf16 %v177, %v177
  %v242 = vpack.c.bf16 %v178, %v178
  %v243 = vpack.c.bf16 %v179, %v179
  %v244 = vpack.c.bf16 %v180, %v180
  %v245 = vpack.c.bf16 %v181, %v181
  %v246 = vpack.c.bf16 %v182, %v182
  %v247 = vpack.c.bf16 %v183, %v183
  %v248 = vpack.c.bf16 %v184, %v184
  %v249 = vpack.c.bf16 %v185, %v185
  %v250 = vpack.c.bf16 %v186, %v186
  %v251 = vpack.c.bf16 %v187, %v187
  %v252 = vpack.c.bf16 %v188, %v188
  %v253 = vpack.c.bf16 %v189, %v189
  %v254 = vpack.c.bf16 %v190, %v190
  %v255 = vpack.c.bf16 %v191, %v191
  %v256 = vpack.c.bf16 %v192, %v192
  %v257 = vpack.c.bf16 %v193, %v193
  %v258 = vpack.c.bf16 %v194, %v194
  %v259 = vpack.c.bf16 %v195, %v195
  %v260 = vpack.c.bf16 %v196, %v196
  %v261 = vpack.c.bf16 %v197, %v197
  %v262 = vpack.c.bf16 %v198, %v198
  %v263 = vpack.c.bf16 %v199, %v199
  %v264 = vpack.c.bf16 %v200, %v200
  %v265 = vpack.c.bf16 %v201, %v201
  %v266 = vpack.c.bf16 %v202, %v202
  %v267 = vpack.c.bf16 %v203, %v203
  %v268 = vpack.c.bf16 %v204, %v204
  %v269 = vpack.c.bf16 %v205, %v205
  %v270 = vpack.c.bf16 %v206, %v206
  %v271 = vpack.c.bf16 %v207, %v207
  %v272 = vpack.c.bf16 %v208, %v208
  %v273 = vpack.c.bf16 %v209, %v209
  %v274 = vpack.c.bf16 %v210, %v210
  %v275 = vpack.c.bf16 %v211, %v211
  %v276 = vpack.c.bf16 %v212, %v212
  %v277 = vpack.c.bf16 %v213, %v213
  %278 = vst [vmem:[%s3] sm:$0xf] %v214
  %279 = vst [vmem:[%s3 + $0x4] sm:$0xf] %v215
  %280 = vst [vmem:[%s3 + $0x8] sm:$0xf] %v216
  %281 = vst [vmem:[%s3 + $0xc] sm:$0xf] %v217
  %282 = vst [vmem:[%s3 + $0x10] sm:$0xf] %v218
  %283 = vst [vmem:[%s3 + $0x14] sm:$0xf] %v219
  %284 = vst [vmem:[%s3 + $0x18] sm:$0xf] %v220
  %285 = vst [vmem:[%s3 + $0x1c] sm:$0xf] %v221
  %286 = vst [vmem:[%s3 + $0x20] sm:$0xf] %v222
  %287 = vst [vmem:[%s3 + $0x24] sm:$0xf] %v223
  %288 = vst [vmem:[%s3 + $0x28] sm:$0xf] %v224
  %289 = vst [vmem:[%s3 + $0x2c] sm:$0xf] %v225
  %290 = vst [vmem:[%s3 + $0x30] sm:$0xf] %v226
  %291 = vst [vmem:[%s3 + $0x34] sm:$0xf] %v227
  %292 = vst [vmem:[%s3 + $0x38] sm:$0xf] %v228
  %293 = vst [vmem:[%s3 + $0x3c] sm:$0xf] %v229
  %294 = vst [vmem:[%s3 + $0x40] sm:$0xf] %v230
  %295 = vst [vmem:[%s3 + $0x44] sm:$0xf] %v231
  %296 = vst [vmem:[%s3 + $0x48] sm:$0xf] %v232
  %297 = vst [vmem:[%s3 + $0x4c] sm:$0xf] %v233
  %298 = vst [vmem:[%s3 + $0x50] sm:$0xf] %v234
  %299 = vst [vmem:[%s3 + $0x54] sm:$0xf] %v235
  %300 = vst [vmem:[%s3 + $0x58] sm:$0xf] %v236
  %301 = vst [vmem:[%s3 + $0x5c] sm:$0xf] %v237
  %302 = vst [vmem:[%s3 + $0x60] sm:$0xf] %v238
  %303 = vst [vmem:[%s3 + $0x64] sm:$0xf] %v239
  %304 = vst [vmem:[%s3 + $0x68] sm:$0xf] %v240
  %305 = vst [vmem:[%s3 + $0x6c] sm:$0xf] %v241
  %306 = vst [vmem:[%s3 + $0x70] sm:$0xf] %v242
  %307 = vst [vmem:[%s3 + $0x74] sm:$0xf] %v243
  %308 = vst [vmem:[%s3 + $0x78] sm:$0xf] %v244
  %309 = vst [vmem:[%s3 + $0x7c] sm:$0xf] %v245
  %310 = vst [vmem:[%s3 + $0x80] sm:$0xf] %v246
  %311 = vst [vmem:[%s3 + $0x84] sm:$0xf] %v247
  %312 = vst [vmem:[%s3 + $0x88] sm:$0xf] %v248
  %313 = vst [vmem:[%s3 + $0x8c] sm:$0xf] %v249
  %314 = vst [vmem:[%s3 + $0x90] sm:$0xf] %v250
  %315 = vst [vmem:[%s3 + $0x94] sm:$0xf] %v251
  %316 = vst [vmem:[%s3 + $0x98] sm:$0xf] %v252
  %317 = vst [vmem:[%s3 + $0x9c] sm:$0xf] %v253
  %318 = vst [vmem:[%s3 + $0xa0] sm:$0xf] %v254
  %319 = vst [vmem:[%s3 + $0xa4] sm:$0xf] %v255
  %320 = vst [vmem:[%s3 + $0xa8] sm:$0xf] %v256
  %321 = vst [vmem:[%s3 + $0xac] sm:$0xf] %v257
  %322 = vst [vmem:[%s3 + $0xb0] sm:$0xf] %v258
  %323 = vst [vmem:[%s3 + $0xb4] sm:$0xf] %v259
  %324 = vst [vmem:[%s3 + $0xb8] sm:$0xf] %v260
  %325 = vst [vmem:[%s3 + $0xbc] sm:$0xf] %v261
  %326 = vst [vmem:[%s3 + $0xc0] sm:$0xf] %v262
  %327 = vst [vmem:[%s3 + $0xc4] sm:$0xf] %v263
  %328 = vst [vmem:[%s3 + $0xc8] sm:$0xf] %v264
  %329 = vst [vmem:[%s3 + $0xcc] sm:$0xf] %v265
  %330 = vst [vmem:[%s3 + $0xd0] sm:$0xf] %v266
  %331 = vst [vmem:[%s3 + $0xd4] sm:$0xf] %v267
  %332 = vst [vmem:[%s3 + $0xd8] sm:$0xf] %v268
  %333 = vst [vmem:[%s3 + $0xdc] sm:$0xf] %v269
  %334 = vst [vmem:[%s3 + $0xe0] sm:$0xf] %v270
  %335 = vst [vmem:[%s3 + $0xe4] sm:$0xf] %v271
  %336 = vst [vmem:[%s3 + $0xe8] sm:$0xf] %v272
  %337 = vst [vmem:[%s3 + $0xec] sm:$0xf] %v273
  %338 = vst [vmem:[%s3 + $0xf0] sm:$0xf] %v274
  %339 = vst [vmem:[%s3 + $0xf4] sm:$0xf] %v275
  %340 = vst [vmem:[%s3 + $0xf8] sm:$0xf] %v276
  %341 = vst [vmem:[%s3 + $0xfc] sm:$0xf] %v277
  // Predicated region
  $region14: #{up_block_forward.13} parent=0 // pred_check
    _
  $region15: #{up_block_forward.13} parent=0 // pred_check_branch
    %343 = sbr.rel (0) target = $region17
  $region16: #{up_block_forward.13} parent=0 // pred_region
    _
  $region17: #{up_block_forward.13} parent=0 // pred_fallthru
    _
  // Predicated region
  $region18: #{up_block_forward.13} parent=0 // pred_check
    _
  $region19: #{up_block_forward.13} parent=0 // pred_check_branch
    %345 = sbr.rel (0) target = $region21
  $region20: #{up_block_forward.13} parent=0 // pred_region
    _
  $region21: #{up_block_forward.13} parent=0 // pred_fallthru
    _

// kernel: up_block_forward.12
$region0: #{up_block_forward.12}
  #allocation0 [shape = 'u32[]', space=smem, size = 0x4, offset = 0x4, fixed_abs, tag = 'smem constant byte address 0x4 - core index']
  #allocation1 [shape = 'u32[72,128]{1,0:T(1,128)}', space=vmem, size = 0x9000, scoped, tag = 'internal scratch']
  %s0 = inlined_call_operand.vmem [shape: bf16[2,4,104,128], index: 0, kind: input, shape index: {}]
  %s1 = inlined_call_operand.vmem [shape: bf16[9,128,128], index: 1, kind: input, shape index: {}]
  %s2 = inlined_call_operand.vmem [shape: f32[2,4,80,128], index: 2, kind: output, shape index: {0}]
  %s3 = inlined_call_operand.vmem [shape: f32[2,4,2,128], index: 3, kind: output, shape index: {1}]
  %4 = xla_tuple %s2, %s3
  %s5 = sld [smem:[#allocation0]]
  $region49: #{up_block_forward.12} parent=0
    _
  %s7 = ssub.s32 1, %s5
  %s8 = scalar_select 0, %s7, %s5
  loop: start=0, step=1, limit=10
  $region2: #{up_block_forward.12} parent=0 // loop_pre_header
    _
  $region3: #{up_block_forward.12} parent=0 // loop_header
    %s10 = sphi 0, %s14
    %p11 = scmp.ge.s32.totalorder %s10, 10
    %s17 = sphi 0, %s29
    %s18 = sphi 0, %s25
    %s19 = sphi 0, %s17
    %s20 = sphi 0, %s18
    %s21 = sphi 0, %s19
    %s22 = sphi 0, %s20
    %s34 = sphi 0, %s36
    %s37 = sphi 0, %s34
    %s38 = sphi 0, %s37
    %s54 = sphi 0, %s38
    %s58 = sphi 0, %s58
    %s60 = sphi 0, %s58
    %s61 = sphi 0, %s60
    %s75 = sphi 0, %s61
    %s83 = sphi 0, %s85
    %s86 = sphi 0, %s83
    %s87 = sphi 0, %s86
    %s103 = sphi 0, %s87
    %s111 = sphi 0, %s113
    %s114 = sphi 0, %s111
    %s115 = sphi 0, %s114
    %s131 = sphi 0, %s115
  $region4: #{up_block_forward.12} parent=0 // loop_header_branch
    %13 = sbr.rel (%p11) target = $region8
  $region5: #{up_block_forward.12} parent=0 // loop_body
    %s15 = ssub.s32 %s10, 1
    %s16 = ssub.s32 %s10, 2
    %s23 = sadd.s32 1, %s18
    %p24 = scmp.ge.s32.totalorder %s23, 4
    %s25 = scalar_select %p24, 0, %s23
    %s26 = sadd.s32 1, %s17
    %s27 = scalar_select %p24, %s26, %s17
    %p28 = scmp.ge.s32.totalorder %s27, 2
    %s29 = scalar_select %p28, 0, %s27
    %s30 = ssub.s32 %s17, %s29
    %s31 = ssub.s32 %s18, %s25
    %s32 = sor.u32 %s30, %s31
    %p33 = scmp.eq.s32.totalorder %s32, 0
    %s35 = sadd.s32 %s34, 1
    %s36 = scalar_select %p33, %s34, %s35
    %p39 = pneg %p33
    %p40 = scmp.eq.s32.totalorder %s10, 7
    %p41 = por %p39, %p40
    %p42 = scmp.ne.s32.totalorder %s34, %s37
    %p43 = scmp.eq.s32.totalorder %s10, 0
    %p44 = por %p42, %p43
    %p45 = scmp.ne.s32.totalorder %s34, %s37
    %p46 = scmp.eq.s32.totalorder %s15, 7
    %p47 = por %p45, %p46
    %p48 = scmp.ne.s32.totalorder %s37, %s38
    %p49 = scmp.eq.s32.totalorder %s15, 0
    %p50 = por %p48, %p49
    %p51 = scmp.ne.s32.totalorder %s37, %s38
    %p52 = scmp.eq.s32.totalorder %s16, 7
    %p53 = por %p51, %p52
    %p55 = scmp.ne.s32.totalorder %s38, %s54
    %p56 = scmp.eq.s32.totalorder %s16, 0
    %p57 = por %p55, %p56
    %s59 = sadd.s32 %s58, 1
    %p62 = scmp.eq.s32.totalorder %s10, 7
    %p63 = scmp.ne.s32.totalorder %s58, %s60
    %p64 = scmp.eq.s32.totalorder %s10, 0
    %p65 = por %p63, %p64
    %p66 = scmp.ne.s32.totalorder %s58, %s60
    %p67 = scmp.eq.s32.totalorder %s15, 7
    %p68 = por %p66, %p67
    %p69 = scmp.ne.s32.totalorder %s60, %s61
    %p70 = scmp.eq.s32.totalorder %s15, 0
    %p71 = por %p69, %p70
    %p72 = scmp.ne.s32.totalorder %s60, %s61
    %p73 = scmp.eq.s32.totalorder %s16, 7
    %p74 = por %p72, %p73
    %p76 = scmp.ne.s32.totalorder %s61, %s75
    %p77 = scmp.eq.s32.totalorder %s16, 0
    %p78 = por %p76, %p77
    %s79 = ssub.s32 %s17, %s29
    %s80 = ssub.s32 %s18, %s25
    %s81 = sor.u32 %s79, %s80
    %p82 = scmp.eq.s32.totalorder %s81, 0
    %s84 = sadd.s32 %s83, 1
    %s85 = scalar_select %p82, %s83, %s84
    %p88 = pneg %p82
    %p89 = scmp.eq.s32.totalorder %s10, 7
    %p90 = por %p88, %p89
    %p91 = scmp.ne.s32.totalorder %s83, %s86
    %p92 = scmp.eq.s32.totalorder %s10, 0
    %p93 = por %p91, %p92
    %p94 = scmp.ne.s32.totalorder %s83, %s86
    %p95 = scmp.eq.s32.totalorder %s15, 7
    %p96 = por %p94, %p95
    %p97 = scmp.ne.s32.totalorder %s86, %s87
    %p98 = scmp.eq.s32.totalorder %s15, 0
    %p99 = por %p97, %p98
    %p100 = scmp.ne.s32.totalorder %s86, %s87
    %p101 = scmp.eq.s32.totalorder %s16, 7
    %p102 = por %p100, %p101
    %p104 = scmp.ne.s32.totalorder %s87, %s103
    %p105 = scmp.eq.s32.totalorder %s16, 0
    %p106 = por %p104, %p105
    %s107 = ssub.s32 %s17, %s29
    %s108 = ssub.s32 %s18, %s25
    %s109 = sor.u32 %s107, %s108
    %p110 = scmp.eq.s32.totalorder %s109, 0
    %s112 = sadd.s32 %s111, 1
    %s113 = scalar_select %p110, %s111, %s112
    %p116 = pneg %p110
    %p117 = scmp.eq.s32.totalorder %s10, 7
    %p118 = por %p116, %p117
    %p119 = scmp.ne.s32.totalorder %s111, %s114
    %p120 = scmp.eq.s32.totalorder %s10, 0
    %p121 = por %p119, %p120
    %p122 = scmp.ne.s32.totalorder %s111, %s114
    %p123 = scmp.eq.s32.totalorder %s15, 7
    %p124 = por %p122, %p123
    %p125 = scmp.ne.s32.totalorder %s114, %s115
    %p126 = scmp.eq.s32.totalorder %s15, 0
    %p127 = por %p125, %p126
    %p128 = scmp.ne.s32.totalorder %s114, %s115
    %p129 = scmp.eq.s32.totalorder %s16, 7
    %p130 = por %p128, %p129
    %p132 = scmp.ne.s32.totalorder %s115, %s131
    %p133 = scmp.eq.s32.totalorder %s16, 0
    %p134 = por %p132, %p133
    %p135 = scmp.le.s32.totalorder 1, %s10
    %p136 = scmp.lt.s32.totalorder %s10, 9
    %p137 = pnand %p135, %p136
    %p138 = pneg %p137
    // Predicated region
    $region9: #{up_block_forward.12} parent=5 // pred_check
      _
    $region10: #{up_block_forward.12} parent=5 // pred_check_branch
      %140 = sbr.rel (%p137) target = $region12
    $region11: #{up_block_forward.12} parent=5 // pred_region
      %s141 = ssub.s32 %s10, 1
      // Predicated region
      $region13: #{up_block_forward.12} parent=11 // pred_check
        %p142 = pneg %p71
      $region14: #{up_block_forward.12} parent=11 // pred_check_branch
        %144 = sbr.rel (%p142) target = $region16
      $region15: #{up_block_forward.12} parent=11 // pred_region
        _
      $region16: #{up_block_forward.12} parent=11 // pred_fallthru
        _
    $region12: #{up_block_forward.12} parent=5 // pred_fallthru
      _
    %p145 = scmp.lt.s32.totalorder %s10, 8
    // Predicated region
    $region17: #{up_block_forward.12} parent=5 // pred_check
      %p146 = pneg %p145
    $region18: #{up_block_forward.12} parent=5 // pred_check_branch
      %148 = sbr.rel (%p146) target = $region20
    $region19: #{up_block_forward.12} parent=5 // pred_region
      // Predicated region
      $region21: #{up_block_forward.12} parent=19 // pred_check
        %p149 = pneg %p44
      $region22: #{up_block_forward.12} parent=19 // pred_check_branch
        %151 = sbr.rel (%p149) target = $region24
      $region23: #{up_block_forward.12} parent=19 // pred_region
        %p152 = scmp.lt.s32.totalorder %s17, 1
        %s153 = scalar_select %p152, %s17, 1
        %p154 = scmp.lt.s32.totalorder %s18, 3
        %s155 = scalar_select %p154, %s18, 3
        %s156 = smul.addr %s155, 13
        %s157 = smul.addr %s153, 52
        %s158 = sadd.s32 %s156, %s157
        %s159 = smul.addr %s158, 4
        %s160 = scalar_lea.vmem %s0, %s159
      $region24: #{up_block_forward.12} parent=19 // pred_fallthru
        _
    $region20: #{up_block_forward.12} parent=5 // pred_fallthru
      _
    %p161 = scmp.le.s32.totalorder 1, %s10
    %p162 = scmp.lt.s32.totalorder %s10, 9
    %p163 = pnand %p161, %p162
    %p164 = pneg %p163
    // Predicated region
    $region25: #{up_block_forward.12} parent=5 // pred_check
      _
    $region26: #{up_block_forward.12} parent=5 // pred_check_branch
      %166 = sbr.rel (%p163) target = $region28
    $region27: #{up_block_forward.12} parent=5 // pred_region
      %s167 = ssub.s32 %s10, 1
      %p168 = scmp.lt.s32.totalorder %s19, 1
      %s169 = scalar_select %p168, %s19, 1
      %p170 = scmp.lt.s32.totalorder %s20, 3
      %s171 = scalar_select %p170, %s20, 3
      %s172 = smul.addr %s171, 13
      %s173 = smul.addr %s169, 52
      %s174 = sadd.s32 %s172, %s173
      %s175 = smul.addr %s174, 4
      %s176 = scalar_lea.vmem %s0, %s175
      %p177 = pneg %p50
      %p178 = pneg %p47
      %p179 = pneg %p71
      %p180 = pneg %p68
      %p181 = pneg %p99
      %p182 = pneg %p96
      %p183 = scmp.lt.s32.totalorder %s19, 1
      %s184 = scalar_select %p183, %s19, 1
      %p185 = scmp.lt.s32.totalorder %s20, 3
      %s186 = scalar_select %p185, %s20, 3
      %s187 = smul.addr %s186, 10
      %s188 = smul.addr %s184, 40
      %s189 = sadd.s32 %s187, %s188
      %s190 = smul.addr %s189, 8
      %s191 = scalar_lea.vmem %s2, %s190
      %p192 = pneg %p127
      %p193 = pneg %p124
      %p194 = scmp.lt.s32.totalorder %s19, 1
      %s195 = scalar_select %p194, %s19, 1
      %p196 = scmp.lt.s32.totalorder %s20, 3
      %s197 = scalar_select %p196, %s20, 3
      %s198 = smul.addr %s195, 4
      %s199 = sadd.s32 %s197, %s198
      %s200 = smul.addr %s199, 2
      %s201 = scalar_lea.vmem %s3, %s200
      %p202 = scmp.lt.s32.totalorder %s19, 1
      %s203 = scalar_select %p202, %s19, 1
      %p204 = scmp.lt.s32.totalorder %s20, 3
      %s205 = scalar_select %p204, %s20, 3
      %s206 = smul.addr %s205, 13
      %s207 = smul.addr %s203, 52
      %s208 = sadd.s32 %s206, %s207
      %s209 = smul.addr %s208, 4
      %s210 = scalar_lea.vmem %s0, %s209
      %p211 = scmp.lt.s32.totalorder %s19, 1
      %s212 = scalar_select %p211, %s19, 1
      %p213 = scmp.lt.s32.totalorder %s20, 3
      %s214 = scalar_select %p213, %s20, 3
      %s215 = smul.addr %s214, 10
      %s216 = smul.addr %s212, 40
      %s217 = sadd.s32 %s215, %s216
      %s218 = smul.addr %s217, 8
      %s219 = scalar_lea.vmem %s2, %s218
      %p220 = scmp.lt.s32.totalorder %s19, 1
      %s221 = scalar_select %p220, %s19, 1
      %p222 = scmp.lt.s32.totalorder %s20, 3
      %s223 = scalar_select %p222, %s20, 3
      %s224 = smul.addr %s221, 4
      %s225 = sadd.s32 %s223, %s224
      %s226 = smul.addr %s225, 2
      %s227 = scalar_lea.vmem %s3, %s226
      %v228 = vld [vmem:[%s210] sm:$0xf]
      %v229 = vld [vmem:[%s210 + $0x4] sm:$0xf]
      %v230 = vld [vmem:[%s210 + $0x8] sm:$0xf]
      %v231 = vld [vmem:[%s210 + $0xc] sm:$0xf]
      %v232 = vld [vmem:[%s210 + $0x10] sm:$0xf]
      %v233 = vld [vmem:[%s210 + $0x14] sm:$0xf]
      %v234 = vld [vmem:[%s210 + $0x18] sm:$0xf]
      %v235 = vld [vmem:[%s210 + $0x1c] sm:$0xf]
      %v236 = vld [vmem:[%s210 + $0x20] sm:$0xf]
      %v237 = vld [vmem:[%s210 + $0x24] sm:$0xf]
      %v238 = vld [vmem:[%s1] sm:$0xf]
      %v239 = vld [vmem:[%s1 + $0x4] sm:$0xf]
      %v240 = vld [vmem:[%s1 + $0x8] sm:$0xf]
      %v241 = vld [vmem:[%s1 + $0xc] sm:$0xf]
      %v242 = vld [vmem:[%s1 + $0x10] sm:$0xf]
      %v243 = vld [vmem:[%s1 + $0x14] sm:$0xf]
      %v244 = vld [vmem:[%s1 + $0x18] sm:$0xf]
      %v245 = vld [vmem:[%s1 + $0x1c] sm:$0xf]
      %v246 = vld [vmem:[%s1 + $0x20] sm:$0xf]
      %v247 = vld [vmem:[%s1 + $0x24] sm:$0xf]
      %v248 = vld [vmem:[%s1 + $0x28] sm:$0xf]
      %v249 = vld [vmem:[%s1 + $0x2c] sm:$0xf]
      %v250 = vld [vmem:[%s1 + $0x30] sm:$0xf]
      %v251 = vld [vmem:[%s1 + $0x34] sm:$0xf]
      %v252 = vld [vmem:[%s1 + $0x38] sm:$0xf]
      %v253 = vld [vmem:[%s1 + $0x3c] sm:$0xf]
      %v254 = vld [vmem:[%s210 + $0x28] sm:$0x1]
      %s255 = scalar_lea.vmem %s1, 64
      %v256 = vld [vmem:[%s255] sm:$0xf]
      %v257 = vld [vmem:[%s255 + $0x4] sm:$0xf]
      %v258 = vld [vmem:[%s255 + $0x8] sm:$0xf]
      %v259 = vld [vmem:[%s255 + $0xc] sm:$0xf]
      %v260 = vld [vmem:[%s255 + $0x10] sm:$0xf]
      %v261 = vld [vmem:[%s255 + $0x14] sm:$0xf]
      %v262 = vld [vmem:[%s255 + $0x18] sm:$0xf]
      %v263 = vld [vmem:[%s255 + $0x1c] sm:$0xf]
      %v264 = vld [vmem:[%s255 + $0x20] sm:$0xf]
      %v265 = vld [vmem:[%s255 + $0x24] sm:$0xf]
      %v266 = vld [vmem:[%s255 + $0x28] sm:$0xf]
      %v267 = vld [vmem:[%s255 + $0x2c] sm:$0xf]
      %v268 = vld [vmem:[%s255 + $0x30] sm:$0xf]
      %v269 = vld [vmem:[%s255 + $0x34] sm:$0xf]
      %v270 = vld [vmem:[%s255 + $0x38] sm:$0xf]
      %v271 = vld [vmem:[%s255 + $0x3c] sm:$0xf]
      %v283 = vunpack.c.l.b16 %v228
      %v284 = vunpack.c.l.b16 %v229
      %v285 = vunpack.c.l.b16 %v230
      %v286 = vunpack.c.l.b16 %v231
      %v287 = vunpack.c.l.b16 %v232
      %v288 = vunpack.c.l.b16 %v233
      %v289 = vunpack.c.l.b16 %v234
      %v290 = vunpack.c.l.b16 %v235
      %v291 = vunpack.c.l.b16 %v236
      %v292 = vunpack.c.l.b16 %v237
      %v293 = vunpack.c.l.b16 %v254
      %v294 = vpack.c.b16 %v284, %v283
      %v295 = vpack.c.b16 %v286, %v285
      %v296 = vpack.c.b16 %v288, %v287
      %v297 = vpack.c.b16 %v290, %v289
      %v298 = vpack.c.b16 %v292, %v291
      %v299 = vpack.c.b16 %v293, %v293
      %vm300 = vsmask.f32 7424
      %v302 = vshrl.u32 %v294, 16
      %v304 = vshll.u32 %v294, 16
      %v306 = vrot.slane %v304, 1
      %v307 = vor.u32 %v302, %v306
      %v309 = vshll.u32 %v295, 16
      %v311 = vrot.slane %v309, 1
      %v312 = vsel %vm300, %v307, %v311
      %v313 = vshrl.u32 %v295, 16
      %v315 = vor.u32 %v313, %v311
      %v317 = vshll.u32 %v296, 16
      %v319 = vrot.slane %v317, 1
      %v320 = vsel %vm300, %v315, %v319
      %v321 = vshrl.u32 %v296, 16
      %v323 = vor.u32 %v321, %v319
      %v325 = vshll.u32 %v297, 16
      %v327 = vrot.slane %v325, 1
      %v328 = vsel %vm300, %v323, %v327
      %v329 = vshrl.u32 %v297, 16
      %v331 = vor.u32 %v329, %v327
      %v333 = vshll.u32 %v298, 16
      %v335 = vrot.slane %v333, 1
      %v336 = vsel %vm300, %v331, %v335
      %v337 = vshrl.u32 %v298, 16
      %v339 = vor.u32 %v337, %v335
      %v341 = vshll.u32 %v299, 16
      %v343 = vrot.slane %v341, 1
      %v344 = vsel %vm300, %v339, %v343
      %v366 = vunpack.c.l.b16 %v256
      %v367 = vunpack.c.l.b16 %v257
      %v368 = vunpack.c.l.b16 %v258
      %v369 = vunpack.c.l.b16 %v259
      %v370 = vunpack.c.l.b16 %v260
      %v371 = vunpack.c.l.b16 %v261
      %v372 = vunpack.c.l.b16 %v262
      %v373 = vunpack.c.l.b16 %v263
      %v374 = vunpack.c.l.b16 %v264
      %v375 = vunpack.c.l.b16 %v265
      %v376 = vunpack.c.l.b16 %v266
      %v377 = vunpack.c.l.b16 %v267
      %v378 = vunpack.c.l.b16 %v268
      %v379 = vunpack.c.l.b16 %v269
      %v380 = vunpack.c.l.b16 %v270
      %v381 = vunpack.c.l.b16 %v271
      %v382 = vpack.c.b16 %v367, %v366
      %v383 = vpack.c.b16 %v369, %v368
      %v384 = vpack.c.b16 %v371, %v370
      %v385 = vpack.c.b16 %v373, %v372
      %v386 = vpack.c.b16 %v375, %v374
      %v387 = vpack.c.b16 %v377, %v376
      %v388 = vpack.c.b16 %v379, %v378
      %v389 = vpack.c.b16 %v381, %v380
      %398 = vmatpush.bf16.msra.mxu0 %v389
      %399 = vmatpush.bf16.msra.mxu0 %v388
      %400 = vmatpush.bf16.msra.mxu0 %v387
      %401 = vmatpush.bf16.msra.mxu0 %v386
      %402 = vmatpush.bf16.msra.mxu0 %v385
      %403 = vmatpush.bf16.msra.mxu0 %v384
      %404 = vmatpush.bf16.msra.mxu0 %v383
      %405 = vmatpush.bf16.msra.mxu0 %v382
      %406 = vmatmul.bf16.gmra.mxu0 %v312
      %v407 = vpop.f32.mrf.mxu0
      %v408 = vadd.f32 0.0, %v407
      %v409 = vpop.f32.mrf.mxu0
      %v410 = vadd.f32 0.0, %v409
      %411 = vmatmul.bf16.gmra.mxu0 %v320
      %v412 = vpop.f32.mrf.mxu0
      %v413 = vadd.f32 0.0, %v412
      %v414 = vpop.f32.mrf.mxu0
      %v415 = vadd.f32 0.0, %v414
      %416 = vmatmul.bf16.gmra.mxu0 %v328
      %v417 = vpop.f32.mrf.mxu0
      %v418 = vadd.f32 0.0, %v417
      %v419 = vpop.f32.mrf.mxu0
      %v420 = vadd.f32 0.0, %v419
      %421 = vmatmul.bf16.gmra.mxu0 %v336
      %v422 = vpop.f32.mrf.mxu0
      %v423 = vadd.f32 0.0, %v422
      %v424 = vpop.f32.mrf.mxu0
      %v425 = vadd.f32 0.0, %v424
      %426 = vmatmul.bf16.gmra.mxu0 %v344
      %v427 = vpop.f32.mrf.mxu0
      %v428 = vadd.f32 0.0, %v427
      %v429 = vpop.f32.mrf.mxu0
      %v430 = vadd.f32 0.0, %v429
      %431 = vdwg.mxu0
      %v453 = vunpack.c.l.b16 %v238
      %v454 = vunpack.c.l.b16 %v239
      %v455 = vunpack.c.l.b16 %v240
      %v456 = vunpack.c.l.b16 %v241
      %v457 = vunpack.c.l.b16 %v242
      %v458 = vunpack.c.l.b16 %v243
      %v459 = vunpack.c.l.b16 %v244
      %v460 = vunpack.c.l.b16 %v245
      %v461 = vunpack.c.l.b16 %v246
      %v462 = vunpack.c.l.b16 %v247
      %v463 = vunpack.c.l.b16 %v248
      %v464 = vunpack.c.l.b16 %v249
      %v465 = vunpack.c.l.b16 %v250
      %v466 = vunpack.c.l.b16 %v251
      %v467 = vunpack.c.l.b16 %v252
      %v468 = vunpack.c.l.b16 %v253
      %v469 = vpack.c.b16 %v454, %v453
      %v470 = vpack.c.b16 %v456, %v455
      %v471 = vpack.c.b16 %v458, %v457
      %v472 = vpack.c.b16 %v460, %v459
      %v473 = vpack.c.b16 %v462, %v461
      %v474 = vpack.c.b16 %v464, %v463
      %v475 = vpack.c.b16 %v466, %v465
      %v476 = vpack.c.b16 %v468, %v467
      %485 = vmatpush.bf16.msra.mxu0 %v476
      %486 = vmatpush.bf16.msra.mxu0 %v475
      %487 = vmatpush.bf16.msra.mxu0 %v474
      %488 = vmatpush.bf16.msra.mxu0 %v473
      %489 = vmatpush.bf16.msra.mxu0 %v472
      %490 = vmatpush.bf16.msra.mxu0 %v471
      %491 = vmatpush.bf16.msra.mxu0 %v470
      %492 = vmatpush.bf16.msra.mxu0 %v469
      %493 = vmatmul.bf16.gmra.mxu0 %v294
      %v494 = vpop.f32.mrf.mxu0
      %v495 = vadd.f32 %v408, %v494
      %v496 = vpop.f32.mrf.mxu0
      %v497 = vadd.f32 %v410, %v496
      %498 = vmatmul.bf16.gmra.mxu0 %v295
      %v499 = vpop.f32.mrf.mxu0
      %v500 = vadd.f32 %v413, %v499
      %v501 = vpop.f32.mrf.mxu0
      %v502 = vadd.f32 %v415, %v501
      %503 = vmatmul.bf16.gmra.mxu0 %v296
      %v504 = vpop.f32.mrf.mxu0
      %v505 = vadd.f32 %v418, %v504
      %v506 = vpop.f32.mrf.mxu0
      %v507 = vadd.f32 %v420, %v506
      %508 = vmatmul.bf16.gmra.mxu0 %v297
      %v509 = vpop.f32.mrf.mxu0
      %v510 = vadd.f32 %v423, %v509
      %v511 = vpop.f32.mrf.mxu0
      %v512 = vadd.f32 %v425, %v511
      %513 = vmatmul.bf16.gmra.mxu0 %v298
      %v514 = vpop.f32.mrf.mxu0
      %v515 = vadd.f32 %v428, %v514
      %v516 = vpop.f32.mrf.mxu0
      %v517 = vadd.f32 %v430, %v516
      %518 = vdwg.mxu0
      %v519 = vld [vmem:[%s210] sm:$0xe]
      %s520 = scalar_lea.vmem %s1, 128
      %v521 = vld [vmem:[%s520] sm:$0xf]
      %v522 = vld [vmem:[%s520 + $0x4] sm:$0xf]
      %v523 = vld [vmem:[%s520 + $0x8] sm:$0xf]
      %v524 = vld [vmem:[%s520 + $0xc] sm:$0xf]
      %v525 = vld [vmem:[%s520 + $0x10] sm:$0xf]
      %v526 = vld [vmem:[%s520 + $0x14] sm:$0xf]
      %v527 = vld [vmem:[%s520 + $0x18] sm:$0xf]
      %v528 = vld [vmem:[%s520 + $0x1c] sm:$0xf]
      %v529 = vld [vmem:[%s520 + $0x20] sm:$0xf]
      %v530 = vld [vmem:[%s520 + $0x24] sm:$0xf]
      %v531 = vld [vmem:[%s520 + $0x28] sm:$0xf]
      %v532 = vld [vmem:[%s520 + $0x2c] sm:$0xf]
      %v533 = vld [vmem:[%s520 + $0x30] sm:$0xf]
      %v534 = vld [vmem:[%s520 + $0x34] sm:$0xf]
      %v535 = vld [vmem:[%s520 + $0x38] sm:$0xf]
      %v536 = vld [vmem:[%s520 + $0x3c] sm:$0xf]
      %v538 = vunpack.c.l.b16 %v519
      %v539 = vpack.c.b16 %v284, %v538
      %vm540 = vcmask 1046528
      %v541 = vrot.slane %v539, 1
      %v542 = vrot.slane %v295, 1
      %v543 = vsel %vm540, %v541, %v542
      %v544 = vrot.slane %v296, 1
      %v545 = vsel %vm540, %v542, %v544
      %v546 = vrot.slane %v297, 1
      %v547 = vsel %vm540, %v544, %v546
      %v548 = vrot.slane %v298, 1
      %v549 = vsel %vm540, %v546, %v548
      %v550 = vrot.slane %v299, 1
      %v551 = vsel %vm540, %v548, %v550
      %v573 = vunpack.c.l.b16 %v521
      %v574 = vunpack.c.l.b16 %v522
      %v575 = vunpack.c.l.b16 %v523
      %v576 = vunpack.c.l.b16 %v524
      %v577 = vunpack.c.l.b16 %v525
      %v578 = vunpack.c.l.b16 %v526
      %v579 = vunpack.c.l.b16 %v527
      %v580 = vunpack.c.l.b16 %v528
      %v581 = vunpack.c.l.b16 %v529
      %v582 = vunpack.c.l.b16 %v530
      %v583 = vunpack.c.l.b16 %v531
      %v584 = vunpack.c.l.b16 %v532
      %v585 = vunpack.c.l.b16 %v533
      %v586 = vunpack.c.l.b16 %v534
      %v587 = vunpack.c.l.b16 %v535
      %v588 = vunpack.c.l.b16 %v536
      %v589 = vpack.c.b16 %v574, %v573
      %v590 = vpack.c.b16 %v576, %v575
      %v591 = vpack.c.b16 %v578, %v577
      %v592 = vpack.c.b16 %v580, %v579
      %v593 = vpack.c.b16 %v582, %v581
      %v594 = vpack.c.b16 %v584, %v583
      %v595 = vpack.c.b16 %v586, %v585
      %v596 = vpack.c.b16 %v588, %v587
      %605 = vmatpush.bf16.msra.mxu0 %v596
      %606 = vmatpush.bf16.msra.mxu0 %v595
      %607 = vmatpush.bf16.msra.mxu0 %v594
      %608 = vmatpush.bf16.msra.mxu0 %v593
      %609 = vmatpush.bf16.msra.mxu0 %v592
      %610 = vmatpush.bf16.msra.mxu0 %v591
      %611 = vmatpush.bf16.msra.mxu0 %v590
      %612 = vmatpush.bf16.msra.mxu0 %v589
      %613 = vmatmul.bf16.gmra.mxu0 %v543
      %v614 = vpop.f32.mrf.mxu0
      %v615 = vadd.f32 0.0, %v614
      %v616 = vpop.f32.mrf.mxu0
      %v617 = vadd.f32 0.0, %v616
      %618 = vmatmul.bf16.gmra.mxu0 %v545
      %v619 = vpop.f32.mrf.mxu0
      %v620 = vadd.f32 0.0, %v619
      %v621 = vpop.f32.mrf.mxu0
      %v622 = vadd.f32 0.0, %v621
      %623 = vmatmul.bf16.gmra.mxu0 %v547
      %v624 = vpop.f32.mrf.mxu0
      %v625 = vadd.f32 0.0, %v624
      %v626 = vpop.f32.mrf.mxu0
      %v627 = vadd.f32 0.0, %v626
      %628 = vmatmul.bf16.gmra.mxu0 %v549
      %v629 = vpop.f32.mrf.mxu0
      %v630 = vadd.f32 0.0, %v629
      %v631 = vpop.f32.mrf.mxu0
      %v632 = vadd.f32 0.0, %v631
      %633 = vmatmul.bf16.gmra.mxu0 %v551
      %v634 = vpop.f32.mrf.mxu0
      %v635 = vadd.f32 0.0, %v634
      %v636 = vpop.f32.mrf.mxu0
      %v637 = vadd.f32 0.0, %v636
      %638 = vdwg.mxu0
      %v639 = vadd.f32 %v495, %v615
      %v640 = vadd.f32 %v497, %v617
      %v641 = vadd.f32 %v500, %v620
      %v642 = vadd.f32 %v502, %v622
      %v643 = vadd.f32 %v505, %v625
      %v644 = vadd.f32 %v507, %v627
      %v645 = vadd.f32 %v510, %v630
      %v646 = vadd.f32 %v512, %v632
      %v647 = vadd.f32 %v515, %v635
      %v648 = vadd.f32 %v517, %v637
      %v649 = vld [vmem:[%s210 + $0x4] sm:$0xe]
      %v650 = vld [vmem:[%s210 + $0x8] sm:$0xf]
      %v651 = vld [vmem:[%s210 + $0xc] sm:$0xf]
      %v652 = vld [vmem:[%s210 + $0x10] sm:$0xf]
      %v653 = vld [vmem:[%s210 + $0x14] sm:$0xf]
      %v654 = vld [vmem:[%s210 + $0x18] sm:$0xf]
      %v655 = vld [vmem:[%s210 + $0x1c] sm:$0xf]
      %v656 = vld [vmem:[%s210 + $0x20] sm:$0xf]
      %v657 = vld [vmem:[%s210 + $0x24] sm:$0xf]
      %v658 = vld [vmem:[%s210 + $0x28] sm:$0xf]
      %v659 = vld [vmem:[%s210 + $0x2c] sm:$0x1]
      %s660 = scalar_lea.vmem %s1, 192
      %v661 = vld [vmem:[%s660] sm:$0xf]
      %v662 = vld [vmem:[%s660 + $0x4] sm:$0xf]
      %v663 = vld [vmem:[%s660 + $0x8] sm:$0xf]
      %v664 = vld [vmem:[%s660 + $0xc] sm:$0xf]
      %v665 = vld [vmem:[%s660 + $0x10] sm:$0xf]
      %v666 = vld [vmem:[%s660 + $0x14] sm:$0xf]
      %v667 = vld [vmem:[%s660 + $0x18] sm:$0xf]
      %v668 = vld [vmem:[%s660 + $0x1c] sm:$0xf]
      %v669 = vld [vmem:[%s660 + $0x20] sm:$0xf]
      %v670 = vld [vmem:[%s660 + $0x24] sm:$0xf]
      %v671 = vld [vmem:[%s660 + $0x28] sm:$0xf]
      %v672 = vld [vmem:[%s660 + $0x2c] sm:$0xf]
      %v673 = vld [vmem:[%s660 + $0x30] sm:$0xf]
      %v674 = vld [vmem:[%s660 + $0x34] sm:$0xf]
      %v675 = vld [vmem:[%s660 + $0x38] sm:$0xf]
      %v676 = vld [vmem:[%s660 + $0x3c] sm:$0xf]
      %v688 = vunpack.c.l.b16 %v649
      %v689 = vunpack.c.l.b16 %v650
      %v690 = vunpack.c.l.b16 %v651
      %v691 = vunpack.c.l.b16 %v652
      %v692 = vunpack.c.l.b16 %v653
      %v693 = vunpack.c.l.b16 %v654
      %v694 = vunpack.c.l.b16 %v655
      %v695 = vunpack.c.l.b16 %v656
      %v696 = vunpack.c.l.b16 %v657
      %v697 = vunpack.c.l.b16 %v658
      %v698 = vunpack.c.l.b16 %v659
      %v699 = vpack.c.b16 %v689, %v688
      %v700 = vpack.c.b16 %v691, %v690
      %v701 = vpack.c.b16 %v693, %v692
      %v702 = vpack.c.b16 %v695, %v694
      %v703 = vpack.c.b16 %v697, %v696
      %v704 = vpack.c.b16 %v698, %v698
      %v705 = vrot.slane %v699, 1
      %v706 = vrot.slane %v700, 1
      %v707 = vsel %vm540, %v705, %v706
      %v708 = vrot.slane %v701, 1
      %v709 = vsel %vm540, %v706, %v708
      %v710 = vrot.slane %v702, 1
      %v711 = vsel %vm540, %v708, %v710
      %v712 = vrot.slane %v703, 1
      %v713 = vsel %vm540, %v710, %v712
      %v714 = vrot.slane %v704, 1
      %v715 = vsel %vm540, %v712, %v714
      %v737 = vunpack.c.l.b16 %v661
      %v738 = vunpack.c.l.b16 %v662
      %v739 = vunpack.c.l.b16 %v663
      %v740 = vunpack.c.l.b16 %v664
      %v741 = vunpack.c.l.b16 %v665
      %v742 = vunpack.c.l.b16 %v666
      %v743 = vunpack.c.l.b16 %v667
      %v744 = vunpack.c.l.b16 %v668
      %v745 = vunpack.c.l.b16 %v669
      %v746 = vunpack.c.l.b16 %v670
      %v747 = vunpack.c.l.b16 %v671
      %v748 = vunpack.c.l.b16 %v672
      %v749 = vunpack.c.l.b16 %v673
      %v750 = vunpack.c.l.b16 %v674
      %v751 = vunpack.c.l.b16 %v675
      %v752 = vunpack.c.l.b16 %v676
      %v753 = vpack.c.b16 %v738, %v737
      %v754 = vpack.c.b16 %v740, %v739
      %v755 = vpack.c.b16 %v742, %v741
      %v756 = vpack.c.b16 %v744, %v743
      %v757 = vpack.c.b16 %v746, %v745
      %v758 = vpack.c.b16 %v748, %v747
      %v759 = vpack.c.b16 %v750, %v749
      %v760 = vpack.c.b16 %v752, %v751
      %769 = vmatpush.bf16.msra.mxu0 %v760
      %770 = vmatpush.bf16.msra.mxu0 %v759
      %771 = vmatpush.bf16.msra.mxu0 %v758
      %772 = vmatpush.bf16.msra.mxu0 %v757
      %773 = vmatpush.bf16.msra.mxu0 %v756
      %774 = vmatpush.bf16.msra.mxu0 %v755
      %775 = vmatpush.bf16.msra.mxu0 %v754
      %776 = vmatpush.bf16.msra.mxu0 %v753
      %777 = vmatmul.bf16.gmra.mxu0 %v707
      %v778 = vpop.f32.mrf.mxu0
      %v779 = vadd.f32 0.0, %v778
      %v780 = vpop.f32.mrf.mxu0
      %v781 = vadd.f32 0.0, %v780
      %782 = vmatmul.bf16.gmra.mxu0 %v709
      %v783 = vpop.f32.mrf.mxu0
      %v784 = vadd.f32 0.0, %v783
      %v785 = vpop.f32.mrf.mxu0
      %v786 = vadd.f32 0.0, %v785
      %787 = vmatmul.bf16.gmra.mxu0 %v711
      %v788 = vpop.f32.mrf.mxu0
      %v789 = vadd.f32 0.0, %v788
      %v790 = vpop.f32.mrf.mxu0
      %v791 = vadd.f32 0.0, %v790
      %792 = vmatmul.bf16.gmra.mxu0 %v713
      %v793 = vpop.f32.mrf.mxu0
      %v794 = vadd.f32 0.0, %v793
      %v795 = vpop.f32.mrf.mxu0
      %v796 = vadd.f32 0.0, %v795
      %797 = vmatmul.bf16.gmra.mxu0 %v715
      %v798 = vpop.f32.mrf.mxu0
      %v799 = vadd.f32 0.0, %v798
      %v800 = vpop.f32.mrf.mxu0
      %v801 = vadd.f32 0.0, %v800
      %802 = vdwg.mxu0
      %v803 = vadd.f32 %v639, %v779
      %v804 = vadd.f32 %v640, %v781
      %v805 = vadd.f32 %v641, %v784
      %v806 = vadd.f32 %v642, %v786
      %v807 = vadd.f32 %v643, %v789
      %v808 = vadd.f32 %v644, %v791
      %v809 = vadd.f32 %v645, %v794
      %v810 = vadd.f32 %v646, %v796
      %v811 = vadd.f32 %v647, %v799
      %v812 = vadd.f32 %v648, %v801
      %v813 = vld [vmem:[%s210 + $0x2c] sm:$0x3]
      %s814 = scalar_lea.vmem %s1, 256
      %v815 = vld [vmem:[%s814] sm:$0xf]
      %v816 = vld [vmem:[%s814 + $0x4] sm:$0xf]
      %v817 = vld [vmem:[%s814 + $0x8] sm:$0xf]
      %v818 = vld [vmem:[%s814 + $0xc] sm:$0xf]
      %v819 = vld [vmem:[%s814 + $0x10] sm:$0xf]
      %v820 = vld [vmem:[%s814 + $0x14] sm:$0xf]
      %v821 = vld [vmem:[%s814 + $0x18] sm:$0xf]
      %v822 = vld [vmem:[%s814 + $0x1c] sm:$0xf]
      %v823 = vld [vmem:[%s814 + $0x20] sm:$0xf]
      %v824 = vld [vmem:[%s814 + $0x24] sm:$0xf]
      %v825 = vld [vmem:[%s814 + $0x28] sm:$0xf]
      %v826 = vld [vmem:[%s814 + $0x2c] sm:$0xf]
      %v827 = vld [vmem:[%s814 + $0x30] sm:$0xf]
      %v828 = vld [vmem:[%s814 + $0x34] sm:$0xf]
      %v829 = vld [vmem:[%s814 + $0x38] sm:$0xf]
      %v830 = vld [vmem:[%s814 + $0x3c] sm:$0xf]
      %v832 = vunpack.c.l.b16 %v813
      %v833 = vpack.c.b16 %v832, %v832
      %vm834 = vsmask.f32 6400
      %v836 = vshrl.u32 %v699, 16
      %v838 = vrot.slane %v836, 1
      %v839 = vshll.u32 %v699, 16
      %v841 = vrot.slane %v839, 2
      %v842 = vor.u32 %v838, %v841
      %v844 = vshrl.u32 %v700, 16
      %v846 = vrot.slane %v844, 1
      %v847 = vshll.u32 %v700, 16
      %v849 = vrot.slane %v847, 2
      %v850 = vor.u32 %v846, %v849
      %v851 = vsel %vm834, %v842, %v850
      %v853 = vshrl.u32 %v701, 16
      %v855 = vrot.slane %v853, 1
      %v856 = vshll.u32 %v701, 16
      %v858 = vrot.slane %v856, 2
      %v859 = vor.u32 %v855, %v858
      %v860 = vsel %vm834, %v850, %v859
      %v862 = vshrl.u32 %v702, 16
      %v864 = vrot.slane %v862, 1
      %v865 = vshll.u32 %v702, 16
      %v867 = vrot.slane %v865, 2
      %v868 = vor.u32 %v864, %v867
      %v869 = vsel %vm834, %v859, %v868
      %v871 = vshrl.u32 %v703, 16
      %v873 = vrot.slane %v871, 1
      %v874 = vshll.u32 %v703, 16
      %v876 = vrot.slane %v874, 2
      %v877 = vor.u32 %v873, %v876
      %v878 = vsel %vm834, %v868, %v877
      %v880 = vshrl.u32 %v833, 16
      %v882 = vrot.slane %v880, 1
      %v883 = vshll.u32 %v833, 16
      %v885 = vrot.slane %v883, 2
      %v886 = vor.u32 %v882, %v885
      %v887 = vsel %vm834, %v877, %v886
      %v909 = vunpack.c.l.b16 %v815
      %v910 = vunpack.c.l.b16 %v816
      %v911 = vunpack.c.l.b16 %v817
      %v912 = vunpack.c.l.b16 %v818
      %v913 = vunpack.c.l.b16 %v819
      %v914 = vunpack.c.l.b16 %v820
      %v915 = vunpack.c.l.b16 %v821
      %v916 = vunpack.c.l.b16 %v822
      %v917 = vunpack.c.l.b16 %v823
      %v918 = vunpack.c.l.b16 %v824
      %v919 = vunpack.c.l.b16 %v825
      %v920 = vunpack.c.l.b16 %v826
      %v921 = vunpack.c.l.b16 %v827
      %v922 = vunpack.c.l.b16 %v828
      %v923 = vunpack.c.l.b16 %v829
      %v924 = vunpack.c.l.b16 %v830
      %v925 = vpack.c.b16 %v910, %v909
      %v926 = vpack.c.b16 %v912, %v911
      %v927 = vpack.c.b16 %v914, %v913
      %v928 = vpack.c.b16 %v916, %v915
      %v929 = vpack.c.b16 %v918, %v917
      %v930 = vpack.c.b16 %v920, %v919
      %v931 = vpack.c.b16 %v922, %v921
      %v932 = vpack.c.b16 %v924, %v923
      %941 = vmatpush.bf16.msra.mxu0 %v932
      %942 = vmatpush.bf16.msra.mxu0 %v931
      %943 = vmatpush.bf16.msra.mxu0 %v930
      %944 = vmatpush.bf16.msra.mxu0 %v929
      %945 = vmatpush.bf16.msra.mxu0 %v928
      %946 = vmatpush.bf16.msra.mxu0 %v927
      %947 = vmatpush.bf16.msra.mxu0 %v926
      %948 = vmatpush.bf16.msra.mxu0 %v925
      %949 = vmatmul.bf16.gmra.mxu0 %v851
      %v950 = vpop.f32.mrf.mxu0
      %v951 = vadd.f32 0.0, %v950
      %v952 = vpop.f32.mrf.mxu0
      %v953 = vadd.f32 0.0, %v952
      %954 = vmatmul.bf16.gmra.mxu0 %v860
      %v955 = vpop.f32.mrf.mxu0
      %v956 = vadd.f32 0.0, %v955
      %v957 = vpop.f32.mrf.mxu0
      %v958 = vadd.f32 0.0, %v957
      %959 = vmatmul.bf16.gmra.mxu0 %v869
      %v960 = vpop.f32.mrf.mxu0
      %v961 = vadd.f32 0.0, %v960
      %v962 = vpop.f32.mrf.mxu0
      %v963 = vadd.f32 0.0, %v962
      %964 = vmatmul.bf16.gmra.mxu0 %v878
      %v965 = vpop.f32.mrf.mxu0
      %v966 = vadd.f32 0.0, %v965
      %v967 = vpop.f32.mrf.mxu0
      %v968 = vadd.f32 0.0, %v967
      %969 = vmatmul.bf16.gmra.mxu0 %v887
      %v970 = vpop.f32.mrf.mxu0
      %v971 = vadd.f32 0.0, %v970
      %v972 = vpop.f32.mrf.mxu0
      %v973 = vadd.f32 0.0, %v972
      %974 = vdwg.mxu0
      %v975 = vadd.f32 %v803, %v951
      %v976 = vadd.f32 %v804, %v953
      %v977 = vadd.f32 %v805, %v956
      %v978 = vadd.f32 %v806, %v958
      %v979 = vadd.f32 %v807, %v961
      %v980 = vadd.f32 %v808, %v963
      %v981 = vadd.f32 %v809, %v966
      %v982 = vadd.f32 %v810, %v968
      %v983 = vadd.f32 %v811, %v971
      %v984 = vadd.f32 %v812, %v973
      %v985 = vld [vmem:[%s210 + $0x4] sm:$0xc]
      %s986 = scalar_lea.vmem %s1, 320
      %v987 = vld [vmem:[%s986] sm:$0xf]
      %v988 = vld [vmem:[%s986 + $0x4] sm:$0xf]
      %v989 = vld [vmem:[%s986 + $0x8] sm:$0xf]
      %v990 = vld [vmem:[%s986 + $0xc] sm:$0xf]
      %v991 = vld [vmem:[%s986 + $0x10] sm:$0xf]
      %v992 = vld [vmem:[%s986 + $0x14] sm:$0xf]
      %v993 = vld [vmem:[%s986 + $0x18] sm:$0xf]
      %v994 = vld [vmem:[%s986 + $0x1c] sm:$0xf]
      %v995 = vld [vmem:[%s986 + $0x20] sm:$0xf]
      %v996 = vld [vmem:[%s986 + $0x24] sm:$0xf]
      %v997 = vld [vmem:[%s986 + $0x28] sm:$0xf]
      %v998 = vld [vmem:[%s986 + $0x2c] sm:$0xf]
      %v999 = vld [vmem:[%s986 + $0x30] sm:$0xf]
      %v1000 = vld [vmem:[%s986 + $0x34] sm:$0xf]
      %v1001 = vld [vmem:[%s986 + $0x38] sm:$0xf]
      %v1002 = vld [vmem:[%s986 + $0x3c] sm:$0xf]
      %v1004 = vunpack.c.l.b16 %v985
      %v1005 = vpack.c.b16 %v689, %v1004
      %vm1006 = vcmask 1045504
      %v1007 = vrot.slane %v1005, 2
      %v1008 = vrot.slane %v700, 2
      %v1009 = vsel %vm1006, %v1007, %v1008
      %v1010 = vrot.slane %v701, 2
      %v1011 = vsel %vm1006, %v1008, %v1010
      %v1012 = vrot.slane %v702, 2
      %v1013 = vsel %vm1006, %v1010, %v1012
      %v1014 = vrot.slane %v703, 2
      %v1015 = vsel %vm1006, %v1012, %v1014
      %v1016 = vrot.slane %v833, 2
      %v1017 = vsel %vm1006, %v1014, %v1016
      %v1039 = vunpack.c.l.b16 %v987
      %v1040 = vunpack.c.l.b16 %v988
      %v1041 = vunpack.c.l.b16 %v989
      %v1042 = vunpack.c.l.b16 %v990
      %v1043 = vunpack.c.l.b16 %v991
      %v1044 = vunpack.c.l.b16 %v992
      %v1045 = vunpack.c.l.b16 %v993
      %v1046 = vunpack.c.l.b16 %v994
      %v1047 = vunpack.c.l.b16 %v995
      %v1048 = vunpack.c.l.b16 %v996
      %v1049 = vunpack.c.l.b16 %v997
      %v1050 = vunpack.c.l.b16 %v998
      %v1051 = vunpack.c.l.b16 %v999
      %v1052 = vunpack.c.l.b16 %v1000
      %v1053 = vunpack.c.l.b16 %v1001
      %v1054 = vunpack.c.l.b16 %v1002
      %v1055 = vpack.c.b16 %v1040, %v1039
      %v1056 = vpack.c.b16 %v1042, %v1041
      %v1057 = vpack.c.b16 %v1044, %v1043
      %v1058 = vpack.c.b16 %v1046, %v1045
      %v1059 = vpack.c.b16 %v1048, %v1047
      %v1060 = vpack.c.b16 %v1050, %v1049
      %v1061 = vpack.c.b16 %v1052, %v1051
      %v1062 = vpack.c.b16 %v1054, %v1053
      %1071 = vmatpush.bf16.msra.mxu0 %v1062
      %1072 = vmatpush.bf16.msra.mxu0 %v1061
      %1073 = vmatpush.bf16.msra.mxu0 %v1060
      %1074 = vmatpush.bf16.msra.mxu0 %v1059
      %1075 = vmatpush.bf16.msra.mxu0 %v1058
      %1076 = vmatpush.bf16.msra.mxu0 %v1057
      %1077 = vmatpush.bf16.msra.mxu0 %v1056
      %1078 = vmatpush.bf16.msra.mxu0 %v1055
      %1079 = vmatmul.bf16.gmra.mxu0 %v1009
      %v1080 = vpop.f32.mrf.mxu0
      %v1081 = vadd.f32 0.0, %v1080
      %v1082 = vpop.f32.mrf.mxu0
      %v1083 = vadd.f32 0.0, %v1082
      %1084 = vmatmul.bf16.gmra.mxu0 %v1011
      %v1085 = vpop.f32.mrf.mxu0
      %v1086 = vadd.f32 0.0, %v1085
      %v1087 = vpop.f32.mrf.mxu0
      %v1088 = vadd.f32 0.0, %v1087
      %1089 = vmatmul.bf16.gmra.mxu0 %v1013
      %v1090 = vpop.f32.mrf.mxu0
      %v1091 = vadd.f32 0.0, %v1090
      %v1092 = vpop.f32.mrf.mxu0
      %v1093 = vadd.f32 0.0, %v1092
      %1094 = vmatmul.bf16.gmra.mxu0 %v1015
      %v1095 = vpop.f32.mrf.mxu0
      %v1096 = vadd.f32 0.0, %v1095
      %v1097 = vpop.f32.mrf.mxu0
      %v1098 = vadd.f32 0.0, %v1097
      %1099 = vmatmul.bf16.gmra.mxu0 %v1017
      %v1100 = vpop.f32.mrf.mxu0
      %v1101 = vadd.f32 0.0, %v1100
      %v1102 = vpop.f32.mrf.mxu0
      %v1103 = vadd.f32 0.0, %v1102
      %1104 = vdwg.mxu0
      %v1105 = vadd.f32 %v975, %v1081
      %v1106 = vadd.f32 %v976, %v1083
      %v1107 = vadd.f32 %v977, %v1086
      %v1108 = vadd.f32 %v978, %v1088
      %v1109 = vadd.f32 %v979, %v1091
      %v1110 = vadd.f32 %v980, %v1093
      %v1111 = vadd.f32 %v981, %v1096
      %v1112 = vadd.f32 %v982, %v1098
      %v1113 = vadd.f32 %v983, %v1101
      %v1114 = vadd.f32 %v984, %v1103
      %v1115 = vld [vmem:[%s210 + $0x8] sm:$0xc]
      %v1116 = vld [vmem:[%s210 + $0xc] sm:$0xf]
      %v1117 = vld [vmem:[%s210 + $0x10] sm:$0xf]
      %v1118 = vld [vmem:[%s210 + $0x14] sm:$0xf]
      %v1119 = vld [vmem:[%s210 + $0x18] sm:$0xf]
      %v1120 = vld [vmem:[%s210 + $0x1c] sm:$0xf]
      %v1121 = vld [vmem:[%s210 + $0x20] sm:$0xf]
      %v1122 = vld [vmem:[%s210 + $0x24] sm:$0xf]
      %v1123 = vld [vmem:[%s210 + $0x28] sm:$0xf]
      %v1124 = vld [vmem:[%s210 + $0x2c] sm:$0xf]
      %v1125 = vld [vmem:[%s210 + $0x30] sm:$0x3]
      %s1126 = scalar_lea.vmem %s1, 384
      %v1127 = vld [vmem:[%s1126] sm:$0xf]
      %v1128 = vld [vmem:[%s1126 + $0x4] sm:$0xf]
      %v1129 = vld [vmem:[%s1126 + $0x8] sm:$0xf]
      %v1130 = vld [vmem:[%s1126 + $0xc] sm:$0xf]
      %v1131 = vld [vmem:[%s1126 + $0x10] sm:$0xf]
      %v1132 = vld [vmem:[%s1126 + $0x14] sm:$0xf]
      %v1133 = vld [vmem:[%s1126 + $0x18] sm:$0xf]
      %v1134 = vld [vmem:[%s1126 + $0x1c] sm:$0xf]
      %v1135 = vld [vmem:[%s1126 + $0x20] sm:$0xf]
      %v1136 = vld [vmem:[%s1126 + $0x24] sm:$0xf]
      %v1137 = vld [vmem:[%s1126 + $0x28] sm:$0xf]
      %v1138 = vld [vmem:[%s1126 + $0x2c] sm:$0xf]
      %v1139 = vld [vmem:[%s1126 + $0x30] sm:$0xf]
      %v1140 = vld [vmem:[%s1126 + $0x34] sm:$0xf]
      %v1141 = vld [vmem:[%s1126 + $0x38] sm:$0xf]
      %v1142 = vld [vmem:[%s1126 + $0x3c] sm:$0xf]
      %v1154 = vunpack.c.l.b16 %v1115
      %v1155 = vunpack.c.l.b16 %v1116
      %v1156 = vunpack.c.l.b16 %v1117
      %v1157 = vunpack.c.l.b16 %v1118
      %v1158 = vunpack.c.l.b16 %v1119
      %v1159 = vunpack.c.l.b16 %v1120
      %v1160 = vunpack.c.l.b16 %v1121
      %v1161 = vunpack.c.l.b16 %v1122
      %v1162 = vunpack.c.l.b16 %v1123
      %v1163 = vunpack.c.l.b16 %v1124
      %v1164 = vunpack.c.l.b16 %v1125
      %v1165 = vpack.c.b16 %v1155, %v1154
      %v1166 = vpack.c.b16 %v1157, %v1156
      %v1167 = vpack.c.b16 %v1159, %v1158
      %v1168 = vpack.c.b16 %v1161, %v1160
      %v1169 = vpack.c.b16 %v1163, %v1162
      %v1170 = vpack.c.b16 %v1164, %v1164
      %v1171 = vrot.slane %v1165, 2
      %v1172 = vrot.slane %v1166, 2
      %v1173 = vsel %vm1006, %v1171, %v1172
      %v1174 = vrot.slane %v1167, 2
      %v1175 = vsel %vm1006, %v1172, %v1174
      %v1176 = vrot.slane %v1168, 2
      %v1177 = vsel %vm1006, %v1174, %v1176
      %v1178 = vrot.slane %v1169, 2
      %v1179 = vsel %vm1006, %v1176, %v1178
      %v1180 = vrot.slane %v1170, 2
      %v1181 = vsel %vm1006, %v1178, %v1180
      %v1203 = vunpack.c.l.b16 %v1127
      %v1204 = vunpack.c.l.b16 %v1128
      %v1205 = vunpack.c.l.b16 %v1129
      %v1206 = vunpack.c.l.b16 %v1130
      %v1207 = vunpack.c.l.b16 %v1131
      %v1208 = vunpack.c.l.b16 %v1132
      %v1209 = vunpack.c.l.b16 %v1133
      %v1210 = vunpack.c.l.b16 %v1134
      %v1211 = vunpack.c.l.b16 %v1135
      %v1212 = vunpack.c.l.b16 %v1136
      %v1213 = vunpack.c.l.b16 %v1137
      %v1214 = vunpack.c.l.b16 %v1138
      %v1215 = vunpack.c.l.b16 %v1139
      %v1216 = vunpack.c.l.b16 %v1140
      %v1217 = vunpack.c.l.b16 %v1141
      %v1218 = vunpack.c.l.b16 %v1142
      %v1219 = vpack.c.b16 %v1204, %v1203
      %v1220 = vpack.c.b16 %v1206, %v1205
      %v1221 = vpack.c.b16 %v1208, %v1207
      %v1222 = vpack.c.b16 %v1210, %v1209
      %v1223 = vpack.c.b16 %v1212, %v1211
      %v1224 = vpack.c.b16 %v1214, %v1213
      %v1225 = vpack.c.b16 %v1216, %v1215
      %v1226 = vpack.c.b16 %v1218, %v1217
      %1235 = vmatpush.bf16.msra.mxu0 %v1226
      %1236 = vmatpush.bf16.msra.mxu0 %v1225
      %1237 = vmatpush.bf16.msra.mxu0 %v1224
      %1238 = vmatpush.bf16.msra.mxu0 %v1223
      %1239 = vmatpush.bf16.msra.mxu0 %v1222
      %1240 = vmatpush.bf16.msra.mxu0 %v1221
      %1241 = vmatpush.bf16.msra.mxu0 %v1220
      %1242 = vmatpush.bf16.msra.mxu0 %v1219
      %1243 = vmatmul.bf16.gmra.mxu0 %v1173
      %v1244 = vpop.f32.mrf.mxu0
      %v1245 = vadd.f32 0.0, %v1244
      %v1246 = vpop.f32.mrf.mxu0
      %v1247 = vadd.f32 0.0, %v1246
      %1248 = vmatmul.bf16.gmra.mxu0 %v1175
      %v1249 = vpop.f32.mrf.mxu0
      %v1250 = vadd.f32 0.0, %v1249
      %v1251 = vpop.f32.mrf.mxu0
      %v1252 = vadd.f32 0.0, %v1251
      %1253 = vmatmul.bf16.gmra.mxu0 %v1177
      %v1254 = vpop.f32.mrf.mxu0
      %v1255 = vadd.f32 0.0, %v1254
      %v1256 = vpop.f32.mrf.mxu0
      %v1257 = vadd.f32 0.0, %v1256
      %1258 = vmatmul.bf16.gmra.mxu0 %v1179
      %v1259 = vpop.f32.mrf.mxu0
      %v1260 = vadd.f32 0.0, %v1259
      %v1261 = vpop.f32.mrf.mxu0
      %v1262 = vadd.f32 0.0, %v1261
      %1263 = vmatmul.bf16.gmra.mxu0 %v1181
      %v1264 = vpop.f32.mrf.mxu0
      %v1265 = vadd.f32 0.0, %v1264
      %v1266 = vpop.f32.mrf.mxu0
      %v1267 = vadd.f32 0.0, %v1266
      %1268 = vdwg.mxu0
      %v1269 = vadd.f32 %v1105, %v1245
      %v1270 = vadd.f32 %v1106, %v1247
      %v1271 = vadd.f32 %v1107, %v1250
      %v1272 = vadd.f32 %v1108, %v1252
      %v1273 = vadd.f32 %v1109, %v1255
      %v1274 = vadd.f32 %v1110, %v1257
      %v1275 = vadd.f32 %v1111, %v1260
      %v1276 = vadd.f32 %v1112, %v1262
      %v1277 = vadd.f32 %v1113, %v1265
      %v1278 = vadd.f32 %v1114, %v1267
      %v1279 = vld [vmem:[%s210 + $0x30] sm:$0x7]
      %s1280 = scalar_lea.vmem %s1, 448
      %v1281 = vld [vmem:[%s1280] sm:$0xf]
      %v1282 = vld [vmem:[%s1280 + $0x4] sm:$0xf]
      %v1283 = vld [vmem:[%s1280 + $0x8] sm:$0xf]
      %v1284 = vld [vmem:[%s1280 + $0xc] sm:$0xf]
      %v1285 = vld [vmem:[%s1280 + $0x10] sm:$0xf]
      %v1286 = vld [vmem:[%s1280 + $0x14] sm:$0xf]
      %v1287 = vld [vmem:[%s1280 + $0x18] sm:$0xf]
      %v1288 = vld [vmem:[%s1280 + $0x1c] sm:$0xf]
      %v1289 = vld [vmem:[%s1280 + $0x20] sm:$0xf]
      %v1290 = vld [vmem:[%s1280 + $0x24] sm:$0xf]
      %v1291 = vld [vmem:[%s1280 + $0x28] sm:$0xf]
      %v1292 = vld [vmem:[%s1280 + $0x2c] sm:$0xf]
      %v1293 = vld [vmem:[%s1280 + $0x30] sm:$0xf]
      %v1294 = vld [vmem:[%s1280 + $0x34] sm:$0xf]
      %v1295 = vld [vmem:[%s1280 + $0x38] sm:$0xf]
      %v1296 = vld [vmem:[%s1280 + $0x3c] sm:$0xf]
      %v1298 = vunpack.c.l.b16 %v1279
      %v1299 = vpack.c.b16 %v1298, %v1298
      %vm1300 = vsmask.f32 5376
      %v1302 = vshrl.u32 %v1165, 16
      %v1304 = vrot.slane %v1302, 2
      %v1305 = vshll.u32 %v1165, 16
      %v1307 = vrot.slane %v1305, 3
      %v1308 = vor.u32 %v1304, %v1307
      %v1310 = vshrl.u32 %v1166, 16
      %v1312 = vrot.slane %v1310, 2
      %v1313 = vshll.u32 %v1166, 16
      %v1315 = vrot.slane %v1313, 3
      %v1316 = vor.u32 %v1312, %v1315
      %v1317 = vsel %vm1300, %v1308, %v1316
      %v1319 = vshrl.u32 %v1167, 16
      %v1321 = vrot.slane %v1319, 2
      %v1322 = vshll.u32 %v1167, 16
      %v1324 = vrot.slane %v1322, 3
      %v1325 = vor.u32 %v1321, %v1324
      %v1326 = vsel %vm1300, %v1316, %v1325
      %v1328 = vshrl.u32 %v1168, 16
      %v1330 = vrot.slane %v1328, 2
      %v1331 = vshll.u32 %v1168, 16
      %v1333 = vrot.slane %v1331, 3
      %v1334 = vor.u32 %v1330, %v1333
      %v1335 = vsel %vm1300, %v1325, %v1334
      %v1337 = vshrl.u32 %v1169, 16
      %v1339 = vrot.slane %v1337, 2
      %v1340 = vshll.u32 %v1169, 16
      %v1342 = vrot.slane %v1340, 3
      %v1343 = vor.u32 %v1339, %v1342
      %v1344 = vsel %vm1300, %v1334, %v1343
      %v1346 = vshrl.u32 %v1299, 16
      %v1348 = vrot.slane %v1346, 2
      %v1349 = vshll.u32 %v1299, 16
      %v1351 = vrot.slane %v1349, 3
      %v1352 = vor.u32 %v1348, %v1351
      %v1353 = vsel %vm1300, %v1343, %v1352
      %v1375 = vunpack.c.l.b16 %v1281
      %v1376 = vunpack.c.l.b16 %v1282
      %v1377 = vunpack.c.l.b16 %v1283
      %v1378 = vunpack.c.l.b16 %v1284
      %v1379 = vunpack.c.l.b16 %v1285
      %v1380 = vunpack.c.l.b16 %v1286
      %v1381 = vunpack.c.l.b16 %v1287
      %v1382 = vunpack.c.l.b16 %v1288
      %v1383 = vunpack.c.l.b16 %v1289
      %v1384 = vunpack.c.l.b16 %v1290
      %v1385 = vunpack.c.l.b16 %v1291
      %v1386 = vunpack.c.l.b16 %v1292
      %v1387 = vunpack.c.l.b16 %v1293
      %v1388 = vunpack.c.l.b16 %v1294
      %v1389 = vunpack.c.l.b16 %v1295
      %v1390 = vunpack.c.l.b16 %v1296
      %v1391 = vpack.c.b16 %v1376, %v1375
      %v1392 = vpack.c.b16 %v1378, %v1377
      %v1393 = vpack.c.b16 %v1380, %v1379
      %v1394 = vpack.c.b16 %v1382, %v1381
      %v1395 = vpack.c.b16 %v1384, %v1383
      %v1396 = vpack.c.b16 %v1386, %v1385
      %v1397 = vpack.c.b16 %v1388, %v1387
      %v1398 = vpack.c.b16 %v1390, %v1389
      %1407 = vmatpush.bf16.msra.mxu0 %v1398
      %1408 = vmatpush.bf16.msra.mxu0 %v1397
      %1409 = vmatpush.bf16.msra.mxu0 %v1396
      %1410 = vmatpush.bf16.msra.mxu0 %v1395
      %1411 = vmatpush.bf16.msra.mxu0 %v1394
      %1412 = vmatpush.bf16.msra.mxu0 %v1393
      %1413 = vmatpush.bf16.msra.mxu0 %v1392
      %1414 = vmatpush.bf16.msra.mxu0 %v1391
      %1415 = vmatmul.bf16.gmra.mxu0 %v1317
      %v1416 = vpop.f32.mrf.mxu0
      %v1417 = vadd.f32 0.0, %v1416
      %v1418 = vpop.f32.mrf.mxu0
      %v1419 = vadd.f32 0.0, %v1418
      %1420 = vmatmul.bf16.gmra.mxu0 %v1326
      %v1421 = vpop.f32.mrf.mxu0
      %v1422 = vadd.f32 0.0, %v1421
      %v1423 = vpop.f32.mrf.mxu0
      %v1424 = vadd.f32 0.0, %v1423
      %1425 = vmatmul.bf16.gmra.mxu0 %v1335
      %v1426 = vpop.f32.mrf.mxu0
      %v1427 = vadd.f32 0.0, %v1426
      %v1428 = vpop.f32.mrf.mxu0
      %v1429 = vadd.f32 0.0, %v1428
      %1430 = vmatmul.bf16.gmra.mxu0 %v1344
      %v1431 = vpop.f32.mrf.mxu0
      %v1432 = vadd.f32 0.0, %v1431
      %v1433 = vpop.f32.mrf.mxu0
      %v1434 = vadd.f32 0.0, %v1433
      %1435 = vmatmul.bf16.gmra.mxu0 %v1353
      %v1436 = vpop.f32.mrf.mxu0
      %v1437 = vadd.f32 0.0, %v1436
      %v1438 = vpop.f32.mrf.mxu0
      %v1439 = vadd.f32 0.0, %v1438
      %1440 = vdwg.mxu0
      %v1441 = vadd.f32 %v1269, %v1417
      %v1442 = vadd.f32 %v1270, %v1419
      %v1443 = vadd.f32 %v1271, %v1422
      %v1444 = vadd.f32 %v1272, %v1424
      %v1445 = vadd.f32 %v1273, %v1427
      %v1446 = vadd.f32 %v1274, %v1429
      %v1447 = vadd.f32 %v1275, %v1432
      %v1448 = vadd.f32 %v1276, %v1434
      %v1449 = vadd.f32 %v1277, %v1437
      %v1450 = vadd.f32 %v1278, %v1439
      %v1451 = vld [vmem:[%s210 + $0x8] sm:$0x8]
      %s1452 = scalar_lea.vmem %s1, 512
      %v1453 = vld [vmem:[%s1452] sm:$0xf]
      %v1454 = vld [vmem:[%s1452 + $0x4] sm:$0xf]
      %v1455 = vld [vmem:[%s1452 + $0x8] sm:$0xf]
      %v1456 = vld [vmem:[%s1452 + $0xc] sm:$0xf]
      %v1457 = vld [vmem:[%s1452 + $0x10] sm:$0xf]
      %v1458 = vld [vmem:[%s1452 + $0x14] sm:$0xf]
      %v1459 = vld [vmem:[%s1452 + $0x18] sm:$0xf]
      %v1460 = vld [vmem:[%s1452 + $0x1c] sm:$0xf]
      %v1461 = vld [vmem:[%s1452 + $0x20] sm:$0xf]
      %v1462 = vld [vmem:[%s1452 + $0x24] sm:$0xf]
      %v1463 = vld [vmem:[%s1452 + $0x28] sm:$0xf]
      %v1464 = vld [vmem:[%s1452 + $0x2c] sm:$0xf]
      %v1465 = vld [vmem:[%s1452 + $0x30] sm:$0xf]
      %v1466 = vld [vmem:[%s1452 + $0x34] sm:$0xf]
      %v1467 = vld [vmem:[%s1452 + $0x38] sm:$0xf]
      %v1468 = vld [vmem:[%s1452 + $0x3c] sm:$0xf]
      %v1470 = vunpack.c.l.b16 %v1451
      %v1471 = vpack.c.b16 %v1155, %v1470
      %vm1472 = vcmask 1044480
      %v1473 = vrot.slane %v1471, 3
      %v1474 = vrot.slane %v1166, 3
      %v1475 = vsel %vm1472, %v1473, %v1474
      %v1476 = vrot.slane %v1167, 3
      %v1477 = vsel %vm1472, %v1474, %v1476
      %v1478 = vrot.slane %v1168, 3
      %v1479 = vsel %vm1472, %v1476, %v1478
      %v1480 = vrot.slane %v1169, 3
      %v1481 = vsel %vm1472, %v1478, %v1480
      %v1482 = vrot.slane %v1299, 3
      %v1483 = vsel %vm1472, %v1480, %v1482
      %v1505 = vunpack.c.l.b16 %v1453
      %v1506 = vunpack.c.l.b16 %v1454
      %v1507 = vunpack.c.l.b16 %v1455
      %v1508 = vunpack.c.l.b16 %v1456
      %v1509 = vunpack.c.l.b16 %v1457
      %v1510 = vunpack.c.l.b16 %v1458
      %v1511 = vunpack.c.l.b16 %v1459
      %v1512 = vunpack.c.l.b16 %v1460
      %v1513 = vunpack.c.l.b16 %v1461
      %v1514 = vunpack.c.l.b16 %v1462
      %v1515 = vunpack.c.l.b16 %v1463
      %v1516 = vunpack.c.l.b16 %v1464
      %v1517 = vunpack.c.l.b16 %v1465
      %v1518 = vunpack.c.l.b16 %v1466
      %v1519 = vunpack.c.l.b16 %v1467
      %v1520 = vunpack.c.l.b16 %v1468
      %v1521 = vpack.c.b16 %v1506, %v1505
      %v1522 = vpack.c.b16 %v1508, %v1507
      %v1523 = vpack.c.b16 %v1510, %v1509
      %v1524 = vpack.c.b16 %v1512, %v1511
      %v1525 = vpack.c.b16 %v1514, %v1513
      %v1526 = vpack.c.b16 %v1516, %v1515
      %v1527 = vpack.c.b16 %v1518, %v1517
      %v1528 = vpack.c.b16 %v1520, %v1519
      %1537 = vmatpush.bf16.msra.mxu0 %v1528
      %1538 = vmatpush.bf16.msra.mxu0 %v1527
      %1539 = vmatpush.bf16.msra.mxu0 %v1526
      %1540 = vmatpush.bf16.msra.mxu0 %v1525
      %1541 = vmatpush.bf16.msra.mxu0 %v1524
      %1542 = vmatpush.bf16.msra.mxu0 %v1523
      %1543 = vmatpush.bf16.msra.mxu0 %v1522
      %1544 = vmatpush.bf16.msra.mxu0 %v1521
      %1545 = vmatmul.bf16.gmra.mxu0 %v1475
      %v1546 = vpop.f32.mrf.mxu0
      %v1547 = vadd.f32 0.0, %v1546
      %v1548 = vpop.f32.mrf.mxu0
      %v1549 = vadd.f32 0.0, %v1548
      %1550 = vmatmul.bf16.gmra.mxu0 %v1477
      %v1551 = vpop.f32.mrf.mxu0
      %v1552 = vadd.f32 0.0, %v1551
      %v1553 = vpop.f32.mrf.mxu0
      %v1554 = vadd.f32 0.0, %v1553
      %1555 = vmatmul.bf16.gmra.mxu0 %v1479
      %v1556 = vpop.f32.mrf.mxu0
      %v1557 = vadd.f32 0.0, %v1556
      %v1558 = vpop.f32.mrf.mxu0
      %v1559 = vadd.f32 0.0, %v1558
      %1560 = vmatmul.bf16.gmra.mxu0 %v1481
      %v1561 = vpop.f32.mrf.mxu0
      %v1562 = vadd.f32 0.0, %v1561
      %v1563 = vpop.f32.mrf.mxu0
      %v1564 = vadd.f32 0.0, %v1563
      %1565 = vmatmul.bf16.gmra.mxu0 %v1483
      %v1566 = vpop.f32.mrf.mxu0
      %v1567 = vadd.f32 0.0, %v1566
      %v1568 = vpop.f32.mrf.mxu0
      %v1569 = vadd.f32 0.0, %v1568
      %1570 = vdwg.mxu0
      %v1571 = vadd.f32 %v1441, %v1547
      %v1572 = vadd.f32 %v1442, %v1549
      %v1573 = vadd.f32 %v1443, %v1552
      %v1574 = vadd.f32 %v1444, %v1554
      %v1575 = vadd.f32 %v1445, %v1557
      %v1576 = vadd.f32 %v1446, %v1559
      %v1577 = vadd.f32 %v1447, %v1562
      %v1578 = vadd.f32 %v1448, %v1564
      %v1579 = vadd.f32 %v1449, %v1567
      %v1580 = vadd.f32 %v1450, %v1569
      %vm1581 = vcmp.ge.f32.partialorder %v1571, 0.0
      %vm1582 = vcmp.ge.f32.partialorder %v1572, 0.0
      %vm1583 = vcmp.ge.f32.partialorder %v1573, 0.0
      %vm1584 = vcmp.ge.f32.partialorder %v1574, 0.0
      %vm1585 = vcmp.ge.f32.partialorder %v1575, 0.0
      %vm1586 = vcmp.ge.f32.partialorder %v1576, 0.0
      %vm1587 = vcmp.ge.f32.partialorder %v1577, 0.0
      %vm1588 = vcmp.ge.f32.partialorder %v1578, 0.0
      %vm1589 = vcmp.ge.f32.partialorder %v1579, 0.0
      %vm1590 = vcmp.ge.f32.partialorder %v1580, 0.0
      %v1591 = vmul.f32 %v1571, 0.01
      %v1592 = vmul.f32 %v1572, 0.01
      %v1593 = vmul.f32 %v1573, 0.01
      %v1594 = vmul.f32 %v1574, 0.01
      %v1595 = vmul.f32 %v1575, 0.01
      %v1596 = vmul.f32 %v1576, 0.01
      %v1597 = vmul.f32 %v1577, 0.01
      %v1598 = vmul.f32 %v1578, 0.01
      %v1599 = vmul.f32 %v1579, 0.01
      %v1600 = vmul.f32 %v1580, 0.01
      %v1601 = vsel %vm1581, %v1571, %v1591
      %v1602 = vsel %vm1582, %v1572, %v1592
      %v1603 = vsel %vm1583, %v1573, %v1593
      %v1604 = vsel %vm1584, %v1574, %v1594
      %v1605 = vsel %vm1585, %v1575, %v1595
      %v1606 = vsel %vm1586, %v1576, %v1596
      %v1607 = vsel %vm1587, %v1577, %v1597
      %v1608 = vsel %vm1588, %v1578, %v1598
      %v1609 = vsel %vm1589, %v1579, %v1599
      %v1610 = vsel %vm1590, %v1580, %v1600
      %v1611 = vlaneseq
      %v1612 = vshrl.u32 %v1611, 7
      %v1613 = vadd.s32 %v1612, 8
      %v1614 = vadd.s32 %v1612, 16
      %v1615 = vadd.s32 %v1612, 24
      %v1616 = vadd.s32 %v1612, 32
      %v1617 = vadd.s32 %v1612, 40
      %v1618 = vadd.s32 %v1612, 48
      %v1619 = vadd.s32 %v1612, 56
      %v1620 = vadd.s32 %v1612, 64
      %v1621 = vadd.s32 %v1612, 72
      %vm1622 = vcmp.lt.s32.totalorder %v1612, 0
      %v1623 = vsub.s32 0, %v1612
      %v1624 = vsel %vm1622, %v1623, %v1612
      %v1625 = vand.u32 %v1624, 65535
      %v1626 = vshrl.u32 %v1624, 16
      %v1628 = vmul.u32 %v1625, 52429
      %v1629 = vmul.u32 %v1625, 52428
      %v1630 = vmul.u32 %v1626, 52429
      %v1631 = vmul.u32 %v1626, 52428
      %v1632 = vshll.u32 %v1629, 16
      %v1633 = vshrl.u32 %v1629, 16
      %v1634 = vshll.u32 %v1630, 16
      %v1635 = vshrl.u32 %v1630, 16
      %vm1636 = vc.u32 %v1628, %v1632
      %v1637 = vsel %vm1636, 1, 0
      %v1638 = vadd.s32 %v1628, %v1632
      %v1639 = vadd.s32 %v1631, %v1637
      %vm1640 = vc.u32 %v1638, %v1634
      %v1641 = vsel %vm1640, 1, 0
      %v1642 = vadd.s32 %v1638, %v1634
      %v1643 = vadd.s32 %v1639, %v1641
      %v1644 = vadd.s32 %v1643, %v1633
      %v1645 = vadd.s32 %v1644, %v1635
      %v1646 = vshrl.u32 %v1645, 3
      %v1647 = vmul.u32 %v1646, 10
      %v1648 = vsub.s32 %v1624, %v1647
      %v1649 = vsub.s32 0, %v1648
      %v1650 = vsel %vm1622, %v1649, %v1648
      %vm1651 = vcmp.lt.s32.totalorder %v1613, 0
      %v1652 = vsub.s32 0, %v1613
      %v1653 = vsel %vm1651, %v1652, %v1613
      %v1654 = vand.u32 %v1653, 65535
      %v1655 = vshrl.u32 %v1653, 16
      %v1657 = vmul.u32 %v1654, 52429
      %v1658 = vmul.u32 %v1654, 52428
      %v1659 = vmul.u32 %v1655, 52429
      %v1660 = vmul.u32 %v1655, 52428
      %v1661 = vshll.u32 %v1658, 16
      %v1662 = vshrl.u32 %v1658, 16
      %v1663 = vshll.u32 %v1659, 16
      %v1664 = vshrl.u32 %v1659, 16
      %vm1665 = vc.u32 %v1657, %v1661
      %v1666 = vsel %vm1665, 1, 0
      %v1667 = vadd.s32 %v1657, %v1661
      %v1668 = vadd.s32 %v1660, %v1666
      %vm1669 = vc.u32 %v1667, %v1663
      %v1670 = vsel %vm1669, 1, 0
      %v1671 = vadd.s32 %v1667, %v1663
      %v1672 = vadd.s32 %v1668, %v1670
      %v1673 = vadd.s32 %v1672, %v1662
      %v1674 = vadd.s32 %v1673, %v1664
      %v1675 = vshrl.u32 %v1674, 3
      %v1676 = vmul.u32 %v1675, 10
      %v1677 = vsub.s32 %v1653, %v1676
      %v1678 = vsub.s32 0, %v1677
      %v1679 = vsel %vm1651, %v1678, %v1677
      %vm1680 = vcmp.lt.s32.totalorder %v1614, 0
      %v1681 = vsub.s32 0, %v1614
      %v1682 = vsel %vm1680, %v1681, %v1614
      %v1683 = vand.u32 %v1682, 65535
      %v1684 = vshrl.u32 %v1682, 16
      %v1686 = vmul.u32 %v1683, 52429
      %v1687 = vmul.u32 %v1683, 52428
      %v1688 = vmul.u32 %v1684, 52429
      %v1689 = vmul.u32 %v1684, 52428
      %v1690 = vshll.u32 %v1687, 16
      %v1691 = vshrl.u32 %v1687, 16
      %v1692 = vshll.u32 %v1688, 16
      %v1693 = vshrl.u32 %v1688, 16
      %vm1694 = vc.u32 %v1686, %v1690
      %v1695 = vsel %vm1694, 1, 0
      %v1696 = vadd.s32 %v1686, %v1690
      %v1697 = vadd.s32 %v1689, %v1695
      %vm1698 = vc.u32 %v1696, %v1692
      %v1699 = vsel %vm1698, 1, 0
      %v1700 = vadd.s32 %v1696, %v1692
      %v1701 = vadd.s32 %v1697, %v1699
      %v1702 = vadd.s32 %v1701, %v1691
      %v1703 = vadd.s32 %v1702, %v1693
      %v1704 = vshrl.u32 %v1703, 3
      %v1705 = vmul.u32 %v1704, 10
      %v1706 = vsub.s32 %v1682, %v1705
      %v1707 = vsub.s32 0, %v1706
      %v1708 = vsel %vm1680, %v1707, %v1706
      %vm1709 = vcmp.lt.s32.totalorder %v1615, 0
      %v1710 = vsub.s32 0, %v1615
      %v1711 = vsel %vm1709, %v1710, %v1615
      %v1712 = vand.u32 %v1711, 65535
      %v1713 = vshrl.u32 %v1711, 16
      %v1715 = vmul.u32 %v1712, 52429
      %v1716 = vmul.u32 %v1712, 52428
      %v1717 = vmul.u32 %v1713, 52429
      %v1718 = vmul.u32 %v1713, 52428
      %v1719 = vshll.u32 %v1716, 16
      %v1720 = vshrl.u32 %v1716, 16
      %v1721 = vshll.u32 %v1717, 16
      %v1722 = vshrl.u32 %v1717, 16
      %vm1723 = vc.u32 %v1715, %v1719
      %v1724 = vsel %vm1723, 1, 0
      %v1725 = vadd.s32 %v1715, %v1719
      %v1726 = vadd.s32 %v1718, %v1724
      %vm1727 = vc.u32 %v1725, %v1721
      %v1728 = vsel %vm1727, 1, 0
      %v1729 = vadd.s32 %v1725, %v1721
      %v1730 = vadd.s32 %v1726, %v1728
      %v1731 = vadd.s32 %v1730, %v1720
      %v1732 = vadd.s32 %v1731, %v1722
      %v1733 = vshrl.u32 %v1732, 3
      %v1734 = vmul.u32 %v1733, 10
      %v1735 = vsub.s32 %v1711, %v1734
      %v1736 = vsub.s32 0, %v1735
      %v1737 = vsel %vm1709, %v1736, %v1735
      %vm1738 = vcmp.lt.s32.totalorder %v1616, 0
      %v1739 = vsub.s32 0, %v1616
      %v1740 = vsel %vm1738, %v1739, %v1616
      %v1741 = vand.u32 %v1740, 65535
      %v1742 = vshrl.u32 %v1740, 16
      %v1744 = vmul.u32 %v1741, 52429
      %v1745 = vmul.u32 %v1741, 52428
      %v1746 = vmul.u32 %v1742, 52429
      %v1747 = vmul.u32 %v1742, 52428
      %v1748 = vshll.u32 %v1745, 16
      %v1749 = vshrl.u32 %v1745, 16
      %v1750 = vshll.u32 %v1746, 16
      %v1751 = vshrl.u32 %v1746, 16
      %vm1752 = vc.u32 %v1744, %v1748
      %v1753 = vsel %vm1752, 1, 0
      %v1754 = vadd.s32 %v1744, %v1748
      %v1755 = vadd.s32 %v1747, %v1753
      %vm1756 = vc.u32 %v1754, %v1750
      %v1757 = vsel %vm1756, 1, 0
      %v1758 = vadd.s32 %v1754, %v1750
      %v1759 = vadd.s32 %v1755, %v1757
      %v1760 = vadd.s32 %v1759, %v1749
      %v1761 = vadd.s32 %v1760, %v1751
      %v1762 = vshrl.u32 %v1761, 3
      %v1763 = vmul.u32 %v1762, 10
      %v1764 = vsub.s32 %v1740, %v1763
      %v1765 = vsub.s32 0, %v1764
      %v1766 = vsel %vm1738, %v1765, %v1764
      %vm1767 = vcmp.lt.s32.totalorder %v1617, 0
      %v1768 = vsub.s32 0, %v1617
      %v1769 = vsel %vm1767, %v1768, %v1617
      %v1770 = vand.u32 %v1769, 65535
      %v1771 = vshrl.u32 %v1769, 16
      %v1773 = vmul.u32 %v1770, 52429
      %v1774 = vmul.u32 %v1770, 52428
      %v1775 = vmul.u32 %v1771, 52429
      %v1776 = vmul.u32 %v1771, 52428
      %v1777 = vshll.u32 %v1774, 16
      %v1778 = vshrl.u32 %v1774, 16
      %v1779 = vshll.u32 %v1775, 16
      %v1780 = vshrl.u32 %v1775, 16
      %vm1781 = vc.u32 %v1773, %v1777
      %v1782 = vsel %vm1781, 1, 0
      %v1783 = vadd.s32 %v1773, %v1777
      %v1784 = vadd.s32 %v1776, %v1782
      %vm1785 = vc.u32 %v1783, %v1779
      %v1786 = vsel %vm1785, 1, 0
      %v1787 = vadd.s32 %v1783, %v1779
      %v1788 = vadd.s32 %v1784, %v1786
      %v1789 = vadd.s32 %v1788, %v1778
      %v1790 = vadd.s32 %v1789, %v1780
      %v1791 = vshrl.u32 %v1790, 3
      %v1792 = vmul.u32 %v1791, 10
      %v1793 = vsub.s32 %v1769, %v1792
      %v1794 = vsub.s32 0, %v1793
      %v1795 = vsel %vm1767, %v1794, %v1793
      %vm1796 = vcmp.lt.s32.totalorder %v1618, 0
      %v1797 = vsub.s32 0, %v1618
      %v1798 = vsel %vm1796, %v1797, %v1618
      %v1799 = vand.u32 %v1798, 65535
      %v1800 = vshrl.u32 %v1798, 16
      %v1802 = vmul.u32 %v1799, 52429
      %v1803 = vmul.u32 %v1799, 52428
      %v1804 = vmul.u32 %v1800, 52429
      %v1805 = vmul.u32 %v1800, 52428
      %v1806 = vshll.u32 %v1803, 16
      %v1807 = vshrl.u32 %v1803, 16
      %v1808 = vshll.u32 %v1804, 16
      %v1809 = vshrl.u32 %v1804, 16
      %vm1810 = vc.u32 %v1802, %v1806
      %v1811 = vsel %vm1810, 1, 0
      %v1812 = vadd.s32 %v1802, %v1806
      %v1813 = vadd.s32 %v1805, %v1811
      %vm1814 = vc.u32 %v1812, %v1808
      %v1815 = vsel %vm1814, 1, 0
      %v1816 = vadd.s32 %v1812, %v1808
      %v1817 = vadd.s32 %v1813, %v1815
      %v1818 = vadd.s32 %v1817, %v1807
      %v1819 = vadd.s32 %v1818, %v1809
      %v1820 = vshrl.u32 %v1819, 3
      %v1821 = vmul.u32 %v1820, 10
      %v1822 = vsub.s32 %v1798, %v1821
      %v1823 = vsub.s32 0, %v1822
      %v1824 = vsel %vm1796, %v1823, %v1822
      %vm1825 = vcmp.lt.s32.totalorder %v1619, 0
      %v1826 = vsub.s32 0, %v1619
      %v1827 = vsel %vm1825, %v1826, %v1619
      %v1828 = vand.u32 %v1827, 65535
      %v1829 = vshrl.u32 %v1827, 16
      %v1831 = vmul.u32 %v1828, 52429
      %v1832 = vmul.u32 %v1828, 52428
      %v1833 = vmul.u32 %v1829, 52429
      %v1834 = vmul.u32 %v1829, 52428
      %v1835 = vshll.u32 %v1832, 16
      %v1836 = vshrl.u32 %v1832, 16
      %v1837 = vshll.u32 %v1833, 16
      %v1838 = vshrl.u32 %v1833, 16
      %vm1839 = vc.u32 %v1831, %v1835
      %v1840 = vsel %vm1839, 1, 0
      %v1841 = vadd.s32 %v1831, %v1835
      %v1842 = vadd.s32 %v1834, %v1840
      %vm1843 = vc.u32 %v1841, %v1837
      %v1844 = vsel %vm1843, 1, 0
      %v1845 = vadd.s32 %v1841, %v1837
      %v1846 = vadd.s32 %v1842, %v1844
      %v1847 = vadd.s32 %v1846, %v1836
      %v1848 = vadd.s32 %v1847, %v1838
      %v1849 = vshrl.u32 %v1848, 3
      %v1850 = vmul.u32 %v1849, 10
      %v1851 = vsub.s32 %v1827, %v1850
      %v1852 = vsub.s32 0, %v1851
      %v1853 = vsel %vm1825, %v1852, %v1851
      %vm1854 = vcmp.lt.s32.totalorder %v1620, 0
      %v1855 = vsub.s32 0, %v1620
      %v1856 = vsel %vm1854, %v1855, %v1620
      %v1857 = vand.u32 %v1856, 65535
      %v1858 = vshrl.u32 %v1856, 16
      %v1860 = vmul.u32 %v1857, 52429
      %v1861 = vmul.u32 %v1857, 52428
      %v1862 = vmul.u32 %v1858, 52429
      %v1863 = vmul.u32 %v1858, 52428
      %v1864 = vshll.u32 %v1861, 16
      %v1865 = vshrl.u32 %v1861, 16
      %v1866 = vshll.u32 %v1862, 16
      %v1867 = vshrl.u32 %v1862, 16
      %vm1868 = vc.u32 %v1860, %v1864
      %v1869 = vsel %vm1868, 1, 0
      %v1870 = vadd.s32 %v1860, %v1864
      %v1871 = vadd.s32 %v1863, %v1869
      %vm1872 = vc.u32 %v1870, %v1866
      %v1873 = vsel %vm1872, 1, 0
      %v1874 = vadd.s32 %v1870, %v1866
      %v1875 = vadd.s32 %v1871, %v1873
      %v1876 = vadd.s32 %v1875, %v1865
      %v1877 = vadd.s32 %v1876, %v1867
      %v1878 = vshrl.u32 %v1877, 3
      %v1879 = vmul.u32 %v1878, 10
      %v1880 = vsub.s32 %v1856, %v1879
      %v1881 = vsub.s32 0, %v1880
      %v1882 = vsel %vm1854, %v1881, %v1880
      %vm1883 = vcmp.lt.s32.totalorder %v1621, 0
      %v1884 = vsub.s32 0, %v1621
      %v1885 = vsel %vm1883, %v1884, %v1621
      %v1886 = vand.u32 %v1885, 65535
      %v1887 = vshrl.u32 %v1885, 16
      %v1889 = vmul.u32 %v1886, 52429
      %v1890 = vmul.u32 %v1886, 52428
      %v1891 = vmul.u32 %v1887, 52429
      %v1892 = vmul.u32 %v1887, 52428
      %v1893 = vshll.u32 %v1890, 16
      %v1894 = vshrl.u32 %v1890, 16
      %v1895 = vshll.u32 %v1891, 16
      %v1896 = vshrl.u32 %v1891, 16
      %vm1897 = vc.u32 %v1889, %v1893
      %v1898 = vsel %vm1897, 1, 0
      %v1899 = vadd.s32 %v1889, %v1893
      %v1900 = vadd.s32 %v1892, %v1898
      %vm1901 = vc.u32 %v1899, %v1895
      %v1902 = vsel %vm1901, 1, 0
      %v1903 = vadd.s32 %v1899, %v1895
      %v1904 = vadd.s32 %v1900, %v1902
      %v1905 = vadd.s32 %v1904, %v1894
      %v1906 = vadd.s32 %v1905, %v1896
      %v1907 = vshrl.u32 %v1906, 3
      %v1908 = vmul.u32 %v1907, 10
      %v1909 = vsub.s32 %v1885, %v1908
      %v1910 = vsub.s32 0, %v1909
      %v1911 = vsel %vm1883, %v1910, %v1909
      %vm1912 = vcmp.ne.s32.totalorder %v1650, 0
      %vm1913 = vcmp.ne.s32.totalorder %v1679, 0
      %vm1914 = vcmp.ne.s32.totalorder %v1708, 0
      %vm1915 = vcmp.ne.s32.totalorder %v1737, 0
      %vm1916 = vcmp.ne.s32.totalorder %v1766, 0
      %vm1917 = vcmp.ne.s32.totalorder %v1795, 0
      %vm1918 = vcmp.ne.s32.totalorder %v1824, 0
      %vm1919 = vcmp.ne.s32.totalorder %v1853, 0
      %vm1920 = vcmp.ne.s32.totalorder %v1882, 0
      %vm1921 = vcmp.ne.s32.totalorder %v1911, 0
      %vm1922 = vcmp.lt.s32.totalorder %v1650, 0
      %vm1923 = vcmp.lt.s32.totalorder %v1679, 0
      %vm1924 = vcmp.lt.s32.totalorder %v1708, 0
      %vm1925 = vcmp.lt.s32.totalorder %v1737, 0
      %vm1926 = vcmp.lt.s32.totalorder %v1766, 0
      %vm1927 = vcmp.lt.s32.totalorder %v1795, 0
      %vm1928 = vcmp.lt.s32.totalorder %v1824, 0
      %vm1929 = vcmp.lt.s32.totalorder %v1853, 0
      %vm1930 = vcmp.lt.s32.totalorder %v1882, 0
      %vm1931 = vcmp.lt.s32.totalorder %v1911, 0
      %vm1932 = vmand %vm1922, %vm1912
      %vm1933 = vmand %vm1923, %vm1913
      %vm1934 = vmand %vm1924, %vm1914
      %vm1935 = vmand %vm1925, %vm1915
      %vm1936 = vmand %vm1926, %vm1916
      %vm1937 = vmand %vm1927, %vm1917
      %vm1938 = vmand %vm1928, %vm1918
      %vm1939 = vmand %vm1929, %vm1919
      %vm1940 = vmand %vm1930, %vm1920
      %vm1941 = vmand %vm1931, %vm1921
      %v1942 = vadd.s32 %v1650, 10
      %v1943 = vadd.s32 %v1679, 10
      %v1944 = vadd.s32 %v1708, 10
      %v1945 = vadd.s32 %v1737, 10
      %v1946 = vadd.s32 %v1766, 10
      %v1947 = vadd.s32 %v1795, 10
      %v1948 = vadd.s32 %v1824, 10
      %v1949 = vadd.s32 %v1853, 10
      %v1950 = vadd.s32 %v1882, 10
      %v1951 = vadd.s32 %v1911, 10
      %v1952 = vsel %vm1932, %v1942, %v1650
      %v1953 = vsel %vm1933, %v1943, %v1679
      %v1954 = vsel %vm1934, %v1944, %v1708
      %v1955 = vsel %vm1935, %v1945, %v1737
      %v1956 = vsel %vm1936, %v1946, %v1766
      %v1957 = vsel %vm1937, %v1947, %v1795
      %v1958 = vsel %vm1938, %v1948, %v1824
      %v1959 = vsel %vm1939, %v1949, %v1853
      %v1960 = vsel %vm1940, %v1950, %v1882
      %v1961 = vsel %vm1941, %v1951, %v1911
      %vm1962 = vcmp.lt.s32.totalorder %v1952, 8
      %vm1963 = vcmp.lt.s32.totalorder %v1953, 8
      %vm1964 = vcmp.lt.s32.totalorder %v1954, 8
      %vm1965 = vcmp.lt.s32.totalorder %v1955, 8
      %vm1966 = vcmp.lt.s32.totalorder %v1956, 8
      %vm1967 = vcmp.lt.s32.totalorder %v1957, 8
      %vm1968 = vcmp.lt.s32.totalorder %v1958, 8
      %vm1969 = vcmp.lt.s32.totalorder %v1959, 8
      %vm1970 = vcmp.lt.s32.totalorder %v1960, 8
      %vm1971 = vcmp.lt.s32.totalorder %v1961, 8
      %v1972 = vsel %vm1962, 1, 0
      %v1973 = vsel %vm1963, 1, 0
      %v1974 = vsel %vm1964, 1, 0
      %v1975 = vsel %vm1965, 1, 0
      %v1976 = vsel %vm1966, 1, 0
      %v1977 = vsel %vm1967, 1, 0
      %v1978 = vsel %vm1968, 1, 0
      %v1979 = vsel %vm1969, 1, 0
      %v1980 = vsel %vm1970, 1, 0
      %v1981 = vsel %vm1971, 1, 0
      %vm1982 = vcmp.eq.s32.totalorder %v1972, 1
      %vm1983 = vcmp.eq.s32.totalorder %v1973, 1
      %vm1984 = vcmp.eq.s32.totalorder %v1974, 1
      %vm1985 = vcmp.eq.s32.totalorder %v1975, 1
      %vm1986 = vcmp.eq.s32.totalorder %v1976, 1
      %vm1987 = vcmp.eq.s32.totalorder %v1977, 1
      %vm1988 = vcmp.eq.s32.totalorder %v1978, 1
      %vm1989 = vcmp.eq.s32.totalorder %v1979, 1
      %vm1990 = vcmp.eq.s32.totalorder %v1980, 1
      %vm1991 = vcmp.eq.s32.totalorder %v1981, 1
      %v1992 = vsel %vm1982, %v1601, 0.0
      %v1993 = vsel %vm1983, %v1602, 0.0
      %v1994 = vsel %vm1984, %v1603, 0.0
      %v1995 = vsel %vm1985, %v1604, 0.0
      %v1996 = vsel %vm1986, %v1605, 0.0
      %v1997 = vsel %vm1987, %v1606, 0.0
      %v1998 = vsel %vm1988, %v1607, 0.0
      %v1999 = vsel %vm1989, %v1608, 0.0
      %v2000 = vsel %vm1990, %v1609, 0.0
      %v2001 = vsel %vm1991, %v1610, 0.0
      %2002 = vst [vmem:[%s219] sm:$0xff] %v1992
      %2003 = vst [vmem:[%s219 + $0x8] sm:$0xff] %v1993
      %2004 = vst [vmem:[%s219 + $0x10] sm:$0xff] %v1994
      %2005 = vst [vmem:[%s219 + $0x18] sm:$0xff] %v1995
      %2006 = vst [vmem:[%s219 + $0x20] sm:$0xff] %v1996
      %2007 = vst [vmem:[%s219 + $0x28] sm:$0xff] %v1997
      %2008 = vst [vmem:[%s219 + $0x30] sm:$0xff] %v1998
      %2009 = vst [vmem:[%s219 + $0x38] sm:$0xff] %v1999
      %2010 = vst [vmem:[%s219 + $0x40] sm:$0xff] %v2000
      %2011 = vst [vmem:[%s219 + $0x48] sm:$0xff] %v2001
      %v2012 = vadd.f32 %v1992, %v1993
      %v2013 = vadd.f32 %v2012, %v1994
      %v2014 = vadd.f32 %v2013, %v1995
      %v2015 = vadd.f32 %v2014, %v1996
      %v2016 = vadd.f32 %v2015, %v1997
      %v2017 = vadd.f32 %v2016, %v1998
      %v2018 = vadd.f32 %v2017, %v1999
      %v2019 = vadd.f32 %v2018, %v2000
      %v2020 = vadd.f32 %v2019, %v2001
      %v2021 = vrot.slane %v2020, 4
      %v2022 = vadd.f32 %v2020, %v2021
      %v2023 = vrot.slane %v2022, 2
      %v2024 = vadd.f32 %v2022, %v2023
      %v2025 = vrot.slane %v2024, 1
      %v2026 = vadd.f32 %v2024, %v2025
      %v2027 = vmul.f32 %v1992, %v1992
      %v2028 = vmul.f32 %v1993, %v1993
      %v2029 = vmul.f32 %v1994, %v1994
      %v2030 = vmul.f32 %v1995, %v1995
      %v2031 = vmul.f32 %v1996, %v1996
      %v2032 = vmul.f32 %v1997, %v1997
      %v2033 = vmul.f32 %v1998, %v1998
      %v2034 = vmul.f32 %v1999, %v1999
      %v2035 = vmul.f32 %v2000, %v2000
      %v2036 = vmul.f32 %v2001, %v2001
      %v2037 = vadd.f32 %v2027, %v2028
      %v2038 = vadd.f32 %v2037, %v2029
      %v2039 = vadd.f32 %v2038, %v2030
      %v2040 = vadd.f32 %v2039, %v2031
      %v2041 = vadd.f32 %v2040, %v2032
      %v2042 = vadd.f32 %v2041, %v2033
      %v2043 = vadd.f32 %v2042, %v2034
      %v2044 = vadd.f32 %v2043, %v2035
      %v2045 = vadd.f32 %v2044, %v2036
      %v2046 = vrot.slane %v2045, 4
      %v2047 = vadd.f32 %v2045, %v2046
      %v2048 = vrot.slane %v2047, 2
      %v2049 = vadd.f32 %v2047, %v2048
      %v2050 = vrot.slane %v2049, 1
      %v2051 = vadd.f32 %v2049, %v2050
      %vm2052 = vcmask 1040384
      %v2053 = vsel %vm2052, %v2026, %v2051
      %2054 = vst [vmem:[%s227] sm:$0x3] %v2053
      %p2055 = scmp.lt.s32.totalorder %s19, 1
      %s2056 = scalar_select %p2055, %s19, 1
      %p2057 = scmp.lt.s32.totalorder %s20, 3
      %s2058 = scalar_select %p2057, %s20, 3
      %s2059 = smul.addr %s2058, 10
      %s2060 = smul.addr %s2056, 40
      %s2061 = sadd.s32 %s2059, %s2060
      %s2062 = smul.addr %s2061, 8
      %s2063 = scalar_lea.vmem %s2, %s2062
      %p2064 = scmp.lt.s32.totalorder %s19, 1
      %s2065 = scalar_select %p2064, %s19, 1
      %p2066 = scmp.lt.s32.totalorder %s20, 3
      %s2067 = scalar_select %p2066, %s20, 3
      %s2068 = smul.addr %s2065, 4
      %s2069 = sadd.s32 %s2067, %s2068
      %s2070 = smul.addr %s2069, 2
      %s2071 = scalar_lea.vmem %s3, %s2070
      // Predicated region
      $region29: #{up_block_forward.12} parent=27 // pred_check
        %p2072 = pneg %p96
      $region30: #{up_block_forward.12} parent=27 // pred_check_branch
        %2074 = sbr.rel (%p2072) target = $region32
      $region31: #{up_block_forward.12} parent=27 // pred_region
        _
      $region32: #{up_block_forward.12} parent=27 // pred_fallthru
        _
      // Predicated region
      $region33: #{up_block_forward.12} parent=27 // pred_check
        %p2075 = pneg %p124
      $region34: #{up_block_forward.12} parent=27 // pred_check_branch
        %2077 = sbr.rel (%p2075) target = $region36
      $region35: #{up_block_forward.12} parent=27 // pred_region
        _
      $region36: #{up_block_forward.12} parent=27 // pred_fallthru
        _
    $region28: #{up_block_forward.12} parent=5 // pred_fallthru
      _
    %p2078 = scmp.le.s32.totalorder 2, %s10
    // Predicated region
    $region37: #{up_block_forward.12} parent=5 // pred_check
      %p2079 = pneg %p2078
    $region38: #{up_block_forward.12} parent=5 // pred_check_branch
      %2081 = sbr.rel (%p2079) target = $region40
    $region39: #{up_block_forward.12} parent=5 // pred_region
      %s2082 = ssub.s32 %s10, 2
      // Predicated region
      $region41: #{up_block_forward.12} parent=39 // pred_check
        %p2083 = pneg %p102
      $region42: #{up_block_forward.12} parent=39 // pred_check_branch
        %2085 = sbr.rel (%p2083) target = $region44
      $region43: #{up_block_forward.12} parent=39 // pred_region
        %p2086 = scmp.lt.s32.totalorder %s21, 1
        %s2087 = scalar_select %p2086, %s21, 1
        %p2088 = scmp.lt.s32.totalorder %s22, 3
        %s2089 = scalar_select %p2088, %s22, 3
        %s2090 = smul.addr %s2089, 10
        %s2091 = smul.addr %s2087, 40
        %s2092 = sadd.s32 %s2090, %s2091
        %s2093 = smul.addr %s2092, 8
        %s2094 = scalar_lea.vmem %s2, %s2093
      $region44: #{up_block_forward.12} parent=39 // pred_fallthru
        _
      // Predicated region
      $region45: #{up_block_forward.12} parent=39 // pred_check
        %p2095 = pneg %p130
      $region46: #{up_block_forward.12} parent=39 // pred_check_branch
        %2097 = sbr.rel (%p2095) target = $region48
      $region47: #{up_block_forward.12} parent=39 // pred_region
        %p2098 = scmp.lt.s32.totalorder %s21, 1
        %s2099 = scalar_select %p2098, %s21, 1
        %p2100 = scmp.lt.s32.totalorder %s22, 3
        %s2101 = scalar_select %p2100, %s22, 3
        %s2102 = smul.addr %s2099, 4
        %s2103 = sadd.s32 %s2101, %s2102
        %s2104 = smul.addr %s2103, 2
        %s2105 = scalar_lea.vmem %s3, %s2104
      $region48: #{up_block_forward.12} parent=39 // pred_fallthru
        _
    $region40: #{up_block_forward.12} parent=5 // pred_fallthru
      _
  $region6: #{up_block_forward.12} parent=0 // loop_footer
    %s14 = sadd.s32 1, %s10
  $region7: #{up_block_forward.12} parent=0 // loop_footer_branch
    %9 = sbr.rel target = $region3
  $region8: #{up_block_forward.12} parent=0 // loop_exit
    _

// kernel: up_block_forward.17
$region0: #{up_block_forward.17}
  #allocation0 [shape = 'u32[]', space=smem, size = 0x4, offset = 0x4, fixed_abs, tag = 'smem constant byte address 0x4 - core index']
  #allocation1 [shape = 'u32[72,128]{1,0:T(1,128)}', space=vmem, size = 0x9000, scoped, tag = 'internal scratch']
  %s0 = inlined_call_operand.vmem [shape: f32[512,128], index: 0, kind: input, shape index: {}]
  %s1 = inlined_call_operand.vmem [shape: f32[1,128], index: 1, kind: input, shape index: {}]
  %s2 = inlined_call_operand.vmem [shape: f32[1,128], index: 2, kind: input, shape index: {}]
  %s3 = inlined_call_operand.hbm [shape: f32[512,128], index: 3, kind: output, shape index: {}]
  %s4 = sld [smem:[#allocation0]]
  $region22: #{up_block_forward.17} parent=0
    _
  %s6 = ssub.s32 1, %s4
  %s7 = scalar_select 0, %s6, %s4
  $region1: #{up_block_forward.17} parent=0
    #allocation2 [shape = 'u8[262144]{0}', space=vmem, size = 0x40000, scoped, tag = 'output window, operand 0, single buffered']
    #allocation3 [shape = 's32[1]{0}', space=sflag, size = 0x4, scoped, tag = 'scoped memory for up_block_forward.17']
    %8 = vsyncpa [#allocation3], 0
    // Predicated region
    $region2: #{up_block_forward.17} parent=1 // pred_check
      _
    $region3: #{up_block_forward.17} parent=1 // pred_check_branch
      %10 = sbr.rel (0) target = $region5
    $region4: #{up_block_forward.17} parent=1 // pred_region
      _
    $region5: #{up_block_forward.17} parent=1 // pred_fallthru
      _
    // Predicated region
    $region6: #{up_block_forward.17} parent=1 // pred_check
      _
    $region7: #{up_block_forward.17} parent=1 // pred_check_branch
      %12 = sbr.rel (0) target = $region9
    $region8: #{up_block_forward.17} parent=1 // pred_region
      _
    $region9: #{up_block_forward.17} parent=1 // pred_fallthru
      _
    // Predicated region
    $region10: #{up_block_forward.17} parent=1 // pred_check
      _
    $region11: #{up_block_forward.17} parent=1 // pred_check_branch
      %14 = sbr.rel (0) target = $region13
    $region12: #{up_block_forward.17} parent=1 // pred_region
      _
    $region13: #{up_block_forward.17} parent=1 // pred_fallthru
      _
    %v15 = vld [vmem:[%s0] sm:$0xff]
    %v16 = vld [vmem:[%s0 + $0x8] sm:$0xff]
    %v17 = vld [vmem:[%s0 + $0x10] sm:$0xff]
    %v18 = vld [vmem:[%s0 + $0x18] sm:$0xff]
    %v19 = vld [vmem:[%s0 + $0x20] sm:$0xff]
    %v20 = vld [vmem:[%s0 + $0x28] sm:$0xff]
    %v21 = vld [vmem:[%s0 + $0x30] sm:$0xff]
    %v22 = vld [vmem:[%s0 + $0x38] sm:$0xff]
    %v23 = vld [vmem:[%s0 + $0x40] sm:$0xff]
    %v24 = vld [vmem:[%s0 + $0x48] sm:$0xff]
    %v25 = vld [vmem:[%s0 + $0x50] sm:$0xff]
    %v26 = vld [vmem:[%s0 + $0x58] sm:$0xff]
    %v27 = vld [vmem:[%s0 + $0x60] sm:$0xff]
    %v28 = vld [vmem:[%s0 + $0x68] sm:$0xff]
    %v29 = vld [vmem:[%s0 + $0x70] sm:$0xff]
    %v30 = vld [vmem:[%s0 + $0x78] sm:$0xff]
    %v31 = vld [vmem:[%s0 + $0x80] sm:$0xff]
    %v32 = vld [vmem:[%s0 + $0x88] sm:$0xff]
    %v33 = vld [vmem:[%s0 + $0x90] sm:$0xff]
    %v34 = vld [vmem:[%s0 + $0x98] sm:$0xff]
    %v35 = vld [vmem:[%s0 + $0xa0] sm:$0xff]
    %v36 = vld [vmem:[%s0 + $0xa8] sm:$0xff]
    %v37 = vld [vmem:[%s0 + $0xb0] sm:$0xff]
    %v38 = vld [vmem:[%s0 + $0xb8] sm:$0xff]
    %v39 = vld [vmem:[%s0 + $0xc0] sm:$0xff]
    %v40 = vld [vmem:[%s0 + $0xc8] sm:$0xff]
    %v41 = vld [vmem:[%s0 + $0xd0] sm:$0xff]
    %v42 = vld [vmem:[%s0 + $0xd8] sm:$0xff]
    %v43 = vld [vmem:[%s0 + $0xe0] sm:$0xff]
    %v44 = vld [vmem:[%s0 + $0xe8] sm:$0xff]
    %v45 = vld [vmem:[%s0 + $0xf0] sm:$0xff]
    %v46 = vld [vmem:[%s0 + $0xf8] sm:$0xff]
    %v47 = vld [vmem:[%s0 + $0x100] sm:$0xff]
    %v48 = vld [vmem:[%s0 + $0x108] sm:$0xff]
    %v49 = vld [vmem:[%s0 + $0x110] sm:$0xff]
    %v50 = vld [vmem:[%s0 + $0x118] sm:$0xff]
    %v51 = vld [vmem:[%s0 + $0x120] sm:$0xff]
    %v52 = vld [vmem:[%s0 + $0x128] sm:$0xff]
    %v53 = vld [vmem:[%s0 + $0x130] sm:$0xff]
    %v54 = vld [vmem:[%s0 + $0x138] sm:$0xff]
    %v55 = vld [vmem:[%s0 + $0x140] sm:$0xff]
    %v56 = vld [vmem:[%s0 + $0x148] sm:$0xff]
    %v57 = vld [vmem:[%s0 + $0x150] sm:$0xff]
    %v58 = vld [vmem:[%s0 + $0x158] sm:$0xff]
    %v59 = vld [vmem:[%s0 + $0x160] sm:$0xff]
    %v60 = vld [vmem:[%s0 + $0x168] sm:$0xff]
    %v61 = vld [vmem:[%s0 + $0x170] sm:$0xff]
    %v62 = vld [vmem:[%s0 + $0x178] sm:$0xff]
    %v63 = vld [vmem:[%s0 + $0x180] sm:$0xff]
    %v64 = vld [vmem:[%s0 + $0x188] sm:$0xff]
    %v65 = vld [vmem:[%s0 + $0x190] sm:$0xff]
    %v66 = vld [vmem:[%s0 + $0x198] sm:$0xff]
    %v67 = vld [vmem:[%s0 + $0x1a0] sm:$0xff]
    %v68 = vld [vmem:[%s0 + $0x1a8] sm:$0xff]
    %v69 = vld [vmem:[%s0 + $0x1b0] sm:$0xff]
    %v70 = vld [vmem:[%s0 + $0x1b8] sm:$0xff]
    %v71 = vld [vmem:[%s0 + $0x1c0] sm:$0xff]
    %v72 = vld [vmem:[%s0 + $0x1c8] sm:$0xff]
    %v73 = vld [vmem:[%s0 + $0x1d0] sm:$0xff]
    %v74 = vld [vmem:[%s0 + $0x1d8] sm:$0xff]
    %v75 = vld [vmem:[%s0 + $0x1e0] sm:$0xff]
    %v76 = vld [vmem:[%s0 + $0x1e8] sm:$0xff]
    %v77 = vld [vmem:[%s0 + $0x1f0] sm:$0xff]
    %v78 = vld [vmem:[%s0 + $0x1f8] sm:$0xff]
    %v79 = vld [vmem:[%s1] sm:$0x1]
    %v81 = vperm.slane %v79, 0
    %v83 = vmul.f32 %v15, %v81
    %v84 = vmul.f32 %v16, %v81
    %v85 = vmul.f32 %v17, %v81
    %v86 = vmul.f32 %v18, %v81
    %v87 = vmul.f32 %v19, %v81
    %v88 = vmul.f32 %v20, %v81
    %v89 = vmul.f32 %v21, %v81
    %v90 = vmul.f32 %v22, %v81
    %v91 = vmul.f32 %v23, %v81
    %v92 = vmul.f32 %v24, %v81
    %v93 = vmul.f32 %v25, %v81
    %v94 = vmul.f32 %v26, %v81
    %v95 = vmul.f32 %v27, %v81
    %v96 = vmul.f32 %v28, %v81
    %v97 = vmul.f32 %v29, %v81
    %v98 = vmul.f32 %v30, %v81
    %v99 = vmul.f32 %v31, %v81
    %v100 = vmul.f32 %v32, %v81
    %v101 = vmul.f32 %v33, %v81
    %v102 = vmul.f32 %v34, %v81
    %v103 = vmul.f32 %v35, %v81
    %v104 = vmul.f32 %v36, %v81
    %v105 = vmul.f32 %v37, %v81
    %v106 = vmul.f32 %v38, %v81
    %v107 = vmul.f32 %v39, %v81
    %v108 = vmul.f32 %v40, %v81
    %v109 = vmul.f32 %v41, %v81
    %v110 = vmul.f32 %v42, %v81
    %v111 = vmul.f32 %v43, %v81
    %v112 = vmul.f32 %v44, %v81
    %v113 = vmul.f32 %v45, %v81
    %v114 = vmul.f32 %v46, %v81
    %v115 = vmul.f32 %v47, %v81
    %v116 = vmul.f32 %v48, %v81
    %v117 = vmul.f32 %v49, %v81
    %v118 = vmul.f32 %v50, %v81
    %v119 = vmul.f32 %v51, %v81
    %v120 = vmul.f32 %v52, %v81
    %v121 = vmul.f32 %v53, %v81
    %v122 = vmul.f32 %v54, %v81
    %v123 = vmul.f32 %v55, %v81
    %v124 = vmul.f32 %v56, %v81
    %v125 = vmul.f32 %v57, %v81
    %v126 = vmul.f32 %v58, %v81
    %v127 = vmul.f32 %v59, %v81
    %v128 = vmul.f32 %v60, %v81
    %v129 = vmul.f32 %v61, %v81
    %v130 = vmul.f32 %v62, %v81
    %v131 = vmul.f32 %v63, %v81
    %v132 = vmul.f32 %v64, %v81
    %v133 = vmul.f32 %v65, %v81
    %v134 = vmul.f32 %v66, %v81
    %v135 = vmul.f32 %v67, %v81
    %v136 = vmul.f32 %v68, %v81
    %v137 = vmul.f32 %v69, %v81
    %v138 = vmul.f32 %v70, %v81
    %v139 = vmul.f32 %v71, %v81
    %v140 = vmul.f32 %v72, %v81
    %v141 = vmul.f32 %v73, %v81
    %v142 = vmul.f32 %v74, %v81
    %v143 = vmul.f32 %v75, %v81
    %v144 = vmul.f32 %v76, %v81
    %v145 = vmul.f32 %v77, %v81
    %v146 = vmul.f32 %v78, %v81
    %v147 = vld [vmem:[%s2] sm:$0x1]
    %v149 = vperm.slane %v147, 0
    %v151 = vadd.f32 %v83, %v149
    %v152 = vadd.f32 %v84, %v149
    %v153 = vadd.f32 %v85, %v149
    %v154 = vadd.f32 %v86, %v149
    %v155 = vadd.f32 %v87, %v149
    %v156 = vadd.f32 %v88, %v149
    %v157 = vadd.f32 %v89, %v149
    %v158 = vadd.f32 %v90, %v149
    %v159 = vadd.f32 %v91, %v149
    %v160 = vadd.f32 %v92, %v149
    %v161 = vadd.f32 %v93, %v149
    %v162 = vadd.f32 %v94, %v149
    %v163 = vadd.f32 %v95, %v149
    %v164 = vadd.f32 %v96, %v149
    %v165 = vadd.f32 %v97, %v149
    %v166 = vadd.f32 %v98, %v149
    %v167 = vadd.f32 %v99, %v149
    %v168 = vadd.f32 %v100, %v149
    %v169 = vadd.f32 %v101, %v149
    %v170 = vadd.f32 %v102, %v149
    %v171 = vadd.f32 %v103, %v149
    %v172 = vadd.f32 %v104, %v149
    %v173 = vadd.f32 %v105, %v149
    %v174 = vadd.f32 %v106, %v149
    %v175 = vadd.f32 %v107, %v149
    %v176 = vadd.f32 %v108, %v149
    %v177 = vadd.f32 %v109, %v149
    %v178 = vadd.f32 %v110, %v149
    %v179 = vadd.f32 %v111, %v149
    %v180 = vadd.f32 %v112, %v149
    %v181 = vadd.f32 %v113, %v149
    %v182 = vadd.f32 %v114, %v149
    %v183 = vadd.f32 %v115, %v149
    %v184 = vadd.f32 %v116, %v149
    %v185 = vadd.f32 %v117, %v149
    %v186 = vadd.f32 %v118, %v149
    %v187 = vadd.f32 %v119, %v149
    %v188 = vadd.f32 %v120, %v149
    %v189 = vadd.f32 %v121, %v149
    %v190 = vadd.f32 %v122, %v149
    %v191 = vadd.f32 %v123, %v149
    %v192 = vadd.f32 %v124, %v149
    %v193 = vadd.f32 %v125, %v149
    %v194 = vadd.f32 %v126, %v149
    %v195 = vadd.f32 %v127, %v149
    %v196 = vadd.f32 %v128, %v149
    %v197 = vadd.f32 %v129, %v149
    %v198 = vadd.f32 %v130, %v149
    %v199 = vadd.f32 %v131, %v149
    %v200 = vadd.f32 %v132, %v149
    %v201 = vadd.f32 %v133, %v149
    %v202 = vadd.f32 %v134, %v149
    %v203 = vadd.f32 %v135, %v149
    %v204 = vadd.f32 %v136, %v149
    %v205 = vadd.f32 %v137, %v149
    %v206 = vadd.f32 %v138, %v149
    %v207 = vadd.f32 %v139, %v149
    %v208 = vadd.f32 %v140, %v149
    %v209 = vadd.f32 %v141, %v149
    %v210 = vadd.f32 %v142, %v149
    %v211 = vadd.f32 %v143, %v149
    %v212 = vadd.f32 %v144, %v149
    %v213 = vadd.f32 %v145, %v149
    %v214 = vadd.f32 %v146, %v149
    %215 = vst [vmem:[#allocation2] sm:$0xff] %v151
    %216 = vst [vmem:[#allocation2 + $0x8] sm:$0xff] %v152
    %217 = vst [vmem:[#allocation2 + $0x10] sm:$0xff] %v153
    %218 = vst [vmem:[#allocation2 + $0x18] sm:$0xff] %v154
    %219 = vst [vmem:[#allocation2 + $0x20] sm:$0xff] %v155
    %220 = vst [vmem:[#allocation2 + $0x28] sm:$0xff] %v156
    %221 = vst [vmem:[#allocation2 + $0x30] sm:$0xff] %v157
    %222 = vst [vmem:[#allocation2 + $0x38] sm:$0xff] %v158
    %223 = vst [vmem:[#allocation2 + $0x40] sm:$0xff] %v159
    %224 = vst [vmem:[#allocation2 + $0x48] sm:$0xff] %v160
    %225 = vst [vmem:[#allocation2 + $0x50] sm:$0xff] %v161
    %226 = vst [vmem:[#allocation2 + $0x58] sm:$0xff] %v162
    %227 = vst [vmem:[#allocation2 + $0x60] sm:$0xff] %v163
    %228 = vst [vmem:[#allocation2 + $0x68] sm:$0xff] %v164
    %229 = vst [vmem:[#allocation2 + $0x70] sm:$0xff] %v165
    %230 = vst [vmem:[#allocation2 + $0x78] sm:$0xff] %v166
    %231 = vst [vmem:[#allocation2 + $0x80] sm:$0xff] %v167
    %232 = vst [vmem:[#allocation2 + $0x88] sm:$0xff] %v168
    %233 = vst [vmem:[#allocation2 + $0x90] sm:$0xff] %v169
    %234 = vst [vmem:[#allocation2 + $0x98] sm:$0xff] %v170
    %235 = vst [vmem:[#allocation2 + $0xa0] sm:$0xff] %v171
    %236 = vst [vmem:[#allocation2 + $0xa8] sm:$0xff] %v172
    %237 = vst [vmem:[#allocation2 + $0xb0] sm:$0xff] %v173
    %238 = vst [vmem:[#allocation2 + $0xb8] sm:$0xff] %v174
    %239 = vst [vmem:[#allocation2 + $0xc0] sm:$0xff] %v175
    %240 = vst [vmem:[#allocation2 + $0xc8] sm:$0xff] %v176
    %241 = vst [vmem:[#allocation2 + $0xd0] sm:$0xff] %v177
    %242 = vst [vmem:[#allocation2 + $0xd8] sm:$0xff] %v178
    %243 = vst [vmem:[#allocation2 + $0xe0] sm:$0xff] %v179
    %244 = vst [vmem:[#allocation2 + $0xe8] sm:$0xff] %v180
    %245 = vst [vmem:[#allocation2 + $0xf0] sm:$0xff] %v181
    %246 = vst [vmem:[#allocation2 + $0xf8] sm:$0xff] %v182
    %247 = vst [vmem:[#allocation2 + $0x100] sm:$0xff] %v183
    %248 = vst [vmem:[#allocation2 + $0x108] sm:$0xff] %v184
    %249 = vst [vmem:[#allocation2 + $0x110] sm:$0xff] %v185
    %250 = vst [vmem:[#allocation2 + $0x118] sm:$0xff] %v186
    %251 = vst [vmem:[#allocation2 + $0x120] sm:$0xff] %v187
    %252 = vst [vmem:[#allocation2 + $0x128] sm:$0xff] %v188
    %253 = vst [vmem:[#allocation2 + $0x130] sm:$0xff] %v189
    %254 = vst [vmem:[#allocation2 + $0x138] sm:$0xff] %v190
    %255 = vst [vmem:[#allocation2 + $0x140] sm:$0xff] %v191
    %256 = vst [vmem:[#allocation2 + $0x148] sm:$0xff] %v192
    %257 = vst [vmem:[#allocation2 + $0x150] sm:$0xff] %v193
    %258 = vst [vmem:[#allocation2 + $0x158] sm:$0xff] %v194
    %259 = vst [vmem:[#allocation2 + $0x160] sm:$0xff] %v195
    %260 = vst [vmem:[#allocation2 + $0x168] sm:$0xff] %v196
    %261 = vst [vmem:[#allocation2 + $0x170] sm:$0xff] %v197
    %262 = vst [vmem:[#allocation2 + $0x178] sm:$0xff] %v198
    %263 = vst [vmem:[#allocation2 + $0x180] sm:$0xff] %v199
    %264 = vst [vmem:[#allocation2 + $0x188] sm:$0xff] %v200
    %265 = vst [vmem:[#allocation2 + $0x190] sm:$0xff] %v201
    %266 = vst [vmem:[#allocation2 + $0x198] sm:$0xff] %v202
    %267 = vst [vmem:[#allocation2 + $0x1a0] sm:$0xff] %v203
    %268 = vst [vmem:[#allocation2 + $0x1a8] sm:$0xff] %v204
    %269 = vst [vmem:[#allocation2 + $0x1b0] sm:$0xff] %v205
    %270 = vst [vmem:[#allocation2 + $0x1b8] sm:$0xff] %v206
    %271 = vst [vmem:[#allocation2 + $0x1c0] sm:$0xff] %v207
    %272 = vst [vmem:[#allocation2 + $0x1c8] sm:$0xff] %v208
    %273 = vst [vmem:[#allocation2 + $0x1d0] sm:$0xff] %v209
    %274 = vst [vmem:[#allocation2 + $0x1d8] sm:$0xff] %v210
    %275 = vst [vmem:[#allocation2 + $0x1e0] sm:$0xff] %v211
    %276 = vst [vmem:[#allocation2 + $0x1e8] sm:$0xff] %v212
    %277 = vst [vmem:[#allocation2 + $0x1f0] sm:$0xff] %v213
    %278 = vst [vmem:[#allocation2 + $0x1f8] sm:$0xff] %v214
    // Predicated region
    $region14: #{up_block_forward.17} parent=1 // pred_check
      _
    $region15: #{up_block_forward.17} parent=1 // pred_check_branch
      %280 = sbr.rel (0) target = $region17
    $region16: #{up_block_forward.17} parent=1 // pred_region
      %282 = vsyncadd [#allocation3], 0
      %s283 = sshll.u32 [#allocation2], 4
      %s284 = int_to_ptr.vmem [resolvable:$true] %s283
      %s285 = sshll.u32 %s3, 4
      %s286 = int_to_ptr.hbm [resolvable:$true] %s285
      %291 = dma.vmem_to_hbm [thread:$0]  %s284, 8192, %s286, [#allocation3], 128, 128, 8
    $region17: #{up_block_forward.17} parent=1 // pred_fallthru
      _
    // Predicated region
    $region18: #{up_block_forward.17} parent=1 // pred_check
      _
    $region19: #{up_block_forward.17} parent=1 // pred_check_branch
      %293 = sbr.rel (0) target = $region21
    $region20: #{up_block_forward.17} parent=1 // pred_region
      %295 = dma.done [#allocation3], 8192
    $region21: #{up_block_forward.17} parent=1 // pred_fallthru
      _
    %296 = vsyncpa [#allocation3], 1

</llo_original>
